<compile_context>
chip_gen: v6e
topology: v6e:2x2x1
jax: 0.10.0
libtpu: 0.0.40
codegen_flags: <defaults>
</compile_context>

<pallas_src>
import jax
import jax.numpy as jnp
from jax import lax
from jax.experimental import pallas as pl
from jax.experimental.pallas import tpu as pltpu

_LANE = 128


def _round_up(x, m):
    return (x + m - 1) // m * m


# ----------------------------- in-kernel helpers -----------------------------


def _store_zero_halo_interior(scr, interior):
    """scr[:, 1:-1, 1:-1, :] = interior (cast to scr dtype); halo <- 0.

    Four tiny border stores replace the old per-element iota interior mask.
    """
    ipb, hp, wp, c = scr.shape
    dt = scr.dtype
    zrow = jnp.zeros((ipb, 1, wp, c), dt)
    zcol = jnp.zeros((ipb, hp - 2, 1, c), dt)
    scr[:, 0:1, :, :] = zrow
    scr[:, hp - 1:hp, :, :] = zrow
    scr[:, 1:hp - 1, 0:1, :] = zcol
    scr[:, 1:hp - 1, wp - 1:wp, :] = zcol
    scr[:, 1:hp - 1, 1:wp - 1, :] = interior.astype(dt)


def _conv3x3_acc(scr, w_ref):
    """3x3 conv as 9 accumulating MXU matmuls over taps of the padded scratch.

    scr: (ipb, ho+2, wo+2, c) compute-dtype ref; w_ref: (3, 3, c, cout) ref.
    Returns the f32 accumulator of shape (ipb*ho*wo, cout).
    Note: tap reshapes are layout-preserving when wo % 8 == 0 (true for the
    CIFAR-style 32/16/8 spatial sizes this block targets).
    """
    ipb, hp, wp, c = scr.shape
    ho, wo = hp - 2, wp - 2
    cout = w_ref.shape[-1]
    m = ipb * ho * wo
    acc = jnp.zeros((m, cout), jnp.float32)
    for kh in range(3):
        for kw in range(3):
            tap = scr[:, kh:kh + ho, kw:kw + wo, :].reshape(m, c)
            acc = acc + jnp.dot(tap, w_ref[kh, kw, :, :],
                                preferred_element_type=jnp.float32)
    return acc


def _bn_relu(x_ref, s_ref, b_ref):
    """relu(x*scale + bias) in f32 (v5e-safe); caller casts at the scratch store."""
    c = x_ref.shape[-1]
    s = s_ref[...].reshape(1, 1, 1, c)
    b = b_ref[...].reshape(1, 1, 1, c)
    return jnp.maximum(x_ref[...].astype(jnp.float32) * s + b, 0.0)


def _emit_conv1_outputs(acc, h_ref, ssum_ref, ssq_ref):
    """Store conv1 tile + per-step bn2 statistics (channel sum / sum-of-squares)."""
    h_ref[...] = acc.reshape(h_ref.shape).astype(h_ref.dtype)
    ssum_ref[...] = jnp.sum(acc, axis=0, keepdims=True)
    ssq_ref[...] = jnp.sum(acc * acc, axis=0, keepdims=True)


# --------------------------------- kernels -----------------------------------


def _conv1_eq_kernel(x_ref, s_ref, b_ref, w_ref, h_ref, ssum_ref, ssq_ref, scr):
    """equalInOut head: conv3x3_s1(relu(bn1(x))) + fused bn2-stat epilogue."""
    a = _bn_relu(x_ref, s_ref, b_ref)
    _store_zero_halo_interior(scr, a)
    acc = _conv3x3_acc(scr, w_ref)
    _emit_conv1_outputs(acc, h_ref, ssum_ref, ssq_ref)


def _conv1_plain_s1_kernel(x_ref, w_ref, h_ref, ssum_ref, ssq_ref, scr):
    """non-equal head, stride 1: conv3x3_s1(x) + fused bn2-stat epilogue."""
    _store_zero_halo_interior(scr, x_ref[...])
    acc = _conv3x3_acc(scr, w_ref)
    _emit_conv1_outputs(acc, h_ref, ssum_ref, ssq_ref)


def _conv1_plain_s2_kernel(p00, p01, p10, p11, w_ref, h_ref, ssum_ref, ssq_ref):
    """non-equal head, stride 2: conv3x3_s2(x) via 4 polyphase inputs.

    p_ab[i, j] = x_pad[2i + a, 2j + b]; tap (kh, kw) of output (i, j) is
    p_{kh%2, kw%2}[i + kh//2, j + kw//2] -> only static unit-stride slices.
    """
    refs = ((p00, p01), (p10, p11))
    ipb, hpp, wpp, c = p00.shape
    ho, wo = hpp - 1, wpp - 1
    m = ipb * ho * wo
    cout = w_ref.shape[-1]
    acc = jnp.zeros((m, cout), jnp.float32)
    for kh in range(3):
        for kw in range(3):
            r = refs[kh % 2][kw % 2]
            tap = r[:, kh // 2:kh // 2 + ho, kw // 2:kw // 2 + wo, :].reshape(m, c)
            acc = acc + jnp.dot(tap, w_ref[kh, kw, :, :],
                                preferred_element_type=jnp.float32)
    _emit_conv1_outputs(acc, h_ref, ssum_ref, ssq_ref)


def _conv2_identity_kernel(h_ref, s_ref, b_ref, w_ref, sc_ref, o_ref, scr):
    """x + conv3x3_s1(relu(bn2(h)))  — identity shortcut fused into the tile."""
    a = _bn_relu(h_ref, s_ref, b_ref)
    _store_zero_halo_interior(scr, a)
    acc = _conv3x3_acc(scr, w_ref)
    out = acc.reshape(o_ref.shape) + sc_ref[...].astype(jnp.float32)
    o_ref[...] = out.astype(o_ref.dtype)


def _conv2_convsc_kernel(h_ref, s_ref, b_ref, w_ref, sc_ref, wsc_ref, o_ref, scr):
    """conv1x1_s(x) + conv3x3_s1(relu(bn2(h)))  — 1x1-conv shortcut fused."""
    a = _bn_relu(h_ref, s_ref, b_ref)
    _store_zero_halo_interior(scr, a)
    acc = _conv3x3_acc(scr, w_ref)
    m = acc.shape[0]
    cin = sc_ref.shape[-1]
    sc = sc_ref[...].reshape(m, cin)
    acc = acc + jnp.dot(sc, wsc_ref[...], preferred_element_type=jnp.float32)
    o_ref[...] = acc.reshape(o_ref.shape).astype(o_ref.dtype)


# ------------------------------ pallas_call glue ------------------------------


def _resident_spec(shape):
    """Whole-array block with a constant index -> stays resident in VMEM."""
    nd = len(shape)
    return pl.BlockSpec(tuple(shape), lambda i, _nd=nd: (0,) * _nd)


def _batched_spec(shape, ipb):
    """Block = `ipb` images' slab; grid axis 0 walks the batch in steps of ipb."""
    nd = len(shape)
    return pl.BlockSpec((ipb,) + tuple(shape[1:]),
                        lambda i, _nd=nd: (i,) + (0,) * (_nd - 1))


def _stat_spec(cpo):
    """One (1, Cpo) statistics row per grid step."""
    return pl.BlockSpec((None, 1, cpo), lambda i: (i, 0, 0))


def _pick_images_per_step(n, ho, wo, target_m=512):
    """Block several images per step so the MXU M dimension is >= ~256-512."""
    best = 1
    for d in range(1, min(n, 8) + 1):
        if n % d == 0 and d * ho * wo <= max(target_m, ho * wo):
            best = d
    return best


def _compiler_params():
    try:
        cap = int(pltpu.get_tpu_info().vmem_capacity_bytes)
        limit = min((cap * 3) // 4, 96 * 1024 * 1024)   # 96 MiB on v5e/v6e, 48 MiB on v7x
    except Exception:
        limit = 32 * 1024 * 1024                        # conservative fallback
    return pltpu.CompilerParams(
        dimension_semantics=("parallel",),              # megacore split over batch steps
        vmem_limit_bytes=int(limit))


def _bn_scale_bias(x, gamma, beta, eps=1e-5):
    """Training-mode batch stats (biased variance) folded to per-channel affine."""
    axes = tuple(range(x.ndim - 1))
    mean = jnp.mean(x, axis=axes)
    var = jnp.mean(jnp.square(x - mean), axis=axes)
    scale = gamma / jnp.sqrt(var + eps)
    bias = beta - mean * scale
    return scale, bias


def _conv_weight_hwio(w_oihw, cpi, cpo, dtype):
    """OIHW conv weight -> (3, 3, Cin_p, Cout_p) in the matmul dtype."""
    o, i, _, _ = w_oihw.shape
    w = jnp.transpose(w_oihw, (2, 3, 1, 0))
    w = jnp.pad(w, ((0, 0), (0, 0), (0, cpi - i), (0, cpo - o)))
    return w.astype(dtype)


def basic_block_forward(x_nchw, params, in_planes, out_planes, stride,
                        compute_dtype=jnp.bfloat16):
    if stride not in (1, 2):
        raise NotImplementedError("WideResNet BasicBlock uses stride 1 or 2")
    equal = (in_planes == out_planes) and (stride == 1)

    x = jnp.transpose(x_nchw, (0, 2, 3, 1))                       # NHWC (input dtype)
    n, h, w, _ = x.shape
    ho = (h - 1) // stride + 1
    wo = (w - 1) // stride + 1
    cpi = _round_up(in_planes, _LANE)
    cpo = _round_up(out_planes, _LANE)
    ipb = _pick_images_per_step(n, ho, wo)
    nsteps = n // ipb
    cparams = _compiler_params()

    # Channel-pad to a multiple of 128 (lane-dense tiles) and DMA in compute dtype.
    x_k = jnp.pad(x, ((0, 0), (0, 0), (0, 0), (0, cpi - in_planes))).astype(compute_dtype)

    w1 = _conv_weight_hwio(params["conv1_w"], cpi, cpo, compute_dtype)

    hmid_sds = jax.ShapeDtypeStruct((n, ho, wo, cpo), compute_dtype)
    stat_sds = jax.ShapeDtypeStruct((nsteps, 1, cpo), jnp.float32)
    hmid_spec = _batched_spec((n, ho, wo, cpo), ipb)
    conv1_out_shapes = (hmid_sds, stat_sds, stat_sds)
    conv1_out_specs = (hmid_spec, _stat_spec(cpo), _stat_spec(cpo))

    # --- residual head: (bn1+relu1)? -> conv1(stride) + fused bn2 stats ------
    if equal:
        s1, b1 = _bn_scale_bias(x.astype(jnp.float32),
                                params["bn1_gamma"], params["bn1_beta"])
        s1 = jnp.pad(s1, (0, cpi - in_planes)).reshape(1, cpi)
        b1 = jnp.pad(b1, (0, cpi - in_planes)).reshape(1, cpi)
        hmid, ssum, ssq = pl.pallas_call(
            _conv1_eq_kernel,
            out_shape=conv1_out_shapes,
            grid=(nsteps,),
            in_specs=[_batched_spec(x_k.shape, ipb), _resident_spec(s1.shape),
                      _resident_spec(b1.shape), _resident_spec(w1.shape)],
            out_specs=conv1_out_specs,
            scratch_shapes=[pltpu.VMEM((ipb, h + 2, w + 2, cpi), compute_dtype)],
            compiler_params=cparams,
        )(x_k, s1, b1, w1)
    elif stride == 1:
        hmid, ssum, ssq = pl.pallas_call(
            _conv1_plain_s1_kernel,
            out_shape=conv1_out_shapes,
            grid=(nsteps,),
            in_specs=[_batched_spec(x_k.shape, ipb), _resident_spec(w1.shape)],
            out_specs=conv1_out_specs,
            scratch_shapes=[pltpu.VMEM((ipb, h + 2, w + 2, cpi), compute_dtype)],
            compiler_params=cparams,
        )(x_k, w1)
    else:  # stride == 2: polyphase split keeps all in-kernel slices unit-stride
        assert h % 2 == 0 and w % 2 == 0, "stride-2 block expects even H, W"
        x_sp = jnp.pad(x_k, ((0, 0), (1, 1), (1, 1), (0, 0)))
        phases = [x_sp[:, a::2, b::2, :] for a in (0, 1) for b in (0, 1)]
        hmid, ssum, ssq = pl.pallas_call(
            _conv1_plain_s2_kernel,
            out_shape=conv1_out_shapes,
            grid=(nsteps,),
            in_specs=[_batched_spec(p.shape, ipb) for p in phases]
                     + [_resident_spec(w1.shape)],
            out_specs=conv1_out_specs,
            compiler_params=cparams,
        )(*phases, w1)

    # --- bn2 batch stats: finalize the f32 sums emitted by the conv1 kernels --
    # (padded channels give mean=var=0 and gamma_pad=0 -> scale=bias=0, so no slice)
    count = float(n * ho * wo)
    mean = jnp.sum(ssum, axis=0).reshape(cpo) / count
    ex2 = jnp.sum(ssq, axis=0).reshape(cpo) / count
    var = jnp.maximum(ex2 - mean * mean, 0.0)
    g2 = jnp.pad(params["bn2_gamma"], (0, cpo - out_planes))
    be2 = jnp.pad(params["bn2_beta"], (0, cpo - out_planes))
    s2 = g2 / jnp.sqrt(var + 1e-5)
    b2 = be2 - mean * s2
    s2 = s2.reshape(1, cpo).astype(jnp.float32)
    b2 = b2.reshape(1, cpo).astype(jnp.float32)

    w2 = _conv_weight_hwio(params["conv2_w"], cpo, cpo, compute_dtype)
    out_sds = jax.ShapeDtypeStruct((n, ho, wo, cpo), compute_dtype)
    out_spec = _batched_spec((n, ho, wo, cpo), ipb)

    # --- bn2+relu2 -> conv2 (stride 1), shortcut fused ------------------------
    if equal:
        out = pl.pallas_call(
            _conv2_identity_kernel,
            out_shape=out_sds,
            grid=(nsteps,),
            in_specs=[hmid_spec, _resident_spec(s2.shape), _resident_spec(b2.shape),
                      _resident_spec(w2.shape), _batched_spec(x_k.shape, ipb)],
            out_specs=out_spec,
            scratch_shapes=[pltpu.VMEM((ipb, ho + 2, wo + 2, cpo), compute_dtype)],
            compiler_params=cparams,
        )(hmid, s2, b2, w2, x_k)
    else:
        xs = x_k[:, ::stride, ::stride, :]                       # (n, ho, wo, cpi)
        ws = params["convsc_w"].reshape(out_planes, in_planes).T  # (cin, cout)
        ws = jnp.pad(ws, ((0, cpi - in_planes), (0, cpo - out_planes)))
        ws = ws.astype(compute_dtype)
        out = pl.pallas_call(
            _conv2_convsc_kernel,
            out_shape=out_sds,
            grid=(nsteps,),
            in_specs=[hmid_spec, _resident_spec(s2.shape), _resident_spec(b2.shape),
                      _resident_spec(w2.shape), _batched_spec(xs.shape, ipb),
                      _resident_spec(ws.shape)],
            out_specs=out_spec,
            scratch_shapes=[pltpu.VMEM((ipb, ho + 2, wo + 2, cpo), compute_dtype)],
            compiler_params=cparams,
        )(hmid, s2, b2, w2, xs, ws)

    out = out[..., :out_planes]
    return jnp.transpose(out, (0, 3, 1, 2)).astype(x_nchw.dtype)  # back to NCHW


# ------------------------------ params / reference ---------------------------


def init_basic_block_params(key, in_planes, out_planes, stride):
    equal = (in_planes == out_planes) and (stride == 1)
    ks = jax.random.split(key, 7)
    p = {
        "conv1_w": 0.1 * jax.random.normal(ks[0], (out_planes, in_planes, 3, 3), jnp.float32),
        "conv2_w": 0.1 * jax.random.normal(ks[1], (out_planes, out_planes, 3, 3), jnp.float32),
        "bn2_gamma": 1.0 + 0.1 * jax.random.normal(ks[2], (out_planes,), jnp.float32),
        "bn2_beta": 0.1 * jax.random.normal(ks[3], (out_planes,), jnp.float32),
    }
    if equal:
        p["bn1_gamma"] = 1.0 + 0.1 * jax.random.normal(ks[4], (in_planes,), jnp.float32)
        p["bn1_beta"] = 0.1 * jax.random.normal(ks[5], (in_planes,), jnp.float32)
    else:
        p["convsc_w"] = 0.1 * jax.random.normal(
            ks[6], (out_planes, in_planes, 1, 1), jnp.float32)
    return p


def _ref_forward(x_nchw, params, in_planes, out_planes, stride):
    equal = (in_planes == out_planes) and (stride == 1)

    def bn(x, g, b, eps=1e-5):
        mean = x.mean(axis=(0, 2, 3), keepdims=True)
        var = ((x - mean) ** 2).mean(axis=(0, 2, 3), keepdims=True)
        return (x - mean) / jnp.sqrt(var + eps) * g.reshape(1, -1, 1, 1) + b.reshape(
            1, -1, 1, 1)

    def conv(x, w, s, pad):
        return lax.conv_general_dilated(
            x, w, (s, s), [(pad, pad), (pad, pad)],
            dimension_numbers=("NCHW", "OIHW", "NCHW"))

    if equal:
        hh = jnp.maximum(bn(x_nchw, params["bn1_gamma"], params["bn1_beta"]), 0.0)
    else:
        hh = x_nchw
    hh = conv(hh, params["conv1_w"], stride, 1)
    hh = jnp.maximum(bn(hh, params["bn2_gamma"], params["bn2_beta"]), 0.0)
    hh = conv(hh, params["conv2_w"], 1, 1)
    sc = x_nchw if equal else conv(x_nchw, params["convsc_w"], stride, 0)
    return sc + hh


# ---------------------------------- main --------------------------------------

if __name__ == "__main__":
    key = jax.random.PRNGKey(0)
    kx, kp1, kp2 = jax.random.split(key, 3)
    x = jax.random.normal(kx, (2, 4, 16, 16), jnp.float32)   # NCHW

    configs = (
        ((4, 4, 1), kp1),   # equalInOut: identity shortcut
        ((4, 8, 2), kp2),   # downsampling block: 1x1-conv shortcut
    )
    for (cin, cout, stride), kp in configs:
        params = init_basic_block_params(kp, cin, cout, stride)
        y_ref = _ref_forward(x, params, cin, cout, stride)
        # bf16 MXU path (default, loose tolerance) and f32 path (tight tolerance).
        for dt, tol in ((jnp.bfloat16, 1e-1), (jnp.float32, 1e-3)):
            y = basic_block_forward(x, params, cin, cout, stride, compute_dtype=dt)
            y = jax.block_until_ready(y)
            assert y.shape == y_ref.shape, (y.shape, y_ref.shape)
            err = float(jnp.max(jnp.abs(y - y_ref)))
            assert jnp.allclose(y, y_ref, atol=tol, rtol=tol), (str(dt), err)
    print("KERNEL_OK")
</pallas_src>

<mosaic_0001>
module attributes {stable_mosaic.version = 11 : i64} {
  func.func @_conv1_eq_kernel(%arg0: i32, %arg1: memref<2x16x16x128xbf16, #tpu.memory_space<vmem>>, %arg2: memref<1x128xf32, #tpu.memory_space<vmem>>, %arg3: memref<1x128xf32, #tpu.memory_space<vmem>>, %arg4: memref<3x3x128x128xbf16, #tpu.memory_space<vmem>>, %arg5: memref<2x16x16x128xbf16, #tpu.memory_space<vmem>>, %arg6: memref<1x1x128xf32, #tpu.memory_space<vmem>>, %arg7: memref<1x1x128xf32, #tpu.memory_space<vmem>>, %arg8: memref<2x18x18x128xbf16, #tpu.memory_space<vmem>>) attributes {dimension_semantics = [#tpu.dimension_semantics<parallel>], iteration_bounds = array<i64: 1>, scalar_prefetch = 0 : i64, scratch_operands = 1 : i64, tpu.core_type = #tpu.core_type<tc>, window_params = [{transform_indices = @transform_0, window_bounds = array<i64: 2, 16, 16, 128>}, {pipeline_mode = #tpu.pipeline_mode<synchronous>, transform_indices = @transform_1, window_bounds = array<i64: 1, 128>}, {pipeline_mode = #tpu.pipeline_mode<synchronous>, transform_indices = @transform_2, window_bounds = array<i64: 1, 128>}, {pipeline_mode = #tpu.pipeline_mode<synchronous>, transform_indices = @transform_3, window_bounds = array<i64: 3, 3, 128, 128>}, {transform_indices = @transform_4, window_bounds = array<i64: 2, 16, 16, 128>}, {transform_indices = @transform_5, window_bounds = array<i64: 1, 1, 128>}, {transform_indices = @transform_6, window_bounds = array<i64: 1, 1, 128>}]} {
    %c0 = arith.constant 0 : index
    %c0_0 = arith.constant 0 : index
    %0 = vector.load %arg2[%c0, %c0_0] : memref<1x128xf32, #tpu.memory_space<vmem>>, vector<1x128xf32>
    %1 = vector.shape_cast %0 : vector<1x128xf32> to vector<1x1x1x128xf32>
    %c0_1 = arith.constant 0 : index
    %c0_2 = arith.constant 0 : index
    %2 = vector.load %arg3[%c0_1, %c0_2] : memref<1x128xf32, #tpu.memory_space<vmem>>, vector<1x128xf32>
    %3 = vector.shape_cast %2 : vector<1x128xf32> to vector<1x1x1x128xf32>
    %c0_3 = arith.constant 0 : index
    %c0_4 = arith.constant 0 : index
    %c0_5 = arith.constant 0 : index
    %c0_6 = arith.constant 0 : index
    %4 = vector.load %arg1[%c0_3, %c0_4, %c0_5, %c0_6] : memref<2x16x16x128xbf16, #tpu.memory_space<vmem>>, vector<2x16x16x128xbf16>
    %5 = arith.extf %4 : vector<2x16x16x128xbf16> to vector<2x16x16x128xf32>
    %6 = vector.broadcast %1 : vector<1x1x1x128xf32> to vector<2x16x16x128xf32>
    %7 = arith.mulf %5, %6 : vector<2x16x16x128xf32>
    %8 = vector.broadcast %3 : vector<1x1x1x128xf32> to vector<2x16x16x128xf32>
    %9 = arith.addf %7, %8 : vector<2x16x16x128xf32>
    %cst = arith.constant 0.000000e+00 : f32
    %10 = vector.broadcast %cst : f32 to vector<2x16x16x128xf32>
    %11 = arith.maximumf %9, %10 : vector<2x16x16x128xf32>
    %cst_7 = arith.constant 0.000000e+00 : bf16
    %12 = vector.broadcast %cst_7 : bf16 to vector<2x1x18x128xbf16>
    %cst_8 = arith.constant 0.000000e+00 : bf16
    %13 = vector.broadcast %cst_8 : bf16 to vector<2x16x1x128xbf16>
    %c0_9 = arith.constant 0 : index
    %c0_10 = arith.constant 0 : index
    %c0_11 = arith.constant 0 : index
    %c0_12 = arith.constant 0 : index
    %14 = vector.load %arg8[%c0_9, %c0_10, %c0_11, %c0_12] : memref<2x18x18x128xbf16, #tpu.memory_space<vmem>>, vector<2x1x18x128xbf16>
    tpu.vector_store %arg8[%c0_9, %c0_10, %c0_11, %c0_12], %12 {strides = array<i32>} : memref<2x18x18x128xbf16, #tpu.memory_space<vmem>>, vector<2x1x18x128xbf16>,
    %c0_13 = arith.constant 0 : index
    %c17 = arith.constant 17 : index
    %c0_14 = arith.constant 0 : index
    %c0_15 = arith.constant 0 : index
    %15 = vector.load %arg8[%c0_13, %c17, %c0_14, %c0_15] : memref<2x18x18x128xbf16, #tpu.memory_space<vmem>>, vector<2x1x18x128xbf16>
    tpu.vector_store %arg8[%c0_13, %c17, %c0_14, %c0_15], %12 {strides = array<i32>} : memref<2x18x18x128xbf16, #tpu.memory_space<vmem>>, vector<2x1x18x128xbf16>,
    %c0_16 = arith.constant 0 : index
    %c1 = arith.constant 1 : index
    %c0_17 = arith.constant 0 : index
    %c0_18 = arith.constant 0 : index
    %16 = vector.load %arg8[%c0_16, %c1, %c0_17, %c0_18] : memref<2x18x18x128xbf16, #tpu.memory_space<vmem>>, vector<2x16x1x128xbf16>
    tpu.vector_store %arg8[%c0_16, %c1, %c0_17, %c0_18], %13 {strides = array<i32>} : memref<2x18x18x128xbf16, #tpu.memory_space<vmem>>, vector<2x16x1x128xbf16>,
    %c0_19 = arith.constant 0 : index
    %c1_20 = arith.constant 1 : index
    %c17_21 = arith.constant 17 : index
    %c0_22 = arith.constant 0 : index
    %17 = vector.load %arg8[%c0_19, %c1_20, %c17_21, %c0_22] : memref<2x18x18x128xbf16, #tpu.memory_space<vmem>>, vector<2x16x1x128xbf16>
    tpu.vector_store %arg8[%c0_19, %c1_20, %c17_21, %c0_22], %13 {strides = array<i32>} : memref<2x18x18x128xbf16, #tpu.memory_space<vmem>>, vector<2x16x1x128xbf16>,
    %18 = arith.truncf %11 : vector<2x16x16x128xf32> to vector<2x16x16x128xbf16>
    %c0_23 = arith.constant 0 : index
    %c1_24 = arith.constant 1 : index
    %c1_25 = arith.constant 1 : index
    %c0_26 = arith.constant 0 : index
    %19 = vector.load %arg8[%c0_23, %c1_24, %c1_25, %c0_26] : memref<2x18x18x128xbf16, #tpu.memory_space<vmem>>, vector<2x16x16x128xbf16>
    tpu.vector_store %arg8[%c0_23, %c1_24, %c1_25, %c0_26], %18 {strides = array<i32>} : memref<2x18x18x128xbf16, #tpu.memory_space<vmem>>, vector<2x16x16x128xbf16>,
    %cst_27 = arith.constant 0.000000e+00 : f32
    %20 = vector.broadcast %cst_27 : f32 to vector<512x128xf32>
    %c0_28 = arith.constant 0 : index
    %c0_29 = arith.constant 0 : index
    %c0_30 = arith.constant 0 : index
    %c0_31 = arith.constant 0 : index
    %21 = vector.load %arg8[%c0_28, %c0_29, %c0_30, %c0_31] : memref<2x18x18x128xbf16, #tpu.memory_space<vmem>>, vector<2x16x16x128xbf16>
    %22 = vector.shape_cast %21 : vector<2x16x16x128xbf16> to vector<512x128xbf16>
    %c0_32 = arith.constant 0 : index
    %c0_33 = arith.constant 0 : index
    %c0_34 = arith.constant 0 : index
    %c0_35 = arith.constant 0 : index
    %23 = vector.load %arg4[%c0_32, %c0_33, %c0_34, %c0_35] : memref<3x3x128x128xbf16, #tpu.memory_space<vmem>>, vector<1x1x128x128xbf16>
    %24 = vector.shape_cast %23 : vector<1x1x128x128xbf16> to vector<128x128xbf16>
    %cst_36 = arith.constant dense<0.000000e+00> : vector<512x128xf32>
    %25 = tpu.matmul %22, %24, %cst_36 {dimension_numbers = #tpu.dot_dimension_numbers<[1], [0], [0], [1], [0, 0, 1, 1], [], []>} : vector<512x128xbf16>, vector<128x128xbf16>, vector<512x128xf32> -> vector<512x128xf32>
    %26 = arith.addf %20, %25 : vector<512x128xf32>
    %c0_37 = arith.constant 0 : index
    %c0_38 = arith.constant 0 : index
    %c1_39 = arith.constant 1 : index
    %c0_40 = arith.constant 0 : index
    %27 = vector.load %arg8[%c0_37, %c0_38, %c1_39, %c0_40] : memref<2x18x18x128xbf16, #tpu.memory_space<vmem>>, vector<2x16x16x128xbf16>
    %28 = vector.shape_cast %27 : vector<2x16x16x128xbf16> to vector<512x128xbf16>
    %c0_41 = arith.constant 0 : index
    %c1_42 = arith.constant 1 : index
    %c0_43 = arith.constant 0 : index
    %c0_44 = arith.constant 0 : index
    %29 = vector.load %arg4[%c0_41, %c1_42, %c0_43, %c0_44] : memref<3x3x128x128xbf16, #tpu.memory_space<vmem>>, vector<1x1x128x128xbf16>
    %30 = vector.shape_cast %29 : vector<1x1x128x128xbf16> to vector<128x128xbf16>
    %cst_45 = arith.constant dense<0.000000e+00> : vector<512x128xf32>
    %31 = tpu.matmul %28, %30, %cst_45 {dimension_numbers = #tpu.dot_dimension_numbers<[1], [0], [0], [1], [0, 0, 1, 1], [], []>} : vector<512x128xbf16>, vector<128x128xbf16>, vector<512x128xf32> -> vector<512x128xf32>
    %32 = arith.addf %26, %31 : vector<512x128xf32>
    %c0_46 = arith.constant 0 : index
    %c0_47 = arith.constant 0 : index
    %c2 = arith.constant 2 : index
    %c0_48 = arith.constant 0 : index
    %33 = vector.load %arg8[%c0_46, %c0_47, %c2, %c0_48] : memref<2x18x18x128xbf16, #tpu.memory_space<vmem>>, vector<2x16x16x128xbf16>
    %34 = vector.shape_cast %33 : vector<2x16x16x128xbf16> to vector<512x128xbf16>
    %c0_49 = arith.constant 0 : index
    %c2_50 = arith.constant 2 : index
    %c0_51 = arith.constant 0 : index
    %c0_52 = arith.constant 0 : index
    %35 = vector.load %arg4[%c0_49, %c2_50, %c0_51, %c0_52] : memref<3x3x128x128xbf16, #tpu.memory_space<vmem>>, vector<1x1x128x128xbf16>
    %36 = vector.shape_cast %35 : vector<1x1x128x128xbf16> to vector<128x128xbf16>
    %cst_53 = arith.constant dense<0.000000e+00> : vector<512x128xf32>
    %37 = tpu.matmul %34, %36, %cst_53 {dimension_numbers = #tpu.dot_dimension_numbers<[1], [0], [0], [1], [0, 0, 1, 1], [], []>} : vector<512x128xbf16>, vector<128x128xbf16>, vector<512x128xf32> -> vector<512x128xf32>
    %38 = arith.addf %32, %37 : vector<512x128xf32>
    %c0_54 = arith.constant 0 : index
    %c1_55 = arith.constant 1 : index
    %c0_56 = arith.constant 0 : index
    %c0_57 = arith.constant 0 : index
    %39 = vector.load %arg8[%c0_54, %c1_55, %c0_56, %c0_57] : memref<2x18x18x128xbf16, #tpu.memory_space<vmem>>, vector<2x16x16x128xbf16>
    %40 = vector.shape_cast %39 : vector<2x16x16x128xbf16> to vector<512x128xbf16>
    %c1_58 = arith.constant 1 : index
    %c0_59 = arith.constant 0 : index
    %c0_60 = arith.constant 0 : index
    %c0_61 = arith.constant 0 : index
    %41 = vector.load %arg4[%c1_58, %c0_59, %c0_60, %c0_61] : memref<3x3x128x128xbf16, #tpu.memory_space<vmem>>, vector<1x1x128x128xbf16>
    %42 = vector.shape_cast %41 : vector<1x1x128x128xbf16> to vector<128x128xbf16>
    %cst_62 = arith.constant dense<0.000000e+00> : vector<512x128xf32>
    %43 = tpu.matmul %40, %42, %cst_62 {dimension_numbers = #tpu.dot_dimension_numbers<[1], [0], [0], [1], [0, 0, 1, 1], [], []>} : vector<512x128xbf16>, vector<128x128xbf16>, vector<512x128xf32> -> vector<512x128xf32>
    %44 = arith.addf %38, %43 : vector<512x128xf32>
    %c0_63 = arith.constant 0 : index
    %c1_64 = arith.constant 1 : index
    %c1_65 = arith.constant 1 : index
    %c0_66 = arith.constant 0 : index
    %45 = vector.load %arg8[%c0_63, %c1_64, %c1_65, %c0_66] : memref<2x18x18x128xbf16, #tpu.memory_space<vmem>>, vector<2x16x16x128xbf16>
    %46 = vector.shape_cast %45 : vector<2x16x16x128xbf16> to vector<512x128xbf16>
    %c1_67 = arith.constant 1 : index
    %c1_68 = arith.constant 1 : index
    %c0_69 = arith.constant 0 : index
    %c0_70 = arith.constant 0 : index
    %47 = vector.load %arg4[%c1_67, %c1_68, %c0_69, %c0_70] : memref<3x3x128x128xbf16, #tpu.memory_space<vmem>>, vector<1x1x128x128xbf16>
    %48 = vector.shape_cast %47 : vector<1x1x128x128xbf16> to vector<128x128xbf16>
    %cst_71 = arith.constant dense<0.000000e+00> : vector<512x128xf32>
    %49 = tpu.matmul %46, %48, %cst_71 {dimension_numbers = #tpu.dot_dimension_numbers<[1], [0], [0], [1], [0, 0, 1, 1], [], []>} : vector<512x128xbf16>, vector<128x128xbf16>, vector<512x128xf32> -> vector<512x128xf32>
    %50 = arith.addf %44, %49 : vector<512x128xf32>
    %c0_72 = arith.constant 0 : index
    %c1_73 = arith.constant 1 : index
    %c2_74 = arith.constant 2 : index
    %c0_75 = arith.constant 0 : index
    %51 = vector.load %arg8[%c0_72, %c1_73, %c2_74, %c0_75] : memref<2x18x18x128xbf16, #tpu.memory_space<vmem>>, vector<2x16x16x128xbf16>
    %52 = vector.shape_cast %51 : vector<2x16x16x128xbf16> to vector<512x128xbf16>
    %c1_76 = arith.constant 1 : index
    %c2_77 = arith.constant 2 : index
    %c0_78 = arith.constant 0 : index
    %c0_79 = arith.constant 0 : index
    %53 = vector.load %arg4[%c1_76, %c2_77, %c0_78, %c0_79] : memref<3x3x128x128xbf16, #tpu.memory_space<vmem>>, vector<1x1x128x128xbf16>
    %54 = vector.shape_cast %53 : vector<1x1x128x128xbf16> to vector<128x128xbf16>
    %cst_80 = arith.constant dense<0.000000e+00> : vector<512x128xf32>
    %55 = tpu.matmul %52, %54, %cst_80 {dimension_numbers = #tpu.dot_dimension_numbers<[1], [0], [0], [1], [0, 0, 1, 1], [], []>} : vector<512x128xbf16>, vector<128x128xbf16>, vector<512x128xf32> -> vector<512x128xf32>
    %56 = arith.addf %50, %55 : vector<512x128xf32>
    %c0_81 = arith.constant 0 : index
    %c2_82 = arith.constant 2 : index
    %c0_83 = arith.constant 0 : index
    %c0_84 = arith.constant 0 : index
    %57 = vector.load %arg8[%c0_81, %c2_82, %c0_83, %c0_84] : memref<2x18x18x128xbf16, #tpu.memory_space<vmem>>, vector<2x16x16x128xbf16>
    %58 = vector.shape_cast %57 : vector<2x16x16x128xbf16> to vector<512x128xbf16>
    %c2_85 = arith.constant 2 : index
    %c0_86 = arith.constant 0 : index
    %c0_87 = arith.constant 0 : index
    %c0_88 = arith.constant 0 : index
    %59 = vector.load %arg4[%c2_85, %c0_86, %c0_87, %c0_88] : memref<3x3x128x128xbf16, #tpu.memory_space<vmem>>, vector<1x1x128x128xbf16>
    %60 = vector.shape_cast %59 : vector<1x1x128x128xbf16> to vector<128x128xbf16>
    %cst_89 = arith.constant dense<0.000000e+00> : vector<512x128xf32>
    %61 = tpu.matmul %58, %60, %cst_89 {dimension_numbers = #tpu.dot_dimension_numbers<[1], [0], [0], [1], [0, 0, 1, 1], [], []>} : vector<512x128xbf16>, vector<128x128xbf16>, vector<512x128xf32> -> vector<512x128xf32>
    %62 = arith.addf %56, %61 : vector<512x128xf32>
    %c0_90 = arith.constant 0 : index
    %c2_91 = arith.constant 2 : index
    %c1_92 = arith.constant 1 : index
    %c0_93 = arith.constant 0 : index
    %63 = vector.load %arg8[%c0_90, %c2_91, %c1_92, %c0_93] : memref<2x18x18x128xbf16, #tpu.memory_space<vmem>>, vector<2x16x16x128xbf16>
    %64 = vector.shape_cast %63 : vector<2x16x16x128xbf16> to vector<512x128xbf16>
    %c2_94 = arith.constant 2 : index
    %c1_95 = arith.constant 1 : index
    %c0_96 = arith.constant 0 : index
    %c0_97 = arith.constant 0 : index
    %65 = vector.load %arg4[%c2_94, %c1_95, %c0_96, %c0_97] : memref<3x3x128x128xbf16, #tpu.memory_space<vmem>>, vector<1x1x128x128xbf16>
    %66 = vector.shape_cast %65 : vector<1x1x128x128xbf16> to vector<128x128xbf16>
    %cst_98 = arith.constant dense<0.000000e+00> : vector<512x128xf32>
    %67 = tpu.matmul %64, %66, %cst_98 {dimension_numbers = #tpu.dot_dimension_numbers<[1], [0], [0], [1], [0, 0, 1, 1], [], []>} : vector<512x128xbf16>, vector<128x128xbf16>, vector<512x128xf32> -> vector<512x128xf32>
    %68 = arith.addf %62, %67 : vector<512x128xf32>
    %c0_99 = arith.constant 0 : index
    %c2_100 = arith.constant 2 : index
    %c2_101 = arith.constant 2 : index
    %c0_102 = arith.constant 0 : index
    %69 = vector.load %arg8[%c0_99, %c2_100, %c2_101, %c0_102] : memref<2x18x18x128xbf16, #tpu.memory_space<vmem>>, vector<2x16x16x128xbf16>
    %70 = vector.shape_cast %69 : vector<2x16x16x128xbf16> to vector<512x128xbf16>
    %c2_103 = arith.constant 2 : index
    %c2_104 = arith.constant 2 : index
    %c0_105 = arith.constant 0 : index
    %c0_106 = arith.constant 0 : index
    %71 = vector.load %arg4[%c2_103, %c2_104, %c0_105, %c0_106] : memref<3x3x128x128xbf16, #tpu.memory_space<vmem>>, vector<1x1x128x128xbf16>
    %72 = vector.shape_cast %71 : vector<1x1x128x128xbf16> to vector<128x128xbf16>
    %cst_107 = arith.constant dense<0.000000e+00> : vector<512x128xf32>
    %73 = tpu.matmul %70, %72, %cst_107 {dimension_numbers = #tpu.dot_dimension_numbers<[1], [0], [0], [1], [0, 0, 1, 1], [], []>} : vector<512x128xbf16>, vector<128x128xbf16>, vector<512x128xf32> -> vector<512x128xf32>
    %74 = arith.addf %68, %73 : vector<512x128xf32>
    %75 = vector.shape_cast %74 : vector<512x128xf32> to vector<2x16x16x128xf32>
    %76 = arith.truncf %75 : vector<2x16x16x128xf32> to vector<2x16x16x128xbf16>
    %c0_108 = arith.constant 0 : index
    %c0_109 = arith.constant 0 : index
    %c0_110 = arith.constant 0 : index
    %c0_111 = arith.constant 0 : index
    %77 = vector.load %arg5[%c0_108, %c0_109, %c0_110, %c0_111] : memref<2x16x16x128xbf16, #tpu.memory_space<vmem>>, vector<2x16x16x128xbf16>
    tpu.vector_store %arg5[%c0_108, %c0_109, %c0_110, %c0_111], %76 {strides = array<i32>} : memref<2x16x16x128xbf16, #tpu.memory_space<vmem>>, vector<2x16x16x128xbf16>,
    %cst_112 = arith.constant dense<0.000000e+00> : vector<128xf32>
    %78 = vector.multi_reduction <add>, %74, %cst_112 [0] : vector<512x128xf32> to vector<128xf32>
    %79 = vector.shape_cast %78 : vector<128xf32> to vector<1x128xf32>
    %c0_113 = arith.constant 0 : index
    %c0_114 = arith.constant 0 : index
    %c0_115 = arith.constant 0 : index
    %80 = vector.load %arg6[%c0_113, %c0_114, %c0_115] : memref<1x1x128xf32, #tpu.memory_space<vmem>>, vector<1x1x128xf32>
    %81 = vector.shape_cast %80 : vector<1x1x128xf32> to vector<1x128xf32>
    %82 = vector.shape_cast %79 : vector<1x128xf32> to vector<1x1x128xf32>
    tpu.vector_store %arg6[%c0_113, %c0_114, %c0_115], %82 {strides = array<i32>} : memref<1x1x128xf32, #tpu.memory_space<vmem>>, vector<1x1x128xf32>,
    %83 = arith.mulf %74, %74 : vector<512x128xf32>
    %cst_116 = arith.constant dense<0.000000e+00> : vector<128xf32>
    %84 = vector.multi_reduction <add>, %83, %cst_116 [0] : vector<512x128xf32> to vector<128xf32>
    %85 = vector.shape_cast %84 : vector<128xf32> to vector<1x128xf32>
    %c0_117 = arith.constant 0 : index
    %c0_118 = arith.constant 0 : index
    %c0_119 = arith.constant 0 : index
    %86 = vector.load %arg7[%c0_117, %c0_118, %c0_119] : memref<1x1x128xf32, #tpu.memory_space<vmem>>, vector<1x1x128xf32>
    %87 = vector.shape_cast %86 : vector<1x1x128xf32> to vector<1x128xf32>
    %88 = vector.shape_cast %85 : vector<1x128xf32> to vector<1x1x128xf32>
    tpu.vector_store %arg7[%c0_117, %c0_118, %c0_119], %88 {strides = array<i32>} : memref<1x1x128xf32, #tpu.memory_space<vmem>>, vector<1x1x128xf32>,
    return
  }
  func.func @transform_0(%arg0: i32) -> (i32, i32, i32, i32) {
    %c0_i32 = arith.constant 0 : i32
    %c0_i32_0 = arith.constant 0 : i32
    %c0_i32_1 = arith.constant 0 : i32
    %c0_i32_2 = arith.constant 0 : i32
    return %arg0, %c0_i32, %c0_i32_0, %c0_i32_1 : i32, i32, i32, i32
  }
  func.func @transform_1(%arg0: i32) -> (i32, i32) {
    %c0_i32 = arith.constant 0 : i32
    %c0_i32_0 = arith.constant 0 : i32
    %c0_i32_1 = arith.constant 0 : i32
    return %c0_i32, %c0_i32_0 : i32, i32
  }
  func.func @transform_2(%arg0: i32) -> (i32, i32) {
    %c0_i32 = arith.constant 0 : i32
    %c0_i32_0 = arith.constant 0 : i32
    %c0_i32_1 = arith.constant 0 : i32
    return %c0_i32, %c0_i32_0 : i32, i32
  }
  func.func @transform_3(%arg0: i32) -> (i32, i32, i32, i32) {
    %c0_i32 = arith.constant 0 : i32
    %c0_i32_0 = arith.constant 0 : i32
    %c0_i32_1 = arith.constant 0 : i32
    %c0_i32_2 = arith.constant 0 : i32
    %c0_i32_3 = arith.constant 0 : i32
    return %c0_i32, %c0_i32_0, %c0_i32_1, %c0_i32_2 : i32, i32, i32, i32
  }
  func.func @transform_4(%arg0: i32) -> (i32, i32, i32, i32) {
    %c0_i32 = arith.constant 0 : i32
    %c0_i32_0 = arith.constant 0 : i32
    %c0_i32_1 = arith.constant 0 : i32
    %c0_i32_2 = arith.constant 0 : i32
    return %arg0, %c0_i32, %c0_i32_0, %c0_i32_1 : i32, i32, i32, i32
  }
  func.func @transform_5(%arg0: i32) -> (i32, i32, i32) {
    %c0_i32 = arith.constant 0 : i32
    %c0_i32_0 = arith.constant 0 : i32
    %c0_i32_1 = arith.constant 0 : i32
    return %arg0, %c0_i32, %c0_i32_0 : i32, i32, i32
  }
  func.func @transform_6(%arg0: i32) -> (i32, i32, i32) {
    %c0_i32 = arith.constant 0 : i32
    %c0_i32_0 = arith.constant 0 : i32
    %c0_i32_1 = arith.constant 0 : i32
    return %arg0, %c0_i32, %c0_i32_0 : i32, i32, i32
  }
}

</mosaic_0001>

<llo_original>
// kernel: tpu_custom_call.1
$region0: #{tpu_custom_call.1}
  #allocation0 [shape = 'u32[]', space=smem, size = 0x4, offset = 0x4, fixed_abs, tag = 'smem constant byte address 0x4 - core index']
  #allocation1 [shape = 'u32[144,128]{1,0:T(1,128)}', space=vmem, size = 0x12000, scoped, tag = 'internal scratch']
  #allocation2 [shape = 'bf16[2,18,18,128]{3,2,1,0:T(8,128)(2,1)}', space=vmem, size = 0x36000, scoped, tag = 'scratch operand']
  %s0 = inlined_call_operand.hbm [shape: bf16[2,16,16,128], index: 0, kind: input, shape index: {}]
  %s1 = inlined_call_operand.vmem [shape: f32[1,128], index: 1, kind: input, shape index: {}]
  %s2 = inlined_call_operand.vmem [shape: f32[1,128], index: 2, kind: input, shape index: {}]
  %s3 = inlined_call_operand.hbm [shape: bf16[3,3,128,128], index: 3, kind: input, shape index: {}]
  %s4 = inlined_call_operand.hbm [shape: bf16[2,16,16,128], index: 4, kind: output, shape index: {0}]
  %s5 = inlined_call_operand.hbm [shape: f32[1,1,128], index: 5, kind: output, shape index: {1}]
  %s6 = inlined_call_operand.hbm [shape: f32[1,1,128], index: 6, kind: output, shape index: {2}]
  %7 = xla_tuple %s4, %s5, %s6
  %s8 = sld [smem:[#allocation0]]
  $region50: #{tpu_custom_call.1} parent=0
    _
  %s10 = ssub.s32 1, %s8
  %s11 = scalar_select 0, %s10, %s8
  $region1: #{tpu_custom_call.1} parent=0
    #allocation3 [shape = 'u8[131072]{0}', space=vmem, size = 0x20000, scoped, tag = 'input window, operand 0, single buffered']
    #allocation4 [shape = 's32[1]{0}', space=sflag, size = 0x4, scoped, tag = 'scoped memory for tpu_custom_call.1']
    #allocation5 [shape = 's32[1]{0}', space=sflag, size = 0x4, scoped, tag = 'scoped memory for tpu_custom_call.1']
    #allocation6 [shape = 'u8[294912]{0}', space=vmem, size = 0x48000, scoped, tag = 'input window, operand 3, single buffered']
    #allocation7 [shape = 's32[1]{0}', space=sflag, size = 0x4, scoped, tag = 'scoped memory for tpu_custom_call.1']
    #allocation8 [shape = 'u8[131072]{0}', space=vmem, size = 0x20000, scoped, tag = 'output window, operand 0, single buffered']
    #allocation9 [shape = 'u8[512]{0}', space=vmem, size = 0x400, scoped, tag = 'output window, operand 1, single buffered']
    #allocation10 [shape = 's32[1]{0}', space=sflag, size = 0x4, scoped, tag = 'scoped memory for tpu_custom_call.1']
    #allocation11 [shape = 'u8[512]{0}', space=vmem, size = 0x400, scoped, tag = 'output window, operand 2, single buffered']
    %12 = vsyncpa [#allocation4], 0
    %13 = vsyncpa [#allocation7], 0
    %14 = vsyncpa [#allocation5], 0
    %15 = vsyncpa [#allocation10], 0
    // Predicated region
    $region2: #{tpu_custom_call.1} parent=1 // pred_check
      _
    $region3: #{tpu_custom_call.1} parent=1 // pred_check_branch
      %17 = sbr.rel (0) target = $region5
    $region4: #{tpu_custom_call.1} parent=1 // pred_region
      %s19 = ssub.s32 4096, 4096
      %20 = vsyncadd [#allocation4], %s19
      %s21 = sshll.u32 [#allocation3], 4
      %s22 = int_to_ptr.vmem [resolvable:$true] %s21
      %27 = dma.hbm_to_vmem [thread:$0]  %s0, 4096, %s22, [#allocation4], 64, 64, 4
    $region5: #{tpu_custom_call.1} parent=1 // pred_fallthru
      _
    // Predicated region
    $region6: #{tpu_custom_call.1} parent=1 // pred_check
      _
    $region7: #{tpu_custom_call.1} parent=1 // pred_check_branch
      %29 = sbr.rel (0) target = $region9
    $region8: #{tpu_custom_call.1} parent=1 // pred_region
      _
    $region9: #{tpu_custom_call.1} parent=1 // pred_fallthru
      _
    // Predicated region
    $region10: #{tpu_custom_call.1} parent=1 // pred_check
      _
    $region11: #{tpu_custom_call.1} parent=1 // pred_check_branch
      %31 = sbr.rel (0) target = $region13
    $region12: #{tpu_custom_call.1} parent=1 // pred_region
      _
    $region13: #{tpu_custom_call.1} parent=1 // pred_fallthru
      _
    // Predicated region
    $region14: #{tpu_custom_call.1} parent=1 // pred_check
      _
    $region15: #{tpu_custom_call.1} parent=1 // pred_check_branch
      %33 = sbr.rel (0) target = $region17
    $region16: #{tpu_custom_call.1} parent=1 // pred_region
      %s35 = ssub.s32 9216, 9216
      %36 = vsyncadd [#allocation7], %s35
      %s37 = sshll.u32 [#allocation6], 4
      %s38 = int_to_ptr.vmem [resolvable:$true] %s37
      %43 = dma.hbm_to_vmem [thread:$0]  %s3, 9216, %s38, [#allocation7], 64, 64, 4
    $region17: #{tpu_custom_call.1} parent=1 // pred_fallthru
      _
    // Predicated region
    $region18: #{tpu_custom_call.1} parent=1 // pred_check
      _
    $region19: #{tpu_custom_call.1} parent=1 // pred_check_branch
      %45 = sbr.rel (0) target = $region21
    $region20: #{tpu_custom_call.1} parent=1 // pred_region
      %46 = dma.done [#allocation4], 4096
    $region21: #{tpu_custom_call.1} parent=1 // pred_fallthru
      _
    // Predicated region
    $region22: #{tpu_custom_call.1} parent=1 // pred_check
      _
    $region23: #{tpu_custom_call.1} parent=1 // pred_check_branch
      %48 = sbr.rel (0) target = $region25
    $region24: #{tpu_custom_call.1} parent=1 // pred_region
      %49 = dma.done [#allocation7], 9216
    $region25: #{tpu_custom_call.1} parent=1 // pred_fallthru
      _
    %v51 = vld [vmem:[%s1] sm:$0x1]
    %v52 = vld [vmem:[%s2] sm:$0x1]
    %v53 = vld [vmem:[#allocation3] sm:$0xf]
    %v54 = vld [vmem:[#allocation3 + $0x4] sm:$0xf]
    %v55 = vld [vmem:[#allocation3 + $0x8] sm:$0xf]
    %v56 = vld [vmem:[#allocation3 + $0xc] sm:$0xf]
    %v57 = vld [vmem:[#allocation3 + $0x10] sm:$0xf]
    %v58 = vld [vmem:[#allocation3 + $0x14] sm:$0xf]
    %v59 = vld [vmem:[#allocation3 + $0x18] sm:$0xf]
    %v60 = vld [vmem:[#allocation3 + $0x1c] sm:$0xf]
    %v61 = vld [vmem:[#allocation3 + $0x20] sm:$0xf]
    %v62 = vld [vmem:[#allocation3 + $0x24] sm:$0xf]
    %v63 = vld [vmem:[#allocation3 + $0x28] sm:$0xf]
    %v64 = vld [vmem:[#allocation3 + $0x2c] sm:$0xf]
    %v65 = vld [vmem:[#allocation3 + $0x30] sm:$0xf]
    %v66 = vld [vmem:[#allocation3 + $0x34] sm:$0xf]
    %v67 = vld [vmem:[#allocation3 + $0x38] sm:$0xf]
    %v68 = vld [vmem:[#allocation3 + $0x3c] sm:$0xf]
    %v69 = vld [vmem:[#allocation3 + $0x40] sm:$0xf]
    %v70 = vld [vmem:[#allocation3 + $0x44] sm:$0xf]
    %v71 = vld [vmem:[#allocation3 + $0x48] sm:$0xf]
    %v72 = vld [vmem:[#allocation3 + $0x4c] sm:$0xf]
    %v73 = vld [vmem:[#allocation3 + $0x50] sm:$0xf]
    %v74 = vld [vmem:[#allocation3 + $0x54] sm:$0xf]
    %v75 = vld [vmem:[#allocation3 + $0x58] sm:$0xf]
    %v76 = vld [vmem:[#allocation3 + $0x5c] sm:$0xf]
    %v77 = vld [vmem:[#allocation3 + $0x60] sm:$0xf]
    %v78 = vld [vmem:[#allocation3 + $0x64] sm:$0xf]
    %v79 = vld [vmem:[#allocation3 + $0x68] sm:$0xf]
    %v80 = vld [vmem:[#allocation3 + $0x6c] sm:$0xf]
    %v81 = vld [vmem:[#allocation3 + $0x70] sm:$0xf]
    %v82 = vld [vmem:[#allocation3 + $0x74] sm:$0xf]
    %v83 = vld [vmem:[#allocation3 + $0x78] sm:$0xf]
    %v84 = vld [vmem:[#allocation3 + $0x7c] sm:$0xf]
    %v85 = vld [vmem:[#allocation3 + $0x80] sm:$0xf]
    %v86 = vld [vmem:[#allocation3 + $0x84] sm:$0xf]
    %v87 = vld [vmem:[#allocation3 + $0x88] sm:$0xf]
    %v88 = vld [vmem:[#allocation3 + $0x8c] sm:$0xf]
    %v89 = vld [vmem:[#allocation3 + $0x90] sm:$0xf]
    %v90 = vld [vmem:[#allocation3 + $0x94] sm:$0xf]
    %v91 = vld [vmem:[#allocation3 + $0x98] sm:$0xf]
    %v92 = vld [vmem:[#allocation3 + $0x9c] sm:$0xf]
    %v93 = vld [vmem:[#allocation3 + $0xa0] sm:$0xf]
    %v94 = vld [vmem:[#allocation3 + $0xa4] sm:$0xf]
    %v95 = vld [vmem:[#allocation3 + $0xa8] sm:$0xf]
    %v96 = vld [vmem:[#allocation3 + $0xac] sm:$0xf]
    %v97 = vld [vmem:[#allocation3 + $0xb0] sm:$0xf]
    %v98 = vld [vmem:[#allocation3 + $0xb4] sm:$0xf]
    %v99 = vld [vmem:[#allocation3 + $0xb8] sm:$0xf]
    %v100 = vld [vmem:[#allocation3 + $0xbc] sm:$0xf]
    %v101 = vld [vmem:[#allocation3 + $0xc0] sm:$0xf]
    %v102 = vld [vmem:[#allocation3 + $0xc4] sm:$0xf]
    %v103 = vld [vmem:[#allocation3 + $0xc8] sm:$0xf]
    %v104 = vld [vmem:[#allocation3 + $0xcc] sm:$0xf]
    %v105 = vld [vmem:[#allocation3 + $0xd0] sm:$0xf]
    %v106 = vld [vmem:[#allocation3 + $0xd4] sm:$0xf]
    %v107 = vld [vmem:[#allocation3 + $0xd8] sm:$0xf]
    %v108 = vld [vmem:[#allocation3 + $0xdc] sm:$0xf]
    %v109 = vld [vmem:[#allocation3 + $0xe0] sm:$0xf]
    %v110 = vld [vmem:[#allocation3 + $0xe4] sm:$0xf]
    %v111 = vld [vmem:[#allocation3 + $0xe8] sm:$0xf]
    %v112 = vld [vmem:[#allocation3 + $0xec] sm:$0xf]
    %v113 = vld [vmem:[#allocation3 + $0xf0] sm:$0xf]
    %v114 = vld [vmem:[#allocation3 + $0xf4] sm:$0xf]
    %v115 = vld [vmem:[#allocation3 + $0xf8] sm:$0xf]
    %v116 = vld [vmem:[#allocation3 + $0xfc] sm:$0xf]
    %v117 = vunpack.c.l.bf16 %v53
    %v118 = vunpack.c.l.bf16 %v54
    %v119 = vunpack.c.l.bf16 %v55
    %v120 = vunpack.c.l.bf16 %v56
    %v121 = vunpack.c.l.bf16 %v57
    %v122 = vunpack.c.l.bf16 %v58
    %v123 = vunpack.c.l.bf16 %v59
    %v124 = vunpack.c.l.bf16 %v60
    %v125 = vunpack.c.l.bf16 %v61
    %v126 = vunpack.c.l.bf16 %v62
    %v127 = vunpack.c.l.bf16 %v63
    %v128 = vunpack.c.l.bf16 %v64
    %v129 = vunpack.c.l.bf16 %v65
    %v130 = vunpack.c.l.bf16 %v66
    %v131 = vunpack.c.l.bf16 %v67
    %v132 = vunpack.c.l.bf16 %v68
    %v133 = vunpack.c.l.bf16 %v69
    %v134 = vunpack.c.l.bf16 %v70
    %v135 = vunpack.c.l.bf16 %v71
    %v136 = vunpack.c.l.bf16 %v72
    %v137 = vunpack.c.l.bf16 %v73
    %v138 = vunpack.c.l.bf16 %v74
    %v139 = vunpack.c.l.bf16 %v75
    %v140 = vunpack.c.l.bf16 %v76
    %v141 = vunpack.c.l.bf16 %v77
    %v142 = vunpack.c.l.bf16 %v78
    %v143 = vunpack.c.l.bf16 %v79
    %v144 = vunpack.c.l.bf16 %v80
    %v145 = vunpack.c.l.bf16 %v81
    %v146 = vunpack.c.l.bf16 %v82
    %v147 = vunpack.c.l.bf16 %v83
    %v148 = vunpack.c.l.bf16 %v84
    %v149 = vunpack.c.l.bf16 %v85
    %v150 = vunpack.c.l.bf16 %v86
    %v151 = vunpack.c.l.bf16 %v87
    %v152 = vunpack.c.l.bf16 %v88
    %v153 = vunpack.c.l.bf16 %v89
    %v154 = vunpack.c.l.bf16 %v90
    %v155 = vunpack.c.l.bf16 %v91
    %v156 = vunpack.c.l.bf16 %v92
    %v157 = vunpack.c.l.bf16 %v93
    %v158 = vunpack.c.l.bf16 %v94
    %v159 = vunpack.c.l.bf16 %v95
    %v160 = vunpack.c.l.bf16 %v96
    %v161 = vunpack.c.l.bf16 %v97
    %v162 = vunpack.c.l.bf16 %v98
    %v163 = vunpack.c.l.bf16 %v99
    %v164 = vunpack.c.l.bf16 %v100
    %v165 = vunpack.c.l.bf16 %v101
    %v166 = vunpack.c.l.bf16 %v102
    %v167 = vunpack.c.l.bf16 %v103
    %v168 = vunpack.c.l.bf16 %v104
    %v169 = vunpack.c.l.bf16 %v105
    %v170 = vunpack.c.l.bf16 %v106
    %v171 = vunpack.c.l.bf16 %v107
    %v172 = vunpack.c.l.bf16 %v108
    %v173 = vunpack.c.l.bf16 %v109
    %v174 = vunpack.c.l.bf16 %v110
    %v175 = vunpack.c.l.bf16 %v111
    %v176 = vunpack.c.l.bf16 %v112
    %v177 = vunpack.c.l.bf16 %v113
    %v178 = vunpack.c.l.bf16 %v114
    %v179 = vunpack.c.l.bf16 %v115
    %v180 = vunpack.c.l.bf16 %v116
    %v182 = vlaneseq
    %v183 = vshrl.u32 %v182, 7
    %v184 = vsub.s32 0, %v183
    %v185 = vrot.slane %v51, %v184
    %v187 = vmul.f32 %v117, %v185
    %v188 = vmul.f32 %v118, %v185
    %v189 = vmul.f32 %v119, %v185
    %v190 = vmul.f32 %v120, %v185
    %v191 = vmul.f32 %v121, %v185
    %v192 = vmul.f32 %v122, %v185
    %v193 = vmul.f32 %v123, %v185
    %v194 = vmul.f32 %v124, %v185
    %v195 = vmul.f32 %v125, %v185
    %v196 = vmul.f32 %v126, %v185
    %v197 = vmul.f32 %v127, %v185
    %v198 = vmul.f32 %v128, %v185
    %v199 = vmul.f32 %v129, %v185
    %v200 = vmul.f32 %v130, %v185
    %v201 = vmul.f32 %v131, %v185
    %v202 = vmul.f32 %v132, %v185
    %v203 = vmul.f32 %v133, %v185
    %v204 = vmul.f32 %v134, %v185
    %v205 = vmul.f32 %v135, %v185
    %v206 = vmul.f32 %v136, %v185
    %v207 = vmul.f32 %v137, %v185
    %v208 = vmul.f32 %v138, %v185
    %v209 = vmul.f32 %v139, %v185
    %v210 = vmul.f32 %v140, %v185
    %v211 = vmul.f32 %v141, %v185
    %v212 = vmul.f32 %v142, %v185
    %v213 = vmul.f32 %v143, %v185
    %v214 = vmul.f32 %v144, %v185
    %v215 = vmul.f32 %v145, %v185
    %v216 = vmul.f32 %v146, %v185
    %v217 = vmul.f32 %v147, %v185
    %v218 = vmul.f32 %v148, %v185
    %v219 = vmul.f32 %v149, %v185
    %v220 = vmul.f32 %v150, %v185
    %v221 = vmul.f32 %v151, %v185
    %v222 = vmul.f32 %v152, %v185
    %v223 = vmul.f32 %v153, %v185
    %v224 = vmul.f32 %v154, %v185
    %v225 = vmul.f32 %v155, %v185
    %v226 = vmul.f32 %v156, %v185
    %v227 = vmul.f32 %v157, %v185
    %v228 = vmul.f32 %v158, %v185
    %v229 = vmul.f32 %v159, %v185
    %v230 = vmul.f32 %v160, %v185
    %v231 = vmul.f32 %v161, %v185
    %v232 = vmul.f32 %v162, %v185
    %v233 = vmul.f32 %v163, %v185
    %v234 = vmul.f32 %v164, %v185
    %v235 = vmul.f32 %v165, %v185
    %v236 = vmul.f32 %v166, %v185
    %v237 = vmul.f32 %v167, %v185
    %v238 = vmul.f32 %v168, %v185
    %v239 = vmul.f32 %v169, %v185
    %v240 = vmul.f32 %v170, %v185
    %v241 = vmul.f32 %v171, %v185
    %v242 = vmul.f32 %v172, %v185
    %v243 = vmul.f32 %v173, %v185
    %v244 = vmul.f32 %v174, %v185
    %v245 = vmul.f32 %v175, %v185
    %v246 = vmul.f32 %v176, %v185
    %v247 = vmul.f32 %v177, %v185
    %v248 = vmul.f32 %v178, %v185
    %v249 = vmul.f32 %v179, %v185
    %v250 = vmul.f32 %v180, %v185
    %v252 = vlaneseq
    %v253 = vshrl.u32 %v252, 7
    %v254 = vsub.s32 0, %v253
    %v255 = vrot.slane %v52, %v254
    %v257 = vadd.f32 %v187, %v255
    %v258 = vadd.f32 %v188, %v255
    %v259 = vadd.f32 %v189, %v255
    %v260 = vadd.f32 %v190, %v255
    %v261 = vadd.f32 %v191, %v255
    %v262 = vadd.f32 %v192, %v255
    %v263 = vadd.f32 %v193, %v255
    %v264 = vadd.f32 %v194, %v255
    %v265 = vadd.f32 %v195, %v255
    %v266 = vadd.f32 %v196, %v255
    %v267 = vadd.f32 %v197, %v255
    %v268 = vadd.f32 %v198, %v255
    %v269 = vadd.f32 %v199, %v255
    %v270 = vadd.f32 %v200, %v255
    %v271 = vadd.f32 %v201, %v255
    %v272 = vadd.f32 %v202, %v255
    %v273 = vadd.f32 %v203, %v255
    %v274 = vadd.f32 %v204, %v255
    %v275 = vadd.f32 %v205, %v255
    %v276 = vadd.f32 %v206, %v255
    %v277 = vadd.f32 %v207, %v255
    %v278 = vadd.f32 %v208, %v255
    %v279 = vadd.f32 %v209, %v255
    %v280 = vadd.f32 %v210, %v255
    %v281 = vadd.f32 %v211, %v255
    %v282 = vadd.f32 %v212, %v255
    %v283 = vadd.f32 %v213, %v255
    %v284 = vadd.f32 %v214, %v255
    %v285 = vadd.f32 %v215, %v255
    %v286 = vadd.f32 %v216, %v255
    %v287 = vadd.f32 %v217, %v255
    %v288 = vadd.f32 %v218, %v255
    %v289 = vadd.f32 %v219, %v255
    %v290 = vadd.f32 %v220, %v255
    %v291 = vadd.f32 %v221, %v255
    %v292 = vadd.f32 %v222, %v255
    %v293 = vadd.f32 %v223, %v255
    %v294 = vadd.f32 %v224, %v255
    %v295 = vadd.f32 %v225, %v255
    %v296 = vadd.f32 %v226, %v255
    %v297 = vadd.f32 %v227, %v255
    %v298 = vadd.f32 %v228, %v255
    %v299 = vadd.f32 %v229, %v255
    %v300 = vadd.f32 %v230, %v255
    %v301 = vadd.f32 %v231, %v255
    %v302 = vadd.f32 %v232, %v255
    %v303 = vadd.f32 %v233, %v255
    %v304 = vadd.f32 %v234, %v255
    %v305 = vadd.f32 %v235, %v255
    %v306 = vadd.f32 %v236, %v255
    %v307 = vadd.f32 %v237, %v255
    %v308 = vadd.f32 %v238, %v255
    %v309 = vadd.f32 %v239, %v255
    %v310 = vadd.f32 %v240, %v255
    %v311 = vadd.f32 %v241, %v255
    %v312 = vadd.f32 %v242, %v255
    %v313 = vadd.f32 %v243, %v255
    %v314 = vadd.f32 %v244, %v255
    %v315 = vadd.f32 %v245, %v255
    %v316 = vadd.f32 %v246, %v255
    %v317 = vadd.f32 %v247, %v255
    %v318 = vadd.f32 %v248, %v255
    %v319 = vadd.f32 %v249, %v255
    %v320 = vadd.f32 %v250, %v255
    %v321 = vmax.f32 %v257, 0.0
    %v322 = vmax.f32 %v258, 0.0
    %v323 = vmax.f32 %v259, 0.0
    %v324 = vmax.f32 %v260, 0.0
    %v325 = vmax.f32 %v261, 0.0
    %v326 = vmax.f32 %v262, 0.0
    %v327 = vmax.f32 %v263, 0.0
    %v328 = vmax.f32 %v264, 0.0
    %v329 = vmax.f32 %v265, 0.0
    %v330 = vmax.f32 %v266, 0.0
    %v331 = vmax.f32 %v267, 0.0
    %v332 = vmax.f32 %v268, 0.0
    %v333 = vmax.f32 %v269, 0.0
    %v334 = vmax.f32 %v270, 0.0
    %v335 = vmax.f32 %v271, 0.0
    %v336 = vmax.f32 %v272, 0.0
    %v337 = vmax.f32 %v273, 0.0
    %v338 = vmax.f32 %v274, 0.0
    %v339 = vmax.f32 %v275, 0.0
    %v340 = vmax.f32 %v276, 0.0
    %v341 = vmax.f32 %v277, 0.0
    %v342 = vmax.f32 %v278, 0.0
    %v343 = vmax.f32 %v279, 0.0
    %v344 = vmax.f32 %v280, 0.0
    %v345 = vmax.f32 %v281, 0.0
    %v346 = vmax.f32 %v282, 0.0
    %v347 = vmax.f32 %v283, 0.0
    %v348 = vmax.f32 %v284, 0.0
    %v349 = vmax.f32 %v285, 0.0
    %v350 = vmax.f32 %v286, 0.0
    %v351 = vmax.f32 %v287, 0.0
    %v352 = vmax.f32 %v288, 0.0
    %v353 = vmax.f32 %v289, 0.0
    %v354 = vmax.f32 %v290, 0.0
    %v355 = vmax.f32 %v291, 0.0
    %v356 = vmax.f32 %v292, 0.0
    %v357 = vmax.f32 %v293, 0.0
    %v358 = vmax.f32 %v294, 0.0
    %v359 = vmax.f32 %v295, 0.0
    %v360 = vmax.f32 %v296, 0.0
    %v361 = vmax.f32 %v297, 0.0
    %v362 = vmax.f32 %v298, 0.0
    %v363 = vmax.f32 %v299, 0.0
    %v364 = vmax.f32 %v300, 0.0
    %v365 = vmax.f32 %v301, 0.0
    %v366 = vmax.f32 %v302, 0.0
    %v367 = vmax.f32 %v303, 0.0
    %v368 = vmax.f32 %v304, 0.0
    %v369 = vmax.f32 %v305, 0.0
    %v370 = vmax.f32 %v306, 0.0
    %v371 = vmax.f32 %v307, 0.0
    %v372 = vmax.f32 %v308, 0.0
    %v373 = vmax.f32 %v309, 0.0
    %v374 = vmax.f32 %v310, 0.0
    %v375 = vmax.f32 %v311, 0.0
    %v376 = vmax.f32 %v312, 0.0
    %v377 = vmax.f32 %v313, 0.0
    %v378 = vmax.f32 %v314, 0.0
    %v379 = vmax.f32 %v315, 0.0
    %v380 = vmax.f32 %v316, 0.0
    %v381 = vmax.f32 %v317, 0.0
    %v382 = vmax.f32 %v318, 0.0
    %v383 = vmax.f32 %v319, 0.0
    %v384 = vmax.f32 %v320, 0.0
    %385 = vst [vmem:[#allocation2] sm:$0xf] 0
    %386 = vst [vmem:[#allocation2 + $0x4] sm:$0xf] 0
    %387 = vst [vmem:[#allocation2 + $0x8] sm:$0x1] 0
    %388 = vst [vmem:[#allocation2 + $0xd8] sm:$0xf] 0
    %389 = vst [vmem:[#allocation2 + $0xdc] sm:$0xf] 0
    %390 = vst [vmem:[#allocation2 + $0xe0] sm:$0x1] 0
    %s391 = scalar_lea.vmem [#allocation2], 204
    %392 = vst [vmem:[%s391] sm:$0xf] 0
    %393 = vst [vmem:[%s391 + $0x4] sm:$0xf] 0
    %394 = vst [vmem:[%s391 + $0x8] sm:$0x1] 0
    %395 = vst [vmem:[%s391 + $0xd8] sm:$0xf] 0
    %396 = vst [vmem:[%s391 + $0xdc] sm:$0xf] 0
    %397 = vst [vmem:[%s391 + $0xe0] sm:$0x1] 0
    %s398 = scalar_lea.vmem [#allocation2], 12
    %vm399 = vcmask 1040384
    %vm400 = vsmask.f32 256
    %vm401 = vmand %vm399, %vm400
    %v402 = vld [vmem:[%s398] sm:$0x1]
    %v403 = vsel %vm401, 0, %v402
    %404 = vst [vmem:[%s398] sm:$0x1] %v403
    %v405 = vld [vmem:[%s398 + $0xc] sm:$0x1]
    %v406 = vsel %vm401, 0, %v405
    %407 = vst [vmem:[%s398 + $0xc] sm:$0x1] %v406
    %v408 = vld [vmem:[%s398 + $0x18] sm:$0x1]
    %v409 = vsel %vm401, 0, %v408
    %410 = vst [vmem:[%s398 + $0x18] sm:$0x1] %v409
    %v411 = vld [vmem:[%s398 + $0x24] sm:$0x1]
    %v412 = vsel %vm401, 0, %v411
    %413 = vst [vmem:[%s398 + $0x24] sm:$0x1] %v412
    %v414 = vld [vmem:[%s398 + $0x30] sm:$0x1]
    %v415 = vsel %vm401, 0, %v414
    %416 = vst [vmem:[%s398 + $0x30] sm:$0x1] %v415
    %v417 = vld [vmem:[%s398 + $0x3c] sm:$0x1]
    %v418 = vsel %vm401, 0, %v417
    %419 = vst [vmem:[%s398 + $0x3c] sm:$0x1] %v418
    %v420 = vld [vmem:[%s398 + $0x48] sm:$0x1]
    %v421 = vsel %vm401, 0, %v420
    %422 = vst [vmem:[%s398 + $0x48] sm:$0x1] %v421
    %v423 = vld [vmem:[%s398 + $0x54] sm:$0x1]
    %v424 = vsel %vm401, 0, %v423
    %425 = vst [vmem:[%s398 + $0x54] sm:$0x1] %v424
    %v426 = vld [vmem:[%s398 + $0x60] sm:$0x1]
    %v427 = vsel %vm401, 0, %v426
    %428 = vst [vmem:[%s398 + $0x60] sm:$0x1] %v427
    %v429 = vld [vmem:[%s398 + $0x6c] sm:$0x1]
    %v430 = vsel %vm401, 0, %v429
    %431 = vst [vmem:[%s398 + $0x6c] sm:$0x1] %v430
    %v432 = vld [vmem:[%s398 + $0x78] sm:$0x1]
    %v433 = vsel %vm401, 0, %v432
    %434 = vst [vmem:[%s398 + $0x78] sm:$0x1] %v433
    %v435 = vld [vmem:[%s398 + $0x84] sm:$0x1]
    %v436 = vsel %vm401, 0, %v435
    %437 = vst [vmem:[%s398 + $0x84] sm:$0x1] %v436
    %v438 = vld [vmem:[%s398 + $0x90] sm:$0x1]
    %v439 = vsel %vm401, 0, %v438
    %440 = vst [vmem:[%s398 + $0x90] sm:$0x1] %v439
    %v441 = vld [vmem:[%s398 + $0x9c] sm:$0x1]
    %v442 = vsel %vm401, 0, %v441
    %443 = vst [vmem:[%s398 + $0x9c] sm:$0x1] %v442
    %v444 = vld [vmem:[%s398 + $0xa8] sm:$0x1]
    %v445 = vsel %vm401, 0, %v444
    %446 = vst [vmem:[%s398 + $0xa8] sm:$0x1] %v445
    %v447 = vld [vmem:[%s398 + $0xb4] sm:$0x1]
    %v448 = vsel %vm401, 0, %v447
    %449 = vst [vmem:[%s398 + $0xb4] sm:$0x1] %v448
    %v450 = vld [vmem:[%s398 + $0xd8] sm:$0x1]
    %v451 = vsel %vm401, 0, %v450
    %452 = vst [vmem:[%s398 + $0xd8] sm:$0x1] %v451
    %v453 = vld [vmem:[%s398 + $0xe4] sm:$0x1]
    %v454 = vsel %vm401, 0, %v453
    %455 = vst [vmem:[%s398 + $0xe4] sm:$0x1] %v454
    %v456 = vld [vmem:[%s398 + $0xf0] sm:$0x1]
    %v457 = vsel %vm401, 0, %v456
    %458 = vst [vmem:[%s398 + $0xf0] sm:$0x1] %v457
    %v459 = vld [vmem:[%s398 + $0xfc] sm:$0x1]
    %v460 = vsel %vm401, 0, %v459
    %461 = vst [vmem:[%s398 + $0xfc] sm:$0x1] %v460
    %v462 = vld [vmem:[%s398 + $0x108] sm:$0x1]
    %v463 = vsel %vm401, 0, %v462
    %464 = vst [vmem:[%s398 + $0x108] sm:$0x1] %v463
    %v465 = vld [vmem:[%s398 + $0x114] sm:$0x1]
    %v466 = vsel %vm401, 0, %v465
    %467 = vst [vmem:[%s398 + $0x114] sm:$0x1] %v466
    %v468 = vld [vmem:[%s398 + $0x120] sm:$0x1]
    %v469 = vsel %vm401, 0, %v468
    %470 = vst [vmem:[%s398 + $0x120] sm:$0x1] %v469
    %v471 = vld [vmem:[%s398 + $0x12c] sm:$0x1]
    %v472 = vsel %vm401, 0, %v471
    %473 = vst [vmem:[%s398 + $0x12c] sm:$0x1] %v472
    %v474 = vld [vmem:[%s398 + $0x138] sm:$0x1]
    %v475 = vsel %vm401, 0, %v474
    %476 = vst [vmem:[%s398 + $0x138] sm:$0x1] %v475
    %v477 = vld [vmem:[%s398 + $0x144] sm:$0x1]
    %v478 = vsel %vm401, 0, %v477
    %479 = vst [vmem:[%s398 + $0x144] sm:$0x1] %v478
    %v480 = vld [vmem:[%s398 + $0x150] sm:$0x1]
    %v481 = vsel %vm401, 0, %v480
    %482 = vst [vmem:[%s398 + $0x150] sm:$0x1] %v481
    %v483 = vld [vmem:[%s398 + $0x15c] sm:$0x1]
    %v484 = vsel %vm401, 0, %v483
    %485 = vst [vmem:[%s398 + $0x15c] sm:$0x1] %v484
    %v486 = vld [vmem:[%s398 + $0x168] sm:$0x1]
    %v487 = vsel %vm401, 0, %v486
    %488 = vst [vmem:[%s398 + $0x168] sm:$0x1] %v487
    %v489 = vld [vmem:[%s398 + $0x174] sm:$0x1]
    %v490 = vsel %vm401, 0, %v489
    %491 = vst [vmem:[%s398 + $0x174] sm:$0x1] %v490
    %v492 = vld [vmem:[%s398 + $0x180] sm:$0x1]
    %v493 = vsel %vm401, 0, %v492
    %494 = vst [vmem:[%s398 + $0x180] sm:$0x1] %v493
    %v495 = vld [vmem:[%s398 + $0x18c] sm:$0x1]
    %v496 = vsel %vm401, 0, %v495
    %497 = vst [vmem:[%s398 + $0x18c] sm:$0x1] %v496
    %vm498 = vsmask.f32 7938
    %vm499 = vmand %vm399, %vm498
    %v500 = vld [vmem:[%s398 + $0x8] sm:$0x1]
    %v501 = vsel %vm499, 0, %v500
    %502 = vst [vmem:[%s398 + $0x8] sm:$0x1] %v501
    %v503 = vld [vmem:[%s398 + $0x14] sm:$0x1]
    %v504 = vsel %vm499, 0, %v503
    %505 = vst [vmem:[%s398 + $0x14] sm:$0x1] %v504
    %v506 = vld [vmem:[%s398 + $0x20] sm:$0x1]
    %v507 = vsel %vm499, 0, %v506
    %508 = vst [vmem:[%s398 + $0x20] sm:$0x1] %v507
    %v509 = vld [vmem:[%s398 + $0x2c] sm:$0x1]
    %v510 = vsel %vm499, 0, %v509
    %511 = vst [vmem:[%s398 + $0x2c] sm:$0x1] %v510
    %v512 = vld [vmem:[%s398 + $0x38] sm:$0x1]
    %v513 = vsel %vm499, 0, %v512
    %514 = vst [vmem:[%s398 + $0x38] sm:$0x1] %v513
    %v515 = vld [vmem:[%s398 + $0x44] sm:$0x1]
    %v516 = vsel %vm499, 0, %v515
    %517 = vst [vmem:[%s398 + $0x44] sm:$0x1] %v516
    %v518 = vld [vmem:[%s398 + $0x50] sm:$0x1]
    %v519 = vsel %vm499, 0, %v518
    %520 = vst [vmem:[%s398 + $0x50] sm:$0x1] %v519
    %v521 = vld [vmem:[%s398 + $0x5c] sm:$0x1]
    %v522 = vsel %vm499, 0, %v521
    %523 = vst [vmem:[%s398 + $0x5c] sm:$0x1] %v522
    %v524 = vld [vmem:[%s398 + $0x68] sm:$0x1]
    %v525 = vsel %vm499, 0, %v524
    %526 = vst [vmem:[%s398 + $0x68] sm:$0x1] %v525
    %v527 = vld [vmem:[%s398 + $0x74] sm:$0x1]
    %v528 = vsel %vm499, 0, %v527
    %529 = vst [vmem:[%s398 + $0x74] sm:$0x1] %v528
    %v530 = vld [vmem:[%s398 + $0x80] sm:$0x1]
    %v531 = vsel %vm499, 0, %v530
    %532 = vst [vmem:[%s398 + $0x80] sm:$0x1] %v531
    %v533 = vld [vmem:[%s398 + $0x8c] sm:$0x1]
    %v534 = vsel %vm499, 0, %v533
    %535 = vst [vmem:[%s398 + $0x8c] sm:$0x1] %v534
    %v536 = vld [vmem:[%s398 + $0x98] sm:$0x1]
    %v537 = vsel %vm499, 0, %v536
    %538 = vst [vmem:[%s398 + $0x98] sm:$0x1] %v537
    %v539 = vld [vmem:[%s398 + $0xa4] sm:$0x1]
    %v540 = vsel %vm499, 0, %v539
    %541 = vst [vmem:[%s398 + $0xa4] sm:$0x1] %v540
    %v542 = vld [vmem:[%s398 + $0xb0] sm:$0x1]
    %v543 = vsel %vm499, 0, %v542
    %544 = vst [vmem:[%s398 + $0xb0] sm:$0x1] %v543
    %v545 = vld [vmem:[%s398 + $0xbc] sm:$0x1]
    %v546 = vsel %vm499, 0, %v545
    %547 = vst [vmem:[%s398 + $0xbc] sm:$0x1] %v546
    %v548 = vld [vmem:[%s398 + $0xe0] sm:$0x1]
    %v549 = vsel %vm499, 0, %v548
    %550 = vst [vmem:[%s398 + $0xe0] sm:$0x1] %v549
    %v551 = vld [vmem:[%s398 + $0xec] sm:$0x1]
    %v552 = vsel %vm499, 0, %v551
    %553 = vst [vmem:[%s398 + $0xec] sm:$0x1] %v552
    %v554 = vld [vmem:[%s398 + $0xf8] sm:$0x1]
    %v555 = vsel %vm499, 0, %v554
    %556 = vst [vmem:[%s398 + $0xf8] sm:$0x1] %v555
    %v557 = vld [vmem:[%s398 + $0x104] sm:$0x1]
    %v558 = vsel %vm499, 0, %v557
    %559 = vst [vmem:[%s398 + $0x104] sm:$0x1] %v558
    %v560 = vld [vmem:[%s398 + $0x110] sm:$0x1]
    %v561 = vsel %vm499, 0, %v560
    %562 = vst [vmem:[%s398 + $0x110] sm:$0x1] %v561
    %v563 = vld [vmem:[%s398 + $0x11c] sm:$0x1]
    %v564 = vsel %vm499, 0, %v563
    %565 = vst [vmem:[%s398 + $0x11c] sm:$0x1] %v564
    %v566 = vld [vmem:[%s398 + $0x128] sm:$0x1]
    %v567 = vsel %vm499, 0, %v566
    %568 = vst [vmem:[%s398 + $0x128] sm:$0x1] %v567
    %v569 = vld [vmem:[%s398 + $0x134] sm:$0x1]
    %v570 = vsel %vm499, 0, %v569
    %571 = vst [vmem:[%s398 + $0x134] sm:$0x1] %v570
    %v572 = vld [vmem:[%s398 + $0x140] sm:$0x1]
    %v573 = vsel %vm499, 0, %v572
    %574 = vst [vmem:[%s398 + $0x140] sm:$0x1] %v573
    %v575 = vld [vmem:[%s398 + $0x14c] sm:$0x1]
    %v576 = vsel %vm499, 0, %v575
    %577 = vst [vmem:[%s398 + $0x14c] sm:$0x1] %v576
    %v578 = vld [vmem:[%s398 + $0x158] sm:$0x1]
    %v579 = vsel %vm499, 0, %v578
    %580 = vst [vmem:[%s398 + $0x158] sm:$0x1] %v579
    %v581 = vld [vmem:[%s398 + $0x164] sm:$0x1]
    %v582 = vsel %vm499, 0, %v581
    %583 = vst [vmem:[%s398 + $0x164] sm:$0x1] %v582
    %v584 = vld [vmem:[%s398 + $0x170] sm:$0x1]
    %v585 = vsel %vm499, 0, %v584
    %586 = vst [vmem:[%s398 + $0x170] sm:$0x1] %v585
    %v587 = vld [vmem:[%s398 + $0x17c] sm:$0x1]
    %v588 = vsel %vm499, 0, %v587
    %589 = vst [vmem:[%s398 + $0x17c] sm:$0x1] %v588
    %v590 = vld [vmem:[%s398 + $0x188] sm:$0x1]
    %v591 = vsel %vm499, 0, %v590
    %592 = vst [vmem:[%s398 + $0x188] sm:$0x1] %v591
    %v593 = vld [vmem:[%s398 + $0x194] sm:$0x1]
    %v594 = vsel %vm499, 0, %v593
    %595 = vst [vmem:[%s398 + $0x194] sm:$0x1] %v594
    %v596 = vpack.c.bf16 %v322, %v321
    %v597 = vpack.c.bf16 %v324, %v323
    %v598 = vpack.c.bf16 %v326, %v325
    %v599 = vpack.c.bf16 %v328, %v327
    %v600 = vpack.c.bf16 %v330, %v329
    %v601 = vpack.c.bf16 %v332, %v331
    %v602 = vpack.c.bf16 %v334, %v333
    %v603 = vpack.c.bf16 %v336, %v335
    %v604 = vpack.c.bf16 %v338, %v337
    %v605 = vpack.c.bf16 %v340, %v339
    %v606 = vpack.c.bf16 %v342, %v341
    %v607 = vpack.c.bf16 %v344, %v343
    %v608 = vpack.c.bf16 %v346, %v345
    %v609 = vpack.c.bf16 %v348, %v347
    %v610 = vpack.c.bf16 %v350, %v349
    %v611 = vpack.c.bf16 %v352, %v351
    %v612 = vpack.c.bf16 %v354, %v353
    %v613 = vpack.c.bf16 %v356, %v355
    %v614 = vpack.c.bf16 %v358, %v357
    %v615 = vpack.c.bf16 %v360, %v359
    %v616 = vpack.c.bf16 %v362, %v361
    %v617 = vpack.c.bf16 %v364, %v363
    %v618 = vpack.c.bf16 %v366, %v365
    %v619 = vpack.c.bf16 %v368, %v367
    %v620 = vpack.c.bf16 %v370, %v369
    %v621 = vpack.c.bf16 %v372, %v371
    %v622 = vpack.c.bf16 %v374, %v373
    %v623 = vpack.c.bf16 %v376, %v375
    %v624 = vpack.c.bf16 %v378, %v377
    %v625 = vpack.c.bf16 %v380, %v379
    %v626 = vpack.c.bf16 %v382, %v381
    %v627 = vpack.c.bf16 %v384, %v383
    %v660 = vunpack.c.l.b16 %v596
    %v661 = vunpack.c.h.b16 %v596
    %v662 = vunpack.c.l.b16 %v597
    %v663 = vunpack.c.h.b16 %v597
    %v664 = vunpack.c.l.b16 %v598
    %v665 = vunpack.c.h.b16 %v598
    %v666 = vunpack.c.l.b16 %v599
    %v667 = vunpack.c.h.b16 %v599
    %v668 = vunpack.c.l.b16 %v600
    %v669 = vunpack.c.h.b16 %v600
    %v670 = vunpack.c.l.b16 %v601
    %v671 = vunpack.c.h.b16 %v601
    %v672 = vunpack.c.l.b16 %v602
    %v673 = vunpack.c.h.b16 %v602
    %v674 = vunpack.c.l.b16 %v603
    %v675 = vunpack.c.h.b16 %v603
    %v676 = vunpack.c.l.b16 %v604
    %v677 = vunpack.c.h.b16 %v604
    %v678 = vunpack.c.l.b16 %v605
    %v679 = vunpack.c.h.b16 %v605
    %v680 = vunpack.c.l.b16 %v606
    %v681 = vunpack.c.h.b16 %v606
    %v682 = vunpack.c.l.b16 %v607
    %v683 = vunpack.c.h.b16 %v607
    %v684 = vunpack.c.l.b16 %v608
    %v685 = vunpack.c.h.b16 %v608
    %v686 = vunpack.c.l.b16 %v609
    %v687 = vunpack.c.h.b16 %v609
    %v688 = vunpack.c.l.b16 %v610
    %v689 = vunpack.c.h.b16 %v610
    %v690 = vunpack.c.l.b16 %v611
    %v691 = vunpack.c.h.b16 %v611
    %v692 = vunpack.c.l.b16 %v612
    %v693 = vunpack.c.h.b16 %v612
    %v694 = vunpack.c.l.b16 %v613
    %v695 = vunpack.c.h.b16 %v613
    %v696 = vunpack.c.l.b16 %v614
    %v697 = vunpack.c.h.b16 %v614
    %v698 = vunpack.c.l.b16 %v615
    %v699 = vunpack.c.h.b16 %v615
    %v700 = vunpack.c.l.b16 %v616
    %v701 = vunpack.c.h.b16 %v616
    %v702 = vunpack.c.l.b16 %v617
    %v703 = vunpack.c.h.b16 %v617
    %v704 = vunpack.c.l.b16 %v618
    %v705 = vunpack.c.h.b16 %v618
    %v706 = vunpack.c.l.b16 %v619
    %v707 = vunpack.c.h.b16 %v619
    %v708 = vunpack.c.l.b16 %v620
    %v709 = vunpack.c.h.b16 %v620
    %v710 = vunpack.c.l.b16 %v621
    %v711 = vunpack.c.h.b16 %v621
    %v712 = vunpack.c.l.b16 %v622
    %v713 = vunpack.c.h.b16 %v622
    %v714 = vunpack.c.l.b16 %v623
    %v715 = vunpack.c.h.b16 %v623
    %v716 = vunpack.c.l.b16 %v624
    %v717 = vunpack.c.h.b16 %v624
    %v718 = vunpack.c.l.b16 %v625
    %v719 = vunpack.c.h.b16 %v625
    %v720 = vunpack.c.l.b16 %v626
    %v721 = vunpack.c.h.b16 %v626
    %v722 = vunpack.c.l.b16 %v627
    %v723 = vunpack.c.h.b16 %v627
    %v724 = vpack.c.b16 %v660, %v660
    %v725 = vpack.c.b16 %v661, %v661
    %v726 = vpack.c.b16 %v662, %v662
    %v727 = vpack.c.b16 %v663, %v663
    %v728 = vpack.c.b16 %v664, %v664
    %v729 = vpack.c.b16 %v665, %v665
    %v730 = vpack.c.b16 %v666, %v666
    %v731 = vpack.c.b16 %v667, %v667
    %v732 = vpack.c.b16 %v668, %v668
    %v733 = vpack.c.b16 %v669, %v669
    %v734 = vpack.c.b16 %v670, %v670
    %v735 = vpack.c.b16 %v671, %v671
    %v736 = vpack.c.b16 %v672, %v672
    %v737 = vpack.c.b16 %v673, %v673
    %v738 = vpack.c.b16 %v674, %v674
    %v739 = vpack.c.b16 %v675, %v675
    %v740 = vpack.c.b16 %v676, %v676
    %v741 = vpack.c.b16 %v677, %v677
    %v742 = vpack.c.b16 %v678, %v678
    %v743 = vpack.c.b16 %v679, %v679
    %v744 = vpack.c.b16 %v680, %v680
    %v745 = vpack.c.b16 %v681, %v681
    %v746 = vpack.c.b16 %v682, %v682
    %v747 = vpack.c.b16 %v683, %v683
    %v748 = vpack.c.b16 %v684, %v684
    %v749 = vpack.c.b16 %v685, %v685
    %v750 = vpack.c.b16 %v686, %v686
    %v751 = vpack.c.b16 %v687, %v687
    %v752 = vpack.c.b16 %v688, %v688
    %v753 = vpack.c.b16 %v689, %v689
    %v754 = vpack.c.b16 %v690, %v690
    %v755 = vpack.c.b16 %v691, %v691
    %v756 = vpack.c.b16 %v692, %v692
    %v757 = vpack.c.b16 %v693, %v693
    %v758 = vpack.c.b16 %v694, %v694
    %v759 = vpack.c.b16 %v695, %v695
    %v760 = vpack.c.b16 %v696, %v696
    %v761 = vpack.c.b16 %v697, %v697
    %v762 = vpack.c.b16 %v698, %v698
    %v763 = vpack.c.b16 %v699, %v699
    %v764 = vpack.c.b16 %v700, %v700
    %v765 = vpack.c.b16 %v701, %v701
    %v766 = vpack.c.b16 %v702, %v702
    %v767 = vpack.c.b16 %v703, %v703
    %v768 = vpack.c.b16 %v704, %v704
    %v769 = vpack.c.b16 %v705, %v705
    %v770 = vpack.c.b16 %v706, %v706
    %v771 = vpack.c.b16 %v707, %v707
    %v772 = vpack.c.b16 %v708, %v708
    %v773 = vpack.c.b16 %v709, %v709
    %v774 = vpack.c.b16 %v710, %v710
    %v775 = vpack.c.b16 %v711, %v711
    %v776 = vpack.c.b16 %v712, %v712
    %v777 = vpack.c.b16 %v713, %v713
    %v778 = vpack.c.b16 %v714, %v714
    %v779 = vpack.c.b16 %v715, %v715
    %v780 = vpack.c.b16 %v716, %v716
    %v781 = vpack.c.b16 %v717, %v717
    %v782 = vpack.c.b16 %v718, %v718
    %v783 = vpack.c.b16 %v719, %v719
    %v784 = vpack.c.b16 %v720, %v720
    %v785 = vpack.c.b16 %v721, %v721
    %v786 = vpack.c.b16 %v722, %v722
    %v787 = vpack.c.b16 %v723, %v723
    %vm788 = vsmask.f32 4368
    %vm789 = vmor %vm400, %vm788
    %v791 = vshrl.u32 %v724, 16
    %v793 = vrot.slane %v791, 7
    %v794 = vshll.u32 %v724, 16
    %v796 = vor.u32 %v793, %v794
    %v797 = vrot.slane %v793, 4
    %v799 = vshrl.u32 %v725, 16
    %v801 = vrot.slane %v799, 7
    %v802 = vshll.u32 %v725, 16
    %v804 = vor.u32 %v801, %v802
    %v805 = vsel %vm789, %v797, %v804
    %v806 = vrot.slane %v801, 4
    %v808 = vshrl.u32 %v726, 16
    %v810 = vrot.slane %v808, 7
    %v811 = vshll.u32 %v726, 16
    %v813 = vor.u32 %v810, %v811
    %v814 = vrot.slane %v810, 4
    %v816 = vshrl.u32 %v727, 16
    %v818 = vrot.slane %v816, 7
    %v819 = vshll.u32 %v727, 16
    %v821 = vor.u32 %v818, %v819
    %v822 = vsel %vm789, %v814, %v821
    %v823 = vrot.slane %v818, 4
    %v825 = vshrl.u32 %v728, 16
    %v827 = vrot.slane %v825, 7
    %v828 = vshll.u32 %v728, 16
    %v830 = vor.u32 %v827, %v828
    %v831 = vrot.slane %v827, 4
    %v833 = vshrl.u32 %v729, 16
    %v835 = vrot.slane %v833, 7
    %v836 = vshll.u32 %v729, 16
    %v838 = vor.u32 %v835, %v836
    %v839 = vsel %vm789, %v831, %v838
    %v840 = vrot.slane %v835, 4
    %v842 = vshrl.u32 %v730, 16
    %v844 = vrot.slane %v842, 7
    %v845 = vshll.u32 %v730, 16
    %v847 = vor.u32 %v844, %v845
    %v848 = vrot.slane %v844, 4
    %v850 = vshrl.u32 %v731, 16
    %v852 = vrot.slane %v850, 7
    %v853 = vshll.u32 %v731, 16
    %v855 = vor.u32 %v852, %v853
    %v856 = vsel %vm789, %v848, %v855
    %v857 = vrot.slane %v852, 4
    %v859 = vshrl.u32 %v732, 16
    %v861 = vrot.slane %v859, 7
    %v862 = vshll.u32 %v732, 16
    %v864 = vor.u32 %v861, %v862
    %v865 = vrot.slane %v861, 4
    %v867 = vshrl.u32 %v733, 16
    %v869 = vrot.slane %v867, 7
    %v870 = vshll.u32 %v733, 16
    %v872 = vor.u32 %v869, %v870
    %v873 = vsel %vm789, %v865, %v872
    %v874 = vrot.slane %v869, 4
    %v876 = vshrl.u32 %v734, 16
    %v878 = vrot.slane %v876, 7
    %v879 = vshll.u32 %v734, 16
    %v881 = vor.u32 %v878, %v879
    %v882 = vrot.slane %v878, 4
    %v884 = vshrl.u32 %v735, 16
    %v886 = vrot.slane %v884, 7
    %v887 = vshll.u32 %v735, 16
    %v889 = vor.u32 %v886, %v887
    %v890 = vsel %vm789, %v882, %v889
    %v891 = vrot.slane %v886, 4
    %v893 = vshrl.u32 %v736, 16
    %v895 = vrot.slane %v893, 7
    %v896 = vshll.u32 %v736, 16
    %v898 = vor.u32 %v895, %v896
    %v899 = vrot.slane %v895, 4
    %v901 = vshrl.u32 %v737, 16
    %v903 = vrot.slane %v901, 7
    %v904 = vshll.u32 %v737, 16
    %v906 = vor.u32 %v903, %v904
    %v907 = vsel %vm789, %v899, %v906
    %v908 = vrot.slane %v903, 4
    %v910 = vshrl.u32 %v738, 16
    %v912 = vrot.slane %v910, 7
    %v913 = vshll.u32 %v738, 16
    %v915 = vor.u32 %v912, %v913
    %v916 = vrot.slane %v912, 4
    %v918 = vshrl.u32 %v739, 16
    %v920 = vrot.slane %v918, 7
    %v921 = vshll.u32 %v739, 16
    %v923 = vor.u32 %v920, %v921
    %v924 = vsel %vm789, %v916, %v923
    %v925 = vrot.slane %v920, 4
    %v927 = vshrl.u32 %v740, 16
    %v929 = vrot.slane %v927, 7
    %v930 = vshll.u32 %v740, 16
    %v932 = vor.u32 %v929, %v930
    %v933 = vrot.slane %v929, 4
    %v935 = vshrl.u32 %v741, 16
    %v937 = vrot.slane %v935, 7
    %v938 = vshll.u32 %v741, 16
    %v940 = vor.u32 %v937, %v938
    %v941 = vsel %vm789, %v933, %v940
    %v942 = vrot.slane %v937, 4
    %v944 = vshrl.u32 %v742, 16
    %v946 = vrot.slane %v944, 7
    %v947 = vshll.u32 %v742, 16
    %v949 = vor.u32 %v946, %v947
    %v950 = vrot.slane %v946, 4
    %v952 = vshrl.u32 %v743, 16
    %v954 = vrot.slane %v952, 7
    %v955 = vshll.u32 %v743, 16
    %v957 = vor.u32 %v954, %v955
    %v958 = vsel %vm789, %v950, %v957
    %v959 = vrot.slane %v954, 4
    %v961 = vshrl.u32 %v744, 16
    %v963 = vrot.slane %v961, 7
    %v964 = vshll.u32 %v744, 16
    %v966 = vor.u32 %v963, %v964
    %v967 = vrot.slane %v963, 4
    %v969 = vshrl.u32 %v745, 16
    %v971 = vrot.slane %v969, 7
    %v972 = vshll.u32 %v745, 16
    %v974 = vor.u32 %v971, %v972
    %v975 = vsel %vm789, %v967, %v974
    %v976 = vrot.slane %v971, 4
    %v978 = vshrl.u32 %v746, 16
    %v980 = vrot.slane %v978, 7
    %v981 = vshll.u32 %v746, 16
    %v983 = vor.u32 %v980, %v981
    %v984 = vrot.slane %v980, 4
    %v986 = vshrl.u32 %v747, 16
    %v988 = vrot.slane %v986, 7
    %v989 = vshll.u32 %v747, 16
    %v991 = vor.u32 %v988, %v989
    %v992 = vsel %vm789, %v984, %v991
    %v993 = vrot.slane %v988, 4
    %v995 = vshrl.u32 %v748, 16
    %v997 = vrot.slane %v995, 7
    %v998 = vshll.u32 %v748, 16
    %v1000 = vor.u32 %v997, %v998
    %v1001 = vrot.slane %v997, 4
    %v1003 = vshrl.u32 %v749, 16
    %v1005 = vrot.slane %v1003, 7
    %v1006 = vshll.u32 %v749, 16
    %v1008 = vor.u32 %v1005, %v1006
    %v1009 = vsel %vm789, %v1001, %v1008
    %v1010 = vrot.slane %v1005, 4
    %v1012 = vshrl.u32 %v750, 16
    %v1014 = vrot.slane %v1012, 7
    %v1015 = vshll.u32 %v750, 16
    %v1017 = vor.u32 %v1014, %v1015
    %v1018 = vrot.slane %v1014, 4
    %v1020 = vshrl.u32 %v751, 16
    %v1022 = vrot.slane %v1020, 7
    %v1023 = vshll.u32 %v751, 16
    %v1025 = vor.u32 %v1022, %v1023
    %v1026 = vsel %vm789, %v1018, %v1025
    %v1027 = vrot.slane %v1022, 4
    %v1029 = vshrl.u32 %v752, 16
    %v1031 = vrot.slane %v1029, 7
    %v1032 = vshll.u32 %v752, 16
    %v1034 = vor.u32 %v1031, %v1032
    %v1035 = vrot.slane %v1031, 4
    %v1037 = vshrl.u32 %v753, 16
    %v1039 = vrot.slane %v1037, 7
    %v1040 = vshll.u32 %v753, 16
    %v1042 = vor.u32 %v1039, %v1040
    %v1043 = vsel %vm789, %v1035, %v1042
    %v1044 = vrot.slane %v1039, 4
    %v1046 = vshrl.u32 %v754, 16
    %v1048 = vrot.slane %v1046, 7
    %v1049 = vshll.u32 %v754, 16
    %v1051 = vor.u32 %v1048, %v1049
    %v1052 = vrot.slane %v1048, 4
    %v1054 = vshrl.u32 %v755, 16
    %v1056 = vrot.slane %v1054, 7
    %v1057 = vshll.u32 %v755, 16
    %v1059 = vor.u32 %v1056, %v1057
    %v1060 = vsel %vm789, %v1052, %v1059
    %v1061 = vrot.slane %v1056, 4
    %v1063 = vshrl.u32 %v756, 16
    %v1065 = vrot.slane %v1063, 7
    %v1066 = vshll.u32 %v756, 16
    %v1068 = vor.u32 %v1065, %v1066
    %v1069 = vrot.slane %v1065, 4
    %v1071 = vshrl.u32 %v757, 16
    %v1073 = vrot.slane %v1071, 7
    %v1074 = vshll.u32 %v757, 16
    %v1076 = vor.u32 %v1073, %v1074
    %v1077 = vsel %vm789, %v1069, %v1076
    %v1078 = vrot.slane %v1073, 4
    %v1080 = vshrl.u32 %v758, 16
    %v1082 = vrot.slane %v1080, 7
    %v1083 = vshll.u32 %v758, 16
    %v1085 = vor.u32 %v1082, %v1083
    %v1086 = vrot.slane %v1082, 4
    %v1088 = vshrl.u32 %v759, 16
    %v1090 = vrot.slane %v1088, 7
    %v1091 = vshll.u32 %v759, 16
    %v1093 = vor.u32 %v1090, %v1091
    %v1094 = vsel %vm789, %v1086, %v1093
    %v1095 = vrot.slane %v1090, 4
    %v1097 = vshrl.u32 %v760, 16
    %v1099 = vrot.slane %v1097, 7
    %v1100 = vshll.u32 %v760, 16
    %v1102 = vor.u32 %v1099, %v1100
    %v1103 = vrot.slane %v1099, 4
    %v1105 = vshrl.u32 %v761, 16
    %v1107 = vrot.slane %v1105, 7
    %v1108 = vshll.u32 %v761, 16
    %v1110 = vor.u32 %v1107, %v1108
    %v1111 = vsel %vm789, %v1103, %v1110
    %v1112 = vrot.slane %v1107, 4
    %v1114 = vshrl.u32 %v762, 16
    %v1116 = vrot.slane %v1114, 7
    %v1117 = vshll.u32 %v762, 16
    %v1119 = vor.u32 %v1116, %v1117
    %v1120 = vrot.slane %v1116, 4
    %v1122 = vshrl.u32 %v763, 16
    %v1124 = vrot.slane %v1122, 7
    %v1125 = vshll.u32 %v763, 16
    %v1127 = vor.u32 %v1124, %v1125
    %v1128 = vsel %vm789, %v1120, %v1127
    %v1129 = vrot.slane %v1124, 4
    %v1131 = vshrl.u32 %v764, 16
    %v1133 = vrot.slane %v1131, 7
    %v1134 = vshll.u32 %v764, 16
    %v1136 = vor.u32 %v1133, %v1134
    %v1137 = vrot.slane %v1133, 4
    %v1139 = vshrl.u32 %v765, 16
    %v1141 = vrot.slane %v1139, 7
    %v1142 = vshll.u32 %v765, 16
    %v1144 = vor.u32 %v1141, %v1142
    %v1145 = vsel %vm789, %v1137, %v1144
    %v1146 = vrot.slane %v1141, 4
    %v1148 = vshrl.u32 %v766, 16
    %v1150 = vrot.slane %v1148, 7
    %v1151 = vshll.u32 %v766, 16
    %v1153 = vor.u32 %v1150, %v1151
    %v1154 = vrot.slane %v1150, 4
    %v1156 = vshrl.u32 %v767, 16
    %v1158 = vrot.slane %v1156, 7
    %v1159 = vshll.u32 %v767, 16
    %v1161 = vor.u32 %v1158, %v1159
    %v1162 = vsel %vm789, %v1154, %v1161
    %v1163 = vrot.slane %v1158, 4
    %v1165 = vshrl.u32 %v768, 16
    %v1167 = vrot.slane %v1165, 7
    %v1168 = vshll.u32 %v768, 16
    %v1170 = vor.u32 %v1167, %v1168
    %v1171 = vrot.slane %v1167, 4
    %v1173 = vshrl.u32 %v769, 16
    %v1175 = vrot.slane %v1173, 7
    %v1176 = vshll.u32 %v769, 16
    %v1178 = vor.u32 %v1175, %v1176
    %v1179 = vsel %vm789, %v1171, %v1178
    %v1180 = vrot.slane %v1175, 4
    %v1182 = vshrl.u32 %v770, 16
    %v1184 = vrot.slane %v1182, 7
    %v1185 = vshll.u32 %v770, 16
    %v1187 = vor.u32 %v1184, %v1185
    %v1188 = vrot.slane %v1184, 4
    %v1190 = vshrl.u32 %v771, 16
    %v1192 = vrot.slane %v1190, 7
    %v1193 = vshll.u32 %v771, 16
    %v1195 = vor.u32 %v1192, %v1193
    %v1196 = vsel %vm789, %v1188, %v1195
    %v1197 = vrot.slane %v1192, 4
    %v1199 = vshrl.u32 %v772, 16
    %v1201 = vrot.slane %v1199, 7
    %v1202 = vshll.u32 %v772, 16
    %v1204 = vor.u32 %v1201, %v1202
    %v1205 = vrot.slane %v1201, 4
    %v1207 = vshrl.u32 %v773, 16
    %v1209 = vrot.slane %v1207, 7
    %v1210 = vshll.u32 %v773, 16
    %v1212 = vor.u32 %v1209, %v1210
    %v1213 = vsel %vm789, %v1205, %v1212
    %v1214 = vrot.slane %v1209, 4
    %v1216 = vshrl.u32 %v774, 16
    %v1218 = vrot.slane %v1216, 7
    %v1219 = vshll.u32 %v774, 16
    %v1221 = vor.u32 %v1218, %v1219
    %v1222 = vrot.slane %v1218, 4
    %v1224 = vshrl.u32 %v775, 16
    %v1226 = vrot.slane %v1224, 7
    %v1227 = vshll.u32 %v775, 16
    %v1229 = vor.u32 %v1226, %v1227
    %v1230 = vsel %vm789, %v1222, %v1229
    %v1231 = vrot.slane %v1226, 4
    %v1233 = vshrl.u32 %v776, 16
    %v1235 = vrot.slane %v1233, 7
    %v1236 = vshll.u32 %v776, 16
    %v1238 = vor.u32 %v1235, %v1236
    %v1239 = vrot.slane %v1235, 4
    %v1241 = vshrl.u32 %v777, 16
    %v1243 = vrot.slane %v1241, 7
    %v1244 = vshll.u32 %v777, 16
    %v1246 = vor.u32 %v1243, %v1244
    %v1247 = vsel %vm789, %v1239, %v1246
    %v1248 = vrot.slane %v1243, 4
    %v1250 = vshrl.u32 %v778, 16
    %v1252 = vrot.slane %v1250, 7
    %v1253 = vshll.u32 %v778, 16
    %v1255 = vor.u32 %v1252, %v1253
    %v1256 = vrot.slane %v1252, 4
    %v1258 = vshrl.u32 %v779, 16
    %v1260 = vrot.slane %v1258, 7
    %v1261 = vshll.u32 %v779, 16
    %v1263 = vor.u32 %v1260, %v1261
    %v1264 = vsel %vm789, %v1256, %v1263
    %v1265 = vrot.slane %v1260, 4
    %v1267 = vshrl.u32 %v780, 16
    %v1269 = vrot.slane %v1267, 7
    %v1270 = vshll.u32 %v780, 16
    %v1272 = vor.u32 %v1269, %v1270
    %v1273 = vrot.slane %v1269, 4
    %v1275 = vshrl.u32 %v781, 16
    %v1277 = vrot.slane %v1275, 7
    %v1278 = vshll.u32 %v781, 16
    %v1280 = vor.u32 %v1277, %v1278
    %v1281 = vsel %vm789, %v1273, %v1280
    %v1282 = vrot.slane %v1277, 4
    %v1284 = vshrl.u32 %v782, 16
    %v1286 = vrot.slane %v1284, 7
    %v1287 = vshll.u32 %v782, 16
    %v1289 = vor.u32 %v1286, %v1287
    %v1290 = vrot.slane %v1286, 4
    %v1292 = vshrl.u32 %v783, 16
    %v1294 = vrot.slane %v1292, 7
    %v1295 = vshll.u32 %v783, 16
    %v1297 = vor.u32 %v1294, %v1295
    %v1298 = vsel %vm789, %v1290, %v1297
    %v1299 = vrot.slane %v1294, 4
    %v1301 = vshrl.u32 %v784, 16
    %v1303 = vrot.slane %v1301, 7
    %v1304 = vshll.u32 %v784, 16
    %v1306 = vor.u32 %v1303, %v1304
    %v1307 = vrot.slane %v1303, 4
    %v1309 = vshrl.u32 %v785, 16
    %v1311 = vrot.slane %v1309, 7
    %v1312 = vshll.u32 %v785, 16
    %v1314 = vor.u32 %v1311, %v1312
    %v1315 = vsel %vm789, %v1307, %v1314
    %v1316 = vrot.slane %v1311, 4
    %v1318 = vshrl.u32 %v786, 16
    %v1320 = vrot.slane %v1318, 7
    %v1321 = vshll.u32 %v786, 16
    %v1323 = vor.u32 %v1320, %v1321
    %v1324 = vrot.slane %v1320, 4
    %v1326 = vshrl.u32 %v787, 16
    %v1328 = vrot.slane %v1326, 7
    %v1329 = vshll.u32 %v787, 16
    %v1331 = vor.u32 %v1328, %v1329
    %v1332 = vsel %vm789, %v1324, %v1331
    %v1333 = vrot.slane %v1328, 4
    %vm1430 = vcmask 1043456
    %vm1431 = vmand %vm1430, %vm498
    %v1432 = vld [vmem:[%s398] sm:$0xf]
    %v1433 = vsel %vm1431, %v796, %v1432
    %1434 = vst [vmem:[%s398] sm:$0xf] %v1433
    %1435 = vst [vmem:[%s398 + $0x4] sm:$0xf] %v805
    %v1436 = vld [vmem:[%s398 + $0x8] sm:$0x1]
    %v1437 = vsel %vm401, %v806, %v1436
    %1438 = vst [vmem:[%s398 + $0x8] sm:$0x1] %v1437
    %v1439 = vld [vmem:[%s398 + $0xc] sm:$0xf]
    %v1440 = vsel %vm1431, %v813, %v1439
    %1441 = vst [vmem:[%s398 + $0xc] sm:$0xf] %v1440
    %1442 = vst [vmem:[%s398 + $0x10] sm:$0xf] %v822
    %v1443 = vld [vmem:[%s398 + $0x14] sm:$0x1]
    %v1444 = vsel %vm401, %v823, %v1443
    %1445 = vst [vmem:[%s398 + $0x14] sm:$0x1] %v1444
    %v1446 = vld [vmem:[%s398 + $0x18] sm:$0xf]
    %v1447 = vsel %vm1431, %v830, %v1446
    %1448 = vst [vmem:[%s398 + $0x18] sm:$0xf] %v1447
    %1449 = vst [vmem:[%s398 + $0x1c] sm:$0xf] %v839
    %v1450 = vld [vmem:[%s398 + $0x20] sm:$0x1]
    %v1451 = vsel %vm401, %v840, %v1450
    %1452 = vst [vmem:[%s398 + $0x20] sm:$0x1] %v1451
    %v1453 = vld [vmem:[%s398 + $0x24] sm:$0xf]
    %v1454 = vsel %vm1431, %v847, %v1453
    %1455 = vst [vmem:[%s398 + $0x24] sm:$0xf] %v1454
    %1456 = vst [vmem:[%s398 + $0x28] sm:$0xf] %v856
    %v1457 = vld [vmem:[%s398 + $0x2c] sm:$0x1]
    %v1458 = vsel %vm401, %v857, %v1457
    %1459 = vst [vmem:[%s398 + $0x2c] sm:$0x1] %v1458
    %v1460 = vld [vmem:[%s398 + $0x30] sm:$0xf]
    %v1461 = vsel %vm1431, %v864, %v1460
    %1462 = vst [vmem:[%s398 + $0x30] sm:$0xf] %v1461
    %1463 = vst [vmem:[%s398 + $0x34] sm:$0xf] %v873
    %v1464 = vld [vmem:[%s398 + $0x38] sm:$0x1]
    %v1465 = vsel %vm401, %v874, %v1464
    %1466 = vst [vmem:[%s398 + $0x38] sm:$0x1] %v1465
    %v1467 = vld [vmem:[%s398 + $0x3c] sm:$0xf]
    %v1468 = vsel %vm1431, %v881, %v1467
    %1469 = vst [vmem:[%s398 + $0x3c] sm:$0xf] %v1468
    %1470 = vst [vmem:[%s398 + $0x40] sm:$0xf] %v890
    %v1471 = vld [vmem:[%s398 + $0x44] sm:$0x1]
    %v1472 = vsel %vm401, %v891, %v1471
    %1473 = vst [vmem:[%s398 + $0x44] sm:$0x1] %v1472
    %v1474 = vld [vmem:[%s398 + $0x48] sm:$0xf]
    %v1475 = vsel %vm1431, %v898, %v1474
    %1476 = vst [vmem:[%s398 + $0x48] sm:$0xf] %v1475
    %1477 = vst [vmem:[%s398 + $0x4c] sm:$0xf] %v907
    %v1478 = vld [vmem:[%s398 + $0x50] sm:$0x1]
    %v1479 = vsel %vm401, %v908, %v1478
    %1480 = vst [vmem:[%s398 + $0x50] sm:$0x1] %v1479
    %v1481 = vld [vmem:[%s398 + $0x54] sm:$0xf]
    %v1482 = vsel %vm1431, %v915, %v1481
    %1483 = vst [vmem:[%s398 + $0x54] sm:$0xf] %v1482
    %1484 = vst [vmem:[%s398 + $0x58] sm:$0xf] %v924
    %v1485 = vld [vmem:[%s398 + $0x5c] sm:$0x1]
    %v1486 = vsel %vm401, %v925, %v1485
    %1487 = vst [vmem:[%s398 + $0x5c] sm:$0x1] %v1486
    %v1488 = vld [vmem:[%s398 + $0x60] sm:$0xf]
    %v1489 = vsel %vm1431, %v932, %v1488
    %1490 = vst [vmem:[%s398 + $0x60] sm:$0xf] %v1489
    %1491 = vst [vmem:[%s398 + $0x64] sm:$0xf] %v941
    %v1492 = vld [vmem:[%s398 + $0x68] sm:$0x1]
    %v1493 = vsel %vm401, %v942, %v1492
    %1494 = vst [vmem:[%s398 + $0x68] sm:$0x1] %v1493
    %v1495 = vld [vmem:[%s398 + $0x6c] sm:$0xf]
    %v1496 = vsel %vm1431, %v949, %v1495
    %1497 = vst [vmem:[%s398 + $0x6c] sm:$0xf] %v1496
    %1498 = vst [vmem:[%s398 + $0x70] sm:$0xf] %v958
    %v1499 = vld [vmem:[%s398 + $0x74] sm:$0x1]
    %v1500 = vsel %vm401, %v959, %v1499
    %1501 = vst [vmem:[%s398 + $0x74] sm:$0x1] %v1500
    %v1502 = vld [vmem:[%s398 + $0x78] sm:$0xf]
    %v1503 = vsel %vm1431, %v966, %v1502
    %1504 = vst [vmem:[%s398 + $0x78] sm:$0xf] %v1503
    %1505 = vst [vmem:[%s398 + $0x7c] sm:$0xf] %v975
    %v1506 = vld [vmem:[%s398 + $0x80] sm:$0x1]
    %v1507 = vsel %vm401, %v976, %v1506
    %1508 = vst [vmem:[%s398 + $0x80] sm:$0x1] %v1507
    %v1509 = vld [vmem:[%s398 + $0x84] sm:$0xf]
    %v1510 = vsel %vm1431, %v983, %v1509
    %1511 = vst [vmem:[%s398 + $0x84] sm:$0xf] %v1510
    %1512 = vst [vmem:[%s398 + $0x88] sm:$0xf] %v992
    %v1513 = vld [vmem:[%s398 + $0x8c] sm:$0x1]
    %v1514 = vsel %vm401, %v993, %v1513
    %1515 = vst [vmem:[%s398 + $0x8c] sm:$0x1] %v1514
    %v1516 = vld [vmem:[%s398 + $0x90] sm:$0xf]
    %v1517 = vsel %vm1431, %v1000, %v1516
    %1518 = vst [vmem:[%s398 + $0x90] sm:$0xf] %v1517
    %1519 = vst [vmem:[%s398 + $0x94] sm:$0xf] %v1009
    %v1520 = vld [vmem:[%s398 + $0x98] sm:$0x1]
    %v1521 = vsel %vm401, %v1010, %v1520
    %1522 = vst [vmem:[%s398 + $0x98] sm:$0x1] %v1521
    %v1523 = vld [vmem:[%s398 + $0x9c] sm:$0xf]
    %v1524 = vsel %vm1431, %v1017, %v1523
    %1525 = vst [vmem:[%s398 + $0x9c] sm:$0xf] %v1524
    %1526 = vst [vmem:[%s398 + $0xa0] sm:$0xf] %v1026
    %v1527 = vld [vmem:[%s398 + $0xa4] sm:$0x1]
    %v1528 = vsel %vm401, %v1027, %v1527
    %1529 = vst [vmem:[%s398 + $0xa4] sm:$0x1] %v1528
    %v1530 = vld [vmem:[%s398 + $0xa8] sm:$0xf]
    %v1531 = vsel %vm1431, %v1034, %v1530
    %1532 = vst [vmem:[%s398 + $0xa8] sm:$0xf] %v1531
    %1533 = vst [vmem:[%s398 + $0xac] sm:$0xf] %v1043
    %v1534 = vld [vmem:[%s398 + $0xb0] sm:$0x1]
    %v1535 = vsel %vm401, %v1044, %v1534
    %1536 = vst [vmem:[%s398 + $0xb0] sm:$0x1] %v1535
    %v1537 = vld [vmem:[%s398 + $0xb4] sm:$0xf]
    %v1538 = vsel %vm1431, %v1051, %v1537
    %1539 = vst [vmem:[%s398 + $0xb4] sm:$0xf] %v1538
    %1540 = vst [vmem:[%s398 + $0xb8] sm:$0xf] %v1060
    %v1541 = vld [vmem:[%s398 + $0xbc] sm:$0x1]
    %v1542 = vsel %vm401, %v1061, %v1541
    %1543 = vst [vmem:[%s398 + $0xbc] sm:$0x1] %v1542
    %v1544 = vld [vmem:[%s398 + $0xd8] sm:$0xf]
    %v1545 = vsel %vm1431, %v1068, %v1544
    %1546 = vst [vmem:[%s398 + $0xd8] sm:$0xf] %v1545
    %1547 = vst [vmem:[%s398 + $0xdc] sm:$0xf] %v1077
    %v1548 = vld [vmem:[%s398 + $0xe0] sm:$0x1]
    %v1549 = vsel %vm401, %v1078, %v1548
    %1550 = vst [vmem:[%s398 + $0xe0] sm:$0x1] %v1549
    %v1551 = vld [vmem:[%s398 + $0xe4] sm:$0xf]
    %v1552 = vsel %vm1431, %v1085, %v1551
    %1553 = vst [vmem:[%s398 + $0xe4] sm:$0xf] %v1552
    %1554 = vst [vmem:[%s398 + $0xe8] sm:$0xf] %v1094
    %v1555 = vld [vmem:[%s398 + $0xec] sm:$0x1]
    %v1556 = vsel %vm401, %v1095, %v1555
    %1557 = vst [vmem:[%s398 + $0xec] sm:$0x1] %v1556
    %v1558 = vld [vmem:[%s398 + $0xf0] sm:$0xf]
    %v1559 = vsel %vm1431, %v1102, %v1558
    %1560 = vst [vmem:[%s398 + $0xf0] sm:$0xf] %v1559
    %1561 = vst [vmem:[%s398 + $0xf4] sm:$0xf] %v1111
    %v1562 = vld [vmem:[%s398 + $0xf8] sm:$0x1]
    %v1563 = vsel %vm401, %v1112, %v1562
    %1564 = vst [vmem:[%s398 + $0xf8] sm:$0x1] %v1563
    %v1565 = vld [vmem:[%s398 + $0xfc] sm:$0xf]
    %v1566 = vsel %vm1431, %v1119, %v1565
    %1567 = vst [vmem:[%s398 + $0xfc] sm:$0xf] %v1566
    %1568 = vst [vmem:[%s398 + $0x100] sm:$0xf] %v1128
    %v1569 = vld [vmem:[%s398 + $0x104] sm:$0x1]
    %v1570 = vsel %vm401, %v1129, %v1569
    %1571 = vst [vmem:[%s398 + $0x104] sm:$0x1] %v1570
    %v1572 = vld [vmem:[%s398 + $0x108] sm:$0xf]
    %v1573 = vsel %vm1431, %v1136, %v1572
    %1574 = vst [vmem:[%s398 + $0x108] sm:$0xf] %v1573
    %1575 = vst [vmem:[%s398 + $0x10c] sm:$0xf] %v1145
    %v1576 = vld [vmem:[%s398 + $0x110] sm:$0x1]
    %v1577 = vsel %vm401, %v1146, %v1576
    %1578 = vst [vmem:[%s398 + $0x110] sm:$0x1] %v1577
    %v1579 = vld [vmem:[%s398 + $0x114] sm:$0xf]
    %v1580 = vsel %vm1431, %v1153, %v1579
    %1581 = vst [vmem:[%s398 + $0x114] sm:$0xf] %v1580
    %1582 = vst [vmem:[%s398 + $0x118] sm:$0xf] %v1162
    %v1583 = vld [vmem:[%s398 + $0x11c] sm:$0x1]
    %v1584 = vsel %vm401, %v1163, %v1583
    %1585 = vst [vmem:[%s398 + $0x11c] sm:$0x1] %v1584
    %v1586 = vld [vmem:[%s398 + $0x120] sm:$0xf]
    %v1587 = vsel %vm1431, %v1170, %v1586
    %1588 = vst [vmem:[%s398 + $0x120] sm:$0xf] %v1587
    %1589 = vst [vmem:[%s398 + $0x124] sm:$0xf] %v1179
    %v1590 = vld [vmem:[%s398 + $0x128] sm:$0x1]
    %v1591 = vsel %vm401, %v1180, %v1590
    %1592 = vst [vmem:[%s398 + $0x128] sm:$0x1] %v1591
    %v1593 = vld [vmem:[%s398 + $0x12c] sm:$0xf]
    %v1594 = vsel %vm1431, %v1187, %v1593
    %1595 = vst [vmem:[%s398 + $0x12c] sm:$0xf] %v1594
    %1596 = vst [vmem:[%s398 + $0x130] sm:$0xf] %v1196
    %v1597 = vld [vmem:[%s398 + $0x134] sm:$0x1]
    %v1598 = vsel %vm401, %v1197, %v1597
    %1599 = vst [vmem:[%s398 + $0x134] sm:$0x1] %v1598
    %v1600 = vld [vmem:[%s398 + $0x138] sm:$0xf]
    %v1601 = vsel %vm1431, %v1204, %v1600
    %1602 = vst [vmem:[%s398 + $0x138] sm:$0xf] %v1601
    %1603 = vst [vmem:[%s398 + $0x13c] sm:$0xf] %v1213
    %v1604 = vld [vmem:[%s398 + $0x140] sm:$0x1]
    %v1605 = vsel %vm401, %v1214, %v1604
    %1606 = vst [vmem:[%s398 + $0x140] sm:$0x1] %v1605
    %v1607 = vld [vmem:[%s398 + $0x144] sm:$0xf]
    %v1608 = vsel %vm1431, %v1221, %v1607
    %1609 = vst [vmem:[%s398 + $0x144] sm:$0xf] %v1608
    %1610 = vst [vmem:[%s398 + $0x148] sm:$0xf] %v1230
    %v1611 = vld [vmem:[%s398 + $0x14c] sm:$0x1]
    %v1612 = vsel %vm401, %v1231, %v1611
    %1613 = vst [vmem:[%s398 + $0x14c] sm:$0x1] %v1612
    %v1614 = vld [vmem:[%s398 + $0x150] sm:$0xf]
    %v1615 = vsel %vm1431, %v1238, %v1614
    %1616 = vst [vmem:[%s398 + $0x150] sm:$0xf] %v1615
    %1617 = vst [vmem:[%s398 + $0x154] sm:$0xf] %v1247
    %v1618 = vld [vmem:[%s398 + $0x158] sm:$0x1]
    %v1619 = vsel %vm401, %v1248, %v1618
    %1620 = vst [vmem:[%s398 + $0x158] sm:$0x1] %v1619
    %v1621 = vld [vmem:[%s398 + $0x15c] sm:$0xf]
    %v1622 = vsel %vm1431, %v1255, %v1621
    %1623 = vst [vmem:[%s398 + $0x15c] sm:$0xf] %v1622
    %1624 = vst [vmem:[%s398 + $0x160] sm:$0xf] %v1264
    %v1625 = vld [vmem:[%s398 + $0x164] sm:$0x1]
    %v1626 = vsel %vm401, %v1265, %v1625
    %1627 = vst [vmem:[%s398 + $0x164] sm:$0x1] %v1626
    %v1628 = vld [vmem:[%s398 + $0x168] sm:$0xf]
    %v1629 = vsel %vm1431, %v1272, %v1628
    %1630 = vst [vmem:[%s398 + $0x168] sm:$0xf] %v1629
    %1631 = vst [vmem:[%s398 + $0x16c] sm:$0xf] %v1281
    %v1632 = vld [vmem:[%s398 + $0x170] sm:$0x1]
    %v1633 = vsel %vm401, %v1282, %v1632
    %1634 = vst [vmem:[%s398 + $0x170] sm:$0x1] %v1633
    %v1635 = vld [vmem:[%s398 + $0x174] sm:$0xf]
    %v1636 = vsel %vm1431, %v1289, %v1635
    %1637 = vst [vmem:[%s398 + $0x174] sm:$0xf] %v1636
    %1638 = vst [vmem:[%s398 + $0x178] sm:$0xf] %v1298
    %v1639 = vld [vmem:[%s398 + $0x17c] sm:$0x1]
    %v1640 = vsel %vm401, %v1299, %v1639
    %1641 = vst [vmem:[%s398 + $0x17c] sm:$0x1] %v1640
    %v1642 = vld [vmem:[%s398 + $0x180] sm:$0xf]
    %v1643 = vsel %vm1431, %v1306, %v1642
    %1644 = vst [vmem:[%s398 + $0x180] sm:$0xf] %v1643
    %1645 = vst [vmem:[%s398 + $0x184] sm:$0xf] %v1315
    %v1646 = vld [vmem:[%s398 + $0x188] sm:$0x1]
    %v1647 = vsel %vm401, %v1316, %v1646
    %1648 = vst [vmem:[%s398 + $0x188] sm:$0x1] %v1647
    %v1649 = vld [vmem:[%s398 + $0x18c] sm:$0xf]
    %v1650 = vsel %vm1431, %v1323, %v1649
    %1651 = vst [vmem:[%s398 + $0x18c] sm:$0xf] %v1650
    %1652 = vst [vmem:[%s398 + $0x190] sm:$0xf] %v1332
    %v1653 = vld [vmem:[%s398 + $0x194] sm:$0x1]
    %v1654 = vsel %vm401, %v1333, %v1653
    %1655 = vst [vmem:[%s398 + $0x194] sm:$0x1] %v1654
    %v1656 = vld [vmem:[#allocation2] sm:$0xf]
    %v1657 = vld [vmem:[#allocation2 + $0x4] sm:$0xf]
    %v1658 = vld [vmem:[#allocation2 + $0xc] sm:$0xf]
    %v1659 = vld [vmem:[#allocation2 + $0x10] sm:$0xf]
    %v1660 = vld [vmem:[#allocation2 + $0x18] sm:$0xf]
    %v1661 = vld [vmem:[#allocation2 + $0x1c] sm:$0xf]
    %v1662 = vld [vmem:[#allocation2 + $0x24] sm:$0xf]
    %v1663 = vld [vmem:[#allocation2 + $0x28] sm:$0xf]
    %v1664 = vld [vmem:[#allocation2 + $0x30] sm:$0xf]
    %v1665 = vld [vmem:[#allocation2 + $0x34] sm:$0xf]
    %v1666 = vld [vmem:[#allocation2 + $0x3c] sm:$0xf]
    %v1667 = vld [vmem:[#allocation2 + $0x40] sm:$0xf]
    %v1668 = vld [vmem:[#allocation2 + $0x48] sm:$0xf]
    %v1669 = vld [vmem:[#allocation2 + $0x4c] sm:$0xf]
    %v1670 = vld [vmem:[#allocation2 + $0x54] sm:$0xf]
    %v1671 = vld [vmem:[#allocation2 + $0x58] sm:$0xf]
    %v1672 = vld [vmem:[#allocation2 + $0x60] sm:$0xf]
    %v1673 = vld [vmem:[#allocation2 + $0x64] sm:$0xf]
    %v1674 = vld [vmem:[#allocation2 + $0x6c] sm:$0xf]
    %v1675 = vld [vmem:[#allocation2 + $0x70] sm:$0xf]
    %v1676 = vld [vmem:[#allocation2 + $0x78] sm:$0xf]
    %v1677 = vld [vmem:[#allocation2 + $0x7c] sm:$0xf]
    %v1678 = vld [vmem:[#allocation2 + $0x84] sm:$0xf]
    %v1679 = vld [vmem:[#allocation2 + $0x88] sm:$0xf]
    %v1680 = vld [vmem:[#allocation2 + $0x90] sm:$0xf]
    %v1681 = vld [vmem:[#allocation2 + $0x94] sm:$0xf]
    %v1682 = vld [vmem:[#allocation2 + $0x9c] sm:$0xf]
    %v1683 = vld [vmem:[#allocation2 + $0xa0] sm:$0xf]
    %v1684 = vld [vmem:[#allocation2 + $0xa8] sm:$0xf]
    %v1685 = vld [vmem:[#allocation2 + $0xac] sm:$0xf]
    %v1686 = vld [vmem:[#allocation2 + $0xb4] sm:$0xf]
    %v1687 = vld [vmem:[#allocation2 + $0xb8] sm:$0xf]
    %v1688 = vld [vmem:[#allocation2 + $0xd8] sm:$0xf]
    %v1689 = vld [vmem:[#allocation2 + $0xdc] sm:$0xf]
    %v1690 = vld [vmem:[#allocation2 + $0xe4] sm:$0xf]
    %v1691 = vld [vmem:[#allocation2 + $0xe8] sm:$0xf]
    %v1692 = vld [vmem:[#allocation2 + $0xf0] sm:$0xf]
    %v1693 = vld [vmem:[#allocation2 + $0xf4] sm:$0xf]
    %v1694 = vld [vmem:[#allocation2 + $0xfc] sm:$0xf]
    %v1695 = vld [vmem:[#allocation2 + $0x100] sm:$0xf]
    %v1696 = vld [vmem:[#allocation2 + $0x108] sm:$0xf]
    %v1697 = vld [vmem:[#allocation2 + $0x10c] sm:$0xf]
    %v1698 = vld [vmem:[#allocation2 + $0x114] sm:$0xf]
    %v1699 = vld [vmem:[#allocation2 + $0x118] sm:$0xf]
    %v1700 = vld [vmem:[#allocation2 + $0x120] sm:$0xf]
    %v1701 = vld [vmem:[#allocation2 + $0x124] sm:$0xf]
    %v1702 = vld [vmem:[#allocation2 + $0x12c] sm:$0xf]
    %v1703 = vld [vmem:[#allocation2 + $0x130] sm:$0xf]
    %v1704 = vld [vmem:[#allocation2 + $0x138] sm:$0xf]
    %v1705 = vld [vmem:[#allocation2 + $0x13c] sm:$0xf]
    %v1706 = vld [vmem:[#allocation2 + $0x144] sm:$0xf]
    %v1707 = vld [vmem:[#allocation2 + $0x148] sm:$0xf]
    %v1708 = vld [vmem:[#allocation2 + $0x150] sm:$0xf]
    %v1709 = vld [vmem:[#allocation2 + $0x154] sm:$0xf]
    %v1710 = vld [vmem:[#allocation2 + $0x15c] sm:$0xf]
    %v1711 = vld [vmem:[#allocation2 + $0x160] sm:$0xf]
    %v1712 = vld [vmem:[#allocation2 + $0x168] sm:$0xf]
    %v1713 = vld [vmem:[#allocation2 + $0x16c] sm:$0xf]
    %v1714 = vld [vmem:[#allocation2 + $0x174] sm:$0xf]
    %v1715 = vld [vmem:[#allocation2 + $0x178] sm:$0xf]
    %v1716 = vld [vmem:[#allocation2 + $0x180] sm:$0xf]
    %v1717 = vld [vmem:[#allocation2 + $0x184] sm:$0xf]
    %v1718 = vld [vmem:[#allocation2 + $0x18c] sm:$0xf]
    %v1719 = vld [vmem:[#allocation2 + $0x190] sm:$0xf]
    %v1720 = vld [vmem:[#allocation6] sm:$0xf]
    %v1721 = vld [vmem:[#allocation6 + $0x4] sm:$0xf]
    %v1722 = vld [vmem:[#allocation6 + $0x8] sm:$0xf]
    %v1723 = vld [vmem:[#allocation6 + $0xc] sm:$0xf]
    %v1724 = vld [vmem:[#allocation6 + $0x10] sm:$0xf]
    %v1725 = vld [vmem:[#allocation6 + $0x14] sm:$0xf]
    %v1726 = vld [vmem:[#allocation6 + $0x18] sm:$0xf]
    %v1727 = vld [vmem:[#allocation6 + $0x1c] sm:$0xf]
    %v1728 = vld [vmem:[#allocation6 + $0x20] sm:$0xf]
    %v1729 = vld [vmem:[#allocation6 + $0x24] sm:$0xf]
    %v1730 = vld [vmem:[#allocation6 + $0x28] sm:$0xf]
    %v1731 = vld [vmem:[#allocation6 + $0x2c] sm:$0xf]
    %v1732 = vld [vmem:[#allocation6 + $0x30] sm:$0xf]
    %v1733 = vld [vmem:[#allocation6 + $0x34] sm:$0xf]
    %v1734 = vld [vmem:[#allocation6 + $0x38] sm:$0xf]
    %v1735 = vld [vmem:[#allocation6 + $0x3c] sm:$0xf]
    %v1736 = vld [vmem:[#allocation2 + $0x8] sm:$0x1]
    %v1737 = vld [vmem:[#allocation2 + $0x14] sm:$0x1]
    %v1738 = vld [vmem:[#allocation2 + $0x20] sm:$0x1]
    %v1739 = vld [vmem:[#allocation2 + $0x2c] sm:$0x1]
    %v1740 = vld [vmem:[#allocation2 + $0x38] sm:$0x1]
    %v1741 = vld [vmem:[#allocation2 + $0x44] sm:$0x1]
    %v1742 = vld [vmem:[#allocation2 + $0x50] sm:$0x1]
    %v1743 = vld [vmem:[#allocation2 + $0x5c] sm:$0x1]
    %v1744 = vld [vmem:[#allocation2 + $0x68] sm:$0x1]
    %v1745 = vld [vmem:[#allocation2 + $0x74] sm:$0x1]
    %v1746 = vld [vmem:[#allocation2 + $0x80] sm:$0x1]
    %v1747 = vld [vmem:[#allocation2 + $0x8c] sm:$0x1]
    %v1748 = vld [vmem:[#allocation2 + $0x98] sm:$0x1]
    %v1749 = vld [vmem:[#allocation2 + $0xa4] sm:$0x1]
    %v1750 = vld [vmem:[#allocation2 + $0xb0] sm:$0x1]
    %v1751 = vld [vmem:[#allocation2 + $0xbc] sm:$0x1]
    %v1752 = vld [vmem:[#allocation2 + $0xe0] sm:$0x1]
    %v1753 = vld [vmem:[#allocation2 + $0xec] sm:$0x1]
    %v1754 = vld [vmem:[#allocation2 + $0xf8] sm:$0x1]
    %v1755 = vld [vmem:[#allocation2 + $0x104] sm:$0x1]
    %v1756 = vld [vmem:[#allocation2 + $0x110] sm:$0x1]
    %v1757 = vld [vmem:[#allocation2 + $0x11c] sm:$0x1]
    %v1758 = vld [vmem:[#allocation2 + $0x128] sm:$0x1]
    %v1759 = vld [vmem:[#allocation2 + $0x134] sm:$0x1]
    %v1760 = vld [vmem:[#allocation2 + $0x140] sm:$0x1]
    %v1761 = vld [vmem:[#allocation2 + $0x14c] sm:$0x1]
    %v1762 = vld [vmem:[#allocation2 + $0x158] sm:$0x1]
    %v1763 = vld [vmem:[#allocation2 + $0x164] sm:$0x1]
    %v1764 = vld [vmem:[#allocation2 + $0x170] sm:$0x1]
    %v1765 = vld [vmem:[#allocation2 + $0x17c] sm:$0x1]
    %v1766 = vld [vmem:[#allocation2 + $0x188] sm:$0x1]
    %v1767 = vld [vmem:[#allocation2 + $0x194] sm:$0x1]
    %vm1768 = vsmask.f32 3328
    %vm1769 = vsmask.f32 7440
    %vm1770 = vmor %vm1768, %vm1769
    %v1772 = vshrl.u32 %v1656, 16
    %v1774 = vrot.slane %v1772, 4
    %v1775 = vshll.u32 %v1656, 16
    %v1777 = vrot.slane %v1775, 5
    %v1778 = vor.u32 %v1774, %v1777
    %v1779 = vrot.slane %v1778, 4
    %v1781 = vshll.u32 %v1657, 16
    %v1783 = vrot.slane %v1781, 5
    %v1784 = vsel %vm1770, %v1779, %v1783
    %v1785 = vshrl.u32 %v1657, 16
    %v1787 = vrot.slane %v1785, 4
    %v1788 = vor.u32 %v1787, %v1783
    %v1789 = vrot.slane %v1788, 4
    %v1791 = vshll.u32 %v1736, 16
    %v1793 = vrot.slane %v1791, 5
    %v1794 = vsel %vm1770, %v1789, %v1793
    %v1796 = vshrl.u32 %v1658, 16
    %v1798 = vrot.slane %v1796, 4
    %v1799 = vshll.u32 %v1658, 16
    %v1801 = vrot.slane %v1799, 5
    %v1802 = vor.u32 %v1798, %v1801
    %v1803 = vrot.slane %v1802, 4
    %v1805 = vshll.u32 %v1659, 16
    %v1807 = vrot.slane %v1805, 5
    %v1808 = vsel %vm1770, %v1803, %v1807
    %v1809 = vshrl.u32 %v1659, 16
    %v1811 = vrot.slane %v1809, 4
    %v1812 = vor.u32 %v1811, %v1807
    %v1813 = vrot.slane %v1812, 4
    %v1815 = vshll.u32 %v1737, 16
    %v1817 = vrot.slane %v1815, 5
    %v1818 = vsel %vm1770, %v1813, %v1817
    %v1820 = vshrl.u32 %v1660, 16
    %v1822 = vrot.slane %v1820, 4
    %v1823 = vshll.u32 %v1660, 16
    %v1825 = vrot.slane %v1823, 5
    %v1826 = vor.u32 %v1822, %v1825
    %v1827 = vrot.slane %v1826, 4
    %v1829 = vshll.u32 %v1661, 16
    %v1831 = vrot.slane %v1829, 5
    %v1832 = vsel %vm1770, %v1827, %v1831
    %v1833 = vshrl.u32 %v1661, 16
    %v1835 = vrot.slane %v1833, 4
    %v1836 = vor.u32 %v1835, %v1831
    %v1837 = vrot.slane %v1836, 4
    %v1839 = vshll.u32 %v1738, 16
    %v1841 = vrot.slane %v1839, 5
    %v1842 = vsel %vm1770, %v1837, %v1841
    %v1844 = vshrl.u32 %v1662, 16
    %v1846 = vrot.slane %v1844, 4
    %v1847 = vshll.u32 %v1662, 16
    %v1849 = vrot.slane %v1847, 5
    %v1850 = vor.u32 %v1846, %v1849
    %v1851 = vrot.slane %v1850, 4
    %v1853 = vshll.u32 %v1663, 16
    %v1855 = vrot.slane %v1853, 5
    %v1856 = vsel %vm1770, %v1851, %v1855
    %v1857 = vshrl.u32 %v1663, 16
    %v1859 = vrot.slane %v1857, 4
    %v1860 = vor.u32 %v1859, %v1855
    %v1861 = vrot.slane %v1860, 4
    %v1863 = vshll.u32 %v1739, 16
    %v1865 = vrot.slane %v1863, 5
    %v1866 = vsel %vm1770, %v1861, %v1865
    %v1868 = vshrl.u32 %v1664, 16
    %v1870 = vrot.slane %v1868, 4
    %v1871 = vshll.u32 %v1664, 16
    %v1873 = vrot.slane %v1871, 5
    %v1874 = vor.u32 %v1870, %v1873
    %v1875 = vrot.slane %v1874, 4
    %v1877 = vshll.u32 %v1665, 16
    %v1879 = vrot.slane %v1877, 5
    %v1880 = vsel %vm1770, %v1875, %v1879
    %v1881 = vshrl.u32 %v1665, 16
    %v1883 = vrot.slane %v1881, 4
    %v1884 = vor.u32 %v1883, %v1879
    %v1885 = vrot.slane %v1884, 4
    %v1887 = vshll.u32 %v1740, 16
    %v1889 = vrot.slane %v1887, 5
    %v1890 = vsel %vm1770, %v1885, %v1889
    %v1892 = vshrl.u32 %v1666, 16
    %v1894 = vrot.slane %v1892, 4
    %v1895 = vshll.u32 %v1666, 16
    %v1897 = vrot.slane %v1895, 5
    %v1898 = vor.u32 %v1894, %v1897
    %v1899 = vrot.slane %v1898, 4
    %v1901 = vshll.u32 %v1667, 16
    %v1903 = vrot.slane %v1901, 5
    %v1904 = vsel %vm1770, %v1899, %v1903
    %v1905 = vshrl.u32 %v1667, 16
    %v1907 = vrot.slane %v1905, 4
    %v1908 = vor.u32 %v1907, %v1903
    %v1909 = vrot.slane %v1908, 4
    %v1911 = vshll.u32 %v1741, 16
    %v1913 = vrot.slane %v1911, 5
    %v1914 = vsel %vm1770, %v1909, %v1913
    %v1916 = vshrl.u32 %v1668, 16
    %v1918 = vrot.slane %v1916, 4
    %v1919 = vshll.u32 %v1668, 16
    %v1921 = vrot.slane %v1919, 5
    %v1922 = vor.u32 %v1918, %v1921
    %v1923 = vrot.slane %v1922, 4
    %v1925 = vshll.u32 %v1669, 16
    %v1927 = vrot.slane %v1925, 5
    %v1928 = vsel %vm1770, %v1923, %v1927
    %v1929 = vshrl.u32 %v1669, 16
    %v1931 = vrot.slane %v1929, 4
    %v1932 = vor.u32 %v1931, %v1927
    %v1933 = vrot.slane %v1932, 4
    %v1935 = vshll.u32 %v1742, 16
    %v1937 = vrot.slane %v1935, 5
    %v1938 = vsel %vm1770, %v1933, %v1937
    %v1940 = vshrl.u32 %v1670, 16
    %v1942 = vrot.slane %v1940, 4
    %v1943 = vshll.u32 %v1670, 16
    %v1945 = vrot.slane %v1943, 5
    %v1946 = vor.u32 %v1942, %v1945
    %v1947 = vrot.slane %v1946, 4
    %v1949 = vshll.u32 %v1671, 16
    %v1951 = vrot.slane %v1949, 5
    %v1952 = vsel %vm1770, %v1947, %v1951
    %v1953 = vshrl.u32 %v1671, 16
    %v1955 = vrot.slane %v1953, 4
    %v1956 = vor.u32 %v1955, %v1951
    %v1957 = vrot.slane %v1956, 4
    %v1959 = vshll.u32 %v1743, 16
    %v1961 = vrot.slane %v1959, 5
    %v1962 = vsel %vm1770, %v1957, %v1961
    %v1964 = vshrl.u32 %v1672, 16
    %v1966 = vrot.slane %v1964, 4
    %v1967 = vshll.u32 %v1672, 16
    %v1969 = vrot.slane %v1967, 5
    %v1970 = vor.u32 %v1966, %v1969
    %v1971 = vrot.slane %v1970, 4
    %v1973 = vshll.u32 %v1673, 16
    %v1975 = vrot.slane %v1973, 5
    %v1976 = vsel %vm1770, %v1971, %v1975
    %v1977 = vshrl.u32 %v1673, 16
    %v1979 = vrot.slane %v1977, 4
    %v1980 = vor.u32 %v1979, %v1975
    %v1981 = vrot.slane %v1980, 4
    %v1983 = vshll.u32 %v1744, 16
    %v1985 = vrot.slane %v1983, 5
    %v1986 = vsel %vm1770, %v1981, %v1985
    %v1988 = vshrl.u32 %v1674, 16
    %v1990 = vrot.slane %v1988, 4
    %v1991 = vshll.u32 %v1674, 16
    %v1993 = vrot.slane %v1991, 5
    %v1994 = vor.u32 %v1990, %v1993
    %v1995 = vrot.slane %v1994, 4
    %v1997 = vshll.u32 %v1675, 16
    %v1999 = vrot.slane %v1997, 5
    %v2000 = vsel %vm1770, %v1995, %v1999
    %v2001 = vshrl.u32 %v1675, 16
    %v2003 = vrot.slane %v2001, 4
    %v2004 = vor.u32 %v2003, %v1999
    %v2005 = vrot.slane %v2004, 4
    %v2007 = vshll.u32 %v1745, 16
    %v2009 = vrot.slane %v2007, 5
    %v2010 = vsel %vm1770, %v2005, %v2009
    %v2012 = vshrl.u32 %v1676, 16
    %v2014 = vrot.slane %v2012, 4
    %v2015 = vshll.u32 %v1676, 16
    %v2017 = vrot.slane %v2015, 5
    %v2018 = vor.u32 %v2014, %v2017
    %v2019 = vrot.slane %v2018, 4
    %v2021 = vshll.u32 %v1677, 16
    %v2023 = vrot.slane %v2021, 5
    %v2024 = vsel %vm1770, %v2019, %v2023
    %v2025 = vshrl.u32 %v1677, 16
    %v2027 = vrot.slane %v2025, 4
    %v2028 = vor.u32 %v2027, %v2023
    %v2029 = vrot.slane %v2028, 4
    %v2031 = vshll.u32 %v1746, 16
    %v2033 = vrot.slane %v2031, 5
    %v2034 = vsel %vm1770, %v2029, %v2033
    %v2036 = vshrl.u32 %v1678, 16
    %v2038 = vrot.slane %v2036, 4
    %v2039 = vshll.u32 %v1678, 16
    %v2041 = vrot.slane %v2039, 5
    %v2042 = vor.u32 %v2038, %v2041
    %v2043 = vrot.slane %v2042, 4
    %v2045 = vshll.u32 %v1679, 16
    %v2047 = vrot.slane %v2045, 5
    %v2048 = vsel %vm1770, %v2043, %v2047
    %v2049 = vshrl.u32 %v1679, 16
    %v2051 = vrot.slane %v2049, 4
    %v2052 = vor.u32 %v2051, %v2047
    %v2053 = vrot.slane %v2052, 4
    %v2055 = vshll.u32 %v1747, 16
    %v2057 = vrot.slane %v2055, 5
    %v2058 = vsel %vm1770, %v2053, %v2057
    %v2060 = vshrl.u32 %v1680, 16
    %v2062 = vrot.slane %v2060, 4
    %v2063 = vshll.u32 %v1680, 16
    %v2065 = vrot.slane %v2063, 5
    %v2066 = vor.u32 %v2062, %v2065
    %v2067 = vrot.slane %v2066, 4
    %v2069 = vshll.u32 %v1681, 16
    %v2071 = vrot.slane %v2069, 5
    %v2072 = vsel %vm1770, %v2067, %v2071
    %v2073 = vshrl.u32 %v1681, 16
    %v2075 = vrot.slane %v2073, 4
    %v2076 = vor.u32 %v2075, %v2071
    %v2077 = vrot.slane %v2076, 4
    %v2079 = vshll.u32 %v1748, 16
    %v2081 = vrot.slane %v2079, 5
    %v2082 = vsel %vm1770, %v2077, %v2081
    %v2084 = vshrl.u32 %v1682, 16
    %v2086 = vrot.slane %v2084, 4
    %v2087 = vshll.u32 %v1682, 16
    %v2089 = vrot.slane %v2087, 5
    %v2090 = vor.u32 %v2086, %v2089
    %v2091 = vrot.slane %v2090, 4
    %v2093 = vshll.u32 %v1683, 16
    %v2095 = vrot.slane %v2093, 5
    %v2096 = vsel %vm1770, %v2091, %v2095
    %v2097 = vshrl.u32 %v1683, 16
    %v2099 = vrot.slane %v2097, 4
    %v2100 = vor.u32 %v2099, %v2095
    %v2101 = vrot.slane %v2100, 4
    %v2103 = vshll.u32 %v1749, 16
    %v2105 = vrot.slane %v2103, 5
    %v2106 = vsel %vm1770, %v2101, %v2105
    %v2108 = vshrl.u32 %v1684, 16
    %v2110 = vrot.slane %v2108, 4
    %v2111 = vshll.u32 %v1684, 16
    %v2113 = vrot.slane %v2111, 5
    %v2114 = vor.u32 %v2110, %v2113
    %v2115 = vrot.slane %v2114, 4
    %v2117 = vshll.u32 %v1685, 16
    %v2119 = vrot.slane %v2117, 5
    %v2120 = vsel %vm1770, %v2115, %v2119
    %v2121 = vshrl.u32 %v1685, 16
    %v2123 = vrot.slane %v2121, 4
    %v2124 = vor.u32 %v2123, %v2119
    %v2125 = vrot.slane %v2124, 4
    %v2127 = vshll.u32 %v1750, 16
    %v2129 = vrot.slane %v2127, 5
    %v2130 = vsel %vm1770, %v2125, %v2129
    %v2132 = vshrl.u32 %v1686, 16
    %v2134 = vrot.slane %v2132, 4
    %v2135 = vshll.u32 %v1686, 16
    %v2137 = vrot.slane %v2135, 5
    %v2138 = vor.u32 %v2134, %v2137
    %v2139 = vrot.slane %v2138, 4
    %v2141 = vshll.u32 %v1687, 16
    %v2143 = vrot.slane %v2141, 5
    %v2144 = vsel %vm1770, %v2139, %v2143
    %v2145 = vshrl.u32 %v1687, 16
    %v2147 = vrot.slane %v2145, 4
    %v2148 = vor.u32 %v2147, %v2143
    %v2149 = vrot.slane %v2148, 4
    %v2151 = vshll.u32 %v1751, 16
    %v2153 = vrot.slane %v2151, 5
    %v2154 = vsel %vm1770, %v2149, %v2153
    %v2156 = vshrl.u32 %v1688, 16
    %v2158 = vrot.slane %v2156, 4
    %v2159 = vshll.u32 %v1688, 16
    %v2161 = vrot.slane %v2159, 5
    %v2162 = vor.u32 %v2158, %v2161
    %v2163 = vrot.slane %v2162, 4
    %v2165 = vshll.u32 %v1689, 16
    %v2167 = vrot.slane %v2165, 5
    %v2168 = vsel %vm1770, %v2163, %v2167
    %v2169 = vshrl.u32 %v1689, 16
    %v2171 = vrot.slane %v2169, 4
    %v2172 = vor.u32 %v2171, %v2167
    %v2173 = vrot.slane %v2172, 4
    %v2175 = vshll.u32 %v1752, 16
    %v2177 = vrot.slane %v2175, 5
    %v2178 = vsel %vm1770, %v2173, %v2177
    %v2180 = vshrl.u32 %v1690, 16
    %v2182 = vrot.slane %v2180, 4
    %v2183 = vshll.u32 %v1690, 16
    %v2185 = vrot.slane %v2183, 5
    %v2186 = vor.u32 %v2182, %v2185
    %v2187 = vrot.slane %v2186, 4
    %v2189 = vshll.u32 %v1691, 16
    %v2191 = vrot.slane %v2189, 5
    %v2192 = vsel %vm1770, %v2187, %v2191
    %v2193 = vshrl.u32 %v1691, 16
    %v2195 = vrot.slane %v2193, 4
    %v2196 = vor.u32 %v2195, %v2191
    %v2197 = vrot.slane %v2196, 4
    %v2199 = vshll.u32 %v1753, 16
    %v2201 = vrot.slane %v2199, 5
    %v2202 = vsel %vm1770, %v2197, %v2201
    %v2204 = vshrl.u32 %v1692, 16
    %v2206 = vrot.slane %v2204, 4
    %v2207 = vshll.u32 %v1692, 16
    %v2209 = vrot.slane %v2207, 5
    %v2210 = vor.u32 %v2206, %v2209
    %v2211 = vrot.slane %v2210, 4
    %v2213 = vshll.u32 %v1693, 16
    %v2215 = vrot.slane %v2213, 5
    %v2216 = vsel %vm1770, %v2211, %v2215
    %v2217 = vshrl.u32 %v1693, 16
    %v2219 = vrot.slane %v2217, 4
    %v2220 = vor.u32 %v2219, %v2215
    %v2221 = vrot.slane %v2220, 4
    %v2223 = vshll.u32 %v1754, 16
    %v2225 = vrot.slane %v2223, 5
    %v2226 = vsel %vm1770, %v2221, %v2225
    %v2228 = vshrl.u32 %v1694, 16
    %v2230 = vrot.slane %v2228, 4
    %v2231 = vshll.u32 %v1694, 16
    %v2233 = vrot.slane %v2231, 5
    %v2234 = vor.u32 %v2230, %v2233
    %v2235 = vrot.slane %v2234, 4
    %v2237 = vshll.u32 %v1695, 16
    %v2239 = vrot.slane %v2237, 5
    %v2240 = vsel %vm1770, %v2235, %v2239
    %v2241 = vshrl.u32 %v1695, 16
    %v2243 = vrot.slane %v2241, 4
    %v2244 = vor.u32 %v2243, %v2239
    %v2245 = vrot.slane %v2244, 4
    %v2247 = vshll.u32 %v1755, 16
    %v2249 = vrot.slane %v2247, 5
    %v2250 = vsel %vm1770, %v2245, %v2249
    %v2252 = vshrl.u32 %v1696, 16
    %v2254 = vrot.slane %v2252, 4
    %v2255 = vshll.u32 %v1696, 16
    %v2257 = vrot.slane %v2255, 5
    %v2258 = vor.u32 %v2254, %v2257
    %v2259 = vrot.slane %v2258, 4
    %v2261 = vshll.u32 %v1697, 16
    %v2263 = vrot.slane %v2261, 5
    %v2264 = vsel %vm1770, %v2259, %v2263
    %v2265 = vshrl.u32 %v1697, 16
    %v2267 = vrot.slane %v2265, 4
    %v2268 = vor.u32 %v2267, %v2263
    %v2269 = vrot.slane %v2268, 4
    %v2271 = vshll.u32 %v1756, 16
    %v2273 = vrot.slane %v2271, 5
    %v2274 = vsel %vm1770, %v2269, %v2273
    %v2276 = vshrl.u32 %v1698, 16
    %v2278 = vrot.slane %v2276, 4
    %v2279 = vshll.u32 %v1698, 16
    %v2281 = vrot.slane %v2279, 5
    %v2282 = vor.u32 %v2278, %v2281
    %v2283 = vrot.slane %v2282, 4
    %v2285 = vshll.u32 %v1699, 16
    %v2287 = vrot.slane %v2285, 5
    %v2288 = vsel %vm1770, %v2283, %v2287
    %v2289 = vshrl.u32 %v1699, 16
    %v2291 = vrot.slane %v2289, 4
    %v2292 = vor.u32 %v2291, %v2287
    %v2293 = vrot.slane %v2292, 4
    %v2295 = vshll.u32 %v1757, 16
    %v2297 = vrot.slane %v2295, 5
    %v2298 = vsel %vm1770, %v2293, %v2297
    %v2300 = vshrl.u32 %v1700, 16
    %v2302 = vrot.slane %v2300, 4
    %v2303 = vshll.u32 %v1700, 16
    %v2305 = vrot.slane %v2303, 5
    %v2306 = vor.u32 %v2302, %v2305
    %v2307 = vrot.slane %v2306, 4
    %v2309 = vshll.u32 %v1701, 16
    %v2311 = vrot.slane %v2309, 5
    %v2312 = vsel %vm1770, %v2307, %v2311
    %v2313 = vshrl.u32 %v1701, 16
    %v2315 = vrot.slane %v2313, 4
    %v2316 = vor.u32 %v2315, %v2311
    %v2317 = vrot.slane %v2316, 4
    %v2319 = vshll.u32 %v1758, 16
    %v2321 = vrot.slane %v2319, 5
    %v2322 = vsel %vm1770, %v2317, %v2321
    %v2324 = vshrl.u32 %v1702, 16
    %v2326 = vrot.slane %v2324, 4
    %v2327 = vshll.u32 %v1702, 16
    %v2329 = vrot.slane %v2327, 5
    %v2330 = vor.u32 %v2326, %v2329
    %v2331 = vrot.slane %v2330, 4
    %v2333 = vshll.u32 %v1703, 16
    %v2335 = vrot.slane %v2333, 5
    %v2336 = vsel %vm1770, %v2331, %v2335
    %v2337 = vshrl.u32 %v1703, 16
    %v2339 = vrot.slane %v2337, 4
    %v2340 = vor.u32 %v2339, %v2335
    %v2341 = vrot.slane %v2340, 4
    %v2343 = vshll.u32 %v1759, 16
    %v2345 = vrot.slane %v2343, 5
    %v2346 = vsel %vm1770, %v2341, %v2345
    %v2348 = vshrl.u32 %v1704, 16
    %v2350 = vrot.slane %v2348, 4
    %v2351 = vshll.u32 %v1704, 16
    %v2353 = vrot.slane %v2351, 5
    %v2354 = vor.u32 %v2350, %v2353
    %v2355 = vrot.slane %v2354, 4
    %v2357 = vshll.u32 %v1705, 16
    %v2359 = vrot.slane %v2357, 5
    %v2360 = vsel %vm1770, %v2355, %v2359
    %v2361 = vshrl.u32 %v1705, 16
    %v2363 = vrot.slane %v2361, 4
    %v2364 = vor.u32 %v2363, %v2359
    %v2365 = vrot.slane %v2364, 4
    %v2367 = vshll.u32 %v1760, 16
    %v2369 = vrot.slane %v2367, 5
    %v2370 = vsel %vm1770, %v2365, %v2369
    %v2372 = vshrl.u32 %v1706, 16
    %v2374 = vrot.slane %v2372, 4
    %v2375 = vshll.u32 %v1706, 16
    %v2377 = vrot.slane %v2375, 5
    %v2378 = vor.u32 %v2374, %v2377
    %v2379 = vrot.slane %v2378, 4
    %v2381 = vshll.u32 %v1707, 16
    %v2383 = vrot.slane %v2381, 5
    %v2384 = vsel %vm1770, %v2379, %v2383
    %v2385 = vshrl.u32 %v1707, 16
    %v2387 = vrot.slane %v2385, 4
    %v2388 = vor.u32 %v2387, %v2383
    %v2389 = vrot.slane %v2388, 4
    %v2391 = vshll.u32 %v1761, 16
    %v2393 = vrot.slane %v2391, 5
    %v2394 = vsel %vm1770, %v2389, %v2393
    %v2396 = vshrl.u32 %v1708, 16
    %v2398 = vrot.slane %v2396, 4
    %v2399 = vshll.u32 %v1708, 16
    %v2401 = vrot.slane %v2399, 5
    %v2402 = vor.u32 %v2398, %v2401
    %v2403 = vrot.slane %v2402, 4
    %v2405 = vshll.u32 %v1709, 16
    %v2407 = vrot.slane %v2405, 5
    %v2408 = vsel %vm1770, %v2403, %v2407
    %v2409 = vshrl.u32 %v1709, 16
    %v2411 = vrot.slane %v2409, 4
    %v2412 = vor.u32 %v2411, %v2407
    %v2413 = vrot.slane %v2412, 4
    %v2415 = vshll.u32 %v1762, 16
    %v2417 = vrot.slane %v2415, 5
    %v2418 = vsel %vm1770, %v2413, %v2417
    %v2420 = vshrl.u32 %v1710, 16
    %v2422 = vrot.slane %v2420, 4
    %v2423 = vshll.u32 %v1710, 16
    %v2425 = vrot.slane %v2423, 5
    %v2426 = vor.u32 %v2422, %v2425
    %v2427 = vrot.slane %v2426, 4
    %v2429 = vshll.u32 %v1711, 16
    %v2431 = vrot.slane %v2429, 5
    %v2432 = vsel %vm1770, %v2427, %v2431
    %v2433 = vshrl.u32 %v1711, 16
    %v2435 = vrot.slane %v2433, 4
    %v2436 = vor.u32 %v2435, %v2431
    %v2437 = vrot.slane %v2436, 4
    %v2439 = vshll.u32 %v1763, 16
    %v2441 = vrot.slane %v2439, 5
    %v2442 = vsel %vm1770, %v2437, %v2441
    %v2444 = vshrl.u32 %v1712, 16
    %v2446 = vrot.slane %v2444, 4
    %v2447 = vshll.u32 %v1712, 16
    %v2449 = vrot.slane %v2447, 5
    %v2450 = vor.u32 %v2446, %v2449
    %v2451 = vrot.slane %v2450, 4
    %v2453 = vshll.u32 %v1713, 16
    %v2455 = vrot.slane %v2453, 5
    %v2456 = vsel %vm1770, %v2451, %v2455
    %v2457 = vshrl.u32 %v1713, 16
    %v2459 = vrot.slane %v2457, 4
    %v2460 = vor.u32 %v2459, %v2455
    %v2461 = vrot.slane %v2460, 4
    %v2463 = vshll.u32 %v1764, 16
    %v2465 = vrot.slane %v2463, 5
    %v2466 = vsel %vm1770, %v2461, %v2465
    %v2468 = vshrl.u32 %v1714, 16
    %v2470 = vrot.slane %v2468, 4
    %v2471 = vshll.u32 %v1714, 16
    %v2473 = vrot.slane %v2471, 5
    %v2474 = vor.u32 %v2470, %v2473
    %v2475 = vrot.slane %v2474, 4
    %v2477 = vshll.u32 %v1715, 16
    %v2479 = vrot.slane %v2477, 5
    %v2480 = vsel %vm1770, %v2475, %v2479
    %v2481 = vshrl.u32 %v1715, 16
    %v2483 = vrot.slane %v2481, 4
    %v2484 = vor.u32 %v2483, %v2479
    %v2485 = vrot.slane %v2484, 4
    %v2487 = vshll.u32 %v1765, 16
    %v2489 = vrot.slane %v2487, 5
    %v2490 = vsel %vm1770, %v2485, %v2489
    %v2492 = vshrl.u32 %v1716, 16
    %v2494 = vrot.slane %v2492, 4
    %v2495 = vshll.u32 %v1716, 16
    %v2497 = vrot.slane %v2495, 5
    %v2498 = vor.u32 %v2494, %v2497
    %v2499 = vrot.slane %v2498, 4
    %v2501 = vshll.u32 %v1717, 16
    %v2503 = vrot.slane %v2501, 5
    %v2504 = vsel %vm1770, %v2499, %v2503
    %v2505 = vshrl.u32 %v1717, 16
    %v2507 = vrot.slane %v2505, 4
    %v2508 = vor.u32 %v2507, %v2503
    %v2509 = vrot.slane %v2508, 4
    %v2511 = vshll.u32 %v1766, 16
    %v2513 = vrot.slane %v2511, 5
    %v2514 = vsel %vm1770, %v2509, %v2513
    %v2516 = vshrl.u32 %v1718, 16
    %v2518 = vrot.slane %v2516, 4
    %v2519 = vshll.u32 %v1718, 16
    %v2521 = vrot.slane %v2519, 5
    %v2522 = vor.u32 %v2518, %v2521
    %v2523 = vrot.slane %v2522, 4
    %v2525 = vshll.u32 %v1719, 16
    %v2527 = vrot.slane %v2525, 5
    %v2528 = vsel %vm1770, %v2523, %v2527
    %v2529 = vshrl.u32 %v1719, 16
    %v2531 = vrot.slane %v2529, 4
    %v2532 = vor.u32 %v2531, %v2527
    %v2533 = vrot.slane %v2532, 4
    %v2535 = vshll.u32 %v1767, 16
    %v2537 = vrot.slane %v2535, 5
    %v2538 = vsel %vm1770, %v2533, %v2537
    %s2539 = scalar_lea.vmem [#allocation6], 64
    %v2540 = vld [vmem:[%s2539] sm:$0xf]
    %v2541 = vld [vmem:[%s2539 + $0x4] sm:$0xf]
    %v2542 = vld [vmem:[%s2539 + $0x8] sm:$0xf]
    %v2543 = vld [vmem:[%s2539 + $0xc] sm:$0xf]
    %v2544 = vld [vmem:[%s2539 + $0x10] sm:$0xf]
    %v2545 = vld [vmem:[%s2539 + $0x14] sm:$0xf]
    %v2546 = vld [vmem:[%s2539 + $0x18] sm:$0xf]
    %v2547 = vld [vmem:[%s2539 + $0x1c] sm:$0xf]
    %v2548 = vld [vmem:[%s2539 + $0x20] sm:$0xf]
    %v2549 = vld [vmem:[%s2539 + $0x24] sm:$0xf]
    %v2550 = vld [vmem:[%s2539 + $0x28] sm:$0xf]
    %v2551 = vld [vmem:[%s2539 + $0x2c] sm:$0xf]
    %v2552 = vld [vmem:[%s2539 + $0x30] sm:$0xf]
    %v2553 = vld [vmem:[%s2539 + $0x34] sm:$0xf]
    %v2554 = vld [vmem:[%s2539 + $0x38] sm:$0xf]
    %v2555 = vld [vmem:[%s2539 + $0x3c] sm:$0xf]
    %v2556 = vunpack.c.l.b16 %v1784
    %v2557 = vunpack.c.l.b16 %v1794
    %v2558 = vunpack.c.l.b16 %v1808
    %v2559 = vunpack.c.l.b16 %v1818
    %v2560 = vunpack.c.l.b16 %v1832
    %v2561 = vunpack.c.l.b16 %v1842
    %v2562 = vunpack.c.l.b16 %v1856
    %v2563 = vunpack.c.l.b16 %v1866
    %v2564 = vunpack.c.l.b16 %v1880
    %v2565 = vunpack.c.l.b16 %v1890
    %v2566 = vunpack.c.l.b16 %v1904
    %v2567 = vunpack.c.l.b16 %v1914
    %v2568 = vunpack.c.l.b16 %v1928
    %v2569 = vunpack.c.l.b16 %v1938
    %v2570 = vunpack.c.l.b16 %v1952
    %v2571 = vunpack.c.l.b16 %v1962
    %v2572 = vunpack.c.l.b16 %v1976
    %v2573 = vunpack.c.l.b16 %v1986
    %v2574 = vunpack.c.l.b16 %v2000
    %v2575 = vunpack.c.l.b16 %v2010
    %v2576 = vunpack.c.l.b16 %v2024
    %v2577 = vunpack.c.l.b16 %v2034
    %v2578 = vunpack.c.l.b16 %v2048
    %v2579 = vunpack.c.l.b16 %v2058
    %v2580 = vunpack.c.l.b16 %v2072
    %v2581 = vunpack.c.l.b16 %v2082
    %v2582 = vunpack.c.l.b16 %v2096
    %v2583 = vunpack.c.l.b16 %v2106
    %v2584 = vunpack.c.l.b16 %v2120
    %v2585 = vunpack.c.l.b16 %v2130
    %v2586 = vunpack.c.l.b16 %v2144
    %v2587 = vunpack.c.l.b16 %v2154
    %v2588 = vunpack.c.l.b16 %v2168
    %v2589 = vunpack.c.l.b16 %v2178
    %v2590 = vunpack.c.l.b16 %v2192
    %v2591 = vunpack.c.l.b16 %v2202
    %v2592 = vunpack.c.l.b16 %v2216
    %v2593 = vunpack.c.l.b16 %v2226
    %v2594 = vunpack.c.l.b16 %v2240
    %v2595 = vunpack.c.l.b16 %v2250
    %v2596 = vunpack.c.l.b16 %v2264
    %v2597 = vunpack.c.l.b16 %v2274
    %v2598 = vunpack.c.l.b16 %v2288
    %v2599 = vunpack.c.l.b16 %v2298
    %v2600 = vunpack.c.l.b16 %v2312
    %v2601 = vunpack.c.l.b16 %v2322
    %v2602 = vunpack.c.l.b16 %v2336
    %v2603 = vunpack.c.l.b16 %v2346
    %v2604 = vunpack.c.l.b16 %v2360
    %v2605 = vunpack.c.l.b16 %v2370
    %v2606 = vunpack.c.l.b16 %v2384
    %v2607 = vunpack.c.l.b16 %v2394
    %v2608 = vunpack.c.l.b16 %v2408
    %v2609 = vunpack.c.l.b16 %v2418
    %v2610 = vunpack.c.l.b16 %v2432
    %v2611 = vunpack.c.l.b16 %v2442
    %v2612 = vunpack.c.l.b16 %v2456
    %v2613 = vunpack.c.l.b16 %v2466
    %v2614 = vunpack.c.l.b16 %v2480
    %v2615 = vunpack.c.l.b16 %v2490
    %v2616 = vunpack.c.l.b16 %v2504
    %v2617 = vunpack.c.l.b16 %v2514
    %v2618 = vunpack.c.l.b16 %v2528
    %v2619 = vunpack.c.l.b16 %v2538
    %v2620 = vpack.c.b16 %v2557, %v2556
    %v2621 = vpack.c.b16 %v2559, %v2558
    %v2622 = vpack.c.b16 %v2561, %v2560
    %v2623 = vpack.c.b16 %v2563, %v2562
    %v2624 = vpack.c.b16 %v2565, %v2564
    %v2625 = vpack.c.b16 %v2567, %v2566
    %v2626 = vpack.c.b16 %v2569, %v2568
    %v2627 = vpack.c.b16 %v2571, %v2570
    %v2628 = vpack.c.b16 %v2573, %v2572
    %v2629 = vpack.c.b16 %v2575, %v2574
    %v2630 = vpack.c.b16 %v2577, %v2576
    %v2631 = vpack.c.b16 %v2579, %v2578
    %v2632 = vpack.c.b16 %v2581, %v2580
    %v2633 = vpack.c.b16 %v2583, %v2582
    %v2634 = vpack.c.b16 %v2585, %v2584
    %v2635 = vpack.c.b16 %v2587, %v2586
    %v2636 = vpack.c.b16 %v2589, %v2588
    %v2637 = vpack.c.b16 %v2591, %v2590
    %v2638 = vpack.c.b16 %v2593, %v2592
    %v2639 = vpack.c.b16 %v2595, %v2594
    %v2640 = vpack.c.b16 %v2597, %v2596
    %v2641 = vpack.c.b16 %v2599, %v2598
    %v2642 = vpack.c.b16 %v2601, %v2600
    %v2643 = vpack.c.b16 %v2603, %v2602
    %v2644 = vpack.c.b16 %v2605, %v2604
    %v2645 = vpack.c.b16 %v2607, %v2606
    %v2646 = vpack.c.b16 %v2609, %v2608
    %v2647 = vpack.c.b16 %v2611, %v2610
    %v2648 = vpack.c.b16 %v2613, %v2612
    %v2649 = vpack.c.b16 %v2615, %v2614
    %v2650 = vpack.c.b16 %v2617, %v2616
    %v2651 = vpack.c.b16 %v2619, %v2618
    %v2700 = vunpack.c.l.b16 %v2540
    %v2701 = vunpack.c.l.b16 %v2541
    %v2702 = vunpack.c.l.b16 %v2542
    %v2703 = vunpack.c.l.b16 %v2543
    %v2704 = vunpack.c.l.b16 %v2544
    %v2705 = vunpack.c.l.b16 %v2545
    %v2706 = vunpack.c.l.b16 %v2546
    %v2707 = vunpack.c.l.b16 %v2547
    %v2708 = vunpack.c.l.b16 %v2548
    %v2709 = vunpack.c.l.b16 %v2549
    %v2710 = vunpack.c.l.b16 %v2550
    %v2711 = vunpack.c.l.b16 %v2551
    %v2712 = vunpack.c.l.b16 %v2552
    %v2713 = vunpack.c.l.b16 %v2553
    %v2714 = vunpack.c.l.b16 %v2554
    %v2715 = vunpack.c.l.b16 %v2555
    %v2716 = vpack.c.b16 %v2701, %v2700
    %v2717 = vpack.c.b16 %v2703, %v2702
    %v2718 = vpack.c.b16 %v2705, %v2704
    %v2719 = vpack.c.b16 %v2707, %v2706
    %v2720 = vpack.c.b16 %v2709, %v2708
    %v2721 = vpack.c.b16 %v2711, %v2710
    %v2722 = vpack.c.b16 %v2713, %v2712
    %v2723 = vpack.c.b16 %v2715, %v2714
    %2732 = vmatprep.subr.bf16.mxu0 0
    %2733 = vmatpush1.bf16.msra.mxu0 %v2723
    %2734 = vmatprep.subr.bf16.mxu0 0
    %2735 = vmatpush1.bf16.msra.mxu0 %v2722
    %2736 = vmatprep.subr.bf16.mxu0 0
    %2737 = vmatpush1.bf16.msra.mxu0 %v2721
    %2738 = vmatprep.subr.bf16.mxu0 0
    %2739 = vmatpush1.bf16.msra.mxu0 %v2720
    %2740 = vmatprep.subr.bf16.mxu0 0
    %2741 = vmatpush1.bf16.msra.mxu0 %v2719
    %2742 = vmatprep.subr.bf16.mxu0 0
    %2743 = vmatpush1.bf16.msra.mxu0 %v2718
    %2744 = vmatprep.subr.bf16.mxu0 0
    %2745 = vmatpush1.bf16.msra.mxu0 %v2717
    %2746 = vmatprep.subr.bf16.mxu0 0
    %2747 = vmatpush1.bf16.msra.mxu0 %v2716
    %2748 = vmatprep.subr.bf16.mxu0 0
    %2749 = vmatpush2.bf16.msra.mxu0 0
    %2750 = vmatprep.subr.bf16.mxu0 0
    %2751 = vmatpush2.bf16.msra.mxu0 0
    %2752 = vmatprep.subr.bf16.mxu0 0
    %2753 = vmatpush2.bf16.msra.mxu0 0
    %2754 = vmatprep.subr.bf16.mxu0 0
    %2755 = vmatpush2.bf16.msra.mxu0 0
    %2756 = vmatprep.subr.bf16.mxu0 0
    %2757 = vmatpush2.bf16.msra.mxu0 0
    %2758 = vmatprep.subr.bf16.mxu0 0
    %2759 = vmatpush2.bf16.msra.mxu0 0
    %2760 = vmatprep.subr.bf16.mxu0 0
    %2761 = vmatpush2.bf16.msra.mxu0 0
    %2762 = vmatprep.subr.bf16.mxu0 0
    %2763 = vmatpush2.bf16.msra.mxu0 0
    %2764 = vmatprep.mubr.bf16.mxu0 0
    %2765 = vmatmul.mubr.bf16.gmra.mxu0 %v2620
    %v2766 = vpop.f32.mrf.mxu0
    %v2767 = vadd.f32 0.0, %v2766
    %v2768 = vpop.f32.mrf.mxu0
    %v2769 = vpop.f32.mrf.mxu0
    %v2770 = vadd.f32 0.0, %v2769
    %v2771 = vpop.f32.mrf.mxu0
    %2772 = vmatprep.mubr.bf16.mxu0 0
    %2773 = vmatmul.mubr.bf16.gmra.mxu0 %v2621
    %v2774 = vpop.f32.mrf.mxu0
    %v2775 = vadd.f32 0.0, %v2774
    %v2776 = vpop.f32.mrf.mxu0
    %v2777 = vpop.f32.mrf.mxu0
    %v2778 = vadd.f32 0.0, %v2777
    %v2779 = vpop.f32.mrf.mxu0
    %2780 = vmatprep.mubr.bf16.mxu0 0
    %2781 = vmatmul.mubr.bf16.gmra.mxu0 %v2622
    %v2782 = vpop.f32.mrf.mxu0
    %v2783 = vadd.f32 0.0, %v2782
    %v2784 = vpop.f32.mrf.mxu0
    %v2785 = vpop.f32.mrf.mxu0
    %v2786 = vadd.f32 0.0, %v2785
    %v2787 = vpop.f32.mrf.mxu0
    %2788 = vmatprep.mubr.bf16.mxu0 0
    %2789 = vmatmul.mubr.bf16.gmra.mxu0 %v2623
    %v2790 = vpop.f32.mrf.mxu0
    %v2791 = vadd.f32 0.0, %v2790
    %v2792 = vpop.f32.mrf.mxu0
    %v2793 = vpop.f32.mrf.mxu0
    %v2794 = vadd.f32 0.0, %v2793
    %v2795 = vpop.f32.mrf.mxu0
    %2796 = vmatprep.mubr.bf16.mxu0 0
    %2797 = vmatmul.mubr.bf16.gmra.mxu0 %v2624
    %v2798 = vpop.f32.mrf.mxu0
    %v2799 = vadd.f32 0.0, %v2798
    %v2800 = vpop.f32.mrf.mxu0
    %v2801 = vpop.f32.mrf.mxu0
    %v2802 = vadd.f32 0.0, %v2801
    %v2803 = vpop.f32.mrf.mxu0
    %2804 = vmatprep.mubr.bf16.mxu0 0
    %2805 = vmatmul.mubr.bf16.gmra.mxu0 %v2625
    %v2806 = vpop.f32.mrf.mxu0
    %v2807 = vadd.f32 0.0, %v2806
    %v2808 = vpop.f32.mrf.mxu0
    %v2809 = vpop.f32.mrf.mxu0
    %v2810 = vadd.f32 0.0, %v2809
    %v2811 = vpop.f32.mrf.mxu0
    %2812 = vmatprep.mubr.bf16.mxu0 0
    %2813 = vmatmul.mubr.bf16.gmra.mxu0 %v2626
    %v2814 = vpop.f32.mrf.mxu0
    %v2815 = vadd.f32 0.0, %v2814
    %v2816 = vpop.f32.mrf.mxu0
    %v2817 = vpop.f32.mrf.mxu0
    %v2818 = vadd.f32 0.0, %v2817
    %v2819 = vpop.f32.mrf.mxu0
    %2820 = vmatprep.mubr.bf16.mxu0 0
    %2821 = vmatmul.mubr.bf16.gmra.mxu0 %v2627
    %v2822 = vpop.f32.mrf.mxu0
    %v2823 = vadd.f32 0.0, %v2822
    %v2824 = vpop.f32.mrf.mxu0
    %v2825 = vpop.f32.mrf.mxu0
    %v2826 = vadd.f32 0.0, %v2825
    %v2827 = vpop.f32.mrf.mxu0
    %2828 = vmatprep.mubr.bf16.mxu0 0
    %2829 = vmatmul.mubr.bf16.gmra.mxu0 %v2628
    %v2830 = vpop.f32.mrf.mxu0
    %v2831 = vadd.f32 0.0, %v2830
    %v2832 = vpop.f32.mrf.mxu0
    %v2833 = vpop.f32.mrf.mxu0
    %v2834 = vadd.f32 0.0, %v2833
    %v2835 = vpop.f32.mrf.mxu0
    %2836 = vmatprep.mubr.bf16.mxu0 0
    %2837 = vmatmul.mubr.bf16.gmra.mxu0 %v2629
    %v2838 = vpop.f32.mrf.mxu0
    %v2839 = vadd.f32 0.0, %v2838
    %v2840 = vpop.f32.mrf.mxu0
    %v2841 = vpop.f32.mrf.mxu0
    %v2842 = vadd.f32 0.0, %v2841
    %v2843 = vpop.f32.mrf.mxu0
    %2844 = vmatprep.mubr.bf16.mxu0 0
    %2845 = vmatmul.mubr.bf16.gmra.mxu0 %v2630
    %v2846 = vpop.f32.mrf.mxu0
    %v2847 = vadd.f32 0.0, %v2846
    %v2848 = vpop.f32.mrf.mxu0
    %v2849 = vpop.f32.mrf.mxu0
    %v2850 = vadd.f32 0.0, %v2849
    %v2851 = vpop.f32.mrf.mxu0
    %2852 = vmatprep.mubr.bf16.mxu0 0
    %2853 = vmatmul.mubr.bf16.gmra.mxu0 %v2631
    %v2854 = vpop.f32.mrf.mxu0
    %v2855 = vadd.f32 0.0, %v2854
    %v2856 = vpop.f32.mrf.mxu0
    %v2857 = vpop.f32.mrf.mxu0
    %v2858 = vadd.f32 0.0, %v2857
    %v2859 = vpop.f32.mrf.mxu0
    %2860 = vmatprep.mubr.bf16.mxu0 0
    %2861 = vmatmul.mubr.bf16.gmra.mxu0 %v2632
    %v2862 = vpop.f32.mrf.mxu0
    %v2863 = vadd.f32 0.0, %v2862
    %v2864 = vpop.f32.mrf.mxu0
    %v2865 = vpop.f32.mrf.mxu0
    %v2866 = vadd.f32 0.0, %v2865
    %v2867 = vpop.f32.mrf.mxu0
    %2868 = vmatprep.mubr.bf16.mxu0 0
    %2869 = vmatmul.mubr.bf16.gmra.mxu0 %v2633
    %v2870 = vpop.f32.mrf.mxu0
    %v2871 = vadd.f32 0.0, %v2870
    %v2872 = vpop.f32.mrf.mxu0
    %v2873 = vpop.f32.mrf.mxu0
    %v2874 = vadd.f32 0.0, %v2873
    %v2875 = vpop.f32.mrf.mxu0
    %2876 = vmatprep.mubr.bf16.mxu0 0
    %2877 = vmatmul.mubr.bf16.gmra.mxu0 %v2634
    %v2878 = vpop.f32.mrf.mxu0
    %v2879 = vadd.f32 0.0, %v2878
    %v2880 = vpop.f32.mrf.mxu0
    %v2881 = vpop.f32.mrf.mxu0
    %v2882 = vadd.f32 0.0, %v2881
    %v2883 = vpop.f32.mrf.mxu0
    %2884 = vmatprep.mubr.bf16.mxu0 0
    %2885 = vmatmul.mubr.bf16.gmra.mxu0 %v2635
    %v2886 = vpop.f32.mrf.mxu0
    %v2887 = vadd.f32 0.0, %v2886
    %v2888 = vpop.f32.mrf.mxu0
    %v2889 = vpop.f32.mrf.mxu0
    %v2890 = vadd.f32 0.0, %v2889
    %v2891 = vpop.f32.mrf.mxu0
    %2892 = vmatprep.mubr.bf16.mxu0 0
    %2893 = vmatmul.mubr.bf16.gmra.mxu0 %v2636
    %v2894 = vpop.f32.mrf.mxu0
    %v2895 = vadd.f32 0.0, %v2894
    %v2896 = vpop.f32.mrf.mxu0
    %v2897 = vpop.f32.mrf.mxu0
    %v2898 = vadd.f32 0.0, %v2897
    %v2899 = vpop.f32.mrf.mxu0
    %2900 = vmatprep.mubr.bf16.mxu0 0
    %2901 = vmatmul.mubr.bf16.gmra.mxu0 %v2637
    %v2902 = vpop.f32.mrf.mxu0
    %v2903 = vadd.f32 0.0, %v2902
    %v2904 = vpop.f32.mrf.mxu0
    %v2905 = vpop.f32.mrf.mxu0
    %v2906 = vadd.f32 0.0, %v2905
    %v2907 = vpop.f32.mrf.mxu0
    %2908 = vmatprep.mubr.bf16.mxu0 0
    %2909 = vmatmul.mubr.bf16.gmra.mxu0 %v2638
    %v2910 = vpop.f32.mrf.mxu0
    %v2911 = vadd.f32 0.0, %v2910
    %v2912 = vpop.f32.mrf.mxu0
    %v2913 = vpop.f32.mrf.mxu0
    %v2914 = vadd.f32 0.0, %v2913
    %v2915 = vpop.f32.mrf.mxu0
    %2916 = vmatprep.mubr.bf16.mxu0 0
    %2917 = vmatmul.mubr.bf16.gmra.mxu0 %v2639
    %v2918 = vpop.f32.mrf.mxu0
    %v2919 = vadd.f32 0.0, %v2918
    %v2920 = vpop.f32.mrf.mxu0
    %v2921 = vpop.f32.mrf.mxu0
    %v2922 = vadd.f32 0.0, %v2921
    %v2923 = vpop.f32.mrf.mxu0
    %2924 = vmatprep.mubr.bf16.mxu0 0
    %2925 = vmatmul.mubr.bf16.gmra.mxu0 %v2640
    %v2926 = vpop.f32.mrf.mxu0
    %v2927 = vadd.f32 0.0, %v2926
    %v2928 = vpop.f32.mrf.mxu0
    %v2929 = vpop.f32.mrf.mxu0
    %v2930 = vadd.f32 0.0, %v2929
    %v2931 = vpop.f32.mrf.mxu0
    %2932 = vmatprep.mubr.bf16.mxu0 0
    %2933 = vmatmul.mubr.bf16.gmra.mxu0 %v2641
    %v2934 = vpop.f32.mrf.mxu0
    %v2935 = vadd.f32 0.0, %v2934
    %v2936 = vpop.f32.mrf.mxu0
    %v2937 = vpop.f32.mrf.mxu0
    %v2938 = vadd.f32 0.0, %v2937
    %v2939 = vpop.f32.mrf.mxu0
    %2940 = vmatprep.mubr.bf16.mxu0 0
    %2941 = vmatmul.mubr.bf16.gmra.mxu0 %v2642
    %v2942 = vpop.f32.mrf.mxu0
    %v2943 = vadd.f32 0.0, %v2942
    %v2944 = vpop.f32.mrf.mxu0
    %v2945 = vpop.f32.mrf.mxu0
    %v2946 = vadd.f32 0.0, %v2945
    %v2947 = vpop.f32.mrf.mxu0
    %2948 = vmatprep.mubr.bf16.mxu0 0
    %2949 = vmatmul.mubr.bf16.gmra.mxu0 %v2643
    %v2950 = vpop.f32.mrf.mxu0
    %v2951 = vadd.f32 0.0, %v2950
    %v2952 = vpop.f32.mrf.mxu0
    %v2953 = vpop.f32.mrf.mxu0
    %v2954 = vadd.f32 0.0, %v2953
    %v2955 = vpop.f32.mrf.mxu0
    %2956 = vmatprep.mubr.bf16.mxu0 0
    %2957 = vmatmul.mubr.bf16.gmra.mxu0 %v2644
    %v2958 = vpop.f32.mrf.mxu0
    %v2959 = vadd.f32 0.0, %v2958
    %v2960 = vpop.f32.mrf.mxu0
    %v2961 = vpop.f32.mrf.mxu0
    %v2962 = vadd.f32 0.0, %v2961
    %v2963 = vpop.f32.mrf.mxu0
    %2964 = vmatprep.mubr.bf16.mxu0 0
    %2965 = vmatmul.mubr.bf16.gmra.mxu0 %v2645
    %v2966 = vpop.f32.mrf.mxu0
    %v2967 = vadd.f32 0.0, %v2966
    %v2968 = vpop.f32.mrf.mxu0
    %v2969 = vpop.f32.mrf.mxu0
    %v2970 = vadd.f32 0.0, %v2969
    %v2971 = vpop.f32.mrf.mxu0
    %2972 = vmatprep.mubr.bf16.mxu0 0
    %2973 = vmatmul.mubr.bf16.gmra.mxu0 %v2646
    %v2974 = vpop.f32.mrf.mxu0
    %v2975 = vadd.f32 0.0, %v2974
    %v2976 = vpop.f32.mrf.mxu0
    %v2977 = vpop.f32.mrf.mxu0
    %v2978 = vadd.f32 0.0, %v2977
    %v2979 = vpop.f32.mrf.mxu0
    %2980 = vmatprep.mubr.bf16.mxu0 0
    %2981 = vmatmul.mubr.bf16.gmra.mxu0 %v2647
    %v2982 = vpop.f32.mrf.mxu0
    %v2983 = vadd.f32 0.0, %v2982
    %v2984 = vpop.f32.mrf.mxu0
    %v2985 = vpop.f32.mrf.mxu0
    %v2986 = vadd.f32 0.0, %v2985
    %v2987 = vpop.f32.mrf.mxu0
    %2988 = vmatprep.mubr.bf16.mxu0 0
    %2989 = vmatmul.mubr.bf16.gmra.mxu0 %v2648
    %v2990 = vpop.f32.mrf.mxu0
    %v2991 = vadd.f32 0.0, %v2990
    %v2992 = vpop.f32.mrf.mxu0
    %v2993 = vpop.f32.mrf.mxu0
    %v2994 = vadd.f32 0.0, %v2993
    %v2995 = vpop.f32.mrf.mxu0
    %2996 = vmatprep.mubr.bf16.mxu0 0
    %2997 = vmatmul.mubr.bf16.gmra.mxu0 %v2649
    %v2998 = vpop.f32.mrf.mxu0
    %v2999 = vadd.f32 0.0, %v2998
    %v3000 = vpop.f32.mrf.mxu0
    %v3001 = vpop.f32.mrf.mxu0
    %v3002 = vadd.f32 0.0, %v3001
    %v3003 = vpop.f32.mrf.mxu0
    %3004 = vmatprep.mubr.bf16.mxu0 0
    %3005 = vmatmul.mubr.bf16.gmra.mxu0 %v2650
    %v3006 = vpop.f32.mrf.mxu0
    %v3007 = vadd.f32 0.0, %v3006
    %v3008 = vpop.f32.mrf.mxu0
    %v3009 = vpop.f32.mrf.mxu0
    %v3010 = vadd.f32 0.0, %v3009
    %v3011 = vpop.f32.mrf.mxu0
    %3012 = vmatprep.mubr.bf16.mxu0 0
    %3013 = vmatmul.mubr.bf16.gmra.mxu0 %v2651
    %v3014 = vpop.f32.mrf.mxu0
    %v3015 = vadd.f32 0.0, %v3014
    %v3016 = vpop.f32.mrf.mxu0
    %v3017 = vpop.f32.mrf.mxu0
    %v3018 = vadd.f32 0.0, %v3017
    %v3019 = vpop.f32.mrf.mxu0
    %3020 = vdwg.mxu0
    %v3085 = vunpack.c.l.b16 %v1656
    %v3086 = vunpack.c.l.b16 %v1657
    %v3087 = vunpack.c.l.b16 %v1658
    %v3088 = vunpack.c.l.b16 %v1659
    %v3089 = vunpack.c.l.b16 %v1660
    %v3090 = vunpack.c.l.b16 %v1661
    %v3091 = vunpack.c.l.b16 %v1662
    %v3092 = vunpack.c.l.b16 %v1663
    %v3093 = vunpack.c.l.b16 %v1664
    %v3094 = vunpack.c.l.b16 %v1665
    %v3095 = vunpack.c.l.b16 %v1666
    %v3096 = vunpack.c.l.b16 %v1667
    %v3097 = vunpack.c.l.b16 %v1668
    %v3098 = vunpack.c.l.b16 %v1669
    %v3099 = vunpack.c.l.b16 %v1670
    %v3100 = vunpack.c.l.b16 %v1671
    %v3101 = vunpack.c.l.b16 %v1672
    %v3102 = vunpack.c.l.b16 %v1673
    %v3103 = vunpack.c.l.b16 %v1674
    %v3104 = vunpack.c.l.b16 %v1675
    %v3105 = vunpack.c.l.b16 %v1676
    %v3106 = vunpack.c.l.b16 %v1677
    %v3107 = vunpack.c.l.b16 %v1678
    %v3108 = vunpack.c.l.b16 %v1679
    %v3109 = vunpack.c.l.b16 %v1680
    %v3110 = vunpack.c.l.b16 %v1681
    %v3111 = vunpack.c.l.b16 %v1682
    %v3112 = vunpack.c.l.b16 %v1683
    %v3113 = vunpack.c.l.b16 %v1684
    %v3114 = vunpack.c.l.b16 %v1685
    %v3115 = vunpack.c.l.b16 %v1686
    %v3116 = vunpack.c.l.b16 %v1687
    %v3117 = vunpack.c.l.b16 %v1688
    %v3118 = vunpack.c.l.b16 %v1689
    %v3119 = vunpack.c.l.b16 %v1690
    %v3120 = vunpack.c.l.b16 %v1691
    %v3121 = vunpack.c.l.b16 %v1692
    %v3122 = vunpack.c.l.b16 %v1693
    %v3123 = vunpack.c.l.b16 %v1694
    %v3124 = vunpack.c.l.b16 %v1695
    %v3125 = vunpack.c.l.b16 %v1696
    %v3126 = vunpack.c.l.b16 %v1697
    %v3127 = vunpack.c.l.b16 %v1698
    %v3128 = vunpack.c.l.b16 %v1699
    %v3129 = vunpack.c.l.b16 %v1700
    %v3130 = vunpack.c.l.b16 %v1701
    %v3131 = vunpack.c.l.b16 %v1702
    %v3132 = vunpack.c.l.b16 %v1703
    %v3133 = vunpack.c.l.b16 %v1704
    %v3134 = vunpack.c.l.b16 %v1705
    %v3135 = vunpack.c.l.b16 %v1706
    %v3136 = vunpack.c.l.b16 %v1707
    %v3137 = vunpack.c.l.b16 %v1708
    %v3138 = vunpack.c.l.b16 %v1709
    %v3139 = vunpack.c.l.b16 %v1710
    %v3140 = vunpack.c.l.b16 %v1711
    %v3141 = vunpack.c.l.b16 %v1712
    %v3142 = vunpack.c.l.b16 %v1713
    %v3143 = vunpack.c.l.b16 %v1714
    %v3144 = vunpack.c.l.b16 %v1715
    %v3145 = vunpack.c.l.b16 %v1716
    %v3146 = vunpack.c.l.b16 %v1717
    %v3147 = vunpack.c.l.b16 %v1718
    %v3148 = vunpack.c.l.b16 %v1719
    %v3149 = vpack.c.b16 %v3086, %v3085
    %v3150 = vpack.c.b16 %v3088, %v3087
    %v3151 = vpack.c.b16 %v3090, %v3089
    %v3152 = vpack.c.b16 %v3092, %v3091
    %v3153 = vpack.c.b16 %v3094, %v3093
    %v3154 = vpack.c.b16 %v3096, %v3095
    %v3155 = vpack.c.b16 %v3098, %v3097
    %v3156 = vpack.c.b16 %v3100, %v3099
    %v3157 = vpack.c.b16 %v3102, %v3101
    %v3158 = vpack.c.b16 %v3104, %v3103
    %v3159 = vpack.c.b16 %v3106, %v3105
    %v3160 = vpack.c.b16 %v3108, %v3107
    %v3161 = vpack.c.b16 %v3110, %v3109
    %v3162 = vpack.c.b16 %v3112, %v3111
    %v3163 = vpack.c.b16 %v3114, %v3113
    %v3164 = vpack.c.b16 %v3116, %v3115
    %v3165 = vpack.c.b16 %v3118, %v3117
    %v3166 = vpack.c.b16 %v3120, %v3119
    %v3167 = vpack.c.b16 %v3122, %v3121
    %v3168 = vpack.c.b16 %v3124, %v3123
    %v3169 = vpack.c.b16 %v3126, %v3125
    %v3170 = vpack.c.b16 %v3128, %v3127
    %v3171 = vpack.c.b16 %v3130, %v3129
    %v3172 = vpack.c.b16 %v3132, %v3131
    %v3173 = vpack.c.b16 %v3134, %v3133
    %v3174 = vpack.c.b16 %v3136, %v3135
    %v3175 = vpack.c.b16 %v3138, %v3137
    %v3176 = vpack.c.b16 %v3140, %v3139
    %v3177 = vpack.c.b16 %v3142, %v3141
    %v3178 = vpack.c.b16 %v3144, %v3143
    %v3179 = vpack.c.b16 %v3146, %v3145
    %v3180 = vpack.c.b16 %v3148, %v3147
    %v3229 = vunpack.c.l.b16 %v1720
    %v3230 = vunpack.c.l.b16 %v1721
    %v3231 = vunpack.c.l.b16 %v1722
    %v3232 = vunpack.c.l.b16 %v1723
    %v3233 = vunpack.c.l.b16 %v1724
    %v3234 = vunpack.c.l.b16 %v1725
    %v3235 = vunpack.c.l.b16 %v1726
    %v3236 = vunpack.c.l.b16 %v1727
    %v3237 = vunpack.c.l.b16 %v1728
    %v3238 = vunpack.c.l.b16 %v1729
    %v3239 = vunpack.c.l.b16 %v1730
    %v3240 = vunpack.c.l.b16 %v1731
    %v3241 = vunpack.c.l.b16 %v1732
    %v3242 = vunpack.c.l.b16 %v1733
    %v3243 = vunpack.c.l.b16 %v1734
    %v3244 = vunpack.c.l.b16 %v1735
    %v3245 = vpack.c.b16 %v3230, %v3229
    %v3246 = vpack.c.b16 %v3232, %v3231
    %v3247 = vpack.c.b16 %v3234, %v3233
    %v3248 = vpack.c.b16 %v3236, %v3235
    %v3249 = vpack.c.b16 %v3238, %v3237
    %v3250 = vpack.c.b16 %v3240, %v3239
    %v3251 = vpack.c.b16 %v3242, %v3241
    %v3252 = vpack.c.b16 %v3244, %v3243
    %3261 = vmatprep.subr.bf16.mxu0 0
    %3262 = vmatpush1.bf16.msra.mxu0 %v3252
    %3263 = vmatprep.subr.bf16.mxu0 0
    %3264 = vmatpush1.bf16.msra.mxu0 %v3251
    %3265 = vmatprep.subr.bf16.mxu0 0
    %3266 = vmatpush1.bf16.msra.mxu0 %v3250
    %3267 = vmatprep.subr.bf16.mxu0 0
    %3268 = vmatpush1.bf16.msra.mxu0 %v3249
    %3269 = vmatprep.subr.bf16.mxu0 0
    %3270 = vmatpush1.bf16.msra.mxu0 %v3248
    %3271 = vmatprep.subr.bf16.mxu0 0
    %3272 = vmatpush1.bf16.msra.mxu0 %v3247
    %3273 = vmatprep.subr.bf16.mxu0 0
    %3274 = vmatpush1.bf16.msra.mxu0 %v3246
    %3275 = vmatprep.subr.bf16.mxu0 0
    %3276 = vmatpush1.bf16.msra.mxu0 %v3245
    %3277 = vmatprep.subr.bf16.mxu0 0
    %3278 = vmatpush2.bf16.msra.mxu0 0
    %3279 = vmatprep.subr.bf16.mxu0 0
    %3280 = vmatpush2.bf16.msra.mxu0 0
    %3281 = vmatprep.subr.bf16.mxu0 0
    %3282 = vmatpush2.bf16.msra.mxu0 0
    %3283 = vmatprep.subr.bf16.mxu0 0
    %3284 = vmatpush2.bf16.msra.mxu0 0
    %3285 = vmatprep.subr.bf16.mxu0 0
    %3286 = vmatpush2.bf16.msra.mxu0 0
    %3287 = vmatprep.subr.bf16.mxu0 0
    %3288 = vmatpush2.bf16.msra.mxu0 0
    %3289 = vmatprep.subr.bf16.mxu0 0
    %3290 = vmatpush2.bf16.msra.mxu0 0
    %3291 = vmatprep.subr.bf16.mxu0 0
    %3292 = vmatpush2.bf16.msra.mxu0 0
    %3293 = vmatprep.mubr.bf16.mxu0 0
    %3294 = vmatmul.mubr.bf16.gmra.mxu0 %v3149
    %v3295 = vpop.f32.mrf.mxu0
    %v3296 = vadd.f32 %v2767, %v3295
    %v3297 = vpop.f32.mrf.mxu0
    %v3298 = vpop.f32.mrf.mxu0
    %v3299 = vadd.f32 %v2770, %v3298
    %v3300 = vpop.f32.mrf.mxu0
    %3301 = vmatprep.mubr.bf16.mxu0 0
    %3302 = vmatmul.mubr.bf16.gmra.mxu0 %v3150
    %v3303 = vpop.f32.mrf.mxu0
    %v3304 = vadd.f32 %v2775, %v3303
    %v3305 = vpop.f32.mrf.mxu0
    %v3306 = vpop.f32.mrf.mxu0
    %v3307 = vadd.f32 %v2778, %v3306
    %v3308 = vpop.f32.mrf.mxu0
    %3309 = vmatprep.mubr.bf16.mxu0 0
    %3310 = vmatmul.mubr.bf16.gmra.mxu0 %v3151
    %v3311 = vpop.f32.mrf.mxu0
    %v3312 = vadd.f32 %v2783, %v3311
    %v3313 = vpop.f32.mrf.mxu0
    %v3314 = vpop.f32.mrf.mxu0
    %v3315 = vadd.f32 %v2786, %v3314
    %v3316 = vpop.f32.mrf.mxu0
    %3317 = vmatprep.mubr.bf16.mxu0 0
    %3318 = vmatmul.mubr.bf16.gmra.mxu0 %v3152
    %v3319 = vpop.f32.mrf.mxu0
    %v3320 = vadd.f32 %v2791, %v3319
    %v3321 = vpop.f32.mrf.mxu0
    %v3322 = vpop.f32.mrf.mxu0
    %v3323 = vadd.f32 %v2794, %v3322
    %v3324 = vpop.f32.mrf.mxu0
    %3325 = vmatprep.mubr.bf16.mxu0 0
    %3326 = vmatmul.mubr.bf16.gmra.mxu0 %v3153
    %v3327 = vpop.f32.mrf.mxu0
    %v3328 = vadd.f32 %v2799, %v3327
    %v3329 = vpop.f32.mrf.mxu0
    %v3330 = vpop.f32.mrf.mxu0
    %v3331 = vadd.f32 %v2802, %v3330
    %v3332 = vpop.f32.mrf.mxu0
    %3333 = vmatprep.mubr.bf16.mxu0 0
    %3334 = vmatmul.mubr.bf16.gmra.mxu0 %v3154
    %v3335 = vpop.f32.mrf.mxu0
    %v3336 = vadd.f32 %v2807, %v3335
    %v3337 = vpop.f32.mrf.mxu0
    %v3338 = vpop.f32.mrf.mxu0
    %v3339 = vadd.f32 %v2810, %v3338
    %v3340 = vpop.f32.mrf.mxu0
    %3341 = vmatprep.mubr.bf16.mxu0 0
    %3342 = vmatmul.mubr.bf16.gmra.mxu0 %v3155
    %v3343 = vpop.f32.mrf.mxu0
    %v3344 = vadd.f32 %v2815, %v3343
    %v3345 = vpop.f32.mrf.mxu0
    %v3346 = vpop.f32.mrf.mxu0
    %v3347 = vadd.f32 %v2818, %v3346
    %v3348 = vpop.f32.mrf.mxu0
    %3349 = vmatprep.mubr.bf16.mxu0 0
    %3350 = vmatmul.mubr.bf16.gmra.mxu0 %v3156
    %v3351 = vpop.f32.mrf.mxu0
    %v3352 = vadd.f32 %v2823, %v3351
    %v3353 = vpop.f32.mrf.mxu0
    %v3354 = vpop.f32.mrf.mxu0
    %v3355 = vadd.f32 %v2826, %v3354
    %v3356 = vpop.f32.mrf.mxu0
    %3357 = vmatprep.mubr.bf16.mxu0 0
    %3358 = vmatmul.mubr.bf16.gmra.mxu0 %v3157
    %v3359 = vpop.f32.mrf.mxu0
    %v3360 = vadd.f32 %v2831, %v3359
    %v3361 = vpop.f32.mrf.mxu0
    %v3362 = vpop.f32.mrf.mxu0
    %v3363 = vadd.f32 %v2834, %v3362
    %v3364 = vpop.f32.mrf.mxu0
    %3365 = vmatprep.mubr.bf16.mxu0 0
    %3366 = vmatmul.mubr.bf16.gmra.mxu0 %v3158
    %v3367 = vpop.f32.mrf.mxu0
    %v3368 = vadd.f32 %v2839, %v3367
    %v3369 = vpop.f32.mrf.mxu0
    %v3370 = vpop.f32.mrf.mxu0
    %v3371 = vadd.f32 %v2842, %v3370
    %v3372 = vpop.f32.mrf.mxu0
    %3373 = vmatprep.mubr.bf16.mxu0 0
    %3374 = vmatmul.mubr.bf16.gmra.mxu0 %v3159
    %v3375 = vpop.f32.mrf.mxu0
    %v3376 = vadd.f32 %v2847, %v3375
    %v3377 = vpop.f32.mrf.mxu0
    %v3378 = vpop.f32.mrf.mxu0
    %v3379 = vadd.f32 %v2850, %v3378
    %v3380 = vpop.f32.mrf.mxu0
    %3381 = vmatprep.mubr.bf16.mxu0 0
    %3382 = vmatmul.mubr.bf16.gmra.mxu0 %v3160
    %v3383 = vpop.f32.mrf.mxu0
    %v3384 = vadd.f32 %v2855, %v3383
    %v3385 = vpop.f32.mrf.mxu0
    %v3386 = vpop.f32.mrf.mxu0
    %v3387 = vadd.f32 %v2858, %v3386
    %v3388 = vpop.f32.mrf.mxu0
    %3389 = vmatprep.mubr.bf16.mxu0 0
    %3390 = vmatmul.mubr.bf16.gmra.mxu0 %v3161
    %v3391 = vpop.f32.mrf.mxu0
    %v3392 = vadd.f32 %v2863, %v3391
    %v3393 = vpop.f32.mrf.mxu0
    %v3394 = vpop.f32.mrf.mxu0
    %v3395 = vadd.f32 %v2866, %v3394
    %v3396 = vpop.f32.mrf.mxu0
    %3397 = vmatprep.mubr.bf16.mxu0 0
    %3398 = vmatmul.mubr.bf16.gmra.mxu0 %v3162
    %v3399 = vpop.f32.mrf.mxu0
    %v3400 = vadd.f32 %v2871, %v3399
    %v3401 = vpop.f32.mrf.mxu0
    %v3402 = vpop.f32.mrf.mxu0
    %v3403 = vadd.f32 %v2874, %v3402
    %v3404 = vpop.f32.mrf.mxu0
    %3405 = vmatprep.mubr.bf16.mxu0 0
    %3406 = vmatmul.mubr.bf16.gmra.mxu0 %v3163
    %v3407 = vpop.f32.mrf.mxu0
    %v3408 = vadd.f32 %v2879, %v3407
    %v3409 = vpop.f32.mrf.mxu0
    %v3410 = vpop.f32.mrf.mxu0
    %v3411 = vadd.f32 %v2882, %v3410
    %v3412 = vpop.f32.mrf.mxu0
    %3413 = vmatprep.mubr.bf16.mxu0 0
    %3414 = vmatmul.mubr.bf16.gmra.mxu0 %v3164
    %v3415 = vpop.f32.mrf.mxu0
    %v3416 = vadd.f32 %v2887, %v3415
    %v3417 = vpop.f32.mrf.mxu0
    %v3418 = vpop.f32.mrf.mxu0
    %v3419 = vadd.f32 %v2890, %v3418
    %v3420 = vpop.f32.mrf.mxu0
    %3421 = vmatprep.mubr.bf16.mxu0 0
    %3422 = vmatmul.mubr.bf16.gmra.mxu0 %v3165
    %v3423 = vpop.f32.mrf.mxu0
    %v3424 = vadd.f32 %v2895, %v3423
    %v3425 = vpop.f32.mrf.mxu0
    %v3426 = vpop.f32.mrf.mxu0
    %v3427 = vadd.f32 %v2898, %v3426
    %v3428 = vpop.f32.mrf.mxu0
    %3429 = vmatprep.mubr.bf16.mxu0 0
    %3430 = vmatmul.mubr.bf16.gmra.mxu0 %v3166
    %v3431 = vpop.f32.mrf.mxu0
    %v3432 = vadd.f32 %v2903, %v3431
    %v3433 = vpop.f32.mrf.mxu0
    %v3434 = vpop.f32.mrf.mxu0
    %v3435 = vadd.f32 %v2906, %v3434
    %v3436 = vpop.f32.mrf.mxu0
    %3437 = vmatprep.mubr.bf16.mxu0 0
    %3438 = vmatmul.mubr.bf16.gmra.mxu0 %v3167
    %v3439 = vpop.f32.mrf.mxu0
    %v3440 = vadd.f32 %v2911, %v3439
    %v3441 = vpop.f32.mrf.mxu0
    %v3442 = vpop.f32.mrf.mxu0
    %v3443 = vadd.f32 %v2914, %v3442
    %v3444 = vpop.f32.mrf.mxu0
    %3445 = vmatprep.mubr.bf16.mxu0 0
    %3446 = vmatmul.mubr.bf16.gmra.mxu0 %v3168
    %v3447 = vpop.f32.mrf.mxu0
    %v3448 = vadd.f32 %v2919, %v3447
    %v3449 = vpop.f32.mrf.mxu0
    %v3450 = vpop.f32.mrf.mxu0
    %v3451 = vadd.f32 %v2922, %v3450
    %v3452 = vpop.f32.mrf.mxu0
    %3453 = vmatprep.mubr.bf16.mxu0 0
    %3454 = vmatmul.mubr.bf16.gmra.mxu0 %v3169
    %v3455 = vpop.f32.mrf.mxu0
    %v3456 = vadd.f32 %v2927, %v3455
    %v3457 = vpop.f32.mrf.mxu0
    %v3458 = vpop.f32.mrf.mxu0
    %v3459 = vadd.f32 %v2930, %v3458
    %v3460 = vpop.f32.mrf.mxu0
    %3461 = vmatprep.mubr.bf16.mxu0 0
    %3462 = vmatmul.mubr.bf16.gmra.mxu0 %v3170
    %v3463 = vpop.f32.mrf.mxu0
    %v3464 = vadd.f32 %v2935, %v3463
    %v3465 = vpop.f32.mrf.mxu0
    %v3466 = vpop.f32.mrf.mxu0
    %v3467 = vadd.f32 %v2938, %v3466
    %v3468 = vpop.f32.mrf.mxu0
    %3469 = vmatprep.mubr.bf16.mxu0 0
    %3470 = vmatmul.mubr.bf16.gmra.mxu0 %v3171
    %v3471 = vpop.f32.mrf.mxu0
    %v3472 = vadd.f32 %v2943, %v3471
    %v3473 = vpop.f32.mrf.mxu0
    %v3474 = vpop.f32.mrf.mxu0
    %v3475 = vadd.f32 %v2946, %v3474
    %v3476 = vpop.f32.mrf.mxu0
    %3477 = vmatprep.mubr.bf16.mxu0 0
    %3478 = vmatmul.mubr.bf16.gmra.mxu0 %v3172
    %v3479 = vpop.f32.mrf.mxu0
    %v3480 = vadd.f32 %v2951, %v3479
    %v3481 = vpop.f32.mrf.mxu0
    %v3482 = vpop.f32.mrf.mxu0
    %v3483 = vadd.f32 %v2954, %v3482
    %v3484 = vpop.f32.mrf.mxu0
    %3485 = vmatprep.mubr.bf16.mxu0 0
    %3486 = vmatmul.mubr.bf16.gmra.mxu0 %v3173
    %v3487 = vpop.f32.mrf.mxu0
    %v3488 = vadd.f32 %v2959, %v3487
    %v3489 = vpop.f32.mrf.mxu0
    %v3490 = vpop.f32.mrf.mxu0
    %v3491 = vadd.f32 %v2962, %v3490
    %v3492 = vpop.f32.mrf.mxu0
    %3493 = vmatprep.mubr.bf16.mxu0 0
    %3494 = vmatmul.mubr.bf16.gmra.mxu0 %v3174
    %v3495 = vpop.f32.mrf.mxu0
    %v3496 = vadd.f32 %v2967, %v3495
    %v3497 = vpop.f32.mrf.mxu0
    %v3498 = vpop.f32.mrf.mxu0
    %v3499 = vadd.f32 %v2970, %v3498
    %v3500 = vpop.f32.mrf.mxu0
    %3501 = vmatprep.mubr.bf16.mxu0 0
    %3502 = vmatmul.mubr.bf16.gmra.mxu0 %v3175
    %v3503 = vpop.f32.mrf.mxu0
    %v3504 = vadd.f32 %v2975, %v3503
    %v3505 = vpop.f32.mrf.mxu0
    %v3506 = vpop.f32.mrf.mxu0
    %v3507 = vadd.f32 %v2978, %v3506
    %v3508 = vpop.f32.mrf.mxu0
    %3509 = vmatprep.mubr.bf16.mxu0 0
    %3510 = vmatmul.mubr.bf16.gmra.mxu0 %v3176
    %v3511 = vpop.f32.mrf.mxu0
    %v3512 = vadd.f32 %v2983, %v3511
    %v3513 = vpop.f32.mrf.mxu0
    %v3514 = vpop.f32.mrf.mxu0
    %v3515 = vadd.f32 %v2986, %v3514
    %v3516 = vpop.f32.mrf.mxu0
    %3517 = vmatprep.mubr.bf16.mxu0 0
    %3518 = vmatmul.mubr.bf16.gmra.mxu0 %v3177
    %v3519 = vpop.f32.mrf.mxu0
    %v3520 = vadd.f32 %v2991, %v3519
    %v3521 = vpop.f32.mrf.mxu0
    %v3522 = vpop.f32.mrf.mxu0
    %v3523 = vadd.f32 %v2994, %v3522
    %v3524 = vpop.f32.mrf.mxu0
    %3525 = vmatprep.mubr.bf16.mxu0 0
    %3526 = vmatmul.mubr.bf16.gmra.mxu0 %v3178
    %v3527 = vpop.f32.mrf.mxu0
    %v3528 = vadd.f32 %v2999, %v3527
    %v3529 = vpop.f32.mrf.mxu0
    %v3530 = vpop.f32.mrf.mxu0
    %v3531 = vadd.f32 %v3002, %v3530
    %v3532 = vpop.f32.mrf.mxu0
    %3533 = vmatprep.mubr.bf16.mxu0 0
    %3534 = vmatmul.mubr.bf16.gmra.mxu0 %v3179
    %v3535 = vpop.f32.mrf.mxu0
    %v3536 = vadd.f32 %v3007, %v3535
    %v3537 = vpop.f32.mrf.mxu0
    %v3538 = vpop.f32.mrf.mxu0
    %v3539 = vadd.f32 %v3010, %v3538
    %v3540 = vpop.f32.mrf.mxu0
    %3541 = vmatprep.mubr.bf16.mxu0 0
    %3542 = vmatmul.mubr.bf16.gmra.mxu0 %v3180
    %v3543 = vpop.f32.mrf.mxu0
    %v3544 = vadd.f32 %v3015, %v3543
    %v3545 = vpop.f32.mrf.mxu0
    %v3546 = vpop.f32.mrf.mxu0
    %v3547 = vadd.f32 %v3018, %v3546
    %v3548 = vpop.f32.mrf.mxu0
    %3549 = vdwg.mxu0
    %v3550 = vld [vmem:[#allocation2] sm:$0xe]
    %v3551 = vld [vmem:[#allocation2 + $0xc] sm:$0xe]
    %v3552 = vld [vmem:[#allocation2 + $0x18] sm:$0xe]
    %v3553 = vld [vmem:[#allocation2 + $0x24] sm:$0xe]
    %v3554 = vld [vmem:[#allocation2 + $0x30] sm:$0xe]
    %v3555 = vld [vmem:[#allocation2 + $0x3c] sm:$0xe]
    %v3556 = vld [vmem:[#allocation2 + $0x48] sm:$0xe]
    %v3557 = vld [vmem:[#allocation2 + $0x54] sm:$0xe]
    %v3558 = vld [vmem:[#allocation2 + $0x60] sm:$0xe]
    %v3559 = vld [vmem:[#allocation2 + $0x6c] sm:$0xe]
    %v3560 = vld [vmem:[#allocation2 + $0x78] sm:$0xe]
    %v3561 = vld [vmem:[#allocation2 + $0x84] sm:$0xe]
    %v3562 = vld [vmem:[#allocation2 + $0x90] sm:$0xe]
    %v3563 = vld [vmem:[#allocation2 + $0x9c] sm:$0xe]
    %v3564 = vld [vmem:[#allocation2 + $0xa8] sm:$0xe]
    %v3565 = vld [vmem:[#allocation2 + $0xb4] sm:$0xe]
    %v3566 = vld [vmem:[#allocation2 + $0xd8] sm:$0xe]
    %v3567 = vld [vmem:[#allocation2 + $0xe4] sm:$0xe]
    %v3568 = vld [vmem:[#allocation2 + $0xf0] sm:$0xe]
    %v3569 = vld [vmem:[#allocation2 + $0xfc] sm:$0xe]
    %v3570 = vld [vmem:[#allocation2 + $0x108] sm:$0xe]
    %v3571 = vld [vmem:[#allocation2 + $0x114] sm:$0xe]
    %v3572 = vld [vmem:[#allocation2 + $0x120] sm:$0xe]
    %v3573 = vld [vmem:[#allocation2 + $0x12c] sm:$0xe]
    %v3574 = vld [vmem:[#allocation2 + $0x138] sm:$0xe]
    %v3575 = vld [vmem:[#allocation2 + $0x144] sm:$0xe]
    %v3576 = vld [vmem:[#allocation2 + $0x150] sm:$0xe]
    %v3577 = vld [vmem:[#allocation2 + $0x15c] sm:$0xe]
    %v3578 = vld [vmem:[#allocation2 + $0x168] sm:$0xe]
    %v3579 = vld [vmem:[#allocation2 + $0x174] sm:$0xe]
    %v3580 = vld [vmem:[#allocation2 + $0x180] sm:$0xe]
    %v3581 = vld [vmem:[#allocation2 + $0x18c] sm:$0xe]
    %vm3646 = vcmask 1042432
    %vm3647 = vcmask 1046532
    %vm3648 = vmor %vm3646, %vm3647
    %v3649 = vrot.slane %v3550, 5
    %v3650 = vrot.slane %v3649, 4
    %v3651 = vrot.slane %v1657, 5
    %v3652 = vsel %vm3648, %v3650, %v3651
    %v3653 = vrot.slane %v3651, 4
    %v3654 = vrot.slane %v1736, 5
    %v3655 = vsel %vm3648, %v3653, %v3654
    %v3656 = vrot.slane %v3551, 5
    %v3657 = vrot.slane %v3656, 4
    %v3658 = vrot.slane %v1659, 5
    %v3659 = vsel %vm3648, %v3657, %v3658
    %v3660 = vrot.slane %v3658, 4
    %v3661 = vrot.slane %v1737, 5
    %v3662 = vsel %vm3648, %v3660, %v3661
    %v3663 = vrot.slane %v3552, 5
    %v3664 = vrot.slane %v3663, 4
    %v3665 = vrot.slane %v1661, 5
    %v3666 = vsel %vm3648, %v3664, %v3665
    %v3667 = vrot.slane %v3665, 4
    %v3668 = vrot.slane %v1738, 5
    %v3669 = vsel %vm3648, %v3667, %v3668
    %v3670 = vrot.slane %v3553, 5
    %v3671 = vrot.slane %v3670, 4
    %v3672 = vrot.slane %v1663, 5
    %v3673 = vsel %vm3648, %v3671, %v3672
    %v3674 = vrot.slane %v3672, 4
    %v3675 = vrot.slane %v1739, 5
    %v3676 = vsel %vm3648, %v3674, %v3675
    %v3677 = vrot.slane %v3554, 5
    %v3678 = vrot.slane %v3677, 4
    %v3679 = vrot.slane %v1665, 5
    %v3680 = vsel %vm3648, %v3678, %v3679
    %v3681 = vrot.slane %v3679, 4
    %v3682 = vrot.slane %v1740, 5
    %v3683 = vsel %vm3648, %v3681, %v3682
    %v3684 = vrot.slane %v3555, 5
    %v3685 = vrot.slane %v3684, 4
    %v3686 = vrot.slane %v1667, 5
    %v3687 = vsel %vm3648, %v3685, %v3686
    %v3688 = vrot.slane %v3686, 4
    %v3689 = vrot.slane %v1741, 5
    %v3690 = vsel %vm3648, %v3688, %v3689
    %v3691 = vrot.slane %v3556, 5
    %v3692 = vrot.slane %v3691, 4
    %v3693 = vrot.slane %v1669, 5
    %v3694 = vsel %vm3648, %v3692, %v3693
    %v3695 = vrot.slane %v3693, 4
    %v3696 = vrot.slane %v1742, 5
    %v3697 = vsel %vm3648, %v3695, %v3696
    %v3698 = vrot.slane %v3557, 5
    %v3699 = vrot.slane %v3698, 4
    %v3700 = vrot.slane %v1671, 5
    %v3701 = vsel %vm3648, %v3699, %v3700
    %v3702 = vrot.slane %v3700, 4
    %v3703 = vrot.slane %v1743, 5
    %v3704 = vsel %vm3648, %v3702, %v3703
    %v3705 = vrot.slane %v3558, 5
    %v3706 = vrot.slane %v3705, 4
    %v3707 = vrot.slane %v1673, 5
    %v3708 = vsel %vm3648, %v3706, %v3707
    %v3709 = vrot.slane %v3707, 4
    %v3710 = vrot.slane %v1744, 5
    %v3711 = vsel %vm3648, %v3709, %v3710
    %v3712 = vrot.slane %v3559, 5
    %v3713 = vrot.slane %v3712, 4
    %v3714 = vrot.slane %v1675, 5
    %v3715 = vsel %vm3648, %v3713, %v3714
    %v3716 = vrot.slane %v3714, 4
    %v3717 = vrot.slane %v1745, 5
    %v3718 = vsel %vm3648, %v3716, %v3717
    %v3719 = vrot.slane %v3560, 5
    %v3720 = vrot.slane %v3719, 4
    %v3721 = vrot.slane %v1677, 5
    %v3722 = vsel %vm3648, %v3720, %v3721
    %v3723 = vrot.slane %v3721, 4
    %v3724 = vrot.slane %v1746, 5
    %v3725 = vsel %vm3648, %v3723, %v3724
    %v3726 = vrot.slane %v3561, 5
    %v3727 = vrot.slane %v3726, 4
    %v3728 = vrot.slane %v1679, 5
    %v3729 = vsel %vm3648, %v3727, %v3728
    %v3730 = vrot.slane %v3728, 4
    %v3731 = vrot.slane %v1747, 5
    %v3732 = vsel %vm3648, %v3730, %v3731
    %v3733 = vrot.slane %v3562, 5
    %v3734 = vrot.slane %v3733, 4
    %v3735 = vrot.slane %v1681, 5
    %v3736 = vsel %vm3648, %v3734, %v3735
    %v3737 = vrot.slane %v3735, 4
    %v3738 = vrot.slane %v1748, 5
    %v3739 = vsel %vm3648, %v3737, %v3738
    %v3740 = vrot.slane %v3563, 5
    %v3741 = vrot.slane %v3740, 4
    %v3742 = vrot.slane %v1683, 5
    %v3743 = vsel %vm3648, %v3741, %v3742
    %v3744 = vrot.slane %v3742, 4
    %v3745 = vrot.slane %v1749, 5
    %v3746 = vsel %vm3648, %v3744, %v3745
    %v3747 = vrot.slane %v3564, 5
    %v3748 = vrot.slane %v3747, 4
    %v3749 = vrot.slane %v1685, 5
    %v3750 = vsel %vm3648, %v3748, %v3749
    %v3751 = vrot.slane %v3749, 4
    %v3752 = vrot.slane %v1750, 5
    %v3753 = vsel %vm3648, %v3751, %v3752
    %v3754 = vrot.slane %v3565, 5
    %v3755 = vrot.slane %v3754, 4
    %v3756 = vrot.slane %v1687, 5
    %v3757 = vsel %vm3648, %v3755, %v3756
    %v3758 = vrot.slane %v3756, 4
    %v3759 = vrot.slane %v1751, 5
    %v3760 = vsel %vm3648, %v3758, %v3759
    %v3761 = vrot.slane %v3566, 5
    %v3762 = vrot.slane %v3761, 4
    %v3763 = vrot.slane %v1689, 5
    %v3764 = vsel %vm3648, %v3762, %v3763
    %v3765 = vrot.slane %v3763, 4
    %v3766 = vrot.slane %v1752, 5
    %v3767 = vsel %vm3648, %v3765, %v3766
    %v3768 = vrot.slane %v3567, 5
    %v3769 = vrot.slane %v3768, 4
    %v3770 = vrot.slane %v1691, 5
    %v3771 = vsel %vm3648, %v3769, %v3770
    %v3772 = vrot.slane %v3770, 4
    %v3773 = vrot.slane %v1753, 5
    %v3774 = vsel %vm3648, %v3772, %v3773
    %v3775 = vrot.slane %v3568, 5
    %v3776 = vrot.slane %v3775, 4
    %v3777 = vrot.slane %v1693, 5
    %v3778 = vsel %vm3648, %v3776, %v3777
    %v3779 = vrot.slane %v3777, 4
    %v3780 = vrot.slane %v1754, 5
    %v3781 = vsel %vm3648, %v3779, %v3780
    %v3782 = vrot.slane %v3569, 5
    %v3783 = vrot.slane %v3782, 4
    %v3784 = vrot.slane %v1695, 5
    %v3785 = vsel %vm3648, %v3783, %v3784
    %v3786 = vrot.slane %v3784, 4
    %v3787 = vrot.slane %v1755, 5
    %v3788 = vsel %vm3648, %v3786, %v3787
    %v3789 = vrot.slane %v3570, 5
    %v3790 = vrot.slane %v3789, 4
    %v3791 = vrot.slane %v1697, 5
    %v3792 = vsel %vm3648, %v3790, %v3791
    %v3793 = vrot.slane %v3791, 4
    %v3794 = vrot.slane %v1756, 5
    %v3795 = vsel %vm3648, %v3793, %v3794
    %v3796 = vrot.slane %v3571, 5
    %v3797 = vrot.slane %v3796, 4
    %v3798 = vrot.slane %v1699, 5
    %v3799 = vsel %vm3648, %v3797, %v3798
    %v3800 = vrot.slane %v3798, 4
    %v3801 = vrot.slane %v1757, 5
    %v3802 = vsel %vm3648, %v3800, %v3801
    %v3803 = vrot.slane %v3572, 5
    %v3804 = vrot.slane %v3803, 4
    %v3805 = vrot.slane %v1701, 5
    %v3806 = vsel %vm3648, %v3804, %v3805
    %v3807 = vrot.slane %v3805, 4
    %v3808 = vrot.slane %v1758, 5
    %v3809 = vsel %vm3648, %v3807, %v3808
    %v3810 = vrot.slane %v3573, 5
    %v3811 = vrot.slane %v3810, 4
    %v3812 = vrot.slane %v1703, 5
    %v3813 = vsel %vm3648, %v3811, %v3812
    %v3814 = vrot.slane %v3812, 4
    %v3815 = vrot.slane %v1759, 5
    %v3816 = vsel %vm3648, %v3814, %v3815
    %v3817 = vrot.slane %v3574, 5
    %v3818 = vrot.slane %v3817, 4
    %v3819 = vrot.slane %v1705, 5
    %v3820 = vsel %vm3648, %v3818, %v3819
    %v3821 = vrot.slane %v3819, 4
    %v3822 = vrot.slane %v1760, 5
    %v3823 = vsel %vm3648, %v3821, %v3822
    %v3824 = vrot.slane %v3575, 5
    %v3825 = vrot.slane %v3824, 4
    %v3826 = vrot.slane %v1707, 5
    %v3827 = vsel %vm3648, %v3825, %v3826
    %v3828 = vrot.slane %v3826, 4
    %v3829 = vrot.slane %v1761, 5
    %v3830 = vsel %vm3648, %v3828, %v3829
    %v3831 = vrot.slane %v3576, 5
    %v3832 = vrot.slane %v3831, 4
    %v3833 = vrot.slane %v1709, 5
    %v3834 = vsel %vm3648, %v3832, %v3833
    %v3835 = vrot.slane %v3833, 4
    %v3836 = vrot.slane %v1762, 5
    %v3837 = vsel %vm3648, %v3835, %v3836
    %v3838 = vrot.slane %v3577, 5
    %v3839 = vrot.slane %v3838, 4
    %v3840 = vrot.slane %v1711, 5
    %v3841 = vsel %vm3648, %v3839, %v3840
    %v3842 = vrot.slane %v3840, 4
    %v3843 = vrot.slane %v1763, 5
    %v3844 = vsel %vm3648, %v3842, %v3843
    %v3845 = vrot.slane %v3578, 5
    %v3846 = vrot.slane %v3845, 4
    %v3847 = vrot.slane %v1713, 5
    %v3848 = vsel %vm3648, %v3846, %v3847
    %v3849 = vrot.slane %v3847, 4
    %v3850 = vrot.slane %v1764, 5
    %v3851 = vsel %vm3648, %v3849, %v3850
    %v3852 = vrot.slane %v3579, 5
    %v3853 = vrot.slane %v3852, 4
    %v3854 = vrot.slane %v1715, 5
    %v3855 = vsel %vm3648, %v3853, %v3854
    %v3856 = vrot.slane %v3854, 4
    %v3857 = vrot.slane %v1765, 5
    %v3858 = vsel %vm3648, %v3856, %v3857
    %v3859 = vrot.slane %v3580, 5
    %v3860 = vrot.slane %v3859, 4
    %v3861 = vrot.slane %v1717, 5
    %v3862 = vsel %vm3648, %v3860, %v3861
    %v3863 = vrot.slane %v3861, 4
    %v3864 = vrot.slane %v1766, 5
    %v3865 = vsel %vm3648, %v3863, %v3864
    %v3866 = vrot.slane %v3581, 5
    %v3867 = vrot.slane %v3866, 4
    %v3868 = vrot.slane %v1719, 5
    %v3869 = vsel %vm3648, %v3867, %v3868
    %v3870 = vrot.slane %v3868, 4
    %v3871 = vrot.slane %v1767, 5
    %v3872 = vsel %vm3648, %v3870, %v3871
    %s3873 = scalar_lea.vmem [#allocation6], 128
    %v3874 = vld [vmem:[%s3873] sm:$0xf]
    %v3875 = vld [vmem:[%s3873 + $0x4] sm:$0xf]
    %v3876 = vld [vmem:[%s3873 + $0x8] sm:$0xf]
    %v3877 = vld [vmem:[%s3873 + $0xc] sm:$0xf]
    %v3878 = vld [vmem:[%s3873 + $0x10] sm:$0xf]
    %v3879 = vld [vmem:[%s3873 + $0x14] sm:$0xf]
    %v3880 = vld [vmem:[%s3873 + $0x18] sm:$0xf]
    %v3881 = vld [vmem:[%s3873 + $0x1c] sm:$0xf]
    %v3882 = vld [vmem:[%s3873 + $0x20] sm:$0xf]
    %v3883 = vld [vmem:[%s3873 + $0x24] sm:$0xf]
    %v3884 = vld [vmem:[%s3873 + $0x28] sm:$0xf]
    %v3885 = vld [vmem:[%s3873 + $0x2c] sm:$0xf]
    %v3886 = vld [vmem:[%s3873 + $0x30] sm:$0xf]
    %v3887 = vld [vmem:[%s3873 + $0x34] sm:$0xf]
    %v3888 = vld [vmem:[%s3873 + $0x38] sm:$0xf]
    %v3889 = vld [vmem:[%s3873 + $0x3c] sm:$0xf]
    %v3890 = vunpack.c.l.b16 %v3652
    %v3891 = vunpack.c.l.b16 %v3655
    %v3892 = vunpack.c.l.b16 %v3659
    %v3893 = vunpack.c.l.b16 %v3662
    %v3894 = vunpack.c.l.b16 %v3666
    %v3895 = vunpack.c.l.b16 %v3669
    %v3896 = vunpack.c.l.b16 %v3673
    %v3897 = vunpack.c.l.b16 %v3676
    %v3898 = vunpack.c.l.b16 %v3680
    %v3899 = vunpack.c.l.b16 %v3683
    %v3900 = vunpack.c.l.b16 %v3687
    %v3901 = vunpack.c.l.b16 %v3690
    %v3902 = vunpack.c.l.b16 %v3694
    %v3903 = vunpack.c.l.b16 %v3697
    %v3904 = vunpack.c.l.b16 %v3701
    %v3905 = vunpack.c.l.b16 %v3704
    %v3906 = vunpack.c.l.b16 %v3708
    %v3907 = vunpack.c.l.b16 %v3711
    %v3908 = vunpack.c.l.b16 %v3715
    %v3909 = vunpack.c.l.b16 %v3718
    %v3910 = vunpack.c.l.b16 %v3722
    %v3911 = vunpack.c.l.b16 %v3725
    %v3912 = vunpack.c.l.b16 %v3729
    %v3913 = vunpack.c.l.b16 %v3732
    %v3914 = vunpack.c.l.b16 %v3736
    %v3915 = vunpack.c.l.b16 %v3739
    %v3916 = vunpack.c.l.b16 %v3743
    %v3917 = vunpack.c.l.b16 %v3746
    %v3918 = vunpack.c.l.b16 %v3750
    %v3919 = vunpack.c.l.b16 %v3753
    %v3920 = vunpack.c.l.b16 %v3757
    %v3921 = vunpack.c.l.b16 %v3760
    %v3922 = vunpack.c.l.b16 %v3764
    %v3923 = vunpack.c.l.b16 %v3767
    %v3924 = vunpack.c.l.b16 %v3771
    %v3925 = vunpack.c.l.b16 %v3774
    %v3926 = vunpack.c.l.b16 %v3778
    %v3927 = vunpack.c.l.b16 %v3781
    %v3928 = vunpack.c.l.b16 %v3785
    %v3929 = vunpack.c.l.b16 %v3788
    %v3930 = vunpack.c.l.b16 %v3792
    %v3931 = vunpack.c.l.b16 %v3795
    %v3932 = vunpack.c.l.b16 %v3799
    %v3933 = vunpack.c.l.b16 %v3802
    %v3934 = vunpack.c.l.b16 %v3806
    %v3935 = vunpack.c.l.b16 %v3809
    %v3936 = vunpack.c.l.b16 %v3813
    %v3937 = vunpack.c.l.b16 %v3816
    %v3938 = vunpack.c.l.b16 %v3820
    %v3939 = vunpack.c.l.b16 %v3823
    %v3940 = vunpack.c.l.b16 %v3827
    %v3941 = vunpack.c.l.b16 %v3830
    %v3942 = vunpack.c.l.b16 %v3834
    %v3943 = vunpack.c.l.b16 %v3837
    %v3944 = vunpack.c.l.b16 %v3841
    %v3945 = vunpack.c.l.b16 %v3844
    %v3946 = vunpack.c.l.b16 %v3848
    %v3947 = vunpack.c.l.b16 %v3851
    %v3948 = vunpack.c.l.b16 %v3855
    %v3949 = vunpack.c.l.b16 %v3858
    %v3950 = vunpack.c.l.b16 %v3862
    %v3951 = vunpack.c.l.b16 %v3865
    %v3952 = vunpack.c.l.b16 %v3869
    %v3953 = vunpack.c.l.b16 %v3872
    %v3954 = vpack.c.b16 %v3891, %v3890
    %v3955 = vpack.c.b16 %v3893, %v3892
    %v3956 = vpack.c.b16 %v3895, %v3894
    %v3957 = vpack.c.b16 %v3897, %v3896
    %v3958 = vpack.c.b16 %v3899, %v3898
    %v3959 = vpack.c.b16 %v3901, %v3900
    %v3960 = vpack.c.b16 %v3903, %v3902
    %v3961 = vpack.c.b16 %v3905, %v3904
    %v3962 = vpack.c.b16 %v3907, %v3906
    %v3963 = vpack.c.b16 %v3909, %v3908
    %v3964 = vpack.c.b16 %v3911, %v3910
    %v3965 = vpack.c.b16 %v3913, %v3912
    %v3966 = vpack.c.b16 %v3915, %v3914
    %v3967 = vpack.c.b16 %v3917, %v3916
    %v3968 = vpack.c.b16 %v3919, %v3918
    %v3969 = vpack.c.b16 %v3921, %v3920
    %v3970 = vpack.c.b16 %v3923, %v3922
    %v3971 = vpack.c.b16 %v3925, %v3924
    %v3972 = vpack.c.b16 %v3927, %v3926
    %v3973 = vpack.c.b16 %v3929, %v3928
    %v3974 = vpack.c.b16 %v3931, %v3930
    %v3975 = vpack.c.b16 %v3933, %v3932
    %v3976 = vpack.c.b16 %v3935, %v3934
    %v3977 = vpack.c.b16 %v3937, %v3936
    %v3978 = vpack.c.b16 %v3939, %v3938
    %v3979 = vpack.c.b16 %v3941, %v3940
    %v3980 = vpack.c.b16 %v3943, %v3942
    %v3981 = vpack.c.b16 %v3945, %v3944
    %v3982 = vpack.c.b16 %v3947, %v3946
    %v3983 = vpack.c.b16 %v3949, %v3948
    %v3984 = vpack.c.b16 %v3951, %v3950
    %v3985 = vpack.c.b16 %v3953, %v3952
    %v4034 = vunpack.c.l.b16 %v3874
    %v4035 = vunpack.c.l.b16 %v3875
    %v4036 = vunpack.c.l.b16 %v3876
    %v4037 = vunpack.c.l.b16 %v3877
    %v4038 = vunpack.c.l.b16 %v3878
    %v4039 = vunpack.c.l.b16 %v3879
    %v4040 = vunpack.c.l.b16 %v3880
    %v4041 = vunpack.c.l.b16 %v3881
    %v4042 = vunpack.c.l.b16 %v3882
    %v4043 = vunpack.c.l.b16 %v3883
    %v4044 = vunpack.c.l.b16 %v3884
    %v4045 = vunpack.c.l.b16 %v3885
    %v4046 = vunpack.c.l.b16 %v3886
    %v4047 = vunpack.c.l.b16 %v3887
    %v4048 = vunpack.c.l.b16 %v3888
    %v4049 = vunpack.c.l.b16 %v3889
    %v4050 = vpack.c.b16 %v4035, %v4034
    %v4051 = vpack.c.b16 %v4037, %v4036
    %v4052 = vpack.c.b16 %v4039, %v4038
    %v4053 = vpack.c.b16 %v4041, %v4040
    %v4054 = vpack.c.b16 %v4043, %v4042
    %v4055 = vpack.c.b16 %v4045, %v4044
    %v4056 = vpack.c.b16 %v4047, %v4046
    %v4057 = vpack.c.b16 %v4049, %v4048
    %4066 = vmatprep.subr.bf16.mxu0 0
    %4067 = vmatpush1.bf16.msra.mxu0 %v4057
    %4068 = vmatprep.subr.bf16.mxu0 0
    %4069 = vmatpush1.bf16.msra.mxu0 %v4056
    %4070 = vmatprep.subr.bf16.mxu0 0
    %4071 = vmatpush1.bf16.msra.mxu0 %v4055
    %4072 = vmatprep.subr.bf16.mxu0 0
    %4073 = vmatpush1.bf16.msra.mxu0 %v4054
    %4074 = vmatprep.subr.bf16.mxu0 0
    %4075 = vmatpush1.bf16.msra.mxu0 %v4053
    %4076 = vmatprep.subr.bf16.mxu0 0
    %4077 = vmatpush1.bf16.msra.mxu0 %v4052
    %4078 = vmatprep.subr.bf16.mxu0 0
    %4079 = vmatpush1.bf16.msra.mxu0 %v4051
    %4080 = vmatprep.subr.bf16.mxu0 0
    %4081 = vmatpush1.bf16.msra.mxu0 %v4050
    %4082 = vmatprep.subr.bf16.mxu0 0
    %4083 = vmatpush2.bf16.msra.mxu0 0
    %4084 = vmatprep.subr.bf16.mxu0 0
    %4085 = vmatpush2.bf16.msra.mxu0 0
    %4086 = vmatprep.subr.bf16.mxu0 0
    %4087 = vmatpush2.bf16.msra.mxu0 0
    %4088 = vmatprep.subr.bf16.mxu0 0
    %4089 = vmatpush2.bf16.msra.mxu0 0
    %4090 = vmatprep.subr.bf16.mxu0 0
    %4091 = vmatpush2.bf16.msra.mxu0 0
    %4092 = vmatprep.subr.bf16.mxu0 0
    %4093 = vmatpush2.bf16.msra.mxu0 0
    %4094 = vmatprep.subr.bf16.mxu0 0
    %4095 = vmatpush2.bf16.msra.mxu0 0
    %4096 = vmatprep.subr.bf16.mxu0 0
    %4097 = vmatpush2.bf16.msra.mxu0 0
    %4098 = vmatprep.mubr.bf16.mxu0 0
    %4099 = vmatmul.mubr.bf16.gmra.mxu0 %v3954
    %v4100 = vpop.f32.mrf.mxu0
    %v4101 = vadd.f32 0.0, %v4100
    %v4102 = vpop.f32.mrf.mxu0
    %v4103 = vpop.f32.mrf.mxu0
    %v4104 = vadd.f32 0.0, %v4103
    %v4105 = vpop.f32.mrf.mxu0
    %4106 = vmatprep.mubr.bf16.mxu0 0
    %4107 = vmatmul.mubr.bf16.gmra.mxu0 %v3955
    %v4108 = vpop.f32.mrf.mxu0
    %v4109 = vadd.f32 0.0, %v4108
    %v4110 = vpop.f32.mrf.mxu0
    %v4111 = vpop.f32.mrf.mxu0
    %v4112 = vadd.f32 0.0, %v4111
    %v4113 = vpop.f32.mrf.mxu0
    %4114 = vmatprep.mubr.bf16.mxu0 0
    %4115 = vmatmul.mubr.bf16.gmra.mxu0 %v3956
    %v4116 = vpop.f32.mrf.mxu0
    %v4117 = vadd.f32 0.0, %v4116
    %v4118 = vpop.f32.mrf.mxu0
    %v4119 = vpop.f32.mrf.mxu0
    %v4120 = vadd.f32 0.0, %v4119
    %v4121 = vpop.f32.mrf.mxu0
    %4122 = vmatprep.mubr.bf16.mxu0 0
    %4123 = vmatmul.mubr.bf16.gmra.mxu0 %v3957
    %v4124 = vpop.f32.mrf.mxu0
    %v4125 = vadd.f32 0.0, %v4124
    %v4126 = vpop.f32.mrf.mxu0
    %v4127 = vpop.f32.mrf.mxu0
    %v4128 = vadd.f32 0.0, %v4127
    %v4129 = vpop.f32.mrf.mxu0
    %4130 = vmatprep.mubr.bf16.mxu0 0
    %4131 = vmatmul.mubr.bf16.gmra.mxu0 %v3958
    %v4132 = vpop.f32.mrf.mxu0
    %v4133 = vadd.f32 0.0, %v4132
    %v4134 = vpop.f32.mrf.mxu0
    %v4135 = vpop.f32.mrf.mxu0
    %v4136 = vadd.f32 0.0, %v4135
    %v4137 = vpop.f32.mrf.mxu0
    %4138 = vmatprep.mubr.bf16.mxu0 0
    %4139 = vmatmul.mubr.bf16.gmra.mxu0 %v3959
    %v4140 = vpop.f32.mrf.mxu0
    %v4141 = vadd.f32 0.0, %v4140
    %v4142 = vpop.f32.mrf.mxu0
    %v4143 = vpop.f32.mrf.mxu0
    %v4144 = vadd.f32 0.0, %v4143
    %v4145 = vpop.f32.mrf.mxu0
    %4146 = vmatprep.mubr.bf16.mxu0 0
    %4147 = vmatmul.mubr.bf16.gmra.mxu0 %v3960
    %v4148 = vpop.f32.mrf.mxu0
    %v4149 = vadd.f32 0.0, %v4148
    %v4150 = vpop.f32.mrf.mxu0
    %v4151 = vpop.f32.mrf.mxu0
    %v4152 = vadd.f32 0.0, %v4151
    %v4153 = vpop.f32.mrf.mxu0
    %4154 = vmatprep.mubr.bf16.mxu0 0
    %4155 = vmatmul.mubr.bf16.gmra.mxu0 %v3961
    %v4156 = vpop.f32.mrf.mxu0
    %v4157 = vadd.f32 0.0, %v4156
    %v4158 = vpop.f32.mrf.mxu0
    %v4159 = vpop.f32.mrf.mxu0
    %v4160 = vadd.f32 0.0, %v4159
    %v4161 = vpop.f32.mrf.mxu0
    %4162 = vmatprep.mubr.bf16.mxu0 0
    %4163 = vmatmul.mubr.bf16.gmra.mxu0 %v3962
    %v4164 = vpop.f32.mrf.mxu0
    %v4165 = vadd.f32 0.0, %v4164
    %v4166 = vpop.f32.mrf.mxu0
    %v4167 = vpop.f32.mrf.mxu0
    %v4168 = vadd.f32 0.0, %v4167
    %v4169 = vpop.f32.mrf.mxu0
    %4170 = vmatprep.mubr.bf16.mxu0 0
    %4171 = vmatmul.mubr.bf16.gmra.mxu0 %v3963
    %v4172 = vpop.f32.mrf.mxu0
    %v4173 = vadd.f32 0.0, %v4172
    %v4174 = vpop.f32.mrf.mxu0
    %v4175 = vpop.f32.mrf.mxu0
    %v4176 = vadd.f32 0.0, %v4175
    %v4177 = vpop.f32.mrf.mxu0
    %4178 = vmatprep.mubr.bf16.mxu0 0
    %4179 = vmatmul.mubr.bf16.gmra.mxu0 %v3964
    %v4180 = vpop.f32.mrf.mxu0
    %v4181 = vadd.f32 0.0, %v4180
    %v4182 = vpop.f32.mrf.mxu0
    %v4183 = vpop.f32.mrf.mxu0
    %v4184 = vadd.f32 0.0, %v4183
    %v4185 = vpop.f32.mrf.mxu0
    %4186 = vmatprep.mubr.bf16.mxu0 0
    %4187 = vmatmul.mubr.bf16.gmra.mxu0 %v3965
    %v4188 = vpop.f32.mrf.mxu0
    %v4189 = vadd.f32 0.0, %v4188
    %v4190 = vpop.f32.mrf.mxu0
    %v4191 = vpop.f32.mrf.mxu0
    %v4192 = vadd.f32 0.0, %v4191
    %v4193 = vpop.f32.mrf.mxu0
    %4194 = vmatprep.mubr.bf16.mxu0 0
    %4195 = vmatmul.mubr.bf16.gmra.mxu0 %v3966
    %v4196 = vpop.f32.mrf.mxu0
    %v4197 = vadd.f32 0.0, %v4196
    %v4198 = vpop.f32.mrf.mxu0
    %v4199 = vpop.f32.mrf.mxu0
    %v4200 = vadd.f32 0.0, %v4199
    %v4201 = vpop.f32.mrf.mxu0
    %4202 = vmatprep.mubr.bf16.mxu0 0
    %4203 = vmatmul.mubr.bf16.gmra.mxu0 %v3967
    %v4204 = vpop.f32.mrf.mxu0
    %v4205 = vadd.f32 0.0, %v4204
    %v4206 = vpop.f32.mrf.mxu0
    %v4207 = vpop.f32.mrf.mxu0
    %v4208 = vadd.f32 0.0, %v4207
    %v4209 = vpop.f32.mrf.mxu0
    %4210 = vmatprep.mubr.bf16.mxu0 0
    %4211 = vmatmul.mubr.bf16.gmra.mxu0 %v3968
    %v4212 = vpop.f32.mrf.mxu0
    %v4213 = vadd.f32 0.0, %v4212
    %v4214 = vpop.f32.mrf.mxu0
    %v4215 = vpop.f32.mrf.mxu0
    %v4216 = vadd.f32 0.0, %v4215
    %v4217 = vpop.f32.mrf.mxu0
    %4218 = vmatprep.mubr.bf16.mxu0 0
    %4219 = vmatmul.mubr.bf16.gmra.mxu0 %v3969
    %v4220 = vpop.f32.mrf.mxu0
    %v4221 = vadd.f32 0.0, %v4220
    %v4222 = vpop.f32.mrf.mxu0
    %v4223 = vpop.f32.mrf.mxu0
    %v4224 = vadd.f32 0.0, %v4223
    %v4225 = vpop.f32.mrf.mxu0
    %4226 = vmatprep.mubr.bf16.mxu0 0
    %4227 = vmatmul.mubr.bf16.gmra.mxu0 %v3970
    %v4228 = vpop.f32.mrf.mxu0
    %v4229 = vadd.f32 0.0, %v4228
    %v4230 = vpop.f32.mrf.mxu0
    %v4231 = vpop.f32.mrf.mxu0
    %v4232 = vadd.f32 0.0, %v4231
    %v4233 = vpop.f32.mrf.mxu0
    %4234 = vmatprep.mubr.bf16.mxu0 0
    %4235 = vmatmul.mubr.bf16.gmra.mxu0 %v3971
    %v4236 = vpop.f32.mrf.mxu0
    %v4237 = vadd.f32 0.0, %v4236
    %v4238 = vpop.f32.mrf.mxu0
    %v4239 = vpop.f32.mrf.mxu0
    %v4240 = vadd.f32 0.0, %v4239
    %v4241 = vpop.f32.mrf.mxu0
    %4242 = vmatprep.mubr.bf16.mxu0 0
    %4243 = vmatmul.mubr.bf16.gmra.mxu0 %v3972
    %v4244 = vpop.f32.mrf.mxu0
    %v4245 = vadd.f32 0.0, %v4244
    %v4246 = vpop.f32.mrf.mxu0
    %v4247 = vpop.f32.mrf.mxu0
    %v4248 = vadd.f32 0.0, %v4247
    %v4249 = vpop.f32.mrf.mxu0
    %4250 = vmatprep.mubr.bf16.mxu0 0
    %4251 = vmatmul.mubr.bf16.gmra.mxu0 %v3973
    %v4252 = vpop.f32.mrf.mxu0
    %v4253 = vadd.f32 0.0, %v4252
    %v4254 = vpop.f32.mrf.mxu0
    %v4255 = vpop.f32.mrf.mxu0
    %v4256 = vadd.f32 0.0, %v4255
    %v4257 = vpop.f32.mrf.mxu0
    %4258 = vmatprep.mubr.bf16.mxu0 0
    %4259 = vmatmul.mubr.bf16.gmra.mxu0 %v3974
    %v4260 = vpop.f32.mrf.mxu0
    %v4261 = vadd.f32 0.0, %v4260
    %v4262 = vpop.f32.mrf.mxu0
    %v4263 = vpop.f32.mrf.mxu0
    %v4264 = vadd.f32 0.0, %v4263
    %v4265 = vpop.f32.mrf.mxu0
    %4266 = vmatprep.mubr.bf16.mxu0 0
    %4267 = vmatmul.mubr.bf16.gmra.mxu0 %v3975
    %v4268 = vpop.f32.mrf.mxu0
    %v4269 = vadd.f32 0.0, %v4268
    %v4270 = vpop.f32.mrf.mxu0
    %v4271 = vpop.f32.mrf.mxu0
    %v4272 = vadd.f32 0.0, %v4271
    %v4273 = vpop.f32.mrf.mxu0
    %4274 = vmatprep.mubr.bf16.mxu0 0
    %4275 = vmatmul.mubr.bf16.gmra.mxu0 %v3976
    %v4276 = vpop.f32.mrf.mxu0
    %v4277 = vadd.f32 0.0, %v4276
    %v4278 = vpop.f32.mrf.mxu0
    %v4279 = vpop.f32.mrf.mxu0
    %v4280 = vadd.f32 0.0, %v4279
    %v4281 = vpop.f32.mrf.mxu0
    %4282 = vmatprep.mubr.bf16.mxu0 0
    %4283 = vmatmul.mubr.bf16.gmra.mxu0 %v3977
    %v4284 = vpop.f32.mrf.mxu0
    %v4285 = vadd.f32 0.0, %v4284
    %v4286 = vpop.f32.mrf.mxu0
    %v4287 = vpop.f32.mrf.mxu0
    %v4288 = vadd.f32 0.0, %v4287
    %v4289 = vpop.f32.mrf.mxu0
    %4290 = vmatprep.mubr.bf16.mxu0 0
    %4291 = vmatmul.mubr.bf16.gmra.mxu0 %v3978
    %v4292 = vpop.f32.mrf.mxu0
    %v4293 = vadd.f32 0.0, %v4292
    %v4294 = vpop.f32.mrf.mxu0
    %v4295 = vpop.f32.mrf.mxu0
    %v4296 = vadd.f32 0.0, %v4295
    %v4297 = vpop.f32.mrf.mxu0
    %4298 = vmatprep.mubr.bf16.mxu0 0
    %4299 = vmatmul.mubr.bf16.gmra.mxu0 %v3979
    %v4300 = vpop.f32.mrf.mxu0
    %v4301 = vadd.f32 0.0, %v4300
    %v4302 = vpop.f32.mrf.mxu0
    %v4303 = vpop.f32.mrf.mxu0
    %v4304 = vadd.f32 0.0, %v4303
    %v4305 = vpop.f32.mrf.mxu0
    %4306 = vmatprep.mubr.bf16.mxu0 0
    %4307 = vmatmul.mubr.bf16.gmra.mxu0 %v3980
    %v4308 = vpop.f32.mrf.mxu0
    %v4309 = vadd.f32 0.0, %v4308
    %v4310 = vpop.f32.mrf.mxu0
    %v4311 = vpop.f32.mrf.mxu0
    %v4312 = vadd.f32 0.0, %v4311
    %v4313 = vpop.f32.mrf.mxu0
    %4314 = vmatprep.mubr.bf16.mxu0 0
    %4315 = vmatmul.mubr.bf16.gmra.mxu0 %v3981
    %v4316 = vpop.f32.mrf.mxu0
    %v4317 = vadd.f32 0.0, %v4316
    %v4318 = vpop.f32.mrf.mxu0
    %v4319 = vpop.f32.mrf.mxu0
    %v4320 = vadd.f32 0.0, %v4319
    %v4321 = vpop.f32.mrf.mxu0
    %4322 = vmatprep.mubr.bf16.mxu0 0
    %4323 = vmatmul.mubr.bf16.gmra.mxu0 %v3982
    %v4324 = vpop.f32.mrf.mxu0
    %v4325 = vadd.f32 0.0, %v4324
    %v4326 = vpop.f32.mrf.mxu0
    %v4327 = vpop.f32.mrf.mxu0
    %v4328 = vadd.f32 0.0, %v4327
    %v4329 = vpop.f32.mrf.mxu0
    %4330 = vmatprep.mubr.bf16.mxu0 0
    %4331 = vmatmul.mubr.bf16.gmra.mxu0 %v3983
    %v4332 = vpop.f32.mrf.mxu0
    %v4333 = vadd.f32 0.0, %v4332
    %v4334 = vpop.f32.mrf.mxu0
    %v4335 = vpop.f32.mrf.mxu0
    %v4336 = vadd.f32 0.0, %v4335
    %v4337 = vpop.f32.mrf.mxu0
    %4338 = vmatprep.mubr.bf16.mxu0 0
    %4339 = vmatmul.mubr.bf16.gmra.mxu0 %v3984
    %v4340 = vpop.f32.mrf.mxu0
    %v4341 = vadd.f32 0.0, %v4340
    %v4342 = vpop.f32.mrf.mxu0
    %v4343 = vpop.f32.mrf.mxu0
    %v4344 = vadd.f32 0.0, %v4343
    %v4345 = vpop.f32.mrf.mxu0
    %4346 = vmatprep.mubr.bf16.mxu0 0
    %4347 = vmatmul.mubr.bf16.gmra.mxu0 %v3985
    %v4348 = vpop.f32.mrf.mxu0
    %v4349 = vadd.f32 0.0, %v4348
    %v4350 = vpop.f32.mrf.mxu0
    %v4351 = vpop.f32.mrf.mxu0
    %v4352 = vadd.f32 0.0, %v4351
    %v4353 = vpop.f32.mrf.mxu0
    %4354 = vdwg.mxu0
    %v4355 = vadd.f32 %v3296, %v4101
    %v4356 = vadd.f32 %v3299, %v4104
    %v4357 = vadd.f32 %v3304, %v4109
    %v4358 = vadd.f32 %v3307, %v4112
    %v4359 = vadd.f32 %v3312, %v4117
    %v4360 = vadd.f32 %v3315, %v4120
    %v4361 = vadd.f32 %v3320, %v4125
    %v4362 = vadd.f32 %v3323, %v4128
    %v4363 = vadd.f32 %v3328, %v4133
    %v4364 = vadd.f32 %v3331, %v4136
    %v4365 = vadd.f32 %v3336, %v4141
    %v4366 = vadd.f32 %v3339, %v4144
    %v4367 = vadd.f32 %v3344, %v4149
    %v4368 = vadd.f32 %v3347, %v4152
    %v4369 = vadd.f32 %v3352, %v4157
    %v4370 = vadd.f32 %v3355, %v4160
    %v4371 = vadd.f32 %v3360, %v4165
    %v4372 = vadd.f32 %v3363, %v4168
    %v4373 = vadd.f32 %v3368, %v4173
    %v4374 = vadd.f32 %v3371, %v4176
    %v4375 = vadd.f32 %v3376, %v4181
    %v4376 = vadd.f32 %v3379, %v4184
    %v4377 = vadd.f32 %v3384, %v4189
    %v4378 = vadd.f32 %v3387, %v4192
    %v4379 = vadd.f32 %v3392, %v4197
    %v4380 = vadd.f32 %v3395, %v4200
    %v4381 = vadd.f32 %v3400, %v4205
    %v4382 = vadd.f32 %v3403, %v4208
    %v4383 = vadd.f32 %v3408, %v4213
    %v4384 = vadd.f32 %v3411, %v4216
    %v4385 = vadd.f32 %v3416, %v4221
    %v4386 = vadd.f32 %v3419, %v4224
    %v4387 = vadd.f32 %v3424, %v4229
    %v4388 = vadd.f32 %v3427, %v4232
    %v4389 = vadd.f32 %v3432, %v4237
    %v4390 = vadd.f32 %v3435, %v4240
    %v4391 = vadd.f32 %v3440, %v4245
    %v4392 = vadd.f32 %v3443, %v4248
    %v4393 = vadd.f32 %v3448, %v4253
    %v4394 = vadd.f32 %v3451, %v4256
    %v4395 = vadd.f32 %v3456, %v4261
    %v4396 = vadd.f32 %v3459, %v4264
    %v4397 = vadd.f32 %v3464, %v4269
    %v4398 = vadd.f32 %v3467, %v4272
    %v4399 = vadd.f32 %v3472, %v4277
    %v4400 = vadd.f32 %v3475, %v4280
    %v4401 = vadd.f32 %v3480, %v4285
    %v4402 = vadd.f32 %v3483, %v4288
    %v4403 = vadd.f32 %v3488, %v4293
    %v4404 = vadd.f32 %v3491, %v4296
    %v4405 = vadd.f32 %v3496, %v4301
    %v4406 = vadd.f32 %v3499, %v4304
    %v4407 = vadd.f32 %v3504, %v4309
    %v4408 = vadd.f32 %v3507, %v4312
    %v4409 = vadd.f32 %v3512, %v4317
    %v4410 = vadd.f32 %v3515, %v4320
    %v4411 = vadd.f32 %v3520, %v4325
    %v4412 = vadd.f32 %v3523, %v4328
    %v4413 = vadd.f32 %v3528, %v4333
    %v4414 = vadd.f32 %v3531, %v4336
    %v4415 = vadd.f32 %v3536, %v4341
    %v4416 = vadd.f32 %v3539, %v4344
    %v4417 = vadd.f32 %v3544, %v4349
    %v4418 = vadd.f32 %v3547, %v4352
    %v4419 = vld [vmem:[%s398] sm:$0xf]
    %v4420 = vld [vmem:[%s398 + $0x4] sm:$0xf]
    %v4421 = vld [vmem:[%s398 + $0xc] sm:$0xf]
    %v4422 = vld [vmem:[%s398 + $0x10] sm:$0xf]
    %v4423 = vld [vmem:[%s398 + $0x18] sm:$0xf]
    %v4424 = vld [vmem:[%s398 + $0x1c] sm:$0xf]
    %v4425 = vld [vmem:[%s398 + $0x24] sm:$0xf]
    %v4426 = vld [vmem:[%s398 + $0x28] sm:$0xf]
    %v4427 = vld [vmem:[%s398 + $0x30] sm:$0xf]
    %v4428 = vld [vmem:[%s398 + $0x34] sm:$0xf]
    %v4429 = vld [vmem:[%s398 + $0x3c] sm:$0xf]
    %v4430 = vld [vmem:[%s398 + $0x40] sm:$0xf]
    %v4431 = vld [vmem:[%s398 + $0x48] sm:$0xf]
    %v4432 = vld [vmem:[%s398 + $0x4c] sm:$0xf]
    %v4433 = vld [vmem:[%s398 + $0x54] sm:$0xf]
    %v4434 = vld [vmem:[%s398 + $0x58] sm:$0xf]
    %v4435 = vld [vmem:[%s398 + $0x60] sm:$0xf]
    %v4436 = vld [vmem:[%s398 + $0x64] sm:$0xf]
    %v4437 = vld [vmem:[%s398 + $0x6c] sm:$0xf]
    %v4438 = vld [vmem:[%s398 + $0x70] sm:$0xf]
    %v4439 = vld [vmem:[%s398 + $0x78] sm:$0xf]
    %v4440 = vld [vmem:[%s398 + $0x7c] sm:$0xf]
    %v4441 = vld [vmem:[%s398 + $0x84] sm:$0xf]
    %v4442 = vld [vmem:[%s398 + $0x88] sm:$0xf]
    %v4443 = vld [vmem:[%s398 + $0x90] sm:$0xf]
    %v4444 = vld [vmem:[%s398 + $0x94] sm:$0xf]
    %v4445 = vld [vmem:[%s398 + $0x9c] sm:$0xf]
    %v4446 = vld [vmem:[%s398 + $0xa0] sm:$0xf]
    %v4447 = vld [vmem:[%s398 + $0xa8] sm:$0xf]
    %v4448 = vld [vmem:[%s398 + $0xac] sm:$0xf]
    %v4449 = vld [vmem:[%s398 + $0xb4] sm:$0xf]
    %v4450 = vld [vmem:[%s398 + $0xb8] sm:$0xf]
    %v4451 = vld [vmem:[%s398 + $0xd8] sm:$0xf]
    %v4452 = vld [vmem:[%s398 + $0xdc] sm:$0xf]
    %v4453 = vld [vmem:[%s398 + $0xe4] sm:$0xf]
    %v4454 = vld [vmem:[%s398 + $0xe8] sm:$0xf]
    %v4455 = vld [vmem:[%s398 + $0xf0] sm:$0xf]
    %v4456 = vld [vmem:[%s398 + $0xf4] sm:$0xf]
    %v4457 = vld [vmem:[%s398 + $0xfc] sm:$0xf]
    %v4458 = vld [vmem:[%s398 + $0x100] sm:$0xf]
    %v4459 = vld [vmem:[%s398 + $0x108] sm:$0xf]
    %v4460 = vld [vmem:[%s398 + $0x10c] sm:$0xf]
    %v4461 = vld [vmem:[%s398 + $0x114] sm:$0xf]
    %v4462 = vld [vmem:[%s398 + $0x118] sm:$0xf]
    %v4463 = vld [vmem:[%s398 + $0x120] sm:$0xf]
    %v4464 = vld [vmem:[%s398 + $0x124] sm:$0xf]
    %v4465 = vld [vmem:[%s398 + $0x12c] sm:$0xf]
    %v4466 = vld [vmem:[%s398 + $0x130] sm:$0xf]
    %v4467 = vld [vmem:[%s398 + $0x138] sm:$0xf]
    %v4468 = vld [vmem:[%s398 + $0x13c] sm:$0xf]
    %v4469 = vld [vmem:[%s398 + $0x144] sm:$0xf]
    %v4470 = vld [vmem:[%s398 + $0x148] sm:$0xf]
    %v4471 = vld [vmem:[%s398 + $0x150] sm:$0xf]
    %v4472 = vld [vmem:[%s398 + $0x154] sm:$0xf]
    %v4473 = vld [vmem:[%s398 + $0x15c] sm:$0xf]
    %v4474 = vld [vmem:[%s398 + $0x160] sm:$0xf]
    %v4475 = vld [vmem:[%s398 + $0x168] sm:$0xf]
    %v4476 = vld [vmem:[%s398 + $0x16c] sm:$0xf]
    %v4477 = vld [vmem:[%s398 + $0x174] sm:$0xf]
    %v4478 = vld [vmem:[%s398 + $0x178] sm:$0xf]
    %v4479 = vld [vmem:[%s398 + $0x180] sm:$0xf]
    %v4480 = vld [vmem:[%s398 + $0x184] sm:$0xf]
    %v4481 = vld [vmem:[%s398 + $0x18c] sm:$0xf]
    %v4482 = vld [vmem:[%s398 + $0x190] sm:$0xf]
    %s4483 = scalar_lea.vmem [#allocation6], 192
    %v4484 = vld [vmem:[%s4483] sm:$0xf]
    %v4485 = vld [vmem:[%s4483 + $0x4] sm:$0xf]
    %v4486 = vld [vmem:[%s4483 + $0x8] sm:$0xf]
    %v4487 = vld [vmem:[%s4483 + $0xc] sm:$0xf]
    %v4488 = vld [vmem:[%s4483 + $0x10] sm:$0xf]
    %v4489 = vld [vmem:[%s4483 + $0x14] sm:$0xf]
    %v4490 = vld [vmem:[%s4483 + $0x18] sm:$0xf]
    %v4491 = vld [vmem:[%s4483 + $0x1c] sm:$0xf]
    %v4492 = vld [vmem:[%s4483 + $0x20] sm:$0xf]
    %v4493 = vld [vmem:[%s4483 + $0x24] sm:$0xf]
    %v4494 = vld [vmem:[%s4483 + $0x28] sm:$0xf]
    %v4495 = vld [vmem:[%s4483 + $0x2c] sm:$0xf]
    %v4496 = vld [vmem:[%s4483 + $0x30] sm:$0xf]
    %v4497 = vld [vmem:[%s4483 + $0x34] sm:$0xf]
    %v4498 = vld [vmem:[%s4483 + $0x38] sm:$0xf]
    %v4499 = vld [vmem:[%s4483 + $0x3c] sm:$0xf]
    %v4564 = vunpack.c.l.b16 %v4419
    %v4565 = vunpack.c.l.b16 %v4420
    %v4566 = vunpack.c.l.b16 %v4421
    %v4567 = vunpack.c.l.b16 %v4422
    %v4568 = vunpack.c.l.b16 %v4423
    %v4569 = vunpack.c.l.b16 %v4424
    %v4570 = vunpack.c.l.b16 %v4425
    %v4571 = vunpack.c.l.b16 %v4426
    %v4572 = vunpack.c.l.b16 %v4427
    %v4573 = vunpack.c.l.b16 %v4428
    %v4574 = vunpack.c.l.b16 %v4429
    %v4575 = vunpack.c.l.b16 %v4430
    %v4576 = vunpack.c.l.b16 %v4431
    %v4577 = vunpack.c.l.b16 %v4432
    %v4578 = vunpack.c.l.b16 %v4433
    %v4579 = vunpack.c.l.b16 %v4434
    %v4580 = vunpack.c.l.b16 %v4435
    %v4581 = vunpack.c.l.b16 %v4436
    %v4582 = vunpack.c.l.b16 %v4437
    %v4583 = vunpack.c.l.b16 %v4438
    %v4584 = vunpack.c.l.b16 %v4439
    %v4585 = vunpack.c.l.b16 %v4440
    %v4586 = vunpack.c.l.b16 %v4441
    %v4587 = vunpack.c.l.b16 %v4442
    %v4588 = vunpack.c.l.b16 %v4443
    %v4589 = vunpack.c.l.b16 %v4444
    %v4590 = vunpack.c.l.b16 %v4445
    %v4591 = vunpack.c.l.b16 %v4446
    %v4592 = vunpack.c.l.b16 %v4447
    %v4593 = vunpack.c.l.b16 %v4448
    %v4594 = vunpack.c.l.b16 %v4449
    %v4595 = vunpack.c.l.b16 %v4450
    %v4596 = vunpack.c.l.b16 %v4451
    %v4597 = vunpack.c.l.b16 %v4452
    %v4598 = vunpack.c.l.b16 %v4453
    %v4599 = vunpack.c.l.b16 %v4454
    %v4600 = vunpack.c.l.b16 %v4455
    %v4601 = vunpack.c.l.b16 %v4456
    %v4602 = vunpack.c.l.b16 %v4457
    %v4603 = vunpack.c.l.b16 %v4458
    %v4604 = vunpack.c.l.b16 %v4459
    %v4605 = vunpack.c.l.b16 %v4460
    %v4606 = vunpack.c.l.b16 %v4461
    %v4607 = vunpack.c.l.b16 %v4462
    %v4608 = vunpack.c.l.b16 %v4463
    %v4609 = vunpack.c.l.b16 %v4464
    %v4610 = vunpack.c.l.b16 %v4465
    %v4611 = vunpack.c.l.b16 %v4466
    %v4612 = vunpack.c.l.b16 %v4467
    %v4613 = vunpack.c.l.b16 %v4468
    %v4614 = vunpack.c.l.b16 %v4469
    %v4615 = vunpack.c.l.b16 %v4470
    %v4616 = vunpack.c.l.b16 %v4471
    %v4617 = vunpack.c.l.b16 %v4472
    %v4618 = vunpack.c.l.b16 %v4473
    %v4619 = vunpack.c.l.b16 %v4474
    %v4620 = vunpack.c.l.b16 %v4475
    %v4621 = vunpack.c.l.b16 %v4476
    %v4622 = vunpack.c.l.b16 %v4477
    %v4623 = vunpack.c.l.b16 %v4478
    %v4624 = vunpack.c.l.b16 %v4479
    %v4625 = vunpack.c.l.b16 %v4480
    %v4626 = vunpack.c.l.b16 %v4481
    %v4627 = vunpack.c.l.b16 %v4482
    %v4628 = vpack.c.b16 %v4565, %v4564
    %v4629 = vpack.c.b16 %v4567, %v4566
    %v4630 = vpack.c.b16 %v4569, %v4568
    %v4631 = vpack.c.b16 %v4571, %v4570
    %v4632 = vpack.c.b16 %v4573, %v4572
    %v4633 = vpack.c.b16 %v4575, %v4574
    %v4634 = vpack.c.b16 %v4577, %v4576
    %v4635 = vpack.c.b16 %v4579, %v4578
    %v4636 = vpack.c.b16 %v4581, %v4580
    %v4637 = vpack.c.b16 %v4583, %v4582
    %v4638 = vpack.c.b16 %v4585, %v4584
    %v4639 = vpack.c.b16 %v4587, %v4586
    %v4640 = vpack.c.b16 %v4589, %v4588
    %v4641 = vpack.c.b16 %v4591, %v4590
    %v4642 = vpack.c.b16 %v4593, %v4592
    %v4643 = vpack.c.b16 %v4595, %v4594
    %v4644 = vpack.c.b16 %v4597, %v4596
    %v4645 = vpack.c.b16 %v4599, %v4598
    %v4646 = vpack.c.b16 %v4601, %v4600
    %v4647 = vpack.c.b16 %v4603, %v4602
    %v4648 = vpack.c.b16 %v4605, %v4604
    %v4649 = vpack.c.b16 %v4607, %v4606
    %v4650 = vpack.c.b16 %v4609, %v4608
    %v4651 = vpack.c.b16 %v4611, %v4610
    %v4652 = vpack.c.b16 %v4613, %v4612
    %v4653 = vpack.c.b16 %v4615, %v4614
    %v4654 = vpack.c.b16 %v4617, %v4616
    %v4655 = vpack.c.b16 %v4619, %v4618
    %v4656 = vpack.c.b16 %v4621, %v4620
    %v4657 = vpack.c.b16 %v4623, %v4622
    %v4658 = vpack.c.b16 %v4625, %v4624
    %v4659 = vpack.c.b16 %v4627, %v4626
    %v4708 = vunpack.c.l.b16 %v4484
    %v4709 = vunpack.c.l.b16 %v4485
    %v4710 = vunpack.c.l.b16 %v4486
    %v4711 = vunpack.c.l.b16 %v4487
    %v4712 = vunpack.c.l.b16 %v4488
    %v4713 = vunpack.c.l.b16 %v4489
    %v4714 = vunpack.c.l.b16 %v4490
    %v4715 = vunpack.c.l.b16 %v4491
    %v4716 = vunpack.c.l.b16 %v4492
    %v4717 = vunpack.c.l.b16 %v4493
    %v4718 = vunpack.c.l.b16 %v4494
    %v4719 = vunpack.c.l.b16 %v4495
    %v4720 = vunpack.c.l.b16 %v4496
    %v4721 = vunpack.c.l.b16 %v4497
    %v4722 = vunpack.c.l.b16 %v4498
    %v4723 = vunpack.c.l.b16 %v4499
    %v4724 = vpack.c.b16 %v4709, %v4708
    %v4725 = vpack.c.b16 %v4711, %v4710
    %v4726 = vpack.c.b16 %v4713, %v4712
    %v4727 = vpack.c.b16 %v4715, %v4714
    %v4728 = vpack.c.b16 %v4717, %v4716
    %v4729 = vpack.c.b16 %v4719, %v4718
    %v4730 = vpack.c.b16 %v4721, %v4720
    %v4731 = vpack.c.b16 %v4723, %v4722
    %4740 = vmatprep.subr.bf16.mxu0 0
    %4741 = vmatpush1.bf16.msra.mxu0 %v4731
    %4742 = vmatprep.subr.bf16.mxu0 0
    %4743 = vmatpush1.bf16.msra.mxu0 %v4730
    %4744 = vmatprep.subr.bf16.mxu0 0
    %4745 = vmatpush1.bf16.msra.mxu0 %v4729
    %4746 = vmatprep.subr.bf16.mxu0 0
    %4747 = vmatpush1.bf16.msra.mxu0 %v4728
    %4748 = vmatprep.subr.bf16.mxu0 0
    %4749 = vmatpush1.bf16.msra.mxu0 %v4727
    %4750 = vmatprep.subr.bf16.mxu0 0
    %4751 = vmatpush1.bf16.msra.mxu0 %v4726
    %4752 = vmatprep.subr.bf16.mxu0 0
    %4753 = vmatpush1.bf16.msra.mxu0 %v4725
    %4754 = vmatprep.subr.bf16.mxu0 0
    %4755 = vmatpush1.bf16.msra.mxu0 %v4724
    %4756 = vmatprep.subr.bf16.mxu0 0
    %4757 = vmatpush2.bf16.msra.mxu0 0
    %4758 = vmatprep.subr.bf16.mxu0 0
    %4759 = vmatpush2.bf16.msra.mxu0 0
    %4760 = vmatprep.subr.bf16.mxu0 0
    %4761 = vmatpush2.bf16.msra.mxu0 0
    %4762 = vmatprep.subr.bf16.mxu0 0
    %4763 = vmatpush2.bf16.msra.mxu0 0
    %4764 = vmatprep.subr.bf16.mxu0 0
    %4765 = vmatpush2.bf16.msra.mxu0 0
    %4766 = vmatprep.subr.bf16.mxu0 0
    %4767 = vmatpush2.bf16.msra.mxu0 0
    %4768 = vmatprep.subr.bf16.mxu0 0
    %4769 = vmatpush2.bf16.msra.mxu0 0
    %4770 = vmatprep.subr.bf16.mxu0 0
    %4771 = vmatpush2.bf16.msra.mxu0 0
    %4772 = vmatprep.mubr.bf16.mxu0 0
    %4773 = vmatmul.mubr.bf16.gmra.mxu0 %v4628
    %v4774 = vpop.f32.mrf.mxu0
    %v4775 = vadd.f32 0.0, %v4774
    %v4776 = vpop.f32.mrf.mxu0
    %v4777 = vpop.f32.mrf.mxu0
    %v4778 = vadd.f32 0.0, %v4777
    %v4779 = vpop.f32.mrf.mxu0
    %4780 = vmatprep.mubr.bf16.mxu0 0
    %4781 = vmatmul.mubr.bf16.gmra.mxu0 %v4629
    %v4782 = vpop.f32.mrf.mxu0
    %v4783 = vadd.f32 0.0, %v4782
    %v4784 = vpop.f32.mrf.mxu0
    %v4785 = vpop.f32.mrf.mxu0
    %v4786 = vadd.f32 0.0, %v4785
    %v4787 = vpop.f32.mrf.mxu0
    %4788 = vmatprep.mubr.bf16.mxu0 0
    %4789 = vmatmul.mubr.bf16.gmra.mxu0 %v4630
    %v4790 = vpop.f32.mrf.mxu0
    %v4791 = vadd.f32 0.0, %v4790
    %v4792 = vpop.f32.mrf.mxu0
    %v4793 = vpop.f32.mrf.mxu0
    %v4794 = vadd.f32 0.0, %v4793
    %v4795 = vpop.f32.mrf.mxu0
    %4796 = vmatprep.mubr.bf16.mxu0 0
    %4797 = vmatmul.mubr.bf16.gmra.mxu0 %v4631
    %v4798 = vpop.f32.mrf.mxu0
    %v4799 = vadd.f32 0.0, %v4798
    %v4800 = vpop.f32.mrf.mxu0
    %v4801 = vpop.f32.mrf.mxu0
    %v4802 = vadd.f32 0.0, %v4801
    %v4803 = vpop.f32.mrf.mxu0
    %4804 = vmatprep.mubr.bf16.mxu0 0
    %4805 = vmatmul.mubr.bf16.gmra.mxu0 %v4632
    %v4806 = vpop.f32.mrf.mxu0
    %v4807 = vadd.f32 0.0, %v4806
    %v4808 = vpop.f32.mrf.mxu0
    %v4809 = vpop.f32.mrf.mxu0
    %v4810 = vadd.f32 0.0, %v4809
    %v4811 = vpop.f32.mrf.mxu0
    %4812 = vmatprep.mubr.bf16.mxu0 0
    %4813 = vmatmul.mubr.bf16.gmra.mxu0 %v4633
    %v4814 = vpop.f32.mrf.mxu0
    %v4815 = vadd.f32 0.0, %v4814
    %v4816 = vpop.f32.mrf.mxu0
    %v4817 = vpop.f32.mrf.mxu0
    %v4818 = vadd.f32 0.0, %v4817
    %v4819 = vpop.f32.mrf.mxu0
    %4820 = vmatprep.mubr.bf16.mxu0 0
    %4821 = vmatmul.mubr.bf16.gmra.mxu0 %v4634
    %v4822 = vpop.f32.mrf.mxu0
    %v4823 = vadd.f32 0.0, %v4822
    %v4824 = vpop.f32.mrf.mxu0
    %v4825 = vpop.f32.mrf.mxu0
    %v4826 = vadd.f32 0.0, %v4825
    %v4827 = vpop.f32.mrf.mxu0
    %4828 = vmatprep.mubr.bf16.mxu0 0
    %4829 = vmatmul.mubr.bf16.gmra.mxu0 %v4635
    %v4830 = vpop.f32.mrf.mxu0
    %v4831 = vadd.f32 0.0, %v4830
    %v4832 = vpop.f32.mrf.mxu0
    %v4833 = vpop.f32.mrf.mxu0
    %v4834 = vadd.f32 0.0, %v4833
    %v4835 = vpop.f32.mrf.mxu0
    %4836 = vmatprep.mubr.bf16.mxu0 0
    %4837 = vmatmul.mubr.bf16.gmra.mxu0 %v4636
    %v4838 = vpop.f32.mrf.mxu0
    %v4839 = vadd.f32 0.0, %v4838
    %v4840 = vpop.f32.mrf.mxu0
    %v4841 = vpop.f32.mrf.mxu0
    %v4842 = vadd.f32 0.0, %v4841
    %v4843 = vpop.f32.mrf.mxu0
    %4844 = vmatprep.mubr.bf16.mxu0 0
    %4845 = vmatmul.mubr.bf16.gmra.mxu0 %v4637
    %v4846 = vpop.f32.mrf.mxu0
    %v4847 = vadd.f32 0.0, %v4846
    %v4848 = vpop.f32.mrf.mxu0
    %v4849 = vpop.f32.mrf.mxu0
    %v4850 = vadd.f32 0.0, %v4849
    %v4851 = vpop.f32.mrf.mxu0
    %4852 = vmatprep.mubr.bf16.mxu0 0
    %4853 = vmatmul.mubr.bf16.gmra.mxu0 %v4638
    %v4854 = vpop.f32.mrf.mxu0
    %v4855 = vadd.f32 0.0, %v4854
    %v4856 = vpop.f32.mrf.mxu0
    %v4857 = vpop.f32.mrf.mxu0
    %v4858 = vadd.f32 0.0, %v4857
    %v4859 = vpop.f32.mrf.mxu0
    %4860 = vmatprep.mubr.bf16.mxu0 0
    %4861 = vmatmul.mubr.bf16.gmra.mxu0 %v4639
    %v4862 = vpop.f32.mrf.mxu0
    %v4863 = vadd.f32 0.0, %v4862
    %v4864 = vpop.f32.mrf.mxu0
    %v4865 = vpop.f32.mrf.mxu0
    %v4866 = vadd.f32 0.0, %v4865
    %v4867 = vpop.f32.mrf.mxu0
    %4868 = vmatprep.mubr.bf16.mxu0 0
    %4869 = vmatmul.mubr.bf16.gmra.mxu0 %v4640
    %v4870 = vpop.f32.mrf.mxu0
    %v4871 = vadd.f32 0.0, %v4870
    %v4872 = vpop.f32.mrf.mxu0
    %v4873 = vpop.f32.mrf.mxu0
    %v4874 = vadd.f32 0.0, %v4873
    %v4875 = vpop.f32.mrf.mxu0
    %4876 = vmatprep.mubr.bf16.mxu0 0
    %4877 = vmatmul.mubr.bf16.gmra.mxu0 %v4641
    %v4878 = vpop.f32.mrf.mxu0
    %v4879 = vadd.f32 0.0, %v4878
    %v4880 = vpop.f32.mrf.mxu0
    %v4881 = vpop.f32.mrf.mxu0
    %v4882 = vadd.f32 0.0, %v4881
    %v4883 = vpop.f32.mrf.mxu0
    %4884 = vmatprep.mubr.bf16.mxu0 0
    %4885 = vmatmul.mubr.bf16.gmra.mxu0 %v4642
    %v4886 = vpop.f32.mrf.mxu0
    %v4887 = vadd.f32 0.0, %v4886
    %v4888 = vpop.f32.mrf.mxu0
    %v4889 = vpop.f32.mrf.mxu0
    %v4890 = vadd.f32 0.0, %v4889
    %v4891 = vpop.f32.mrf.mxu0
    %4892 = vmatprep.mubr.bf16.mxu0 0
    %4893 = vmatmul.mubr.bf16.gmra.mxu0 %v4643
    %v4894 = vpop.f32.mrf.mxu0
    %v4895 = vadd.f32 0.0, %v4894
    %v4896 = vpop.f32.mrf.mxu0
    %v4897 = vpop.f32.mrf.mxu0
    %v4898 = vadd.f32 0.0, %v4897
    %v4899 = vpop.f32.mrf.mxu0
    %4900 = vmatprep.mubr.bf16.mxu0 0
    %4901 = vmatmul.mubr.bf16.gmra.mxu0 %v4644
    %v4902 = vpop.f32.mrf.mxu0
    %v4903 = vadd.f32 0.0, %v4902
    %v4904 = vpop.f32.mrf.mxu0
    %v4905 = vpop.f32.mrf.mxu0
    %v4906 = vadd.f32 0.0, %v4905
    %v4907 = vpop.f32.mrf.mxu0
    %4908 = vmatprep.mubr.bf16.mxu0 0
    %4909 = vmatmul.mubr.bf16.gmra.mxu0 %v4645
    %v4910 = vpop.f32.mrf.mxu0
    %v4911 = vadd.f32 0.0, %v4910
    %v4912 = vpop.f32.mrf.mxu0
    %v4913 = vpop.f32.mrf.mxu0
    %v4914 = vadd.f32 0.0, %v4913
    %v4915 = vpop.f32.mrf.mxu0
    %4916 = vmatprep.mubr.bf16.mxu0 0
    %4917 = vmatmul.mubr.bf16.gmra.mxu0 %v4646
    %v4918 = vpop.f32.mrf.mxu0
    %v4919 = vadd.f32 0.0, %v4918
    %v4920 = vpop.f32.mrf.mxu0
    %v4921 = vpop.f32.mrf.mxu0
    %v4922 = vadd.f32 0.0, %v4921
    %v4923 = vpop.f32.mrf.mxu0
    %4924 = vmatprep.mubr.bf16.mxu0 0
    %4925 = vmatmul.mubr.bf16.gmra.mxu0 %v4647
    %v4926 = vpop.f32.mrf.mxu0
    %v4927 = vadd.f32 0.0, %v4926
    %v4928 = vpop.f32.mrf.mxu0
    %v4929 = vpop.f32.mrf.mxu0
    %v4930 = vadd.f32 0.0, %v4929
    %v4931 = vpop.f32.mrf.mxu0
    %4932 = vmatprep.mubr.bf16.mxu0 0
    %4933 = vmatmul.mubr.bf16.gmra.mxu0 %v4648
    %v4934 = vpop.f32.mrf.mxu0
    %v4935 = vadd.f32 0.0, %v4934
    %v4936 = vpop.f32.mrf.mxu0
    %v4937 = vpop.f32.mrf.mxu0
    %v4938 = vadd.f32 0.0, %v4937
    %v4939 = vpop.f32.mrf.mxu0
    %4940 = vmatprep.mubr.bf16.mxu0 0
    %4941 = vmatmul.mubr.bf16.gmra.mxu0 %v4649
    %v4942 = vpop.f32.mrf.mxu0
    %v4943 = vadd.f32 0.0, %v4942
    %v4944 = vpop.f32.mrf.mxu0
    %v4945 = vpop.f32.mrf.mxu0
    %v4946 = vadd.f32 0.0, %v4945
    %v4947 = vpop.f32.mrf.mxu0
    %4948 = vmatprep.mubr.bf16.mxu0 0
    %4949 = vmatmul.mubr.bf16.gmra.mxu0 %v4650
    %v4950 = vpop.f32.mrf.mxu0
    %v4951 = vadd.f32 0.0, %v4950
    %v4952 = vpop.f32.mrf.mxu0
    %v4953 = vpop.f32.mrf.mxu0
    %v4954 = vadd.f32 0.0, %v4953
    %v4955 = vpop.f32.mrf.mxu0
    %4956 = vmatprep.mubr.bf16.mxu0 0
    %4957 = vmatmul.mubr.bf16.gmra.mxu0 %v4651
    %v4958 = vpop.f32.mrf.mxu0
    %v4959 = vadd.f32 0.0, %v4958
    %v4960 = vpop.f32.mrf.mxu0
    %v4961 = vpop.f32.mrf.mxu0
    %v4962 = vadd.f32 0.0, %v4961
    %v4963 = vpop.f32.mrf.mxu0
    %4964 = vmatprep.mubr.bf16.mxu0 0
    %4965 = vmatmul.mubr.bf16.gmra.mxu0 %v4652
    %v4966 = vpop.f32.mrf.mxu0
    %v4967 = vadd.f32 0.0, %v4966
    %v4968 = vpop.f32.mrf.mxu0
    %v4969 = vpop.f32.mrf.mxu0
    %v4970 = vadd.f32 0.0, %v4969
    %v4971 = vpop.f32.mrf.mxu0
    %4972 = vmatprep.mubr.bf16.mxu0 0
    %4973 = vmatmul.mubr.bf16.gmra.mxu0 %v4653
    %v4974 = vpop.f32.mrf.mxu0
    %v4975 = vadd.f32 0.0, %v4974
    %v4976 = vpop.f32.mrf.mxu0
    %v4977 = vpop.f32.mrf.mxu0
    %v4978 = vadd.f32 0.0, %v4977
    %v4979 = vpop.f32.mrf.mxu0
    %4980 = vmatprep.mubr.bf16.mxu0 0
    %4981 = vmatmul.mubr.bf16.gmra.mxu0 %v4654
    %v4982 = vpop.f32.mrf.mxu0
    %v4983 = vadd.f32 0.0, %v4982
    %v4984 = vpop.f32.mrf.mxu0
    %v4985 = vpop.f32.mrf.mxu0
    %v4986 = vadd.f32 0.0, %v4985
    %v4987 = vpop.f32.mrf.mxu0
    %4988 = vmatprep.mubr.bf16.mxu0 0
    %4989 = vmatmul.mubr.bf16.gmra.mxu0 %v4655
    %v4990 = vpop.f32.mrf.mxu0
    %v4991 = vadd.f32 0.0, %v4990
    %v4992 = vpop.f32.mrf.mxu0
    %v4993 = vpop.f32.mrf.mxu0
    %v4994 = vadd.f32 0.0, %v4993
    %v4995 = vpop.f32.mrf.mxu0
    %4996 = vmatprep.mubr.bf16.mxu0 0
    %4997 = vmatmul.mubr.bf16.gmra.mxu0 %v4656
    %v4998 = vpop.f32.mrf.mxu0
    %v4999 = vadd.f32 0.0, %v4998
    %v5000 = vpop.f32.mrf.mxu0
    %v5001 = vpop.f32.mrf.mxu0
    %v5002 = vadd.f32 0.0, %v5001
    %v5003 = vpop.f32.mrf.mxu0
    %5004 = vmatprep.mubr.bf16.mxu0 0
    %5005 = vmatmul.mubr.bf16.gmra.mxu0 %v4657
    %v5006 = vpop.f32.mrf.mxu0
    %v5007 = vadd.f32 0.0, %v5006
    %v5008 = vpop.f32.mrf.mxu0
    %v5009 = vpop.f32.mrf.mxu0
    %v5010 = vadd.f32 0.0, %v5009
    %v5011 = vpop.f32.mrf.mxu0
    %5012 = vmatprep.mubr.bf16.mxu0 0
    %5013 = vmatmul.mubr.bf16.gmra.mxu0 %v4658
    %v5014 = vpop.f32.mrf.mxu0
    %v5015 = vadd.f32 0.0, %v5014
    %v5016 = vpop.f32.mrf.mxu0
    %v5017 = vpop.f32.mrf.mxu0
    %v5018 = vadd.f32 0.0, %v5017
    %v5019 = vpop.f32.mrf.mxu0
    %5020 = vmatprep.mubr.bf16.mxu0 0
    %5021 = vmatmul.mubr.bf16.gmra.mxu0 %v4659
    %v5022 = vpop.f32.mrf.mxu0
    %v5023 = vadd.f32 0.0, %v5022
    %v5024 = vpop.f32.mrf.mxu0
    %v5025 = vpop.f32.mrf.mxu0
    %v5026 = vadd.f32 0.0, %v5025
    %v5027 = vpop.f32.mrf.mxu0
    %5028 = vdwg.mxu0
    %v5029 = vadd.f32 %v4355, %v4775
    %v5030 = vadd.f32 %v4356, %v4778
    %v5031 = vadd.f32 %v4357, %v4783
    %v5032 = vadd.f32 %v4358, %v4786
    %v5033 = vadd.f32 %v4359, %v4791
    %v5034 = vadd.f32 %v4360, %v4794
    %v5035 = vadd.f32 %v4361, %v4799
    %v5036 = vadd.f32 %v4362, %v4802
    %v5037 = vadd.f32 %v4363, %v4807
    %v5038 = vadd.f32 %v4364, %v4810
    %v5039 = vadd.f32 %v4365, %v4815
    %v5040 = vadd.f32 %v4366, %v4818
    %v5041 = vadd.f32 %v4367, %v4823
    %v5042 = vadd.f32 %v4368, %v4826
    %v5043 = vadd.f32 %v4369, %v4831
    %v5044 = vadd.f32 %v4370, %v4834
    %v5045 = vadd.f32 %v4371, %v4839
    %v5046 = vadd.f32 %v4372, %v4842
    %v5047 = vadd.f32 %v4373, %v4847
    %v5048 = vadd.f32 %v4374, %v4850
    %v5049 = vadd.f32 %v4375, %v4855
    %v5050 = vadd.f32 %v4376, %v4858
    %v5051 = vadd.f32 %v4377, %v4863
    %v5052 = vadd.f32 %v4378, %v4866
    %v5053 = vadd.f32 %v4379, %v4871
    %v5054 = vadd.f32 %v4380, %v4874
    %v5055 = vadd.f32 %v4381, %v4879
    %v5056 = vadd.f32 %v4382, %v4882
    %v5057 = vadd.f32 %v4383, %v4887
    %v5058 = vadd.f32 %v4384, %v4890
    %v5059 = vadd.f32 %v4385, %v4895
    %v5060 = vadd.f32 %v4386, %v4898
    %v5061 = vadd.f32 %v4387, %v4903
    %v5062 = vadd.f32 %v4388, %v4906
    %v5063 = vadd.f32 %v4389, %v4911
    %v5064 = vadd.f32 %v4390, %v4914
    %v5065 = vadd.f32 %v4391, %v4919
    %v5066 = vadd.f32 %v4392, %v4922
    %v5067 = vadd.f32 %v4393, %v4927
    %v5068 = vadd.f32 %v4394, %v4930
    %v5069 = vadd.f32 %v4395, %v4935
    %v5070 = vadd.f32 %v4396, %v4938
    %v5071 = vadd.f32 %v4397, %v4943
    %v5072 = vadd.f32 %v4398, %v4946
    %v5073 = vadd.f32 %v4399, %v4951
    %v5074 = vadd.f32 %v4400, %v4954
    %v5075 = vadd.f32 %v4401, %v4959
    %v5076 = vadd.f32 %v4402, %v4962
    %v5077 = vadd.f32 %v4403, %v4967
    %v5078 = vadd.f32 %v4404, %v4970
    %v5079 = vadd.f32 %v4405, %v4975
    %v5080 = vadd.f32 %v4406, %v4978
    %v5081 = vadd.f32 %v4407, %v4983
    %v5082 = vadd.f32 %v4408, %v4986
    %v5083 = vadd.f32 %v4409, %v4991
    %v5084 = vadd.f32 %v4410, %v4994
    %v5085 = vadd.f32 %v4411, %v4999
    %v5086 = vadd.f32 %v4412, %v5002
    %v5087 = vadd.f32 %v4413, %v5007
    %v5088 = vadd.f32 %v4414, %v5010
    %v5089 = vadd.f32 %v4415, %v5015
    %v5090 = vadd.f32 %v4416, %v5018
    %v5091 = vadd.f32 %v4417, %v5023
    %v5092 = vadd.f32 %v4418, %v5026
    %v5093 = vld [vmem:[%s398] sm:$0xf]
    %v5094 = vld [vmem:[%s398 + $0x4] sm:$0xf]
    %v5095 = vld [vmem:[%s398 + $0x8] sm:$0x1]
    %v5096 = vld [vmem:[%s398 + $0xc] sm:$0xf]
    %v5097 = vld [vmem:[%s398 + $0x10] sm:$0xf]
    %v5098 = vld [vmem:[%s398 + $0x14] sm:$0x1]
    %v5099 = vld [vmem:[%s398 + $0x18] sm:$0xf]
    %v5100 = vld [vmem:[%s398 + $0x1c] sm:$0xf]
    %v5101 = vld [vmem:[%s398 + $0x20] sm:$0x1]
    %v5102 = vld [vmem:[%s398 + $0x24] sm:$0xf]
    %v5103 = vld [vmem:[%s398 + $0x28] sm:$0xf]
    %v5104 = vld [vmem:[%s398 + $0x2c] sm:$0x1]
    %v5105 = vld [vmem:[%s398 + $0x30] sm:$0xf]
    %v5106 = vld [vmem:[%s398 + $0x34] sm:$0xf]
    %v5107 = vld [vmem:[%s398 + $0x38] sm:$0x1]
    %v5108 = vld [vmem:[%s398 + $0x3c] sm:$0xf]
    %v5109 = vld [vmem:[%s398 + $0x40] sm:$0xf]
    %v5110 = vld [vmem:[%s398 + $0x44] sm:$0x1]
    %v5111 = vld [vmem:[%s398 + $0x48] sm:$0xf]
    %v5112 = vld [vmem:[%s398 + $0x4c] sm:$0xf]
    %v5113 = vld [vmem:[%s398 + $0x50] sm:$0x1]
    %v5114 = vld [vmem:[%s398 + $0x54] sm:$0xf]
    %v5115 = vld [vmem:[%s398 + $0x58] sm:$0xf]
    %v5116 = vld [vmem:[%s398 + $0x5c] sm:$0x1]
    %v5117 = vld [vmem:[%s398 + $0x60] sm:$0xf]
    %v5118 = vld [vmem:[%s398 + $0x64] sm:$0xf]
    %v5119 = vld [vmem:[%s398 + $0x68] sm:$0x1]
    %v5120 = vld [vmem:[%s398 + $0x6c] sm:$0xf]
    %v5121 = vld [vmem:[%s398 + $0x70] sm:$0xf]
    %v5122 = vld [vmem:[%s398 + $0x74] sm:$0x1]
    %v5123 = vld [vmem:[%s398 + $0x78] sm:$0xf]
    %v5124 = vld [vmem:[%s398 + $0x7c] sm:$0xf]
    %v5125 = vld [vmem:[%s398 + $0x80] sm:$0x1]
    %v5126 = vld [vmem:[%s398 + $0x84] sm:$0xf]
    %v5127 = vld [vmem:[%s398 + $0x88] sm:$0xf]
    %v5128 = vld [vmem:[%s398 + $0x8c] sm:$0x1]
    %v5129 = vld [vmem:[%s398 + $0x90] sm:$0xf]
    %v5130 = vld [vmem:[%s398 + $0x94] sm:$0xf]
    %v5131 = vld [vmem:[%s398 + $0x98] sm:$0x1]
    %v5132 = vld [vmem:[%s398 + $0x9c] sm:$0xf]
    %v5133 = vld [vmem:[%s398 + $0xa0] sm:$0xf]
    %v5134 = vld [vmem:[%s398 + $0xa4] sm:$0x1]
    %v5135 = vld [vmem:[%s398 + $0xa8] sm:$0xf]
    %v5136 = vld [vmem:[%s398 + $0xac] sm:$0xf]
    %v5137 = vld [vmem:[%s398 + $0xb0] sm:$0x1]
    %v5138 = vld [vmem:[%s398 + $0xb4] sm:$0xf]
    %v5139 = vld [vmem:[%s398 + $0xb8] sm:$0xf]
    %v5140 = vld [vmem:[%s398 + $0xbc] sm:$0x1]
    %v5141 = vld [vmem:[%s398 + $0xd8] sm:$0xf]
    %v5142 = vld [vmem:[%s398 + $0xdc] sm:$0xf]
    %v5143 = vld [vmem:[%s398 + $0xe0] sm:$0x1]
    %v5144 = vld [vmem:[%s398 + $0xe4] sm:$0xf]
    %v5145 = vld [vmem:[%s398 + $0xe8] sm:$0xf]
    %v5146 = vld [vmem:[%s398 + $0xec] sm:$0x1]
    %v5147 = vld [vmem:[%s398 + $0xf0] sm:$0xf]
    %v5148 = vld [vmem:[%s398 + $0xf4] sm:$0xf]
    %v5149 = vld [vmem:[%s398 + $0xf8] sm:$0x1]
    %v5150 = vld [vmem:[%s398 + $0xfc] sm:$0xf]
    %v5151 = vld [vmem:[%s398 + $0x100] sm:$0xf]
    %v5152 = vld [vmem:[%s398 + $0x104] sm:$0x1]
    %v5153 = vld [vmem:[%s398 + $0x108] sm:$0xf]
    %v5154 = vld [vmem:[%s398 + $0x10c] sm:$0xf]
    %v5155 = vld [vmem:[%s398 + $0x110] sm:$0x1]
    %v5156 = vld [vmem:[%s398 + $0x114] sm:$0xf]
    %v5157 = vld [vmem:[%s398 + $0x118] sm:$0xf]
    %v5158 = vld [vmem:[%s398 + $0x11c] sm:$0x1]
    %v5159 = vld [vmem:[%s398 + $0x120] sm:$0xf]
    %v5160 = vld [vmem:[%s398 + $0x124] sm:$0xf]
    %v5161 = vld [vmem:[%s398 + $0x128] sm:$0x1]
    %v5162 = vld [vmem:[%s398 + $0x12c] sm:$0xf]
    %v5163 = vld [vmem:[%s398 + $0x130] sm:$0xf]
    %v5164 = vld [vmem:[%s398 + $0x134] sm:$0x1]
    %v5165 = vld [vmem:[%s398 + $0x138] sm:$0xf]
    %v5166 = vld [vmem:[%s398 + $0x13c] sm:$0xf]
    %v5167 = vld [vmem:[%s398 + $0x140] sm:$0x1]
    %v5168 = vld [vmem:[%s398 + $0x144] sm:$0xf]
    %v5169 = vld [vmem:[%s398 + $0x148] sm:$0xf]
    %v5170 = vld [vmem:[%s398 + $0x14c] sm:$0x1]
    %v5171 = vld [vmem:[%s398 + $0x150] sm:$0xf]
    %v5172 = vld [vmem:[%s398 + $0x154] sm:$0xf]
    %v5173 = vld [vmem:[%s398 + $0x158] sm:$0x1]
    %v5174 = vld [vmem:[%s398 + $0x15c] sm:$0xf]
    %v5175 = vld [vmem:[%s398 + $0x160] sm:$0xf]
    %v5176 = vld [vmem:[%s398 + $0x164] sm:$0x1]
    %v5177 = vld [vmem:[%s398 + $0x168] sm:$0xf]
    %v5178 = vld [vmem:[%s398 + $0x16c] sm:$0xf]
    %v5179 = vld [vmem:[%s398 + $0x170] sm:$0x1]
    %v5180 = vld [vmem:[%s398 + $0x174] sm:$0xf]
    %v5181 = vld [vmem:[%s398 + $0x178] sm:$0xf]
    %v5182 = vld [vmem:[%s398 + $0x17c] sm:$0x1]
    %v5183 = vld [vmem:[%s398 + $0x180] sm:$0xf]
    %v5184 = vld [vmem:[%s398 + $0x184] sm:$0xf]
    %v5185 = vld [vmem:[%s398 + $0x188] sm:$0x1]
    %v5186 = vld [vmem:[%s398 + $0x18c] sm:$0xf]
    %v5187 = vld [vmem:[%s398 + $0x190] sm:$0xf]
    %v5188 = vld [vmem:[%s398 + $0x194] sm:$0x1]
    %v5190 = vshrl.u32 %v5093, 16
    %v5192 = vrot.slane %v5190, 4
    %v5193 = vshll.u32 %v5093, 16
    %v5195 = vrot.slane %v5193, 5
    %v5196 = vor.u32 %v5192, %v5195
    %v5197 = vrot.slane %v5196, 4
    %v5199 = vshll.u32 %v5094, 16
    %v5201 = vrot.slane %v5199, 5
    %v5202 = vsel %vm1770, %v5197, %v5201
    %v5203 = vshrl.u32 %v5094, 16
    %v5205 = vrot.slane %v5203, 4
    %v5206 = vor.u32 %v5205, %v5201
    %v5207 = vrot.slane %v5206, 4
    %v5209 = vshll.u32 %v5095, 16
    %v5211 = vrot.slane %v5209, 5
    %v5212 = vsel %vm1770, %v5207, %v5211
    %v5214 = vshrl.u32 %v5096, 16
    %v5216 = vrot.slane %v5214, 4
    %v5217 = vshll.u32 %v5096, 16
    %v5219 = vrot.slane %v5217, 5
    %v5220 = vor.u32 %v5216, %v5219
    %v5221 = vrot.slane %v5220, 4
    %v5223 = vshll.u32 %v5097, 16
    %v5225 = vrot.slane %v5223, 5
    %v5226 = vsel %vm1770, %v5221, %v5225
    %v5227 = vshrl.u32 %v5097, 16
    %v5229 = vrot.slane %v5227, 4
    %v5230 = vor.u32 %v5229, %v5225
    %v5231 = vrot.slane %v5230, 4
    %v5233 = vshll.u32 %v5098, 16
    %v5235 = vrot.slane %v5233, 5
    %v5236 = vsel %vm1770, %v5231, %v5235
    %v5238 = vshrl.u32 %v5099, 16
    %v5240 = vrot.slane %v5238, 4
    %v5241 = vshll.u32 %v5099, 16
    %v5243 = vrot.slane %v5241, 5
    %v5244 = vor.u32 %v5240, %v5243
    %v5245 = vrot.slane %v5244, 4
    %v5247 = vshll.u32 %v5100, 16
    %v5249 = vrot.slane %v5247, 5
    %v5250 = vsel %vm1770, %v5245, %v5249
    %v5251 = vshrl.u32 %v5100, 16
    %v5253 = vrot.slane %v5251, 4
    %v5254 = vor.u32 %v5253, %v5249
    %v5255 = vrot.slane %v5254, 4
    %v5257 = vshll.u32 %v5101, 16
    %v5259 = vrot.slane %v5257, 5
    %v5260 = vsel %vm1770, %v5255, %v5259
    %v5262 = vshrl.u32 %v5102, 16
    %v5264 = vrot.slane %v5262, 4
    %v5265 = vshll.u32 %v5102, 16
    %v5267 = vrot.slane %v5265, 5
    %v5268 = vor.u32 %v5264, %v5267
    %v5269 = vrot.slane %v5268, 4
    %v5271 = vshll.u32 %v5103, 16
    %v5273 = vrot.slane %v5271, 5
    %v5274 = vsel %vm1770, %v5269, %v5273
    %v5275 = vshrl.u32 %v5103, 16
    %v5277 = vrot.slane %v5275, 4
    %v5278 = vor.u32 %v5277, %v5273
    %v5279 = vrot.slane %v5278, 4
    %v5281 = vshll.u32 %v5104, 16
    %v5283 = vrot.slane %v5281, 5
    %v5284 = vsel %vm1770, %v5279, %v5283
    %v5286 = vshrl.u32 %v5105, 16
    %v5288 = vrot.slane %v5286, 4
    %v5289 = vshll.u32 %v5105, 16
    %v5291 = vrot.slane %v5289, 5
    %v5292 = vor.u32 %v5288, %v5291
    %v5293 = vrot.slane %v5292, 4
    %v5295 = vshll.u32 %v5106, 16
    %v5297 = vrot.slane %v5295, 5
    %v5298 = vsel %vm1770, %v5293, %v5297
    %v5299 = vshrl.u32 %v5106, 16
    %v5301 = vrot.slane %v5299, 4
    %v5302 = vor.u32 %v5301, %v5297
    %v5303 = vrot.slane %v5302, 4
    %v5305 = vshll.u32 %v5107, 16
    %v5307 = vrot.slane %v5305, 5
    %v5308 = vsel %vm1770, %v5303, %v5307
    %v5310 = vshrl.u32 %v5108, 16
    %v5312 = vrot.slane %v5310, 4
    %v5313 = vshll.u32 %v5108, 16
    %v5315 = vrot.slane %v5313, 5
    %v5316 = vor.u32 %v5312, %v5315
    %v5317 = vrot.slane %v5316, 4
    %v5319 = vshll.u32 %v5109, 16
    %v5321 = vrot.slane %v5319, 5
    %v5322 = vsel %vm1770, %v5317, %v5321
    %v5323 = vshrl.u32 %v5109, 16
    %v5325 = vrot.slane %v5323, 4
    %v5326 = vor.u32 %v5325, %v5321
    %v5327 = vrot.slane %v5326, 4
    %v5329 = vshll.u32 %v5110, 16
    %v5331 = vrot.slane %v5329, 5
    %v5332 = vsel %vm1770, %v5327, %v5331
    %v5334 = vshrl.u32 %v5111, 16
    %v5336 = vrot.slane %v5334, 4
    %v5337 = vshll.u32 %v5111, 16
    %v5339 = vrot.slane %v5337, 5
    %v5340 = vor.u32 %v5336, %v5339
    %v5341 = vrot.slane %v5340, 4
    %v5343 = vshll.u32 %v5112, 16
    %v5345 = vrot.slane %v5343, 5
    %v5346 = vsel %vm1770, %v5341, %v5345
    %v5347 = vshrl.u32 %v5112, 16
    %v5349 = vrot.slane %v5347, 4
    %v5350 = vor.u32 %v5349, %v5345
    %v5351 = vrot.slane %v5350, 4
    %v5353 = vshll.u32 %v5113, 16
    %v5355 = vrot.slane %v5353, 5
    %v5356 = vsel %vm1770, %v5351, %v5355
    %v5358 = vshrl.u32 %v5114, 16
    %v5360 = vrot.slane %v5358, 4
    %v5361 = vshll.u32 %v5114, 16
    %v5363 = vrot.slane %v5361, 5
    %v5364 = vor.u32 %v5360, %v5363
    %v5365 = vrot.slane %v5364, 4
    %v5367 = vshll.u32 %v5115, 16
    %v5369 = vrot.slane %v5367, 5
    %v5370 = vsel %vm1770, %v5365, %v5369
    %v5371 = vshrl.u32 %v5115, 16
    %v5373 = vrot.slane %v5371, 4
    %v5374 = vor.u32 %v5373, %v5369
    %v5375 = vrot.slane %v5374, 4
    %v5377 = vshll.u32 %v5116, 16
    %v5379 = vrot.slane %v5377, 5
    %v5380 = vsel %vm1770, %v5375, %v5379
    %v5382 = vshrl.u32 %v5117, 16
    %v5384 = vrot.slane %v5382, 4
    %v5385 = vshll.u32 %v5117, 16
    %v5387 = vrot.slane %v5385, 5
    %v5388 = vor.u32 %v5384, %v5387
    %v5389 = vrot.slane %v5388, 4
    %v5391 = vshll.u32 %v5118, 16
    %v5393 = vrot.slane %v5391, 5
    %v5394 = vsel %vm1770, %v5389, %v5393
    %v5395 = vshrl.u32 %v5118, 16
    %v5397 = vrot.slane %v5395, 4
    %v5398 = vor.u32 %v5397, %v5393
    %v5399 = vrot.slane %v5398, 4
    %v5401 = vshll.u32 %v5119, 16
    %v5403 = vrot.slane %v5401, 5
    %v5404 = vsel %vm1770, %v5399, %v5403
    %v5406 = vshrl.u32 %v5120, 16
    %v5408 = vrot.slane %v5406, 4
    %v5409 = vshll.u32 %v5120, 16
    %v5411 = vrot.slane %v5409, 5
    %v5412 = vor.u32 %v5408, %v5411
    %v5413 = vrot.slane %v5412, 4
    %v5415 = vshll.u32 %v5121, 16
    %v5417 = vrot.slane %v5415, 5
    %v5418 = vsel %vm1770, %v5413, %v5417
    %v5419 = vshrl.u32 %v5121, 16
    %v5421 = vrot.slane %v5419, 4
    %v5422 = vor.u32 %v5421, %v5417
    %v5423 = vrot.slane %v5422, 4
    %v5425 = vshll.u32 %v5122, 16
    %v5427 = vrot.slane %v5425, 5
    %v5428 = vsel %vm1770, %v5423, %v5427
    %v5430 = vshrl.u32 %v5123, 16
    %v5432 = vrot.slane %v5430, 4
    %v5433 = vshll.u32 %v5123, 16
    %v5435 = vrot.slane %v5433, 5
    %v5436 = vor.u32 %v5432, %v5435
    %v5437 = vrot.slane %v5436, 4
    %v5439 = vshll.u32 %v5124, 16
    %v5441 = vrot.slane %v5439, 5
    %v5442 = vsel %vm1770, %v5437, %v5441
    %v5443 = vshrl.u32 %v5124, 16
    %v5445 = vrot.slane %v5443, 4
    %v5446 = vor.u32 %v5445, %v5441
    %v5447 = vrot.slane %v5446, 4
    %v5449 = vshll.u32 %v5125, 16
    %v5451 = vrot.slane %v5449, 5
    %v5452 = vsel %vm1770, %v5447, %v5451
    %v5454 = vshrl.u32 %v5126, 16
    %v5456 = vrot.slane %v5454, 4
    %v5457 = vshll.u32 %v5126, 16
    %v5459 = vrot.slane %v5457, 5
    %v5460 = vor.u32 %v5456, %v5459
    %v5461 = vrot.slane %v5460, 4
    %v5463 = vshll.u32 %v5127, 16
    %v5465 = vrot.slane %v5463, 5
    %v5466 = vsel %vm1770, %v5461, %v5465
    %v5467 = vshrl.u32 %v5127, 16
    %v5469 = vrot.slane %v5467, 4
    %v5470 = vor.u32 %v5469, %v5465
    %v5471 = vrot.slane %v5470, 4
    %v5473 = vshll.u32 %v5128, 16
    %v5475 = vrot.slane %v5473, 5
    %v5476 = vsel %vm1770, %v5471, %v5475
    %v5478 = vshrl.u32 %v5129, 16
    %v5480 = vrot.slane %v5478, 4
    %v5481 = vshll.u32 %v5129, 16
    %v5483 = vrot.slane %v5481, 5
    %v5484 = vor.u32 %v5480, %v5483
    %v5485 = vrot.slane %v5484, 4
    %v5487 = vshll.u32 %v5130, 16
    %v5489 = vrot.slane %v5487, 5
    %v5490 = vsel %vm1770, %v5485, %v5489
    %v5491 = vshrl.u32 %v5130, 16
    %v5493 = vrot.slane %v5491, 4
    %v5494 = vor.u32 %v5493, %v5489
    %v5495 = vrot.slane %v5494, 4
    %v5497 = vshll.u32 %v5131, 16
    %v5499 = vrot.slane %v5497, 5
    %v5500 = vsel %vm1770, %v5495, %v5499
    %v5502 = vshrl.u32 %v5132, 16
    %v5504 = vrot.slane %v5502, 4
    %v5505 = vshll.u32 %v5132, 16
    %v5507 = vrot.slane %v5505, 5
    %v5508 = vor.u32 %v5504, %v5507
    %v5509 = vrot.slane %v5508, 4
    %v5511 = vshll.u32 %v5133, 16
    %v5513 = vrot.slane %v5511, 5
    %v5514 = vsel %vm1770, %v5509, %v5513
    %v5515 = vshrl.u32 %v5133, 16
    %v5517 = vrot.slane %v5515, 4
    %v5518 = vor.u32 %v5517, %v5513
    %v5519 = vrot.slane %v5518, 4
    %v5521 = vshll.u32 %v5134, 16
    %v5523 = vrot.slane %v5521, 5
    %v5524 = vsel %vm1770, %v5519, %v5523
    %v5526 = vshrl.u32 %v5135, 16
    %v5528 = vrot.slane %v5526, 4
    %v5529 = vshll.u32 %v5135, 16
    %v5531 = vrot.slane %v5529, 5
    %v5532 = vor.u32 %v5528, %v5531
    %v5533 = vrot.slane %v5532, 4
    %v5535 = vshll.u32 %v5136, 16
    %v5537 = vrot.slane %v5535, 5
    %v5538 = vsel %vm1770, %v5533, %v5537
    %v5539 = vshrl.u32 %v5136, 16
    %v5541 = vrot.slane %v5539, 4
    %v5542 = vor.u32 %v5541, %v5537
    %v5543 = vrot.slane %v5542, 4
    %v5545 = vshll.u32 %v5137, 16
    %v5547 = vrot.slane %v5545, 5
    %v5548 = vsel %vm1770, %v5543, %v5547
    %v5550 = vshrl.u32 %v5138, 16
    %v5552 = vrot.slane %v5550, 4
    %v5553 = vshll.u32 %v5138, 16
    %v5555 = vrot.slane %v5553, 5
    %v5556 = vor.u32 %v5552, %v5555
    %v5557 = vrot.slane %v5556, 4
    %v5559 = vshll.u32 %v5139, 16
    %v5561 = vrot.slane %v5559, 5
    %v5562 = vsel %vm1770, %v5557, %v5561
    %v5563 = vshrl.u32 %v5139, 16
    %v5565 = vrot.slane %v5563, 4
    %v5566 = vor.u32 %v5565, %v5561
    %v5567 = vrot.slane %v5566, 4
    %v5569 = vshll.u32 %v5140, 16
    %v5571 = vrot.slane %v5569, 5
    %v5572 = vsel %vm1770, %v5567, %v5571
    %v5574 = vshrl.u32 %v5141, 16
    %v5576 = vrot.slane %v5574, 4
    %v5577 = vshll.u32 %v5141, 16
    %v5579 = vrot.slane %v5577, 5
    %v5580 = vor.u32 %v5576, %v5579
    %v5581 = vrot.slane %v5580, 4
    %v5583 = vshll.u32 %v5142, 16
    %v5585 = vrot.slane %v5583, 5
    %v5586 = vsel %vm1770, %v5581, %v5585
    %v5587 = vshrl.u32 %v5142, 16
    %v5589 = vrot.slane %v5587, 4
    %v5590 = vor.u32 %v5589, %v5585
    %v5591 = vrot.slane %v5590, 4
    %v5593 = vshll.u32 %v5143, 16
    %v5595 = vrot.slane %v5593, 5
    %v5596 = vsel %vm1770, %v5591, %v5595
    %v5598 = vshrl.u32 %v5144, 16
    %v5600 = vrot.slane %v5598, 4
    %v5601 = vshll.u32 %v5144, 16
    %v5603 = vrot.slane %v5601, 5
    %v5604 = vor.u32 %v5600, %v5603
    %v5605 = vrot.slane %v5604, 4
    %v5607 = vshll.u32 %v5145, 16
    %v5609 = vrot.slane %v5607, 5
    %v5610 = vsel %vm1770, %v5605, %v5609
    %v5611 = vshrl.u32 %v5145, 16
    %v5613 = vrot.slane %v5611, 4
    %v5614 = vor.u32 %v5613, %v5609
    %v5615 = vrot.slane %v5614, 4
    %v5617 = vshll.u32 %v5146, 16
    %v5619 = vrot.slane %v5617, 5
    %v5620 = vsel %vm1770, %v5615, %v5619
    %v5622 = vshrl.u32 %v5147, 16
    %v5624 = vrot.slane %v5622, 4
    %v5625 = vshll.u32 %v5147, 16
    %v5627 = vrot.slane %v5625, 5
    %v5628 = vor.u32 %v5624, %v5627
    %v5629 = vrot.slane %v5628, 4
    %v5631 = vshll.u32 %v5148, 16
    %v5633 = vrot.slane %v5631, 5
    %v5634 = vsel %vm1770, %v5629, %v5633
    %v5635 = vshrl.u32 %v5148, 16
    %v5637 = vrot.slane %v5635, 4
    %v5638 = vor.u32 %v5637, %v5633
    %v5639 = vrot.slane %v5638, 4
    %v5641 = vshll.u32 %v5149, 16
    %v5643 = vrot.slane %v5641, 5
    %v5644 = vsel %vm1770, %v5639, %v5643
    %v5646 = vshrl.u32 %v5150, 16
    %v5648 = vrot.slane %v5646, 4
    %v5649 = vshll.u32 %v5150, 16
    %v5651 = vrot.slane %v5649, 5
    %v5652 = vor.u32 %v5648, %v5651
    %v5653 = vrot.slane %v5652, 4
    %v5655 = vshll.u32 %v5151, 16
    %v5657 = vrot.slane %v5655, 5
    %v5658 = vsel %vm1770, %v5653, %v5657
    %v5659 = vshrl.u32 %v5151, 16
    %v5661 = vrot.slane %v5659, 4
    %v5662 = vor.u32 %v5661, %v5657
    %v5663 = vrot.slane %v5662, 4
    %v5665 = vshll.u32 %v5152, 16
    %v5667 = vrot.slane %v5665, 5
    %v5668 = vsel %vm1770, %v5663, %v5667
    %v5670 = vshrl.u32 %v5153, 16
    %v5672 = vrot.slane %v5670, 4
    %v5673 = vshll.u32 %v5153, 16
    %v5675 = vrot.slane %v5673, 5
    %v5676 = vor.u32 %v5672, %v5675
    %v5677 = vrot.slane %v5676, 4
    %v5679 = vshll.u32 %v5154, 16
    %v5681 = vrot.slane %v5679, 5
    %v5682 = vsel %vm1770, %v5677, %v5681
    %v5683 = vshrl.u32 %v5154, 16
    %v5685 = vrot.slane %v5683, 4
    %v5686 = vor.u32 %v5685, %v5681
    %v5687 = vrot.slane %v5686, 4
    %v5689 = vshll.u32 %v5155, 16
    %v5691 = vrot.slane %v5689, 5
    %v5692 = vsel %vm1770, %v5687, %v5691
    %v5694 = vshrl.u32 %v5156, 16
    %v5696 = vrot.slane %v5694, 4
    %v5697 = vshll.u32 %v5156, 16
    %v5699 = vrot.slane %v5697, 5
    %v5700 = vor.u32 %v5696, %v5699
    %v5701 = vrot.slane %v5700, 4
    %v5703 = vshll.u32 %v5157, 16
    %v5705 = vrot.slane %v5703, 5
    %v5706 = vsel %vm1770, %v5701, %v5705
    %v5707 = vshrl.u32 %v5157, 16
    %v5709 = vrot.slane %v5707, 4
    %v5710 = vor.u32 %v5709, %v5705
    %v5711 = vrot.slane %v5710, 4
    %v5713 = vshll.u32 %v5158, 16
    %v5715 = vrot.slane %v5713, 5
    %v5716 = vsel %vm1770, %v5711, %v5715
    %v5718 = vshrl.u32 %v5159, 16
    %v5720 = vrot.slane %v5718, 4
    %v5721 = vshll.u32 %v5159, 16
    %v5723 = vrot.slane %v5721, 5
    %v5724 = vor.u32 %v5720, %v5723
    %v5725 = vrot.slane %v5724, 4
    %v5727 = vshll.u32 %v5160, 16
    %v5729 = vrot.slane %v5727, 5
    %v5730 = vsel %vm1770, %v5725, %v5729
    %v5731 = vshrl.u32 %v5160, 16
    %v5733 = vrot.slane %v5731, 4
    %v5734 = vor.u32 %v5733, %v5729
    %v5735 = vrot.slane %v5734, 4
    %v5737 = vshll.u32 %v5161, 16
    %v5739 = vrot.slane %v5737, 5
    %v5740 = vsel %vm1770, %v5735, %v5739
    %v5742 = vshrl.u32 %v5162, 16
    %v5744 = vrot.slane %v5742, 4
    %v5745 = vshll.u32 %v5162, 16
    %v5747 = vrot.slane %v5745, 5
    %v5748 = vor.u32 %v5744, %v5747
    %v5749 = vrot.slane %v5748, 4
    %v5751 = vshll.u32 %v5163, 16
    %v5753 = vrot.slane %v5751, 5
    %v5754 = vsel %vm1770, %v5749, %v5753
    %v5755 = vshrl.u32 %v5163, 16
    %v5757 = vrot.slane %v5755, 4
    %v5758 = vor.u32 %v5757, %v5753
    %v5759 = vrot.slane %v5758, 4
    %v5761 = vshll.u32 %v5164, 16
    %v5763 = vrot.slane %v5761, 5
    %v5764 = vsel %vm1770, %v5759, %v5763
    %v5766 = vshrl.u32 %v5165, 16
    %v5768 = vrot.slane %v5766, 4
    %v5769 = vshll.u32 %v5165, 16
    %v5771 = vrot.slane %v5769, 5
    %v5772 = vor.u32 %v5768, %v5771
    %v5773 = vrot.slane %v5772, 4
    %v5775 = vshll.u32 %v5166, 16
    %v5777 = vrot.slane %v5775, 5
    %v5778 = vsel %vm1770, %v5773, %v5777
    %v5779 = vshrl.u32 %v5166, 16
    %v5781 = vrot.slane %v5779, 4
    %v5782 = vor.u32 %v5781, %v5777
    %v5783 = vrot.slane %v5782, 4
    %v5785 = vshll.u32 %v5167, 16
    %v5787 = vrot.slane %v5785, 5
    %v5788 = vsel %vm1770, %v5783, %v5787
    %v5790 = vshrl.u32 %v5168, 16
    %v5792 = vrot.slane %v5790, 4
    %v5793 = vshll.u32 %v5168, 16
    %v5795 = vrot.slane %v5793, 5
    %v5796 = vor.u32 %v5792, %v5795
    %v5797 = vrot.slane %v5796, 4
    %v5799 = vshll.u32 %v5169, 16
    %v5801 = vrot.slane %v5799, 5
    %v5802 = vsel %vm1770, %v5797, %v5801
    %v5803 = vshrl.u32 %v5169, 16
    %v5805 = vrot.slane %v5803, 4
    %v5806 = vor.u32 %v5805, %v5801
    %v5807 = vrot.slane %v5806, 4
    %v5809 = vshll.u32 %v5170, 16
    %v5811 = vrot.slane %v5809, 5
    %v5812 = vsel %vm1770, %v5807, %v5811
    %v5814 = vshrl.u32 %v5171, 16
    %v5816 = vrot.slane %v5814, 4
    %v5817 = vshll.u32 %v5171, 16
    %v5819 = vrot.slane %v5817, 5
    %v5820 = vor.u32 %v5816, %v5819
    %v5821 = vrot.slane %v5820, 4
    %v5823 = vshll.u32 %v5172, 16
    %v5825 = vrot.slane %v5823, 5
    %v5826 = vsel %vm1770, %v5821, %v5825
    %v5827 = vshrl.u32 %v5172, 16
    %v5829 = vrot.slane %v5827, 4
    %v5830 = vor.u32 %v5829, %v5825
    %v5831 = vrot.slane %v5830, 4
    %v5833 = vshll.u32 %v5173, 16
    %v5835 = vrot.slane %v5833, 5
    %v5836 = vsel %vm1770, %v5831, %v5835
    %v5838 = vshrl.u32 %v5174, 16
    %v5840 = vrot.slane %v5838, 4
    %v5841 = vshll.u32 %v5174, 16
    %v5843 = vrot.slane %v5841, 5
    %v5844 = vor.u32 %v5840, %v5843
    %v5845 = vrot.slane %v5844, 4
    %v5847 = vshll.u32 %v5175, 16
    %v5849 = vrot.slane %v5847, 5
    %v5850 = vsel %vm1770, %v5845, %v5849
    %v5851 = vshrl.u32 %v5175, 16
    %v5853 = vrot.slane %v5851, 4
    %v5854 = vor.u32 %v5853, %v5849
    %v5855 = vrot.slane %v5854, 4
    %v5857 = vshll.u32 %v5176, 16
    %v5859 = vrot.slane %v5857, 5
    %v5860 = vsel %vm1770, %v5855, %v5859
    %v5862 = vshrl.u32 %v5177, 16
    %v5864 = vrot.slane %v5862, 4
    %v5865 = vshll.u32 %v5177, 16
    %v5867 = vrot.slane %v5865, 5
    %v5868 = vor.u32 %v5864, %v5867
    %v5869 = vrot.slane %v5868, 4
    %v5871 = vshll.u32 %v5178, 16
    %v5873 = vrot.slane %v5871, 5
    %v5874 = vsel %vm1770, %v5869, %v5873
    %v5875 = vshrl.u32 %v5178, 16
    %v5877 = vrot.slane %v5875, 4
    %v5878 = vor.u32 %v5877, %v5873
    %v5879 = vrot.slane %v5878, 4
    %v5881 = vshll.u32 %v5179, 16
    %v5883 = vrot.slane %v5881, 5
    %v5884 = vsel %vm1770, %v5879, %v5883
    %v5886 = vshrl.u32 %v5180, 16
    %v5888 = vrot.slane %v5886, 4
    %v5889 = vshll.u32 %v5180, 16
    %v5891 = vrot.slane %v5889, 5
    %v5892 = vor.u32 %v5888, %v5891
    %v5893 = vrot.slane %v5892, 4
    %v5895 = vshll.u32 %v5181, 16
    %v5897 = vrot.slane %v5895, 5
    %v5898 = vsel %vm1770, %v5893, %v5897
    %v5899 = vshrl.u32 %v5181, 16
    %v5901 = vrot.slane %v5899, 4
    %v5902 = vor.u32 %v5901, %v5897
    %v5903 = vrot.slane %v5902, 4
    %v5905 = vshll.u32 %v5182, 16
    %v5907 = vrot.slane %v5905, 5
    %v5908 = vsel %vm1770, %v5903, %v5907
    %v5910 = vshrl.u32 %v5183, 16
    %v5912 = vrot.slane %v5910, 4
    %v5913 = vshll.u32 %v5183, 16
    %v5915 = vrot.slane %v5913, 5
    %v5916 = vor.u32 %v5912, %v5915
    %v5917 = vrot.slane %v5916, 4
    %v5919 = vshll.u32 %v5184, 16
    %v5921 = vrot.slane %v5919, 5
    %v5922 = vsel %vm1770, %v5917, %v5921
    %v5923 = vshrl.u32 %v5184, 16
    %v5925 = vrot.slane %v5923, 4
    %v5926 = vor.u32 %v5925, %v5921
    %v5927 = vrot.slane %v5926, 4
    %v5929 = vshll.u32 %v5185, 16
    %v5931 = vrot.slane %v5929, 5
    %v5932 = vsel %vm1770, %v5927, %v5931
    %v5934 = vshrl.u32 %v5186, 16
    %v5936 = vrot.slane %v5934, 4
    %v5937 = vshll.u32 %v5186, 16
    %v5939 = vrot.slane %v5937, 5
    %v5940 = vor.u32 %v5936, %v5939
    %v5941 = vrot.slane %v5940, 4
    %v5943 = vshll.u32 %v5187, 16
    %v5945 = vrot.slane %v5943, 5
    %v5946 = vsel %vm1770, %v5941, %v5945
    %v5947 = vshrl.u32 %v5187, 16
    %v5949 = vrot.slane %v5947, 4
    %v5950 = vor.u32 %v5949, %v5945
    %v5951 = vrot.slane %v5950, 4
    %v5953 = vshll.u32 %v5188, 16
    %v5955 = vrot.slane %v5953, 5
    %v5956 = vsel %vm1770, %v5951, %v5955
    %s5957 = scalar_lea.vmem [#allocation6], 256
    %v5958 = vld [vmem:[%s5957] sm:$0xf]
    %v5959 = vld [vmem:[%s5957 + $0x4] sm:$0xf]
    %v5960 = vld [vmem:[%s5957 + $0x8] sm:$0xf]
    %v5961 = vld [vmem:[%s5957 + $0xc] sm:$0xf]
    %v5962 = vld [vmem:[%s5957 + $0x10] sm:$0xf]
    %v5963 = vld [vmem:[%s5957 + $0x14] sm:$0xf]
    %v5964 = vld [vmem:[%s5957 + $0x18] sm:$0xf]
    %v5965 = vld [vmem:[%s5957 + $0x1c] sm:$0xf]
    %v5966 = vld [vmem:[%s5957 + $0x20] sm:$0xf]
    %v5967 = vld [vmem:[%s5957 + $0x24] sm:$0xf]
    %v5968 = vld [vmem:[%s5957 + $0x28] sm:$0xf]
    %v5969 = vld [vmem:[%s5957 + $0x2c] sm:$0xf]
    %v5970 = vld [vmem:[%s5957 + $0x30] sm:$0xf]
    %v5971 = vld [vmem:[%s5957 + $0x34] sm:$0xf]
    %v5972 = vld [vmem:[%s5957 + $0x38] sm:$0xf]
    %v5973 = vld [vmem:[%s5957 + $0x3c] sm:$0xf]
    %v5974 = vunpack.c.l.b16 %v5202
    %v5975 = vunpack.c.l.b16 %v5212
    %v5976 = vunpack.c.l.b16 %v5226
    %v5977 = vunpack.c.l.b16 %v5236
    %v5978 = vunpack.c.l.b16 %v5250
    %v5979 = vunpack.c.l.b16 %v5260
    %v5980 = vunpack.c.l.b16 %v5274
    %v5981 = vunpack.c.l.b16 %v5284
    %v5982 = vunpack.c.l.b16 %v5298
    %v5983 = vunpack.c.l.b16 %v5308
    %v5984 = vunpack.c.l.b16 %v5322
    %v5985 = vunpack.c.l.b16 %v5332
    %v5986 = vunpack.c.l.b16 %v5346
    %v5987 = vunpack.c.l.b16 %v5356
    %v5988 = vunpack.c.l.b16 %v5370
    %v5989 = vunpack.c.l.b16 %v5380
    %v5990 = vunpack.c.l.b16 %v5394
    %v5991 = vunpack.c.l.b16 %v5404
    %v5992 = vunpack.c.l.b16 %v5418
    %v5993 = vunpack.c.l.b16 %v5428
    %v5994 = vunpack.c.l.b16 %v5442
    %v5995 = vunpack.c.l.b16 %v5452
    %v5996 = vunpack.c.l.b16 %v5466
    %v5997 = vunpack.c.l.b16 %v5476
    %v5998 = vunpack.c.l.b16 %v5490
    %v5999 = vunpack.c.l.b16 %v5500
    %v6000 = vunpack.c.l.b16 %v5514
    %v6001 = vunpack.c.l.b16 %v5524
    %v6002 = vunpack.c.l.b16 %v5538
    %v6003 = vunpack.c.l.b16 %v5548
    %v6004 = vunpack.c.l.b16 %v5562
    %v6005 = vunpack.c.l.b16 %v5572
    %v6006 = vunpack.c.l.b16 %v5586
    %v6007 = vunpack.c.l.b16 %v5596
    %v6008 = vunpack.c.l.b16 %v5610
    %v6009 = vunpack.c.l.b16 %v5620
    %v6010 = vunpack.c.l.b16 %v5634
    %v6011 = vunpack.c.l.b16 %v5644
    %v6012 = vunpack.c.l.b16 %v5658
    %v6013 = vunpack.c.l.b16 %v5668
    %v6014 = vunpack.c.l.b16 %v5682
    %v6015 = vunpack.c.l.b16 %v5692
    %v6016 = vunpack.c.l.b16 %v5706
    %v6017 = vunpack.c.l.b16 %v5716
    %v6018 = vunpack.c.l.b16 %v5730
    %v6019 = vunpack.c.l.b16 %v5740
    %v6020 = vunpack.c.l.b16 %v5754
    %v6021 = vunpack.c.l.b16 %v5764
    %v6022 = vunpack.c.l.b16 %v5778
    %v6023 = vunpack.c.l.b16 %v5788
    %v6024 = vunpack.c.l.b16 %v5802
    %v6025 = vunpack.c.l.b16 %v5812
    %v6026 = vunpack.c.l.b16 %v5826
    %v6027 = vunpack.c.l.b16 %v5836
    %v6028 = vunpack.c.l.b16 %v5850
    %v6029 = vunpack.c.l.b16 %v5860
    %v6030 = vunpack.c.l.b16 %v5874
    %v6031 = vunpack.c.l.b16 %v5884
    %v6032 = vunpack.c.l.b16 %v5898
    %v6033 = vunpack.c.l.b16 %v5908
    %v6034 = vunpack.c.l.b16 %v5922
    %v6035 = vunpack.c.l.b16 %v5932
    %v6036 = vunpack.c.l.b16 %v5946
    %v6037 = vunpack.c.l.b16 %v5956
    %v6038 = vpack.c.b16 %v5975, %v5974
    %v6039 = vpack.c.b16 %v5977, %v5976
    %v6040 = vpack.c.b16 %v5979, %v5978
    %v6041 = vpack.c.b16 %v5981, %v5980
    %v6042 = vpack.c.b16 %v5983, %v5982
    %v6043 = vpack.c.b16 %v5985, %v5984
    %v6044 = vpack.c.b16 %v5987, %v5986
    %v6045 = vpack.c.b16 %v5989, %v5988
    %v6046 = vpack.c.b16 %v5991, %v5990
    %v6047 = vpack.c.b16 %v5993, %v5992
    %v6048 = vpack.c.b16 %v5995, %v5994
    %v6049 = vpack.c.b16 %v5997, %v5996
    %v6050 = vpack.c.b16 %v5999, %v5998
    %v6051 = vpack.c.b16 %v6001, %v6000
    %v6052 = vpack.c.b16 %v6003, %v6002
    %v6053 = vpack.c.b16 %v6005, %v6004
    %v6054 = vpack.c.b16 %v6007, %v6006
    %v6055 = vpack.c.b16 %v6009, %v6008
    %v6056 = vpack.c.b16 %v6011, %v6010
    %v6057 = vpack.c.b16 %v6013, %v6012
    %v6058 = vpack.c.b16 %v6015, %v6014
    %v6059 = vpack.c.b16 %v6017, %v6016
    %v6060 = vpack.c.b16 %v6019, %v6018
    %v6061 = vpack.c.b16 %v6021, %v6020
    %v6062 = vpack.c.b16 %v6023, %v6022
    %v6063 = vpack.c.b16 %v6025, %v6024
    %v6064 = vpack.c.b16 %v6027, %v6026
    %v6065 = vpack.c.b16 %v6029, %v6028
    %v6066 = vpack.c.b16 %v6031, %v6030
    %v6067 = vpack.c.b16 %v6033, %v6032
    %v6068 = vpack.c.b16 %v6035, %v6034
    %v6069 = vpack.c.b16 %v6037, %v6036
    %v6118 = vunpack.c.l.b16 %v5958
    %v6119 = vunpack.c.l.b16 %v5959
    %v6120 = vunpack.c.l.b16 %v5960
    %v6121 = vunpack.c.l.b16 %v5961
    %v6122 = vunpack.c.l.b16 %v5962
    %v6123 = vunpack.c.l.b16 %v5963
    %v6124 = vunpack.c.l.b16 %v5964
    %v6125 = vunpack.c.l.b16 %v5965
    %v6126 = vunpack.c.l.b16 %v5966
    %v6127 = vunpack.c.l.b16 %v5967
    %v6128 = vunpack.c.l.b16 %v5968
    %v6129 = vunpack.c.l.b16 %v5969
    %v6130 = vunpack.c.l.b16 %v5970
    %v6131 = vunpack.c.l.b16 %v5971
    %v6132 = vunpack.c.l.b16 %v5972
    %v6133 = vunpack.c.l.b16 %v5973
    %v6134 = vpack.c.b16 %v6119, %v6118
    %v6135 = vpack.c.b16 %v6121, %v6120
    %v6136 = vpack.c.b16 %v6123, %v6122
    %v6137 = vpack.c.b16 %v6125, %v6124
    %v6138 = vpack.c.b16 %v6127, %v6126
    %v6139 = vpack.c.b16 %v6129, %v6128
    %v6140 = vpack.c.b16 %v6131, %v6130
    %v6141 = vpack.c.b16 %v6133, %v6132
    %6150 = vmatprep.subr.bf16.mxu0 0
    %6151 = vmatpush1.bf16.msra.mxu0 %v6141
    %6152 = vmatprep.subr.bf16.mxu0 0
    %6153 = vmatpush1.bf16.msra.mxu0 %v6140
    %6154 = vmatprep.subr.bf16.mxu0 0
    %6155 = vmatpush1.bf16.msra.mxu0 %v6139
    %6156 = vmatprep.subr.bf16.mxu0 0
    %6157 = vmatpush1.bf16.msra.mxu0 %v6138
    %6158 = vmatprep.subr.bf16.mxu0 0
    %6159 = vmatpush1.bf16.msra.mxu0 %v6137
    %6160 = vmatprep.subr.bf16.mxu0 0
    %6161 = vmatpush1.bf16.msra.mxu0 %v6136
    %6162 = vmatprep.subr.bf16.mxu0 0
    %6163 = vmatpush1.bf16.msra.mxu0 %v6135
    %6164 = vmatprep.subr.bf16.mxu0 0
    %6165 = vmatpush1.bf16.msra.mxu0 %v6134
    %6166 = vmatprep.subr.bf16.mxu0 0
    %6167 = vmatpush2.bf16.msra.mxu0 0
    %6168 = vmatprep.subr.bf16.mxu0 0
    %6169 = vmatpush2.bf16.msra.mxu0 0
    %6170 = vmatprep.subr.bf16.mxu0 0
    %6171 = vmatpush2.bf16.msra.mxu0 0
    %6172 = vmatprep.subr.bf16.mxu0 0
    %6173 = vmatpush2.bf16.msra.mxu0 0
    %6174 = vmatprep.subr.bf16.mxu0 0
    %6175 = vmatpush2.bf16.msra.mxu0 0
    %6176 = vmatprep.subr.bf16.mxu0 0
    %6177 = vmatpush2.bf16.msra.mxu0 0
    %6178 = vmatprep.subr.bf16.mxu0 0
    %6179 = vmatpush2.bf16.msra.mxu0 0
    %6180 = vmatprep.subr.bf16.mxu0 0
    %6181 = vmatpush2.bf16.msra.mxu0 0
    %6182 = vmatprep.mubr.bf16.mxu0 0
    %6183 = vmatmul.mubr.bf16.gmra.mxu0 %v6038
    %v6184 = vpop.f32.mrf.mxu0
    %v6185 = vadd.f32 0.0, %v6184
    %v6186 = vpop.f32.mrf.mxu0
    %v6187 = vpop.f32.mrf.mxu0
    %v6188 = vadd.f32 0.0, %v6187
    %v6189 = vpop.f32.mrf.mxu0
    %6190 = vmatprep.mubr.bf16.mxu0 0
    %6191 = vmatmul.mubr.bf16.gmra.mxu0 %v6039
    %v6192 = vpop.f32.mrf.mxu0
    %v6193 = vadd.f32 0.0, %v6192
    %v6194 = vpop.f32.mrf.mxu0
    %v6195 = vpop.f32.mrf.mxu0
    %v6196 = vadd.f32 0.0, %v6195
    %v6197 = vpop.f32.mrf.mxu0
    %6198 = vmatprep.mubr.bf16.mxu0 0
    %6199 = vmatmul.mubr.bf16.gmra.mxu0 %v6040
    %v6200 = vpop.f32.mrf.mxu0
    %v6201 = vadd.f32 0.0, %v6200
    %v6202 = vpop.f32.mrf.mxu0
    %v6203 = vpop.f32.mrf.mxu0
    %v6204 = vadd.f32 0.0, %v6203
    %v6205 = vpop.f32.mrf.mxu0
    %6206 = vmatprep.mubr.bf16.mxu0 0
    %6207 = vmatmul.mubr.bf16.gmra.mxu0 %v6041
    %v6208 = vpop.f32.mrf.mxu0
    %v6209 = vadd.f32 0.0, %v6208
    %v6210 = vpop.f32.mrf.mxu0
    %v6211 = vpop.f32.mrf.mxu0
    %v6212 = vadd.f32 0.0, %v6211
    %v6213 = vpop.f32.mrf.mxu0
    %6214 = vmatprep.mubr.bf16.mxu0 0
    %6215 = vmatmul.mubr.bf16.gmra.mxu0 %v6042
    %v6216 = vpop.f32.mrf.mxu0
    %v6217 = vadd.f32 0.0, %v6216
    %v6218 = vpop.f32.mrf.mxu0
    %v6219 = vpop.f32.mrf.mxu0
    %v6220 = vadd.f32 0.0, %v6219
    %v6221 = vpop.f32.mrf.mxu0
    %6222 = vmatprep.mubr.bf16.mxu0 0
    %6223 = vmatmul.mubr.bf16.gmra.mxu0 %v6043
    %v6224 = vpop.f32.mrf.mxu0
    %v6225 = vadd.f32 0.0, %v6224
    %v6226 = vpop.f32.mrf.mxu0
    %v6227 = vpop.f32.mrf.mxu0
    %v6228 = vadd.f32 0.0, %v6227
    %v6229 = vpop.f32.mrf.mxu0
    %6230 = vmatprep.mubr.bf16.mxu0 0
    %6231 = vmatmul.mubr.bf16.gmra.mxu0 %v6044
    %v6232 = vpop.f32.mrf.mxu0
    %v6233 = vadd.f32 0.0, %v6232
    %v6234 = vpop.f32.mrf.mxu0
    %v6235 = vpop.f32.mrf.mxu0
    %v6236 = vadd.f32 0.0, %v6235
    %v6237 = vpop.f32.mrf.mxu0
    %6238 = vmatprep.mubr.bf16.mxu0 0
    %6239 = vmatmul.mubr.bf16.gmra.mxu0 %v6045
    %v6240 = vpop.f32.mrf.mxu0
    %v6241 = vadd.f32 0.0, %v6240
    %v6242 = vpop.f32.mrf.mxu0
    %v6243 = vpop.f32.mrf.mxu0
    %v6244 = vadd.f32 0.0, %v6243
    %v6245 = vpop.f32.mrf.mxu0
    %6246 = vmatprep.mubr.bf16.mxu0 0
    %6247 = vmatmul.mubr.bf16.gmra.mxu0 %v6046
    %v6248 = vpop.f32.mrf.mxu0
    %v6249 = vadd.f32 0.0, %v6248
    %v6250 = vpop.f32.mrf.mxu0
    %v6251 = vpop.f32.mrf.mxu0
    %v6252 = vadd.f32 0.0, %v6251
    %v6253 = vpop.f32.mrf.mxu0
    %6254 = vmatprep.mubr.bf16.mxu0 0
    %6255 = vmatmul.mubr.bf16.gmra.mxu0 %v6047
    %v6256 = vpop.f32.mrf.mxu0
    %v6257 = vadd.f32 0.0, %v6256
    %v6258 = vpop.f32.mrf.mxu0
    %v6259 = vpop.f32.mrf.mxu0
    %v6260 = vadd.f32 0.0, %v6259
    %v6261 = vpop.f32.mrf.mxu0
    %6262 = vmatprep.mubr.bf16.mxu0 0
    %6263 = vmatmul.mubr.bf16.gmra.mxu0 %v6048
    %v6264 = vpop.f32.mrf.mxu0
    %v6265 = vadd.f32 0.0, %v6264
    %v6266 = vpop.f32.mrf.mxu0
    %v6267 = vpop.f32.mrf.mxu0
    %v6268 = vadd.f32 0.0, %v6267
    %v6269 = vpop.f32.mrf.mxu0
    %6270 = vmatprep.mubr.bf16.mxu0 0
    %6271 = vmatmul.mubr.bf16.gmra.mxu0 %v6049
    %v6272 = vpop.f32.mrf.mxu0
    %v6273 = vadd.f32 0.0, %v6272
    %v6274 = vpop.f32.mrf.mxu0
    %v6275 = vpop.f32.mrf.mxu0
    %v6276 = vadd.f32 0.0, %v6275
    %v6277 = vpop.f32.mrf.mxu0
    %6278 = vmatprep.mubr.bf16.mxu0 0
    %6279 = vmatmul.mubr.bf16.gmra.mxu0 %v6050
    %v6280 = vpop.f32.mrf.mxu0
    %v6281 = vadd.f32 0.0, %v6280
    %v6282 = vpop.f32.mrf.mxu0
    %v6283 = vpop.f32.mrf.mxu0
    %v6284 = vadd.f32 0.0, %v6283
    %v6285 = vpop.f32.mrf.mxu0
    %6286 = vmatprep.mubr.bf16.mxu0 0
    %6287 = vmatmul.mubr.bf16.gmra.mxu0 %v6051
    %v6288 = vpop.f32.mrf.mxu0
    %v6289 = vadd.f32 0.0, %v6288
    %v6290 = vpop.f32.mrf.mxu0
    %v6291 = vpop.f32.mrf.mxu0
    %v6292 = vadd.f32 0.0, %v6291
    %v6293 = vpop.f32.mrf.mxu0
    %6294 = vmatprep.mubr.bf16.mxu0 0
    %6295 = vmatmul.mubr.bf16.gmra.mxu0 %v6052
    %v6296 = vpop.f32.mrf.mxu0
    %v6297 = vadd.f32 0.0, %v6296
    %v6298 = vpop.f32.mrf.mxu0
    %v6299 = vpop.f32.mrf.mxu0
    %v6300 = vadd.f32 0.0, %v6299
    %v6301 = vpop.f32.mrf.mxu0
    %6302 = vmatprep.mubr.bf16.mxu0 0
    %6303 = vmatmul.mubr.bf16.gmra.mxu0 %v6053
    %v6304 = vpop.f32.mrf.mxu0
    %v6305 = vadd.f32 0.0, %v6304
    %v6306 = vpop.f32.mrf.mxu0
    %v6307 = vpop.f32.mrf.mxu0
    %v6308 = vadd.f32 0.0, %v6307
    %v6309 = vpop.f32.mrf.mxu0
    %6310 = vmatprep.mubr.bf16.mxu0 0
    %6311 = vmatmul.mubr.bf16.gmra.mxu0 %v6054
    %v6312 = vpop.f32.mrf.mxu0
    %v6313 = vadd.f32 0.0, %v6312
    %v6314 = vpop.f32.mrf.mxu0
    %v6315 = vpop.f32.mrf.mxu0
    %v6316 = vadd.f32 0.0, %v6315
    %v6317 = vpop.f32.mrf.mxu0
    %6318 = vmatprep.mubr.bf16.mxu0 0
    %6319 = vmatmul.mubr.bf16.gmra.mxu0 %v6055
    %v6320 = vpop.f32.mrf.mxu0
    %v6321 = vadd.f32 0.0, %v6320
    %v6322 = vpop.f32.mrf.mxu0
    %v6323 = vpop.f32.mrf.mxu0
    %v6324 = vadd.f32 0.0, %v6323
    %v6325 = vpop.f32.mrf.mxu0
    %6326 = vmatprep.mubr.bf16.mxu0 0
    %6327 = vmatmul.mubr.bf16.gmra.mxu0 %v6056
    %v6328 = vpop.f32.mrf.mxu0
    %v6329 = vadd.f32 0.0, %v6328
    %v6330 = vpop.f32.mrf.mxu0
    %v6331 = vpop.f32.mrf.mxu0
    %v6332 = vadd.f32 0.0, %v6331
    %v6333 = vpop.f32.mrf.mxu0
    %6334 = vmatprep.mubr.bf16.mxu0 0
    %6335 = vmatmul.mubr.bf16.gmra.mxu0 %v6057
    %v6336 = vpop.f32.mrf.mxu0
    %v6337 = vadd.f32 0.0, %v6336
    %v6338 = vpop.f32.mrf.mxu0
    %v6339 = vpop.f32.mrf.mxu0
    %v6340 = vadd.f32 0.0, %v6339
    %v6341 = vpop.f32.mrf.mxu0
    %6342 = vmatprep.mubr.bf16.mxu0 0
    %6343 = vmatmul.mubr.bf16.gmra.mxu0 %v6058
    %v6344 = vpop.f32.mrf.mxu0
    %v6345 = vadd.f32 0.0, %v6344
    %v6346 = vpop.f32.mrf.mxu0
    %v6347 = vpop.f32.mrf.mxu0
    %v6348 = vadd.f32 0.0, %v6347
    %v6349 = vpop.f32.mrf.mxu0
    %6350 = vmatprep.mubr.bf16.mxu0 0
    %6351 = vmatmul.mubr.bf16.gmra.mxu0 %v6059
    %v6352 = vpop.f32.mrf.mxu0
    %v6353 = vadd.f32 0.0, %v6352
    %v6354 = vpop.f32.mrf.mxu0
    %v6355 = vpop.f32.mrf.mxu0
    %v6356 = vadd.f32 0.0, %v6355
    %v6357 = vpop.f32.mrf.mxu0
    %6358 = vmatprep.mubr.bf16.mxu0 0
    %6359 = vmatmul.mubr.bf16.gmra.mxu0 %v6060
    %v6360 = vpop.f32.mrf.mxu0
    %v6361 = vadd.f32 0.0, %v6360
    %v6362 = vpop.f32.mrf.mxu0
    %v6363 = vpop.f32.mrf.mxu0
    %v6364 = vadd.f32 0.0, %v6363
    %v6365 = vpop.f32.mrf.mxu0
    %6366 = vmatprep.mubr.bf16.mxu0 0
    %6367 = vmatmul.mubr.bf16.gmra.mxu0 %v6061
    %v6368 = vpop.f32.mrf.mxu0
    %v6369 = vadd.f32 0.0, %v6368
    %v6370 = vpop.f32.mrf.mxu0
    %v6371 = vpop.f32.mrf.mxu0
    %v6372 = vadd.f32 0.0, %v6371
    %v6373 = vpop.f32.mrf.mxu0
    %6374 = vmatprep.mubr.bf16.mxu0 0
    %6375 = vmatmul.mubr.bf16.gmra.mxu0 %v6062
    %v6376 = vpop.f32.mrf.mxu0
    %v6377 = vadd.f32 0.0, %v6376
    %v6378 = vpop.f32.mrf.mxu0
    %v6379 = vpop.f32.mrf.mxu0
    %v6380 = vadd.f32 0.0, %v6379
    %v6381 = vpop.f32.mrf.mxu0
    %6382 = vmatprep.mubr.bf16.mxu0 0
    %6383 = vmatmul.mubr.bf16.gmra.mxu0 %v6063
    %v6384 = vpop.f32.mrf.mxu0
    %v6385 = vadd.f32 0.0, %v6384
    %v6386 = vpop.f32.mrf.mxu0
    %v6387 = vpop.f32.mrf.mxu0
    %v6388 = vadd.f32 0.0, %v6387
    %v6389 = vpop.f32.mrf.mxu0
    %6390 = vmatprep.mubr.bf16.mxu0 0
    %6391 = vmatmul.mubr.bf16.gmra.mxu0 %v6064
    %v6392 = vpop.f32.mrf.mxu0
    %v6393 = vadd.f32 0.0, %v6392
    %v6394 = vpop.f32.mrf.mxu0
    %v6395 = vpop.f32.mrf.mxu0
    %v6396 = vadd.f32 0.0, %v6395
    %v6397 = vpop.f32.mrf.mxu0
    %6398 = vmatprep.mubr.bf16.mxu0 0
    %6399 = vmatmul.mubr.bf16.gmra.mxu0 %v6065
    %v6400 = vpop.f32.mrf.mxu0
    %v6401 = vadd.f32 0.0, %v6400
    %v6402 = vpop.f32.mrf.mxu0
    %v6403 = vpop.f32.mrf.mxu0
    %v6404 = vadd.f32 0.0, %v6403
    %v6405 = vpop.f32.mrf.mxu0
    %6406 = vmatprep.mubr.bf16.mxu0 0
    %6407 = vmatmul.mubr.bf16.gmra.mxu0 %v6066
    %v6408 = vpop.f32.mrf.mxu0
    %v6409 = vadd.f32 0.0, %v6408
    %v6410 = vpop.f32.mrf.mxu0
    %v6411 = vpop.f32.mrf.mxu0
    %v6412 = vadd.f32 0.0, %v6411
    %v6413 = vpop.f32.mrf.mxu0
    %6414 = vmatprep.mubr.bf16.mxu0 0
    %6415 = vmatmul.mubr.bf16.gmra.mxu0 %v6067
    %v6416 = vpop.f32.mrf.mxu0
    %v6417 = vadd.f32 0.0, %v6416
    %v6418 = vpop.f32.mrf.mxu0
    %v6419 = vpop.f32.mrf.mxu0
    %v6420 = vadd.f32 0.0, %v6419
    %v6421 = vpop.f32.mrf.mxu0
    %6422 = vmatprep.mubr.bf16.mxu0 0
    %6423 = vmatmul.mubr.bf16.gmra.mxu0 %v6068
    %v6424 = vpop.f32.mrf.mxu0
    %v6425 = vadd.f32 0.0, %v6424
    %v6426 = vpop.f32.mrf.mxu0
    %v6427 = vpop.f32.mrf.mxu0
    %v6428 = vadd.f32 0.0, %v6427
    %v6429 = vpop.f32.mrf.mxu0
    %6430 = vmatprep.mubr.bf16.mxu0 0
    %6431 = vmatmul.mubr.bf16.gmra.mxu0 %v6069
    %v6432 = vpop.f32.mrf.mxu0
    %v6433 = vadd.f32 0.0, %v6432
    %v6434 = vpop.f32.mrf.mxu0
    %v6435 = vpop.f32.mrf.mxu0
    %v6436 = vadd.f32 0.0, %v6435
    %v6437 = vpop.f32.mrf.mxu0
    %6438 = vdwg.mxu0
    %v6439 = vadd.f32 %v5029, %v6185
    %v6440 = vadd.f32 %v5030, %v6188
    %v6441 = vadd.f32 %v5031, %v6193
    %v6442 = vadd.f32 %v5032, %v6196
    %v6443 = vadd.f32 %v5033, %v6201
    %v6444 = vadd.f32 %v5034, %v6204
    %v6445 = vadd.f32 %v5035, %v6209
    %v6446 = vadd.f32 %v5036, %v6212
    %v6447 = vadd.f32 %v5037, %v6217
    %v6448 = vadd.f32 %v5038, %v6220
    %v6449 = vadd.f32 %v5039, %v6225
    %v6450 = vadd.f32 %v5040, %v6228
    %v6451 = vadd.f32 %v5041, %v6233
    %v6452 = vadd.f32 %v5042, %v6236
    %v6453 = vadd.f32 %v5043, %v6241
    %v6454 = vadd.f32 %v5044, %v6244
    %v6455 = vadd.f32 %v5045, %v6249
    %v6456 = vadd.f32 %v5046, %v6252
    %v6457 = vadd.f32 %v5047, %v6257
    %v6458 = vadd.f32 %v5048, %v6260
    %v6459 = vadd.f32 %v5049, %v6265
    %v6460 = vadd.f32 %v5050, %v6268
    %v6461 = vadd.f32 %v5051, %v6273
    %v6462 = vadd.f32 %v5052, %v6276
    %v6463 = vadd.f32 %v5053, %v6281
    %v6464 = vadd.f32 %v5054, %v6284
    %v6465 = vadd.f32 %v5055, %v6289
    %v6466 = vadd.f32 %v5056, %v6292
    %v6467 = vadd.f32 %v5057, %v6297
    %v6468 = vadd.f32 %v5058, %v6300
    %v6469 = vadd.f32 %v5059, %v6305
    %v6470 = vadd.f32 %v5060, %v6308
    %v6471 = vadd.f32 %v5061, %v6313
    %v6472 = vadd.f32 %v5062, %v6316
    %v6473 = vadd.f32 %v5063, %v6321
    %v6474 = vadd.f32 %v5064, %v6324
    %v6475 = vadd.f32 %v5065, %v6329
    %v6476 = vadd.f32 %v5066, %v6332
    %v6477 = vadd.f32 %v5067, %v6337
    %v6478 = vadd.f32 %v5068, %v6340
    %v6479 = vadd.f32 %v5069, %v6345
    %v6480 = vadd.f32 %v5070, %v6348
    %v6481 = vadd.f32 %v5071, %v6353
    %v6482 = vadd.f32 %v5072, %v6356
    %v6483 = vadd.f32 %v5073, %v6361
    %v6484 = vadd.f32 %v5074, %v6364
    %v6485 = vadd.f32 %v5075, %v6369
    %v6486 = vadd.f32 %v5076, %v6372
    %v6487 = vadd.f32 %v5077, %v6377
    %v6488 = vadd.f32 %v5078, %v6380
    %v6489 = vadd.f32 %v5079, %v6385
    %v6490 = vadd.f32 %v5080, %v6388
    %v6491 = vadd.f32 %v5081, %v6393
    %v6492 = vadd.f32 %v5082, %v6396
    %v6493 = vadd.f32 %v5083, %v6401
    %v6494 = vadd.f32 %v5084, %v6404
    %v6495 = vadd.f32 %v5085, %v6409
    %v6496 = vadd.f32 %v5086, %v6412
    %v6497 = vadd.f32 %v5087, %v6417
    %v6498 = vadd.f32 %v5088, %v6420
    %v6499 = vadd.f32 %v5089, %v6425
    %v6500 = vadd.f32 %v5090, %v6428
    %v6501 = vadd.f32 %v5091, %v6433
    %v6502 = vadd.f32 %v5092, %v6436
    %v6503 = vld [vmem:[%s398] sm:$0xe]
    %v6504 = vld [vmem:[%s398 + $0xc] sm:$0xe]
    %v6505 = vld [vmem:[%s398 + $0x18] sm:$0xe]
    %v6506 = vld [vmem:[%s398 + $0x24] sm:$0xe]
    %v6507 = vld [vmem:[%s398 + $0x30] sm:$0xe]
    %v6508 = vld [vmem:[%s398 + $0x3c] sm:$0xe]
    %v6509 = vld [vmem:[%s398 + $0x48] sm:$0xe]
    %v6510 = vld [vmem:[%s398 + $0x54] sm:$0xe]
    %v6511 = vld [vmem:[%s398 + $0x60] sm:$0xe]
    %v6512 = vld [vmem:[%s398 + $0x6c] sm:$0xe]
    %v6513 = vld [vmem:[%s398 + $0x78] sm:$0xe]
    %v6514 = vld [vmem:[%s398 + $0x84] sm:$0xe]
    %v6515 = vld [vmem:[%s398 + $0x90] sm:$0xe]
    %v6516 = vld [vmem:[%s398 + $0x9c] sm:$0xe]
    %v6517 = vld [vmem:[%s398 + $0xa8] sm:$0xe]
    %v6518 = vld [vmem:[%s398 + $0xb4] sm:$0xe]
    %v6519 = vld [vmem:[%s398 + $0xd8] sm:$0xe]
    %v6520 = vld [vmem:[%s398 + $0xe4] sm:$0xe]
    %v6521 = vld [vmem:[%s398 + $0xf0] sm:$0xe]
    %v6522 = vld [vmem:[%s398 + $0xfc] sm:$0xe]
    %v6523 = vld [vmem:[%s398 + $0x108] sm:$0xe]
    %v6524 = vld [vmem:[%s398 + $0x114] sm:$0xe]
    %v6525 = vld [vmem:[%s398 + $0x120] sm:$0xe]
    %v6526 = vld [vmem:[%s398 + $0x12c] sm:$0xe]
    %v6527 = vld [vmem:[%s398 + $0x138] sm:$0xe]
    %v6528 = vld [vmem:[%s398 + $0x144] sm:$0xe]
    %v6529 = vld [vmem:[%s398 + $0x150] sm:$0xe]
    %v6530 = vld [vmem:[%s398 + $0x15c] sm:$0xe]
    %v6531 = vld [vmem:[%s398 + $0x168] sm:$0xe]
    %v6532 = vld [vmem:[%s398 + $0x174] sm:$0xe]
    %v6533 = vld [vmem:[%s398 + $0x180] sm:$0xe]
    %v6534 = vld [vmem:[%s398 + $0x18c] sm:$0xe]
    %v6631 = vrot.slane %v6503, 5
    %v6632 = vrot.slane %v6631, 4
    %v6633 = vrot.slane %v5094, 5
    %v6634 = vsel %vm3648, %v6632, %v6633
    %v6635 = vrot.slane %v6633, 4
    %v6636 = vrot.slane %v5095, 5
    %v6637 = vsel %vm3648, %v6635, %v6636
    %v6638 = vrot.slane %v6504, 5
    %v6639 = vrot.slane %v6638, 4
    %v6640 = vrot.slane %v5097, 5
    %v6641 = vsel %vm3648, %v6639, %v6640
    %v6642 = vrot.slane %v6640, 4
    %v6643 = vrot.slane %v5098, 5
    %v6644 = vsel %vm3648, %v6642, %v6643
    %v6645 = vrot.slane %v6505, 5
    %v6646 = vrot.slane %v6645, 4
    %v6647 = vrot.slane %v5100, 5
    %v6648 = vsel %vm3648, %v6646, %v6647
    %v6649 = vrot.slane %v6647, 4
    %v6650 = vrot.slane %v5101, 5
    %v6651 = vsel %vm3648, %v6649, %v6650
    %v6652 = vrot.slane %v6506, 5
    %v6653 = vrot.slane %v6652, 4
    %v6654 = vrot.slane %v5103, 5
    %v6655 = vsel %vm3648, %v6653, %v6654
    %v6656 = vrot.slane %v6654, 4
    %v6657 = vrot.slane %v5104, 5
    %v6658 = vsel %vm3648, %v6656, %v6657
    %v6659 = vrot.slane %v6507, 5
    %v6660 = vrot.slane %v6659, 4
    %v6661 = vrot.slane %v5106, 5
    %v6662 = vsel %vm3648, %v6660, %v6661
    %v6663 = vrot.slane %v6661, 4
    %v6664 = vrot.slane %v5107, 5
    %v6665 = vsel %vm3648, %v6663, %v6664
    %v6666 = vrot.slane %v6508, 5
    %v6667 = vrot.slane %v6666, 4
    %v6668 = vrot.slane %v5109, 5
    %v6669 = vsel %vm3648, %v6667, %v6668
    %v6670 = vrot.slane %v6668, 4
    %v6671 = vrot.slane %v5110, 5
    %v6672 = vsel %vm3648, %v6670, %v6671
    %v6673 = vrot.slane %v6509, 5
    %v6674 = vrot.slane %v6673, 4
    %v6675 = vrot.slane %v5112, 5
    %v6676 = vsel %vm3648, %v6674, %v6675
    %v6677 = vrot.slane %v6675, 4
    %v6678 = vrot.slane %v5113, 5
    %v6679 = vsel %vm3648, %v6677, %v6678
    %v6680 = vrot.slane %v6510, 5
    %v6681 = vrot.slane %v6680, 4
    %v6682 = vrot.slane %v5115, 5
    %v6683 = vsel %vm3648, %v6681, %v6682
    %v6684 = vrot.slane %v6682, 4
    %v6685 = vrot.slane %v5116, 5
    %v6686 = vsel %vm3648, %v6684, %v6685
    %v6687 = vrot.slane %v6511, 5
    %v6688 = vrot.slane %v6687, 4
    %v6689 = vrot.slane %v5118, 5
    %v6690 = vsel %vm3648, %v6688, %v6689
    %v6691 = vrot.slane %v6689, 4
    %v6692 = vrot.slane %v5119, 5
    %v6693 = vsel %vm3648, %v6691, %v6692
    %v6694 = vrot.slane %v6512, 5
    %v6695 = vrot.slane %v6694, 4
    %v6696 = vrot.slane %v5121, 5
    %v6697 = vsel %vm3648, %v6695, %v6696
    %v6698 = vrot.slane %v6696, 4
    %v6699 = vrot.slane %v5122, 5
    %v6700 = vsel %vm3648, %v6698, %v6699
    %v6701 = vrot.slane %v6513, 5
    %v6702 = vrot.slane %v6701, 4
    %v6703 = vrot.slane %v5124, 5
    %v6704 = vsel %vm3648, %v6702, %v6703
    %v6705 = vrot.slane %v6703, 4
    %v6706 = vrot.slane %v5125, 5
    %v6707 = vsel %vm3648, %v6705, %v6706
    %v6708 = vrot.slane %v6514, 5
    %v6709 = vrot.slane %v6708, 4
    %v6710 = vrot.slane %v5127, 5
    %v6711 = vsel %vm3648, %v6709, %v6710
    %v6712 = vrot.slane %v6710, 4
    %v6713 = vrot.slane %v5128, 5
    %v6714 = vsel %vm3648, %v6712, %v6713
    %v6715 = vrot.slane %v6515, 5
    %v6716 = vrot.slane %v6715, 4
    %v6717 = vrot.slane %v5130, 5
    %v6718 = vsel %vm3648, %v6716, %v6717
    %v6719 = vrot.slane %v6717, 4
    %v6720 = vrot.slane %v5131, 5
    %v6721 = vsel %vm3648, %v6719, %v6720
    %v6722 = vrot.slane %v6516, 5
    %v6723 = vrot.slane %v6722, 4
    %v6724 = vrot.slane %v5133, 5
    %v6725 = vsel %vm3648, %v6723, %v6724
    %v6726 = vrot.slane %v6724, 4
    %v6727 = vrot.slane %v5134, 5
    %v6728 = vsel %vm3648, %v6726, %v6727
    %v6729 = vrot.slane %v6517, 5
    %v6730 = vrot.slane %v6729, 4
    %v6731 = vrot.slane %v5136, 5
    %v6732 = vsel %vm3648, %v6730, %v6731
    %v6733 = vrot.slane %v6731, 4
    %v6734 = vrot.slane %v5137, 5
    %v6735 = vsel %vm3648, %v6733, %v6734
    %v6736 = vrot.slane %v6518, 5
    %v6737 = vrot.slane %v6736, 4
    %v6738 = vrot.slane %v5139, 5
    %v6739 = vsel %vm3648, %v6737, %v6738
    %v6740 = vrot.slane %v6738, 4
    %v6741 = vrot.slane %v5140, 5
    %v6742 = vsel %vm3648, %v6740, %v6741
    %v6743 = vrot.slane %v6519, 5
    %v6744 = vrot.slane %v6743, 4
    %v6745 = vrot.slane %v5142, 5
    %v6746 = vsel %vm3648, %v6744, %v6745
    %v6747 = vrot.slane %v6745, 4
    %v6748 = vrot.slane %v5143, 5
    %v6749 = vsel %vm3648, %v6747, %v6748
    %v6750 = vrot.slane %v6520, 5
    %v6751 = vrot.slane %v6750, 4
    %v6752 = vrot.slane %v5145, 5
    %v6753 = vsel %vm3648, %v6751, %v6752
    %v6754 = vrot.slane %v6752, 4
    %v6755 = vrot.slane %v5146, 5
    %v6756 = vsel %vm3648, %v6754, %v6755
    %v6757 = vrot.slane %v6521, 5
    %v6758 = vrot.slane %v6757, 4
    %v6759 = vrot.slane %v5148, 5
    %v6760 = vsel %vm3648, %v6758, %v6759
    %v6761 = vrot.slane %v6759, 4
    %v6762 = vrot.slane %v5149, 5
    %v6763 = vsel %vm3648, %v6761, %v6762
    %v6764 = vrot.slane %v6522, 5
    %v6765 = vrot.slane %v6764, 4
    %v6766 = vrot.slane %v5151, 5
    %v6767 = vsel %vm3648, %v6765, %v6766
    %v6768 = vrot.slane %v6766, 4
    %v6769 = vrot.slane %v5152, 5
    %v6770 = vsel %vm3648, %v6768, %v6769
    %v6771 = vrot.slane %v6523, 5
    %v6772 = vrot.slane %v6771, 4
    %v6773 = vrot.slane %v5154, 5
    %v6774 = vsel %vm3648, %v6772, %v6773
    %v6775 = vrot.slane %v6773, 4
    %v6776 = vrot.slane %v5155, 5
    %v6777 = vsel %vm3648, %v6775, %v6776
    %v6778 = vrot.slane %v6524, 5
    %v6779 = vrot.slane %v6778, 4
    %v6780 = vrot.slane %v5157, 5
    %v6781 = vsel %vm3648, %v6779, %v6780
    %v6782 = vrot.slane %v6780, 4
    %v6783 = vrot.slane %v5158, 5
    %v6784 = vsel %vm3648, %v6782, %v6783
    %v6785 = vrot.slane %v6525, 5
    %v6786 = vrot.slane %v6785, 4
    %v6787 = vrot.slane %v5160, 5
    %v6788 = vsel %vm3648, %v6786, %v6787
    %v6789 = vrot.slane %v6787, 4
    %v6790 = vrot.slane %v5161, 5
    %v6791 = vsel %vm3648, %v6789, %v6790
    %v6792 = vrot.slane %v6526, 5
    %v6793 = vrot.slane %v6792, 4
    %v6794 = vrot.slane %v5163, 5
    %v6795 = vsel %vm3648, %v6793, %v6794
    %v6796 = vrot.slane %v6794, 4
    %v6797 = vrot.slane %v5164, 5
    %v6798 = vsel %vm3648, %v6796, %v6797
    %v6799 = vrot.slane %v6527, 5
    %v6800 = vrot.slane %v6799, 4
    %v6801 = vrot.slane %v5166, 5
    %v6802 = vsel %vm3648, %v6800, %v6801
    %v6803 = vrot.slane %v6801, 4
    %v6804 = vrot.slane %v5167, 5
    %v6805 = vsel %vm3648, %v6803, %v6804
    %v6806 = vrot.slane %v6528, 5
    %v6807 = vrot.slane %v6806, 4
    %v6808 = vrot.slane %v5169, 5
    %v6809 = vsel %vm3648, %v6807, %v6808
    %v6810 = vrot.slane %v6808, 4
    %v6811 = vrot.slane %v5170, 5
    %v6812 = vsel %vm3648, %v6810, %v6811
    %v6813 = vrot.slane %v6529, 5
    %v6814 = vrot.slane %v6813, 4
    %v6815 = vrot.slane %v5172, 5
    %v6816 = vsel %vm3648, %v6814, %v6815
    %v6817 = vrot.slane %v6815, 4
    %v6818 = vrot.slane %v5173, 5
    %v6819 = vsel %vm3648, %v6817, %v6818
    %v6820 = vrot.slane %v6530, 5
    %v6821 = vrot.slane %v6820, 4
    %v6822 = vrot.slane %v5175, 5
    %v6823 = vsel %vm3648, %v6821, %v6822
    %v6824 = vrot.slane %v6822, 4
    %v6825 = vrot.slane %v5176, 5
    %v6826 = vsel %vm3648, %v6824, %v6825
    %v6827 = vrot.slane %v6531, 5
    %v6828 = vrot.slane %v6827, 4
    %v6829 = vrot.slane %v5178, 5
    %v6830 = vsel %vm3648, %v6828, %v6829
    %v6831 = vrot.slane %v6829, 4
    %v6832 = vrot.slane %v5179, 5
    %v6833 = vsel %vm3648, %v6831, %v6832
    %v6834 = vrot.slane %v6532, 5
    %v6835 = vrot.slane %v6834, 4
    %v6836 = vrot.slane %v5181, 5
    %v6837 = vsel %vm3648, %v6835, %v6836
    %v6838 = vrot.slane %v6836, 4
    %v6839 = vrot.slane %v5182, 5
    %v6840 = vsel %vm3648, %v6838, %v6839
    %v6841 = vrot.slane %v6533, 5
    %v6842 = vrot.slane %v6841, 4
    %v6843 = vrot.slane %v5184, 5
    %v6844 = vsel %vm3648, %v6842, %v6843
    %v6845 = vrot.slane %v6843, 4
    %v6846 = vrot.slane %v5185, 5
    %v6847 = vsel %vm3648, %v6845, %v6846
    %v6848 = vrot.slane %v6534, 5
    %v6849 = vrot.slane %v6848, 4
    %v6850 = vrot.slane %v5187, 5
    %v6851 = vsel %vm3648, %v6849, %v6850
    %v6852 = vrot.slane %v6850, 4
    %v6853 = vrot.slane %v5188, 5
    %v6854 = vsel %vm3648, %v6852, %v6853
    %s6855 = scalar_lea.vmem [#allocation6], 320
    %v6856 = vld [vmem:[%s6855] sm:$0xf]
    %v6857 = vld [vmem:[%s6855 + $0x4] sm:$0xf]
    %v6858 = vld [vmem:[%s6855 + $0x8] sm:$0xf]
    %v6859 = vld [vmem:[%s6855 + $0xc] sm:$0xf]
    %v6860 = vld [vmem:[%s6855 + $0x10] sm:$0xf]
    %v6861 = vld [vmem:[%s6855 + $0x14] sm:$0xf]
    %v6862 = vld [vmem:[%s6855 + $0x18] sm:$0xf]
    %v6863 = vld [vmem:[%s6855 + $0x1c] sm:$0xf]
    %v6864 = vld [vmem:[%s6855 + $0x20] sm:$0xf]
    %v6865 = vld [vmem:[%s6855 + $0x24] sm:$0xf]
    %v6866 = vld [vmem:[%s6855 + $0x28] sm:$0xf]
    %v6867 = vld [vmem:[%s6855 + $0x2c] sm:$0xf]
    %v6868 = vld [vmem:[%s6855 + $0x30] sm:$0xf]
    %v6869 = vld [vmem:[%s6855 + $0x34] sm:$0xf]
    %v6870 = vld [vmem:[%s6855 + $0x38] sm:$0xf]
    %v6871 = vld [vmem:[%s6855 + $0x3c] sm:$0xf]
    %v6872 = vunpack.c.l.b16 %v6634
    %v6873 = vunpack.c.l.b16 %v6637
    %v6874 = vunpack.c.l.b16 %v6641
    %v6875 = vunpack.c.l.b16 %v6644
    %v6876 = vunpack.c.l.b16 %v6648
    %v6877 = vunpack.c.l.b16 %v6651
    %v6878 = vunpack.c.l.b16 %v6655
    %v6879 = vunpack.c.l.b16 %v6658
    %v6880 = vunpack.c.l.b16 %v6662
    %v6881 = vunpack.c.l.b16 %v6665
    %v6882 = vunpack.c.l.b16 %v6669
    %v6883 = vunpack.c.l.b16 %v6672
    %v6884 = vunpack.c.l.b16 %v6676
    %v6885 = vunpack.c.l.b16 %v6679
    %v6886 = vunpack.c.l.b16 %v6683
    %v6887 = vunpack.c.l.b16 %v6686
    %v6888 = vunpack.c.l.b16 %v6690
    %v6889 = vunpack.c.l.b16 %v6693
    %v6890 = vunpack.c.l.b16 %v6697
    %v6891 = vunpack.c.l.b16 %v6700
    %v6892 = vunpack.c.l.b16 %v6704
    %v6893 = vunpack.c.l.b16 %v6707
    %v6894 = vunpack.c.l.b16 %v6711
    %v6895 = vunpack.c.l.b16 %v6714
    %v6896 = vunpack.c.l.b16 %v6718
    %v6897 = vunpack.c.l.b16 %v6721
    %v6898 = vunpack.c.l.b16 %v6725
    %v6899 = vunpack.c.l.b16 %v6728
    %v6900 = vunpack.c.l.b16 %v6732
    %v6901 = vunpack.c.l.b16 %v6735
    %v6902 = vunpack.c.l.b16 %v6739
    %v6903 = vunpack.c.l.b16 %v6742
    %v6904 = vunpack.c.l.b16 %v6746
    %v6905 = vunpack.c.l.b16 %v6749
    %v6906 = vunpack.c.l.b16 %v6753
    %v6907 = vunpack.c.l.b16 %v6756
    %v6908 = vunpack.c.l.b16 %v6760
    %v6909 = vunpack.c.l.b16 %v6763
    %v6910 = vunpack.c.l.b16 %v6767
    %v6911 = vunpack.c.l.b16 %v6770
    %v6912 = vunpack.c.l.b16 %v6774
    %v6913 = vunpack.c.l.b16 %v6777
    %v6914 = vunpack.c.l.b16 %v6781
    %v6915 = vunpack.c.l.b16 %v6784
    %v6916 = vunpack.c.l.b16 %v6788
    %v6917 = vunpack.c.l.b16 %v6791
    %v6918 = vunpack.c.l.b16 %v6795
    %v6919 = vunpack.c.l.b16 %v6798
    %v6920 = vunpack.c.l.b16 %v6802
    %v6921 = vunpack.c.l.b16 %v6805
    %v6922 = vunpack.c.l.b16 %v6809
    %v6923 = vunpack.c.l.b16 %v6812
    %v6924 = vunpack.c.l.b16 %v6816
    %v6925 = vunpack.c.l.b16 %v6819
    %v6926 = vunpack.c.l.b16 %v6823
    %v6927 = vunpack.c.l.b16 %v6826
    %v6928 = vunpack.c.l.b16 %v6830
    %v6929 = vunpack.c.l.b16 %v6833
    %v6930 = vunpack.c.l.b16 %v6837
    %v6931 = vunpack.c.l.b16 %v6840
    %v6932 = vunpack.c.l.b16 %v6844
    %v6933 = vunpack.c.l.b16 %v6847
    %v6934 = vunpack.c.l.b16 %v6851
    %v6935 = vunpack.c.l.b16 %v6854
    %v6936 = vpack.c.b16 %v6873, %v6872
    %v6937 = vpack.c.b16 %v6875, %v6874
    %v6938 = vpack.c.b16 %v6877, %v6876
    %v6939 = vpack.c.b16 %v6879, %v6878
    %v6940 = vpack.c.b16 %v6881, %v6880
    %v6941 = vpack.c.b16 %v6883, %v6882
    %v6942 = vpack.c.b16 %v6885, %v6884
    %v6943 = vpack.c.b16 %v6887, %v6886
    %v6944 = vpack.c.b16 %v6889, %v6888
    %v6945 = vpack.c.b16 %v6891, %v6890
    %v6946 = vpack.c.b16 %v6893, %v6892
    %v6947 = vpack.c.b16 %v6895, %v6894
    %v6948 = vpack.c.b16 %v6897, %v6896
    %v6949 = vpack.c.b16 %v6899, %v6898
    %v6950 = vpack.c.b16 %v6901, %v6900
    %v6951 = vpack.c.b16 %v6903, %v6902
    %v6952 = vpack.c.b16 %v6905, %v6904
    %v6953 = vpack.c.b16 %v6907, %v6906
    %v6954 = vpack.c.b16 %v6909, %v6908
    %v6955 = vpack.c.b16 %v6911, %v6910
    %v6956 = vpack.c.b16 %v6913, %v6912
    %v6957 = vpack.c.b16 %v6915, %v6914
    %v6958 = vpack.c.b16 %v6917, %v6916
    %v6959 = vpack.c.b16 %v6919, %v6918
    %v6960 = vpack.c.b16 %v6921, %v6920
    %v6961 = vpack.c.b16 %v6923, %v6922
    %v6962 = vpack.c.b16 %v6925, %v6924
    %v6963 = vpack.c.b16 %v6927, %v6926
    %v6964 = vpack.c.b16 %v6929, %v6928
    %v6965 = vpack.c.b16 %v6931, %v6930
    %v6966 = vpack.c.b16 %v6933, %v6932
    %v6967 = vpack.c.b16 %v6935, %v6934
    %v7016 = vunpack.c.l.b16 %v6856
    %v7017 = vunpack.c.l.b16 %v6857
    %v7018 = vunpack.c.l.b16 %v6858
    %v7019 = vunpack.c.l.b16 %v6859
    %v7020 = vunpack.c.l.b16 %v6860
    %v7021 = vunpack.c.l.b16 %v6861
    %v7022 = vunpack.c.l.b16 %v6862
    %v7023 = vunpack.c.l.b16 %v6863
    %v7024 = vunpack.c.l.b16 %v6864
    %v7025 = vunpack.c.l.b16 %v6865
    %v7026 = vunpack.c.l.b16 %v6866
    %v7027 = vunpack.c.l.b16 %v6867
    %v7028 = vunpack.c.l.b16 %v6868
    %v7029 = vunpack.c.l.b16 %v6869
    %v7030 = vunpack.c.l.b16 %v6870
    %v7031 = vunpack.c.l.b16 %v6871
    %v7032 = vpack.c.b16 %v7017, %v7016
    %v7033 = vpack.c.b16 %v7019, %v7018
    %v7034 = vpack.c.b16 %v7021, %v7020
    %v7035 = vpack.c.b16 %v7023, %v7022
    %v7036 = vpack.c.b16 %v7025, %v7024
    %v7037 = vpack.c.b16 %v7027, %v7026
    %v7038 = vpack.c.b16 %v7029, %v7028
    %v7039 = vpack.c.b16 %v7031, %v7030
    %7048 = vmatprep.subr.bf16.mxu0 0
    %7049 = vmatpush1.bf16.msra.mxu0 %v7039
    %7050 = vmatprep.subr.bf16.mxu0 0
    %7051 = vmatpush1.bf16.msra.mxu0 %v7038
    %7052 = vmatprep.subr.bf16.mxu0 0
    %7053 = vmatpush1.bf16.msra.mxu0 %v7037
    %7054 = vmatprep.subr.bf16.mxu0 0
    %7055 = vmatpush1.bf16.msra.mxu0 %v7036
    %7056 = vmatprep.subr.bf16.mxu0 0
    %7057 = vmatpush1.bf16.msra.mxu0 %v7035
    %7058 = vmatprep.subr.bf16.mxu0 0
    %7059 = vmatpush1.bf16.msra.mxu0 %v7034
    %7060 = vmatprep.subr.bf16.mxu0 0
    %7061 = vmatpush1.bf16.msra.mxu0 %v7033
    %7062 = vmatprep.subr.bf16.mxu0 0
    %7063 = vmatpush1.bf16.msra.mxu0 %v7032
    %7064 = vmatprep.subr.bf16.mxu0 0
    %7065 = vmatpush2.bf16.msra.mxu0 0
    %7066 = vmatprep.subr.bf16.mxu0 0
    %7067 = vmatpush2.bf16.msra.mxu0 0
    %7068 = vmatprep.subr.bf16.mxu0 0
    %7069 = vmatpush2.bf16.msra.mxu0 0
    %7070 = vmatprep.subr.bf16.mxu0 0
    %7071 = vmatpush2.bf16.msra.mxu0 0
    %7072 = vmatprep.subr.bf16.mxu0 0
    %7073 = vmatpush2.bf16.msra.mxu0 0
    %7074 = vmatprep.subr.bf16.mxu0 0
    %7075 = vmatpush2.bf16.msra.mxu0 0
    %7076 = vmatprep.subr.bf16.mxu0 0
    %7077 = vmatpush2.bf16.msra.mxu0 0
    %7078 = vmatprep.subr.bf16.mxu0 0
    %7079 = vmatpush2.bf16.msra.mxu0 0
    %7080 = vmatprep.mubr.bf16.mxu0 0
    %7081 = vmatmul.mubr.bf16.gmra.mxu0 %v6936
    %v7082 = vpop.f32.mrf.mxu0
    %v7083 = vadd.f32 0.0, %v7082
    %v7084 = vpop.f32.mrf.mxu0
    %v7085 = vpop.f32.mrf.mxu0
    %v7086 = vadd.f32 0.0, %v7085
    %v7087 = vpop.f32.mrf.mxu0
    %7088 = vmatprep.mubr.bf16.mxu0 0
    %7089 = vmatmul.mubr.bf16.gmra.mxu0 %v6937
    %v7090 = vpop.f32.mrf.mxu0
    %v7091 = vadd.f32 0.0, %v7090
    %v7092 = vpop.f32.mrf.mxu0
    %v7093 = vpop.f32.mrf.mxu0
    %v7094 = vadd.f32 0.0, %v7093
    %v7095 = vpop.f32.mrf.mxu0
    %7096 = vmatprep.mubr.bf16.mxu0 0
    %7097 = vmatmul.mubr.bf16.gmra.mxu0 %v6938
    %v7098 = vpop.f32.mrf.mxu0
    %v7099 = vadd.f32 0.0, %v7098
    %v7100 = vpop.f32.mrf.mxu0
    %v7101 = vpop.f32.mrf.mxu0
    %v7102 = vadd.f32 0.0, %v7101
    %v7103 = vpop.f32.mrf.mxu0
    %7104 = vmatprep.mubr.bf16.mxu0 0
    %7105 = vmatmul.mubr.bf16.gmra.mxu0 %v6939
    %v7106 = vpop.f32.mrf.mxu0
    %v7107 = vadd.f32 0.0, %v7106
    %v7108 = vpop.f32.mrf.mxu0
    %v7109 = vpop.f32.mrf.mxu0
    %v7110 = vadd.f32 0.0, %v7109
    %v7111 = vpop.f32.mrf.mxu0
    %7112 = vmatprep.mubr.bf16.mxu0 0
    %7113 = vmatmul.mubr.bf16.gmra.mxu0 %v6940
    %v7114 = vpop.f32.mrf.mxu0
    %v7115 = vadd.f32 0.0, %v7114
    %v7116 = vpop.f32.mrf.mxu0
    %v7117 = vpop.f32.mrf.mxu0
    %v7118 = vadd.f32 0.0, %v7117
    %v7119 = vpop.f32.mrf.mxu0
    %7120 = vmatprep.mubr.bf16.mxu0 0
    %7121 = vmatmul.mubr.bf16.gmra.mxu0 %v6941
    %v7122 = vpop.f32.mrf.mxu0
    %v7123 = vadd.f32 0.0, %v7122
    %v7124 = vpop.f32.mrf.mxu0
    %v7125 = vpop.f32.mrf.mxu0
    %v7126 = vadd.f32 0.0, %v7125
    %v7127 = vpop.f32.mrf.mxu0
    %7128 = vmatprep.mubr.bf16.mxu0 0
    %7129 = vmatmul.mubr.bf16.gmra.mxu0 %v6942
    %v7130 = vpop.f32.mrf.mxu0
    %v7131 = vadd.f32 0.0, %v7130
    %v7132 = vpop.f32.mrf.mxu0
    %v7133 = vpop.f32.mrf.mxu0
    %v7134 = vadd.f32 0.0, %v7133
    %v7135 = vpop.f32.mrf.mxu0
    %7136 = vmatprep.mubr.bf16.mxu0 0
    %7137 = vmatmul.mubr.bf16.gmra.mxu0 %v6943
    %v7138 = vpop.f32.mrf.mxu0
    %v7139 = vadd.f32 0.0, %v7138
    %v7140 = vpop.f32.mrf.mxu0
    %v7141 = vpop.f32.mrf.mxu0
    %v7142 = vadd.f32 0.0, %v7141
    %v7143 = vpop.f32.mrf.mxu0
    %7144 = vmatprep.mubr.bf16.mxu0 0
    %7145 = vmatmul.mubr.bf16.gmra.mxu0 %v6944
    %v7146 = vpop.f32.mrf.mxu0
    %v7147 = vadd.f32 0.0, %v7146
    %v7148 = vpop.f32.mrf.mxu0
    %v7149 = vpop.f32.mrf.mxu0
    %v7150 = vadd.f32 0.0, %v7149
    %v7151 = vpop.f32.mrf.mxu0
    %7152 = vmatprep.mubr.bf16.mxu0 0
    %7153 = vmatmul.mubr.bf16.gmra.mxu0 %v6945
    %v7154 = vpop.f32.mrf.mxu0
    %v7155 = vadd.f32 0.0, %v7154
    %v7156 = vpop.f32.mrf.mxu0
    %v7157 = vpop.f32.mrf.mxu0
    %v7158 = vadd.f32 0.0, %v7157
    %v7159 = vpop.f32.mrf.mxu0
    %7160 = vmatprep.mubr.bf16.mxu0 0
    %7161 = vmatmul.mubr.bf16.gmra.mxu0 %v6946
    %v7162 = vpop.f32.mrf.mxu0
    %v7163 = vadd.f32 0.0, %v7162
    %v7164 = vpop.f32.mrf.mxu0
    %v7165 = vpop.f32.mrf.mxu0
    %v7166 = vadd.f32 0.0, %v7165
    %v7167 = vpop.f32.mrf.mxu0
    %7168 = vmatprep.mubr.bf16.mxu0 0
    %7169 = vmatmul.mubr.bf16.gmra.mxu0 %v6947
    %v7170 = vpop.f32.mrf.mxu0
    %v7171 = vadd.f32 0.0, %v7170
    %v7172 = vpop.f32.mrf.mxu0
    %v7173 = vpop.f32.mrf.mxu0
    %v7174 = vadd.f32 0.0, %v7173
    %v7175 = vpop.f32.mrf.mxu0
    %7176 = vmatprep.mubr.bf16.mxu0 0
    %7177 = vmatmul.mubr.bf16.gmra.mxu0 %v6948
    %v7178 = vpop.f32.mrf.mxu0
    %v7179 = vadd.f32 0.0, %v7178
    %v7180 = vpop.f32.mrf.mxu0
    %v7181 = vpop.f32.mrf.mxu0
    %v7182 = vadd.f32 0.0, %v7181
    %v7183 = vpop.f32.mrf.mxu0
    %7184 = vmatprep.mubr.bf16.mxu0 0
    %7185 = vmatmul.mubr.bf16.gmra.mxu0 %v6949
    %v7186 = vpop.f32.mrf.mxu0
    %v7187 = vadd.f32 0.0, %v7186
    %v7188 = vpop.f32.mrf.mxu0
    %v7189 = vpop.f32.mrf.mxu0
    %v7190 = vadd.f32 0.0, %v7189
    %v7191 = vpop.f32.mrf.mxu0
    %7192 = vmatprep.mubr.bf16.mxu0 0
    %7193 = vmatmul.mubr.bf16.gmra.mxu0 %v6950
    %v7194 = vpop.f32.mrf.mxu0
    %v7195 = vadd.f32 0.0, %v7194
    %v7196 = vpop.f32.mrf.mxu0
    %v7197 = vpop.f32.mrf.mxu0
    %v7198 = vadd.f32 0.0, %v7197
    %v7199 = vpop.f32.mrf.mxu0
    %7200 = vmatprep.mubr.bf16.mxu0 0
    %7201 = vmatmul.mubr.bf16.gmra.mxu0 %v6951
    %v7202 = vpop.f32.mrf.mxu0
    %v7203 = vadd.f32 0.0, %v7202
    %v7204 = vpop.f32.mrf.mxu0
    %v7205 = vpop.f32.mrf.mxu0
    %v7206 = vadd.f32 0.0, %v7205
    %v7207 = vpop.f32.mrf.mxu0
    %7208 = vmatprep.mubr.bf16.mxu0 0
    %7209 = vmatmul.mubr.bf16.gmra.mxu0 %v6952
    %v7210 = vpop.f32.mrf.mxu0
    %v7211 = vadd.f32 0.0, %v7210
    %v7212 = vpop.f32.mrf.mxu0
    %v7213 = vpop.f32.mrf.mxu0
    %v7214 = vadd.f32 0.0, %v7213
    %v7215 = vpop.f32.mrf.mxu0
    %7216 = vmatprep.mubr.bf16.mxu0 0
    %7217 = vmatmul.mubr.bf16.gmra.mxu0 %v6953
    %v7218 = vpop.f32.mrf.mxu0
    %v7219 = vadd.f32 0.0, %v7218
    %v7220 = vpop.f32.mrf.mxu0
    %v7221 = vpop.f32.mrf.mxu0
    %v7222 = vadd.f32 0.0, %v7221
    %v7223 = vpop.f32.mrf.mxu0
    %7224 = vmatprep.mubr.bf16.mxu0 0
    %7225 = vmatmul.mubr.bf16.gmra.mxu0 %v6954
    %v7226 = vpop.f32.mrf.mxu0
    %v7227 = vadd.f32 0.0, %v7226
    %v7228 = vpop.f32.mrf.mxu0
    %v7229 = vpop.f32.mrf.mxu0
    %v7230 = vadd.f32 0.0, %v7229
    %v7231 = vpop.f32.mrf.mxu0
    %7232 = vmatprep.mubr.bf16.mxu0 0
    %7233 = vmatmul.mubr.bf16.gmra.mxu0 %v6955
    %v7234 = vpop.f32.mrf.mxu0
    %v7235 = vadd.f32 0.0, %v7234
    %v7236 = vpop.f32.mrf.mxu0
    %v7237 = vpop.f32.mrf.mxu0
    %v7238 = vadd.f32 0.0, %v7237
    %v7239 = vpop.f32.mrf.mxu0
    %7240 = vmatprep.mubr.bf16.mxu0 0
    %7241 = vmatmul.mubr.bf16.gmra.mxu0 %v6956
    %v7242 = vpop.f32.mrf.mxu0
    %v7243 = vadd.f32 0.0, %v7242
    %v7244 = vpop.f32.mrf.mxu0
    %v7245 = vpop.f32.mrf.mxu0
    %v7246 = vadd.f32 0.0, %v7245
    %v7247 = vpop.f32.mrf.mxu0
    %7248 = vmatprep.mubr.bf16.mxu0 0
    %7249 = vmatmul.mubr.bf16.gmra.mxu0 %v6957
    %v7250 = vpop.f32.mrf.mxu0
    %v7251 = vadd.f32 0.0, %v7250
    %v7252 = vpop.f32.mrf.mxu0
    %v7253 = vpop.f32.mrf.mxu0
    %v7254 = vadd.f32 0.0, %v7253
    %v7255 = vpop.f32.mrf.mxu0
    %7256 = vmatprep.mubr.bf16.mxu0 0
    %7257 = vmatmul.mubr.bf16.gmra.mxu0 %v6958
    %v7258 = vpop.f32.mrf.mxu0
    %v7259 = vadd.f32 0.0, %v7258
    %v7260 = vpop.f32.mrf.mxu0
    %v7261 = vpop.f32.mrf.mxu0
    %v7262 = vadd.f32 0.0, %v7261
    %v7263 = vpop.f32.mrf.mxu0
    %7264 = vmatprep.mubr.bf16.mxu0 0
    %7265 = vmatmul.mubr.bf16.gmra.mxu0 %v6959
    %v7266 = vpop.f32.mrf.mxu0
    %v7267 = vadd.f32 0.0, %v7266
    %v7268 = vpop.f32.mrf.mxu0
    %v7269 = vpop.f32.mrf.mxu0
    %v7270 = vadd.f32 0.0, %v7269
    %v7271 = vpop.f32.mrf.mxu0
    %7272 = vmatprep.mubr.bf16.mxu0 0
    %7273 = vmatmul.mubr.bf16.gmra.mxu0 %v6960
    %v7274 = vpop.f32.mrf.mxu0
    %v7275 = vadd.f32 0.0, %v7274
    %v7276 = vpop.f32.mrf.mxu0
    %v7277 = vpop.f32.mrf.mxu0
    %v7278 = vadd.f32 0.0, %v7277
    %v7279 = vpop.f32.mrf.mxu0
    %7280 = vmatprep.mubr.bf16.mxu0 0
    %7281 = vmatmul.mubr.bf16.gmra.mxu0 %v6961
    %v7282 = vpop.f32.mrf.mxu0
    %v7283 = vadd.f32 0.0, %v7282
    %v7284 = vpop.f32.mrf.mxu0
    %v7285 = vpop.f32.mrf.mxu0
    %v7286 = vadd.f32 0.0, %v7285
    %v7287 = vpop.f32.mrf.mxu0
    %7288 = vmatprep.mubr.bf16.mxu0 0
    %7289 = vmatmul.mubr.bf16.gmra.mxu0 %v6962
    %v7290 = vpop.f32.mrf.mxu0
    %v7291 = vadd.f32 0.0, %v7290
    %v7292 = vpop.f32.mrf.mxu0
    %v7293 = vpop.f32.mrf.mxu0
    %v7294 = vadd.f32 0.0, %v7293
    %v7295 = vpop.f32.mrf.mxu0
    %7296 = vmatprep.mubr.bf16.mxu0 0
    %7297 = vmatmul.mubr.bf16.gmra.mxu0 %v6963
    %v7298 = vpop.f32.mrf.mxu0
    %v7299 = vadd.f32 0.0, %v7298
    %v7300 = vpop.f32.mrf.mxu0
    %v7301 = vpop.f32.mrf.mxu0
    %v7302 = vadd.f32 0.0, %v7301
    %v7303 = vpop.f32.mrf.mxu0
    %7304 = vmatprep.mubr.bf16.mxu0 0
    %7305 = vmatmul.mubr.bf16.gmra.mxu0 %v6964
    %v7306 = vpop.f32.mrf.mxu0
    %v7307 = vadd.f32 0.0, %v7306
    %v7308 = vpop.f32.mrf.mxu0
    %v7309 = vpop.f32.mrf.mxu0
    %v7310 = vadd.f32 0.0, %v7309
    %v7311 = vpop.f32.mrf.mxu0
    %7312 = vmatprep.mubr.bf16.mxu0 0
    %7313 = vmatmul.mubr.bf16.gmra.mxu0 %v6965
    %v7314 = vpop.f32.mrf.mxu0
    %v7315 = vadd.f32 0.0, %v7314
    %v7316 = vpop.f32.mrf.mxu0
    %v7317 = vpop.f32.mrf.mxu0
    %v7318 = vadd.f32 0.0, %v7317
    %v7319 = vpop.f32.mrf.mxu0
    %7320 = vmatprep.mubr.bf16.mxu0 0
    %7321 = vmatmul.mubr.bf16.gmra.mxu0 %v6966
    %v7322 = vpop.f32.mrf.mxu0
    %v7323 = vadd.f32 0.0, %v7322
    %v7324 = vpop.f32.mrf.mxu0
    %v7325 = vpop.f32.mrf.mxu0
    %v7326 = vadd.f32 0.0, %v7325
    %v7327 = vpop.f32.mrf.mxu0
    %7328 = vmatprep.mubr.bf16.mxu0 0
    %7329 = vmatmul.mubr.bf16.gmra.mxu0 %v6967
    %v7330 = vpop.f32.mrf.mxu0
    %v7331 = vadd.f32 0.0, %v7330
    %v7332 = vpop.f32.mrf.mxu0
    %v7333 = vpop.f32.mrf.mxu0
    %v7334 = vadd.f32 0.0, %v7333
    %v7335 = vpop.f32.mrf.mxu0
    %7336 = vdwg.mxu0
    %v7337 = vadd.f32 %v6439, %v7083
    %v7338 = vadd.f32 %v6440, %v7086
    %v7339 = vadd.f32 %v6441, %v7091
    %v7340 = vadd.f32 %v6442, %v7094
    %v7341 = vadd.f32 %v6443, %v7099
    %v7342 = vadd.f32 %v6444, %v7102
    %v7343 = vadd.f32 %v6445, %v7107
    %v7344 = vadd.f32 %v6446, %v7110
    %v7345 = vadd.f32 %v6447, %v7115
    %v7346 = vadd.f32 %v6448, %v7118
    %v7347 = vadd.f32 %v6449, %v7123
    %v7348 = vadd.f32 %v6450, %v7126
    %v7349 = vadd.f32 %v6451, %v7131
    %v7350 = vadd.f32 %v6452, %v7134
    %v7351 = vadd.f32 %v6453, %v7139
    %v7352 = vadd.f32 %v6454, %v7142
    %v7353 = vadd.f32 %v6455, %v7147
    %v7354 = vadd.f32 %v6456, %v7150
    %v7355 = vadd.f32 %v6457, %v7155
    %v7356 = vadd.f32 %v6458, %v7158
    %v7357 = vadd.f32 %v6459, %v7163
    %v7358 = vadd.f32 %v6460, %v7166
    %v7359 = vadd.f32 %v6461, %v7171
    %v7360 = vadd.f32 %v6462, %v7174
    %v7361 = vadd.f32 %v6463, %v7179
    %v7362 = vadd.f32 %v6464, %v7182
    %v7363 = vadd.f32 %v6465, %v7187
    %v7364 = vadd.f32 %v6466, %v7190
    %v7365 = vadd.f32 %v6467, %v7195
    %v7366 = vadd.f32 %v6468, %v7198
    %v7367 = vadd.f32 %v6469, %v7203
    %v7368 = vadd.f32 %v6470, %v7206
    %v7369 = vadd.f32 %v6471, %v7211
    %v7370 = vadd.f32 %v6472, %v7214
    %v7371 = vadd.f32 %v6473, %v7219
    %v7372 = vadd.f32 %v6474, %v7222
    %v7373 = vadd.f32 %v6475, %v7227
    %v7374 = vadd.f32 %v6476, %v7230
    %v7375 = vadd.f32 %v6477, %v7235
    %v7376 = vadd.f32 %v6478, %v7238
    %v7377 = vadd.f32 %v6479, %v7243
    %v7378 = vadd.f32 %v6480, %v7246
    %v7379 = vadd.f32 %v6481, %v7251
    %v7380 = vadd.f32 %v6482, %v7254
    %v7381 = vadd.f32 %v6483, %v7259
    %v7382 = vadd.f32 %v6484, %v7262
    %v7383 = vadd.f32 %v6485, %v7267
    %v7384 = vadd.f32 %v6486, %v7270
    %v7385 = vadd.f32 %v6487, %v7275
    %v7386 = vadd.f32 %v6488, %v7278
    %v7387 = vadd.f32 %v6489, %v7283
    %v7388 = vadd.f32 %v6490, %v7286
    %v7389 = vadd.f32 %v6491, %v7291
    %v7390 = vadd.f32 %v6492, %v7294
    %v7391 = vadd.f32 %v6493, %v7299
    %v7392 = vadd.f32 %v6494, %v7302
    %v7393 = vadd.f32 %v6495, %v7307
    %v7394 = vadd.f32 %v6496, %v7310
    %v7395 = vadd.f32 %v6497, %v7315
    %v7396 = vadd.f32 %v6498, %v7318
    %v7397 = vadd.f32 %v6499, %v7323
    %v7398 = vadd.f32 %v6500, %v7326
    %v7399 = vadd.f32 %v6501, %v7331
    %v7400 = vadd.f32 %v6502, %v7334
    %s7401 = scalar_lea.vmem [#allocation2], 24
    %v7402 = vld [vmem:[%s7401] sm:$0xf]
    %v7403 = vld [vmem:[%s7401 + $0x4] sm:$0xf]
    %v7404 = vld [vmem:[%s7401 + $0xc] sm:$0xf]
    %v7405 = vld [vmem:[%s7401 + $0x10] sm:$0xf]
    %v7406 = vld [vmem:[%s7401 + $0x18] sm:$0xf]
    %v7407 = vld [vmem:[%s7401 + $0x1c] sm:$0xf]
    %v7408 = vld [vmem:[%s7401 + $0x24] sm:$0xf]
    %v7409 = vld [vmem:[%s7401 + $0x28] sm:$0xf]
    %v7410 = vld [vmem:[%s7401 + $0x30] sm:$0xf]
    %v7411 = vld [vmem:[%s7401 + $0x34] sm:$0xf]
    %v7412 = vld [vmem:[%s7401 + $0x3c] sm:$0xf]
    %v7413 = vld [vmem:[%s7401 + $0x40] sm:$0xf]
    %v7414 = vld [vmem:[%s7401 + $0x48] sm:$0xf]
    %v7415 = vld [vmem:[%s7401 + $0x4c] sm:$0xf]
    %v7416 = vld [vmem:[%s7401 + $0x54] sm:$0xf]
    %v7417 = vld [vmem:[%s7401 + $0x58] sm:$0xf]
    %v7418 = vld [vmem:[%s7401 + $0x60] sm:$0xf]
    %v7419 = vld [vmem:[%s7401 + $0x64] sm:$0xf]
    %v7420 = vld [vmem:[%s7401 + $0x6c] sm:$0xf]
    %v7421 = vld [vmem:[%s7401 + $0x70] sm:$0xf]
    %v7422 = vld [vmem:[%s7401 + $0x78] sm:$0xf]
    %v7423 = vld [vmem:[%s7401 + $0x7c] sm:$0xf]
    %v7424 = vld [vmem:[%s7401 + $0x84] sm:$0xf]
    %v7425 = vld [vmem:[%s7401 + $0x88] sm:$0xf]
    %v7426 = vld [vmem:[%s7401 + $0x90] sm:$0xf]
    %v7427 = vld [vmem:[%s7401 + $0x94] sm:$0xf]
    %v7428 = vld [vmem:[%s7401 + $0x9c] sm:$0xf]
    %v7429 = vld [vmem:[%s7401 + $0xa0] sm:$0xf]
    %v7430 = vld [vmem:[%s7401 + $0xa8] sm:$0xf]
    %v7431 = vld [vmem:[%s7401 + $0xac] sm:$0xf]
    %v7432 = vld [vmem:[%s7401 + $0xb4] sm:$0xf]
    %v7433 = vld [vmem:[%s7401 + $0xb8] sm:$0xf]
    %v7434 = vld [vmem:[%s7401 + $0xd8] sm:$0xf]
    %v7435 = vld [vmem:[%s7401 + $0xdc] sm:$0xf]
    %v7436 = vld [vmem:[%s7401 + $0xe4] sm:$0xf]
    %v7437 = vld [vmem:[%s7401 + $0xe8] sm:$0xf]
    %v7438 = vld [vmem:[%s7401 + $0xf0] sm:$0xf]
    %v7439 = vld [vmem:[%s7401 + $0xf4] sm:$0xf]
    %v7440 = vld [vmem:[%s7401 + $0xfc] sm:$0xf]
    %v7441 = vld [vmem:[%s7401 + $0x100] sm:$0xf]
    %v7442 = vld [vmem:[%s7401 + $0x108] sm:$0xf]
    %v7443 = vld [vmem:[%s7401 + $0x10c] sm:$0xf]
    %v7444 = vld [vmem:[%s7401 + $0x114] sm:$0xf]
    %v7445 = vld [vmem:[%s7401 + $0x118] sm:$0xf]
    %v7446 = vld [vmem:[%s7401 + $0x120] sm:$0xf]
    %v7447 = vld [vmem:[%s7401 + $0x124] sm:$0xf]
    %v7448 = vld [vmem:[%s7401 + $0x12c] sm:$0xf]
    %v7449 = vld [vmem:[%s7401 + $0x130] sm:$0xf]
    %v7450 = vld [vmem:[%s7401 + $0x138] sm:$0xf]
    %v7451 = vld [vmem:[%s7401 + $0x13c] sm:$0xf]
    %v7452 = vld [vmem:[%s7401 + $0x144] sm:$0xf]
    %v7453 = vld [vmem:[%s7401 + $0x148] sm:$0xf]
    %v7454 = vld [vmem:[%s7401 + $0x150] sm:$0xf]
    %v7455 = vld [vmem:[%s7401 + $0x154] sm:$0xf]
    %v7456 = vld [vmem:[%s7401 + $0x15c] sm:$0xf]
    %v7457 = vld [vmem:[%s7401 + $0x160] sm:$0xf]
    %v7458 = vld [vmem:[%s7401 + $0x168] sm:$0xf]
    %v7459 = vld [vmem:[%s7401 + $0x16c] sm:$0xf]
    %v7460 = vld [vmem:[%s7401 + $0x174] sm:$0xf]
    %v7461 = vld [vmem:[%s7401 + $0x178] sm:$0xf]
    %v7462 = vld [vmem:[%s7401 + $0x180] sm:$0xf]
    %v7463 = vld [vmem:[%s7401 + $0x184] sm:$0xf]
    %v7464 = vld [vmem:[%s7401 + $0x18c] sm:$0xf]
    %v7465 = vld [vmem:[%s7401 + $0x190] sm:$0xf]
    %s7466 = scalar_lea.vmem [#allocation6], 384
    %v7467 = vld [vmem:[%s7466] sm:$0xf]
    %v7468 = vld [vmem:[%s7466 + $0x4] sm:$0xf]
    %v7469 = vld [vmem:[%s7466 + $0x8] sm:$0xf]
    %v7470 = vld [vmem:[%s7466 + $0xc] sm:$0xf]
    %v7471 = vld [vmem:[%s7466 + $0x10] sm:$0xf]
    %v7472 = vld [vmem:[%s7466 + $0x14] sm:$0xf]
    %v7473 = vld [vmem:[%s7466 + $0x18] sm:$0xf]
    %v7474 = vld [vmem:[%s7466 + $0x1c] sm:$0xf]
    %v7475 = vld [vmem:[%s7466 + $0x20] sm:$0xf]
    %v7476 = vld [vmem:[%s7466 + $0x24] sm:$0xf]
    %v7477 = vld [vmem:[%s7466 + $0x28] sm:$0xf]
    %v7478 = vld [vmem:[%s7466 + $0x2c] sm:$0xf]
    %v7479 = vld [vmem:[%s7466 + $0x30] sm:$0xf]
    %v7480 = vld [vmem:[%s7466 + $0x34] sm:$0xf]
    %v7481 = vld [vmem:[%s7466 + $0x38] sm:$0xf]
    %v7482 = vld [vmem:[%s7466 + $0x3c] sm:$0xf]
    %v7547 = vunpack.c.l.b16 %v7402
    %v7548 = vunpack.c.l.b16 %v7403
    %v7549 = vunpack.c.l.b16 %v7404
    %v7550 = vunpack.c.l.b16 %v7405
    %v7551 = vunpack.c.l.b16 %v7406
    %v7552 = vunpack.c.l.b16 %v7407
    %v7553 = vunpack.c.l.b16 %v7408
    %v7554 = vunpack.c.l.b16 %v7409
    %v7555 = vunpack.c.l.b16 %v7410
    %v7556 = vunpack.c.l.b16 %v7411
    %v7557 = vunpack.c.l.b16 %v7412
    %v7558 = vunpack.c.l.b16 %v7413
    %v7559 = vunpack.c.l.b16 %v7414
    %v7560 = vunpack.c.l.b16 %v7415
    %v7561 = vunpack.c.l.b16 %v7416
    %v7562 = vunpack.c.l.b16 %v7417
    %v7563 = vunpack.c.l.b16 %v7418
    %v7564 = vunpack.c.l.b16 %v7419
    %v7565 = vunpack.c.l.b16 %v7420
    %v7566 = vunpack.c.l.b16 %v7421
    %v7567 = vunpack.c.l.b16 %v7422
    %v7568 = vunpack.c.l.b16 %v7423
    %v7569 = vunpack.c.l.b16 %v7424
    %v7570 = vunpack.c.l.b16 %v7425
    %v7571 = vunpack.c.l.b16 %v7426
    %v7572 = vunpack.c.l.b16 %v7427
    %v7573 = vunpack.c.l.b16 %v7428
    %v7574 = vunpack.c.l.b16 %v7429
    %v7575 = vunpack.c.l.b16 %v7430
    %v7576 = vunpack.c.l.b16 %v7431
    %v7577 = vunpack.c.l.b16 %v7432
    %v7578 = vunpack.c.l.b16 %v7433
    %v7579 = vunpack.c.l.b16 %v7434
    %v7580 = vunpack.c.l.b16 %v7435
    %v7581 = vunpack.c.l.b16 %v7436
    %v7582 = vunpack.c.l.b16 %v7437
    %v7583 = vunpack.c.l.b16 %v7438
    %v7584 = vunpack.c.l.b16 %v7439
    %v7585 = vunpack.c.l.b16 %v7440
    %v7586 = vunpack.c.l.b16 %v7441
    %v7587 = vunpack.c.l.b16 %v7442
    %v7588 = vunpack.c.l.b16 %v7443
    %v7589 = vunpack.c.l.b16 %v7444
    %v7590 = vunpack.c.l.b16 %v7445
    %v7591 = vunpack.c.l.b16 %v7446
    %v7592 = vunpack.c.l.b16 %v7447
    %v7593 = vunpack.c.l.b16 %v7448
    %v7594 = vunpack.c.l.b16 %v7449
    %v7595 = vunpack.c.l.b16 %v7450
    %v7596 = vunpack.c.l.b16 %v7451
    %v7597 = vunpack.c.l.b16 %v7452
    %v7598 = vunpack.c.l.b16 %v7453
    %v7599 = vunpack.c.l.b16 %v7454
    %v7600 = vunpack.c.l.b16 %v7455
    %v7601 = vunpack.c.l.b16 %v7456
    %v7602 = vunpack.c.l.b16 %v7457
    %v7603 = vunpack.c.l.b16 %v7458
    %v7604 = vunpack.c.l.b16 %v7459
    %v7605 = vunpack.c.l.b16 %v7460
    %v7606 = vunpack.c.l.b16 %v7461
    %v7607 = vunpack.c.l.b16 %v7462
    %v7608 = vunpack.c.l.b16 %v7463
    %v7609 = vunpack.c.l.b16 %v7464
    %v7610 = vunpack.c.l.b16 %v7465
    %v7611 = vpack.c.b16 %v7548, %v7547
    %v7612 = vpack.c.b16 %v7550, %v7549
    %v7613 = vpack.c.b16 %v7552, %v7551
    %v7614 = vpack.c.b16 %v7554, %v7553
    %v7615 = vpack.c.b16 %v7556, %v7555
    %v7616 = vpack.c.b16 %v7558, %v7557
    %v7617 = vpack.c.b16 %v7560, %v7559
    %v7618 = vpack.c.b16 %v7562, %v7561
    %v7619 = vpack.c.b16 %v7564, %v7563
    %v7620 = vpack.c.b16 %v7566, %v7565
    %v7621 = vpack.c.b16 %v7568, %v7567
    %v7622 = vpack.c.b16 %v7570, %v7569
    %v7623 = vpack.c.b16 %v7572, %v7571
    %v7624 = vpack.c.b16 %v7574, %v7573
    %v7625 = vpack.c.b16 %v7576, %v7575
    %v7626 = vpack.c.b16 %v7578, %v7577
    %v7627 = vpack.c.b16 %v7580, %v7579
    %v7628 = vpack.c.b16 %v7582, %v7581
    %v7629 = vpack.c.b16 %v7584, %v7583
    %v7630 = vpack.c.b16 %v7586, %v7585
    %v7631 = vpack.c.b16 %v7588, %v7587
    %v7632 = vpack.c.b16 %v7590, %v7589
    %v7633 = vpack.c.b16 %v7592, %v7591
    %v7634 = vpack.c.b16 %v7594, %v7593
    %v7635 = vpack.c.b16 %v7596, %v7595
    %v7636 = vpack.c.b16 %v7598, %v7597
    %v7637 = vpack.c.b16 %v7600, %v7599
    %v7638 = vpack.c.b16 %v7602, %v7601
    %v7639 = vpack.c.b16 %v7604, %v7603
    %v7640 = vpack.c.b16 %v7606, %v7605
    %v7641 = vpack.c.b16 %v7608, %v7607
    %v7642 = vpack.c.b16 %v7610, %v7609
    %v7691 = vunpack.c.l.b16 %v7467
    %v7692 = vunpack.c.l.b16 %v7468
    %v7693 = vunpack.c.l.b16 %v7469
    %v7694 = vunpack.c.l.b16 %v7470
    %v7695 = vunpack.c.l.b16 %v7471
    %v7696 = vunpack.c.l.b16 %v7472
    %v7697 = vunpack.c.l.b16 %v7473
    %v7698 = vunpack.c.l.b16 %v7474
    %v7699 = vunpack.c.l.b16 %v7475
    %v7700 = vunpack.c.l.b16 %v7476
    %v7701 = vunpack.c.l.b16 %v7477
    %v7702 = vunpack.c.l.b16 %v7478
    %v7703 = vunpack.c.l.b16 %v7479
    %v7704 = vunpack.c.l.b16 %v7480
    %v7705 = vunpack.c.l.b16 %v7481
    %v7706 = vunpack.c.l.b16 %v7482
    %v7707 = vpack.c.b16 %v7692, %v7691
    %v7708 = vpack.c.b16 %v7694, %v7693
    %v7709 = vpack.c.b16 %v7696, %v7695
    %v7710 = vpack.c.b16 %v7698, %v7697
    %v7711 = vpack.c.b16 %v7700, %v7699
    %v7712 = vpack.c.b16 %v7702, %v7701
    %v7713 = vpack.c.b16 %v7704, %v7703
    %v7714 = vpack.c.b16 %v7706, %v7705
    %7723 = vmatprep.subr.bf16.mxu0 0
    %7724 = vmatpush1.bf16.msra.mxu0 %v7714
    %7725 = vmatprep.subr.bf16.mxu0 0
    %7726 = vmatpush1.bf16.msra.mxu0 %v7713
    %7727 = vmatprep.subr.bf16.mxu0 0
    %7728 = vmatpush1.bf16.msra.mxu0 %v7712
    %7729 = vmatprep.subr.bf16.mxu0 0
    %7730 = vmatpush1.bf16.msra.mxu0 %v7711
    %7731 = vmatprep.subr.bf16.mxu0 0
    %7732 = vmatpush1.bf16.msra.mxu0 %v7710
    %7733 = vmatprep.subr.bf16.mxu0 0
    %7734 = vmatpush1.bf16.msra.mxu0 %v7709
    %7735 = vmatprep.subr.bf16.mxu0 0
    %7736 = vmatpush1.bf16.msra.mxu0 %v7708
    %7737 = vmatprep.subr.bf16.mxu0 0
    %7738 = vmatpush1.bf16.msra.mxu0 %v7707
    %7739 = vmatprep.subr.bf16.mxu0 0
    %7740 = vmatpush2.bf16.msra.mxu0 0
    %7741 = vmatprep.subr.bf16.mxu0 0
    %7742 = vmatpush2.bf16.msra.mxu0 0
    %7743 = vmatprep.subr.bf16.mxu0 0
    %7744 = vmatpush2.bf16.msra.mxu0 0
    %7745 = vmatprep.subr.bf16.mxu0 0
    %7746 = vmatpush2.bf16.msra.mxu0 0
    %7747 = vmatprep.subr.bf16.mxu0 0
    %7748 = vmatpush2.bf16.msra.mxu0 0
    %7749 = vmatprep.subr.bf16.mxu0 0
    %7750 = vmatpush2.bf16.msra.mxu0 0
    %7751 = vmatprep.subr.bf16.mxu0 0
    %7752 = vmatpush2.bf16.msra.mxu0 0
    %7753 = vmatprep.subr.bf16.mxu0 0
    %7754 = vmatpush2.bf16.msra.mxu0 0
    %7755 = vmatprep.mubr.bf16.mxu0 0
    %7756 = vmatmul.mubr.bf16.gmra.mxu0 %v7611
    %v7757 = vpop.f32.mrf.mxu0
    %v7758 = vadd.f32 0.0, %v7757
    %v7759 = vpop.f32.mrf.mxu0
    %v7760 = vpop.f32.mrf.mxu0
    %v7761 = vadd.f32 0.0, %v7760
    %v7762 = vpop.f32.mrf.mxu0
    %7763 = vmatprep.mubr.bf16.mxu0 0
    %7764 = vmatmul.mubr.bf16.gmra.mxu0 %v7612
    %v7765 = vpop.f32.mrf.mxu0
    %v7766 = vadd.f32 0.0, %v7765
    %v7767 = vpop.f32.mrf.mxu0
    %v7768 = vpop.f32.mrf.mxu0
    %v7769 = vadd.f32 0.0, %v7768
    %v7770 = vpop.f32.mrf.mxu0
    %7771 = vmatprep.mubr.bf16.mxu0 0
    %7772 = vmatmul.mubr.bf16.gmra.mxu0 %v7613
    %v7773 = vpop.f32.mrf.mxu0
    %v7774 = vadd.f32 0.0, %v7773
    %v7775 = vpop.f32.mrf.mxu0
    %v7776 = vpop.f32.mrf.mxu0
    %v7777 = vadd.f32 0.0, %v7776
    %v7778 = vpop.f32.mrf.mxu0
    %7779 = vmatprep.mubr.bf16.mxu0 0
    %7780 = vmatmul.mubr.bf16.gmra.mxu0 %v7614
    %v7781 = vpop.f32.mrf.mxu0
    %v7782 = vadd.f32 0.0, %v7781
    %v7783 = vpop.f32.mrf.mxu0
    %v7784 = vpop.f32.mrf.mxu0
    %v7785 = vadd.f32 0.0, %v7784
    %v7786 = vpop.f32.mrf.mxu0
    %7787 = vmatprep.mubr.bf16.mxu0 0
    %7788 = vmatmul.mubr.bf16.gmra.mxu0 %v7615
    %v7789 = vpop.f32.mrf.mxu0
    %v7790 = vadd.f32 0.0, %v7789
    %v7791 = vpop.f32.mrf.mxu0
    %v7792 = vpop.f32.mrf.mxu0
    %v7793 = vadd.f32 0.0, %v7792
    %v7794 = vpop.f32.mrf.mxu0
    %7795 = vmatprep.mubr.bf16.mxu0 0
    %7796 = vmatmul.mubr.bf16.gmra.mxu0 %v7616
    %v7797 = vpop.f32.mrf.mxu0
    %v7798 = vadd.f32 0.0, %v7797
    %v7799 = vpop.f32.mrf.mxu0
    %v7800 = vpop.f32.mrf.mxu0
    %v7801 = vadd.f32 0.0, %v7800
    %v7802 = vpop.f32.mrf.mxu0
    %7803 = vmatprep.mubr.bf16.mxu0 0
    %7804 = vmatmul.mubr.bf16.gmra.mxu0 %v7617
    %v7805 = vpop.f32.mrf.mxu0
    %v7806 = vadd.f32 0.0, %v7805
    %v7807 = vpop.f32.mrf.mxu0
    %v7808 = vpop.f32.mrf.mxu0
    %v7809 = vadd.f32 0.0, %v7808
    %v7810 = vpop.f32.mrf.mxu0
    %7811 = vmatprep.mubr.bf16.mxu0 0
    %7812 = vmatmul.mubr.bf16.gmra.mxu0 %v7618
    %v7813 = vpop.f32.mrf.mxu0
    %v7814 = vadd.f32 0.0, %v7813
    %v7815 = vpop.f32.mrf.mxu0
    %v7816 = vpop.f32.mrf.mxu0
    %v7817 = vadd.f32 0.0, %v7816
    %v7818 = vpop.f32.mrf.mxu0
    %7819 = vmatprep.mubr.bf16.mxu0 0
    %7820 = vmatmul.mubr.bf16.gmra.mxu0 %v7619
    %v7821 = vpop.f32.mrf.mxu0
    %v7822 = vadd.f32 0.0, %v7821
    %v7823 = vpop.f32.mrf.mxu0
    %v7824 = vpop.f32.mrf.mxu0
    %v7825 = vadd.f32 0.0, %v7824
    %v7826 = vpop.f32.mrf.mxu0
    %7827 = vmatprep.mubr.bf16.mxu0 0
    %7828 = vmatmul.mubr.bf16.gmra.mxu0 %v7620
    %v7829 = vpop.f32.mrf.mxu0
    %v7830 = vadd.f32 0.0, %v7829
    %v7831 = vpop.f32.mrf.mxu0
    %v7832 = vpop.f32.mrf.mxu0
    %v7833 = vadd.f32 0.0, %v7832
    %v7834 = vpop.f32.mrf.mxu0
    %7835 = vmatprep.mubr.bf16.mxu0 0
    %7836 = vmatmul.mubr.bf16.gmra.mxu0 %v7621
    %v7837 = vpop.f32.mrf.mxu0
    %v7838 = vadd.f32 0.0, %v7837
    %v7839 = vpop.f32.mrf.mxu0
    %v7840 = vpop.f32.mrf.mxu0
    %v7841 = vadd.f32 0.0, %v7840
    %v7842 = vpop.f32.mrf.mxu0
    %7843 = vmatprep.mubr.bf16.mxu0 0
    %7844 = vmatmul.mubr.bf16.gmra.mxu0 %v7622
    %v7845 = vpop.f32.mrf.mxu0
    %v7846 = vadd.f32 0.0, %v7845
    %v7847 = vpop.f32.mrf.mxu0
    %v7848 = vpop.f32.mrf.mxu0
    %v7849 = vadd.f32 0.0, %v7848
    %v7850 = vpop.f32.mrf.mxu0
    %7851 = vmatprep.mubr.bf16.mxu0 0
    %7852 = vmatmul.mubr.bf16.gmra.mxu0 %v7623
    %v7853 = vpop.f32.mrf.mxu0
    %v7854 = vadd.f32 0.0, %v7853
    %v7855 = vpop.f32.mrf.mxu0
    %v7856 = vpop.f32.mrf.mxu0
    %v7857 = vadd.f32 0.0, %v7856
    %v7858 = vpop.f32.mrf.mxu0
    %7859 = vmatprep.mubr.bf16.mxu0 0
    %7860 = vmatmul.mubr.bf16.gmra.mxu0 %v7624
    %v7861 = vpop.f32.mrf.mxu0
    %v7862 = vadd.f32 0.0, %v7861
    %v7863 = vpop.f32.mrf.mxu0
    %v7864 = vpop.f32.mrf.mxu0
    %v7865 = vadd.f32 0.0, %v7864
    %v7866 = vpop.f32.mrf.mxu0
    %7867 = vmatprep.mubr.bf16.mxu0 0
    %7868 = vmatmul.mubr.bf16.gmra.mxu0 %v7625
    %v7869 = vpop.f32.mrf.mxu0
    %v7870 = vadd.f32 0.0, %v7869
    %v7871 = vpop.f32.mrf.mxu0
    %v7872 = vpop.f32.mrf.mxu0
    %v7873 = vadd.f32 0.0, %v7872
    %v7874 = vpop.f32.mrf.mxu0
    %7875 = vmatprep.mubr.bf16.mxu0 0
    %7876 = vmatmul.mubr.bf16.gmra.mxu0 %v7626
    %v7877 = vpop.f32.mrf.mxu0
    %v7878 = vadd.f32 0.0, %v7877
    %v7879 = vpop.f32.mrf.mxu0
    %v7880 = vpop.f32.mrf.mxu0
    %v7881 = vadd.f32 0.0, %v7880
    %v7882 = vpop.f32.mrf.mxu0
    %7883 = vmatprep.mubr.bf16.mxu0 0
    %7884 = vmatmul.mubr.bf16.gmra.mxu0 %v7627
    %v7885 = vpop.f32.mrf.mxu0
    %v7886 = vadd.f32 0.0, %v7885
    %v7887 = vpop.f32.mrf.mxu0
    %v7888 = vpop.f32.mrf.mxu0
    %v7889 = vadd.f32 0.0, %v7888
    %v7890 = vpop.f32.mrf.mxu0
    %7891 = vmatprep.mubr.bf16.mxu0 0
    %7892 = vmatmul.mubr.bf16.gmra.mxu0 %v7628
    %v7893 = vpop.f32.mrf.mxu0
    %v7894 = vadd.f32 0.0, %v7893
    %v7895 = vpop.f32.mrf.mxu0
    %v7896 = vpop.f32.mrf.mxu0
    %v7897 = vadd.f32 0.0, %v7896
    %v7898 = vpop.f32.mrf.mxu0
    %7899 = vmatprep.mubr.bf16.mxu0 0
    %7900 = vmatmul.mubr.bf16.gmra.mxu0 %v7629
    %v7901 = vpop.f32.mrf.mxu0
    %v7902 = vadd.f32 0.0, %v7901
    %v7903 = vpop.f32.mrf.mxu0
    %v7904 = vpop.f32.mrf.mxu0
    %v7905 = vadd.f32 0.0, %v7904
    %v7906 = vpop.f32.mrf.mxu0
    %7907 = vmatprep.mubr.bf16.mxu0 0
    %7908 = vmatmul.mubr.bf16.gmra.mxu0 %v7630
    %v7909 = vpop.f32.mrf.mxu0
    %v7910 = vadd.f32 0.0, %v7909
    %v7911 = vpop.f32.mrf.mxu0
    %v7912 = vpop.f32.mrf.mxu0
    %v7913 = vadd.f32 0.0, %v7912
    %v7914 = vpop.f32.mrf.mxu0
    %7915 = vmatprep.mubr.bf16.mxu0 0
    %7916 = vmatmul.mubr.bf16.gmra.mxu0 %v7631
    %v7917 = vpop.f32.mrf.mxu0
    %v7918 = vadd.f32 0.0, %v7917
    %v7919 = vpop.f32.mrf.mxu0
    %v7920 = vpop.f32.mrf.mxu0
    %v7921 = vadd.f32 0.0, %v7920
    %v7922 = vpop.f32.mrf.mxu0
    %7923 = vmatprep.mubr.bf16.mxu0 0
    %7924 = vmatmul.mubr.bf16.gmra.mxu0 %v7632
    %v7925 = vpop.f32.mrf.mxu0
    %v7926 = vadd.f32 0.0, %v7925
    %v7927 = vpop.f32.mrf.mxu0
    %v7928 = vpop.f32.mrf.mxu0
    %v7929 = vadd.f32 0.0, %v7928
    %v7930 = vpop.f32.mrf.mxu0
    %7931 = vmatprep.mubr.bf16.mxu0 0
    %7932 = vmatmul.mubr.bf16.gmra.mxu0 %v7633
    %v7933 = vpop.f32.mrf.mxu0
    %v7934 = vadd.f32 0.0, %v7933
    %v7935 = vpop.f32.mrf.mxu0
    %v7936 = vpop.f32.mrf.mxu0
    %v7937 = vadd.f32 0.0, %v7936
    %v7938 = vpop.f32.mrf.mxu0
    %7939 = vmatprep.mubr.bf16.mxu0 0
    %7940 = vmatmul.mubr.bf16.gmra.mxu0 %v7634
    %v7941 = vpop.f32.mrf.mxu0
    %v7942 = vadd.f32 0.0, %v7941
    %v7943 = vpop.f32.mrf.mxu0
    %v7944 = vpop.f32.mrf.mxu0
    %v7945 = vadd.f32 0.0, %v7944
    %v7946 = vpop.f32.mrf.mxu0
    %7947 = vmatprep.mubr.bf16.mxu0 0
    %7948 = vmatmul.mubr.bf16.gmra.mxu0 %v7635
    %v7949 = vpop.f32.mrf.mxu0
    %v7950 = vadd.f32 0.0, %v7949
    %v7951 = vpop.f32.mrf.mxu0
    %v7952 = vpop.f32.mrf.mxu0
    %v7953 = vadd.f32 0.0, %v7952
    %v7954 = vpop.f32.mrf.mxu0
    %7955 = vmatprep.mubr.bf16.mxu0 0
    %7956 = vmatmul.mubr.bf16.gmra.mxu0 %v7636
    %v7957 = vpop.f32.mrf.mxu0
    %v7958 = vadd.f32 0.0, %v7957
    %v7959 = vpop.f32.mrf.mxu0
    %v7960 = vpop.f32.mrf.mxu0
    %v7961 = vadd.f32 0.0, %v7960
    %v7962 = vpop.f32.mrf.mxu0
    %7963 = vmatprep.mubr.bf16.mxu0 0
    %7964 = vmatmul.mubr.bf16.gmra.mxu0 %v7637
    %v7965 = vpop.f32.mrf.mxu0
    %v7966 = vadd.f32 0.0, %v7965
    %v7967 = vpop.f32.mrf.mxu0
    %v7968 = vpop.f32.mrf.mxu0
    %v7969 = vadd.f32 0.0, %v7968
    %v7970 = vpop.f32.mrf.mxu0
    %7971 = vmatprep.mubr.bf16.mxu0 0
    %7972 = vmatmul.mubr.bf16.gmra.mxu0 %v7638
    %v7973 = vpop.f32.mrf.mxu0
    %v7974 = vadd.f32 0.0, %v7973
    %v7975 = vpop.f32.mrf.mxu0
    %v7976 = vpop.f32.mrf.mxu0
    %v7977 = vadd.f32 0.0, %v7976
    %v7978 = vpop.f32.mrf.mxu0
    %7979 = vmatprep.mubr.bf16.mxu0 0
    %7980 = vmatmul.mubr.bf16.gmra.mxu0 %v7639
    %v7981 = vpop.f32.mrf.mxu0
    %v7982 = vadd.f32 0.0, %v7981
    %v7983 = vpop.f32.mrf.mxu0
    %v7984 = vpop.f32.mrf.mxu0
    %v7985 = vadd.f32 0.0, %v7984
    %v7986 = vpop.f32.mrf.mxu0
    %7987 = vmatprep.mubr.bf16.mxu0 0
    %7988 = vmatmul.mubr.bf16.gmra.mxu0 %v7640
    %v7989 = vpop.f32.mrf.mxu0
    %v7990 = vadd.f32 0.0, %v7989
    %v7991 = vpop.f32.mrf.mxu0
    %v7992 = vpop.f32.mrf.mxu0
    %v7993 = vadd.f32 0.0, %v7992
    %v7994 = vpop.f32.mrf.mxu0
    %7995 = vmatprep.mubr.bf16.mxu0 0
    %7996 = vmatmul.mubr.bf16.gmra.mxu0 %v7641
    %v7997 = vpop.f32.mrf.mxu0
    %v7998 = vadd.f32 0.0, %v7997
    %v7999 = vpop.f32.mrf.mxu0
    %v8000 = vpop.f32.mrf.mxu0
    %v8001 = vadd.f32 0.0, %v8000
    %v8002 = vpop.f32.mrf.mxu0
    %8003 = vmatprep.mubr.bf16.mxu0 0
    %8004 = vmatmul.mubr.bf16.gmra.mxu0 %v7642
    %v8005 = vpop.f32.mrf.mxu0
    %v8006 = vadd.f32 0.0, %v8005
    %v8007 = vpop.f32.mrf.mxu0
    %v8008 = vpop.f32.mrf.mxu0
    %v8009 = vadd.f32 0.0, %v8008
    %v8010 = vpop.f32.mrf.mxu0
    %8011 = vdwg.mxu0
    %v8012 = vadd.f32 %v7337, %v7758
    %v8013 = vadd.f32 %v7338, %v7761
    %v8014 = vadd.f32 %v7339, %v7766
    %v8015 = vadd.f32 %v7340, %v7769
    %v8016 = vadd.f32 %v7341, %v7774
    %v8017 = vadd.f32 %v7342, %v7777
    %v8018 = vadd.f32 %v7343, %v7782
    %v8019 = vadd.f32 %v7344, %v7785
    %v8020 = vadd.f32 %v7345, %v7790
    %v8021 = vadd.f32 %v7346, %v7793
    %v8022 = vadd.f32 %v7347, %v7798
    %v8023 = vadd.f32 %v7348, %v7801
    %v8024 = vadd.f32 %v7349, %v7806
    %v8025 = vadd.f32 %v7350, %v7809
    %v8026 = vadd.f32 %v7351, %v7814
    %v8027 = vadd.f32 %v7352, %v7817
    %v8028 = vadd.f32 %v7353, %v7822
    %v8029 = vadd.f32 %v7354, %v7825
    %v8030 = vadd.f32 %v7355, %v7830
    %v8031 = vadd.f32 %v7356, %v7833
    %v8032 = vadd.f32 %v7357, %v7838
    %v8033 = vadd.f32 %v7358, %v7841
    %v8034 = vadd.f32 %v7359, %v7846
    %v8035 = vadd.f32 %v7360, %v7849
    %v8036 = vadd.f32 %v7361, %v7854
    %v8037 = vadd.f32 %v7362, %v7857
    %v8038 = vadd.f32 %v7363, %v7862
    %v8039 = vadd.f32 %v7364, %v7865
    %v8040 = vadd.f32 %v7365, %v7870
    %v8041 = vadd.f32 %v7366, %v7873
    %v8042 = vadd.f32 %v7367, %v7878
    %v8043 = vadd.f32 %v7368, %v7881
    %v8044 = vadd.f32 %v7369, %v7886
    %v8045 = vadd.f32 %v7370, %v7889
    %v8046 = vadd.f32 %v7371, %v7894
    %v8047 = vadd.f32 %v7372, %v7897
    %v8048 = vadd.f32 %v7373, %v7902
    %v8049 = vadd.f32 %v7374, %v7905
    %v8050 = vadd.f32 %v7375, %v7910
    %v8051 = vadd.f32 %v7376, %v7913
    %v8052 = vadd.f32 %v7377, %v7918
    %v8053 = vadd.f32 %v7378, %v7921
    %v8054 = vadd.f32 %v7379, %v7926
    %v8055 = vadd.f32 %v7380, %v7929
    %v8056 = vadd.f32 %v7381, %v7934
    %v8057 = vadd.f32 %v7382, %v7937
    %v8058 = vadd.f32 %v7383, %v7942
    %v8059 = vadd.f32 %v7384, %v7945
    %v8060 = vadd.f32 %v7385, %v7950
    %v8061 = vadd.f32 %v7386, %v7953
    %v8062 = vadd.f32 %v7387, %v7958
    %v8063 = vadd.f32 %v7388, %v7961
    %v8064 = vadd.f32 %v7389, %v7966
    %v8065 = vadd.f32 %v7390, %v7969
    %v8066 = vadd.f32 %v7391, %v7974
    %v8067 = vadd.f32 %v7392, %v7977
    %v8068 = vadd.f32 %v7393, %v7982
    %v8069 = vadd.f32 %v7394, %v7985
    %v8070 = vadd.f32 %v7395, %v7990
    %v8071 = vadd.f32 %v7396, %v7993
    %v8072 = vadd.f32 %v7397, %v7998
    %v8073 = vadd.f32 %v7398, %v8001
    %v8074 = vadd.f32 %v7399, %v8006
    %v8075 = vadd.f32 %v7400, %v8009
    %v8076 = vld [vmem:[%s7401] sm:$0xf]
    %v8077 = vld [vmem:[%s7401 + $0x4] sm:$0xf]
    %v8078 = vld [vmem:[%s7401 + $0x8] sm:$0x1]
    %v8079 = vld [vmem:[%s7401 + $0xc] sm:$0xf]
    %v8080 = vld [vmem:[%s7401 + $0x10] sm:$0xf]
    %v8081 = vld [vmem:[%s7401 + $0x14] sm:$0x1]
    %v8082 = vld [vmem:[%s7401 + $0x18] sm:$0xf]
    %v8083 = vld [vmem:[%s7401 + $0x1c] sm:$0xf]
    %v8084 = vld [vmem:[%s7401 + $0x20] sm:$0x1]
    %v8085 = vld [vmem:[%s7401 + $0x24] sm:$0xf]
    %v8086 = vld [vmem:[%s7401 + $0x28] sm:$0xf]
    %v8087 = vld [vmem:[%s7401 + $0x2c] sm:$0x1]
    %v8088 = vld [vmem:[%s7401 + $0x30] sm:$0xf]
    %v8089 = vld [vmem:[%s7401 + $0x34] sm:$0xf]
    %v8090 = vld [vmem:[%s7401 + $0x38] sm:$0x1]
    %v8091 = vld [vmem:[%s7401 + $0x3c] sm:$0xf]
    %v8092 = vld [vmem:[%s7401 + $0x40] sm:$0xf]
    %v8093 = vld [vmem:[%s7401 + $0x44] sm:$0x1]
    %v8094 = vld [vmem:[%s7401 + $0x48] sm:$0xf]
    %v8095 = vld [vmem:[%s7401 + $0x4c] sm:$0xf]
    %v8096 = vld [vmem:[%s7401 + $0x50] sm:$0x1]
    %v8097 = vld [vmem:[%s7401 + $0x54] sm:$0xf]
    %v8098 = vld [vmem:[%s7401 + $0x58] sm:$0xf]
    %v8099 = vld [vmem:[%s7401 + $0x5c] sm:$0x1]
    %v8100 = vld [vmem:[%s7401 + $0x60] sm:$0xf]
    %v8101 = vld [vmem:[%s7401 + $0x64] sm:$0xf]
    %v8102 = vld [vmem:[%s7401 + $0x68] sm:$0x1]
    %v8103 = vld [vmem:[%s7401 + $0x6c] sm:$0xf]
    %v8104 = vld [vmem:[%s7401 + $0x70] sm:$0xf]
    %v8105 = vld [vmem:[%s7401 + $0x74] sm:$0x1]
    %v8106 = vld [vmem:[%s7401 + $0x78] sm:$0xf]
    %v8107 = vld [vmem:[%s7401 + $0x7c] sm:$0xf]
    %v8108 = vld [vmem:[%s7401 + $0x80] sm:$0x1]
    %v8109 = vld [vmem:[%s7401 + $0x84] sm:$0xf]
    %v8110 = vld [vmem:[%s7401 + $0x88] sm:$0xf]
    %v8111 = vld [vmem:[%s7401 + $0x8c] sm:$0x1]
    %v8112 = vld [vmem:[%s7401 + $0x90] sm:$0xf]
    %v8113 = vld [vmem:[%s7401 + $0x94] sm:$0xf]
    %v8114 = vld [vmem:[%s7401 + $0x98] sm:$0x1]
    %v8115 = vld [vmem:[%s7401 + $0x9c] sm:$0xf]
    %v8116 = vld [vmem:[%s7401 + $0xa0] sm:$0xf]
    %v8117 = vld [vmem:[%s7401 + $0xa4] sm:$0x1]
    %v8118 = vld [vmem:[%s7401 + $0xa8] sm:$0xf]
    %v8119 = vld [vmem:[%s7401 + $0xac] sm:$0xf]
    %v8120 = vld [vmem:[%s7401 + $0xb0] sm:$0x1]
    %v8121 = vld [vmem:[%s7401 + $0xb4] sm:$0xf]
    %v8122 = vld [vmem:[%s7401 + $0xb8] sm:$0xf]
    %v8123 = vld [vmem:[%s7401 + $0xbc] sm:$0x1]
    %v8124 = vld [vmem:[%s7401 + $0xd8] sm:$0xf]
    %v8125 = vld [vmem:[%s7401 + $0xdc] sm:$0xf]
    %v8126 = vld [vmem:[%s7401 + $0xe0] sm:$0x1]
    %v8127 = vld [vmem:[%s7401 + $0xe4] sm:$0xf]
    %v8128 = vld [vmem:[%s7401 + $0xe8] sm:$0xf]
    %v8129 = vld [vmem:[%s7401 + $0xec] sm:$0x1]
    %v8130 = vld [vmem:[%s7401 + $0xf0] sm:$0xf]
    %v8131 = vld [vmem:[%s7401 + $0xf4] sm:$0xf]
    %v8132 = vld [vmem:[%s7401 + $0xf8] sm:$0x1]
    %v8133 = vld [vmem:[%s7401 + $0xfc] sm:$0xf]
    %v8134 = vld [vmem:[%s7401 + $0x100] sm:$0xf]
    %v8135 = vld [vmem:[%s7401 + $0x104] sm:$0x1]
    %v8136 = vld [vmem:[%s7401 + $0x108] sm:$0xf]
    %v8137 = vld [vmem:[%s7401 + $0x10c] sm:$0xf]
    %v8138 = vld [vmem:[%s7401 + $0x110] sm:$0x1]
    %v8139 = vld [vmem:[%s7401 + $0x114] sm:$0xf]
    %v8140 = vld [vmem:[%s7401 + $0x118] sm:$0xf]
    %v8141 = vld [vmem:[%s7401 + $0x11c] sm:$0x1]
    %v8142 = vld [vmem:[%s7401 + $0x120] sm:$0xf]
    %v8143 = vld [vmem:[%s7401 + $0x124] sm:$0xf]
    %v8144 = vld [vmem:[%s7401 + $0x128] sm:$0x1]
    %v8145 = vld [vmem:[%s7401 + $0x12c] sm:$0xf]
    %v8146 = vld [vmem:[%s7401 + $0x130] sm:$0xf]
    %v8147 = vld [vmem:[%s7401 + $0x134] sm:$0x1]
    %v8148 = vld [vmem:[%s7401 + $0x138] sm:$0xf]
    %v8149 = vld [vmem:[%s7401 + $0x13c] sm:$0xf]
    %v8150 = vld [vmem:[%s7401 + $0x140] sm:$0x1]
    %v8151 = vld [vmem:[%s7401 + $0x144] sm:$0xf]
    %v8152 = vld [vmem:[%s7401 + $0x148] sm:$0xf]
    %v8153 = vld [vmem:[%s7401 + $0x14c] sm:$0x1]
    %v8154 = vld [vmem:[%s7401 + $0x150] sm:$0xf]
    %v8155 = vld [vmem:[%s7401 + $0x154] sm:$0xf]
    %v8156 = vld [vmem:[%s7401 + $0x158] sm:$0x1]
    %v8157 = vld [vmem:[%s7401 + $0x15c] sm:$0xf]
    %v8158 = vld [vmem:[%s7401 + $0x160] sm:$0xf]
    %v8159 = vld [vmem:[%s7401 + $0x164] sm:$0x1]
    %v8160 = vld [vmem:[%s7401 + $0x168] sm:$0xf]
    %v8161 = vld [vmem:[%s7401 + $0x16c] sm:$0xf]
    %v8162 = vld [vmem:[%s7401 + $0x170] sm:$0x1]
    %v8163 = vld [vmem:[%s7401 + $0x174] sm:$0xf]
    %v8164 = vld [vmem:[%s7401 + $0x178] sm:$0xf]
    %v8165 = vld [vmem:[%s7401 + $0x17c] sm:$0x1]
    %v8166 = vld [vmem:[%s7401 + $0x180] sm:$0xf]
    %v8167 = vld [vmem:[%s7401 + $0x184] sm:$0xf]
    %v8168 = vld [vmem:[%s7401 + $0x188] sm:$0x1]
    %v8169 = vld [vmem:[%s7401 + $0x18c] sm:$0xf]
    %v8170 = vld [vmem:[%s7401 + $0x190] sm:$0xf]
    %v8171 = vld [vmem:[%s7401 + $0x194] sm:$0x1]
    %v8173 = vshrl.u32 %v8076, 16
    %v8175 = vrot.slane %v8173, 4
    %v8176 = vshll.u32 %v8076, 16
    %v8178 = vrot.slane %v8176, 5
    %v8179 = vor.u32 %v8175, %v8178
    %v8180 = vrot.slane %v8179, 4
    %v8182 = vshll.u32 %v8077, 16
    %v8184 = vrot.slane %v8182, 5
    %v8185 = vsel %vm1770, %v8180, %v8184
    %v8186 = vshrl.u32 %v8077, 16
    %v8188 = vrot.slane %v8186, 4
    %v8189 = vor.u32 %v8188, %v8184
    %v8190 = vrot.slane %v8189, 4
    %v8192 = vshll.u32 %v8078, 16
    %v8194 = vrot.slane %v8192, 5
    %v8195 = vsel %vm1770, %v8190, %v8194
    %v8197 = vshrl.u32 %v8079, 16
    %v8199 = vrot.slane %v8197, 4
    %v8200 = vshll.u32 %v8079, 16
    %v8202 = vrot.slane %v8200, 5
    %v8203 = vor.u32 %v8199, %v8202
    %v8204 = vrot.slane %v8203, 4
    %v8206 = vshll.u32 %v8080, 16
    %v8208 = vrot.slane %v8206, 5
    %v8209 = vsel %vm1770, %v8204, %v8208
    %v8210 = vshrl.u32 %v8080, 16
    %v8212 = vrot.slane %v8210, 4
    %v8213 = vor.u32 %v8212, %v8208
    %v8214 = vrot.slane %v8213, 4
    %v8216 = vshll.u32 %v8081, 16
    %v8218 = vrot.slane %v8216, 5
    %v8219 = vsel %vm1770, %v8214, %v8218
    %v8221 = vshrl.u32 %v8082, 16
    %v8223 = vrot.slane %v8221, 4
    %v8224 = vshll.u32 %v8082, 16
    %v8226 = vrot.slane %v8224, 5
    %v8227 = vor.u32 %v8223, %v8226
    %v8228 = vrot.slane %v8227, 4
    %v8230 = vshll.u32 %v8083, 16
    %v8232 = vrot.slane %v8230, 5
    %v8233 = vsel %vm1770, %v8228, %v8232
    %v8234 = vshrl.u32 %v8083, 16
    %v8236 = vrot.slane %v8234, 4
    %v8237 = vor.u32 %v8236, %v8232
    %v8238 = vrot.slane %v8237, 4
    %v8240 = vshll.u32 %v8084, 16
    %v8242 = vrot.slane %v8240, 5
    %v8243 = vsel %vm1770, %v8238, %v8242
    %v8245 = vshrl.u32 %v8085, 16
    %v8247 = vrot.slane %v8245, 4
    %v8248 = vshll.u32 %v8085, 16
    %v8250 = vrot.slane %v8248, 5
    %v8251 = vor.u32 %v8247, %v8250
    %v8252 = vrot.slane %v8251, 4
    %v8254 = vshll.u32 %v8086, 16
    %v8256 = vrot.slane %v8254, 5
    %v8257 = vsel %vm1770, %v8252, %v8256
    %v8258 = vshrl.u32 %v8086, 16
    %v8260 = vrot.slane %v8258, 4
    %v8261 = vor.u32 %v8260, %v8256
    %v8262 = vrot.slane %v8261, 4
    %v8264 = vshll.u32 %v8087, 16
    %v8266 = vrot.slane %v8264, 5
    %v8267 = vsel %vm1770, %v8262, %v8266
    %v8269 = vshrl.u32 %v8088, 16
    %v8271 = vrot.slane %v8269, 4
    %v8272 = vshll.u32 %v8088, 16
    %v8274 = vrot.slane %v8272, 5
    %v8275 = vor.u32 %v8271, %v8274
    %v8276 = vrot.slane %v8275, 4
    %v8278 = vshll.u32 %v8089, 16
    %v8280 = vrot.slane %v8278, 5
    %v8281 = vsel %vm1770, %v8276, %v8280
    %v8282 = vshrl.u32 %v8089, 16
    %v8284 = vrot.slane %v8282, 4
    %v8285 = vor.u32 %v8284, %v8280
    %v8286 = vrot.slane %v8285, 4
    %v8288 = vshll.u32 %v8090, 16
    %v8290 = vrot.slane %v8288, 5
    %v8291 = vsel %vm1770, %v8286, %v8290
    %v8293 = vshrl.u32 %v8091, 16
    %v8295 = vrot.slane %v8293, 4
    %v8296 = vshll.u32 %v8091, 16
    %v8298 = vrot.slane %v8296, 5
    %v8299 = vor.u32 %v8295, %v8298
    %v8300 = vrot.slane %v8299, 4
    %v8302 = vshll.u32 %v8092, 16
    %v8304 = vrot.slane %v8302, 5
    %v8305 = vsel %vm1770, %v8300, %v8304
    %v8306 = vshrl.u32 %v8092, 16
    %v8308 = vrot.slane %v8306, 4
    %v8309 = vor.u32 %v8308, %v8304
    %v8310 = vrot.slane %v8309, 4
    %v8312 = vshll.u32 %v8093, 16
    %v8314 = vrot.slane %v8312, 5
    %v8315 = vsel %vm1770, %v8310, %v8314
    %v8317 = vshrl.u32 %v8094, 16
    %v8319 = vrot.slane %v8317, 4
    %v8320 = vshll.u32 %v8094, 16
    %v8322 = vrot.slane %v8320, 5
    %v8323 = vor.u32 %v8319, %v8322
    %v8324 = vrot.slane %v8323, 4
    %v8326 = vshll.u32 %v8095, 16
    %v8328 = vrot.slane %v8326, 5
    %v8329 = vsel %vm1770, %v8324, %v8328
    %v8330 = vshrl.u32 %v8095, 16
    %v8332 = vrot.slane %v8330, 4
    %v8333 = vor.u32 %v8332, %v8328
    %v8334 = vrot.slane %v8333, 4
    %v8336 = vshll.u32 %v8096, 16
    %v8338 = vrot.slane %v8336, 5
    %v8339 = vsel %vm1770, %v8334, %v8338
    %v8341 = vshrl.u32 %v8097, 16
    %v8343 = vrot.slane %v8341, 4
    %v8344 = vshll.u32 %v8097, 16
    %v8346 = vrot.slane %v8344, 5
    %v8347 = vor.u32 %v8343, %v8346
    %v8348 = vrot.slane %v8347, 4
    %v8350 = vshll.u32 %v8098, 16
    %v8352 = vrot.slane %v8350, 5
    %v8353 = vsel %vm1770, %v8348, %v8352
    %v8354 = vshrl.u32 %v8098, 16
    %v8356 = vrot.slane %v8354, 4
    %v8357 = vor.u32 %v8356, %v8352
    %v8358 = vrot.slane %v8357, 4
    %v8360 = vshll.u32 %v8099, 16
    %v8362 = vrot.slane %v8360, 5
    %v8363 = vsel %vm1770, %v8358, %v8362
    %v8365 = vshrl.u32 %v8100, 16
    %v8367 = vrot.slane %v8365, 4
    %v8368 = vshll.u32 %v8100, 16
    %v8370 = vrot.slane %v8368, 5
    %v8371 = vor.u32 %v8367, %v8370
    %v8372 = vrot.slane %v8371, 4
    %v8374 = vshll.u32 %v8101, 16
    %v8376 = vrot.slane %v8374, 5
    %v8377 = vsel %vm1770, %v8372, %v8376
    %v8378 = vshrl.u32 %v8101, 16
    %v8380 = vrot.slane %v8378, 4
    %v8381 = vor.u32 %v8380, %v8376
    %v8382 = vrot.slane %v8381, 4
    %v8384 = vshll.u32 %v8102, 16
    %v8386 = vrot.slane %v8384, 5
    %v8387 = vsel %vm1770, %v8382, %v8386
    %v8389 = vshrl.u32 %v8103, 16
    %v8391 = vrot.slane %v8389, 4
    %v8392 = vshll.u32 %v8103, 16
    %v8394 = vrot.slane %v8392, 5
    %v8395 = vor.u32 %v8391, %v8394
    %v8396 = vrot.slane %v8395, 4
    %v8398 = vshll.u32 %v8104, 16
    %v8400 = vrot.slane %v8398, 5
    %v8401 = vsel %vm1770, %v8396, %v8400
    %v8402 = vshrl.u32 %v8104, 16
    %v8404 = vrot.slane %v8402, 4
    %v8405 = vor.u32 %v8404, %v8400
    %v8406 = vrot.slane %v8405, 4
    %v8408 = vshll.u32 %v8105, 16
    %v8410 = vrot.slane %v8408, 5
    %v8411 = vsel %vm1770, %v8406, %v8410
    %v8413 = vshrl.u32 %v8106, 16
    %v8415 = vrot.slane %v8413, 4
    %v8416 = vshll.u32 %v8106, 16
    %v8418 = vrot.slane %v8416, 5
    %v8419 = vor.u32 %v8415, %v8418
    %v8420 = vrot.slane %v8419, 4
    %v8422 = vshll.u32 %v8107, 16
    %v8424 = vrot.slane %v8422, 5
    %v8425 = vsel %vm1770, %v8420, %v8424
    %v8426 = vshrl.u32 %v8107, 16
    %v8428 = vrot.slane %v8426, 4
    %v8429 = vor.u32 %v8428, %v8424
    %v8430 = vrot.slane %v8429, 4
    %v8432 = vshll.u32 %v8108, 16
    %v8434 = vrot.slane %v8432, 5
    %v8435 = vsel %vm1770, %v8430, %v8434
    %v8437 = vshrl.u32 %v8109, 16
    %v8439 = vrot.slane %v8437, 4
    %v8440 = vshll.u32 %v8109, 16
    %v8442 = vrot.slane %v8440, 5
    %v8443 = vor.u32 %v8439, %v8442
    %v8444 = vrot.slane %v8443, 4
    %v8446 = vshll.u32 %v8110, 16
    %v8448 = vrot.slane %v8446, 5
    %v8449 = vsel %vm1770, %v8444, %v8448
    %v8450 = vshrl.u32 %v8110, 16
    %v8452 = vrot.slane %v8450, 4
    %v8453 = vor.u32 %v8452, %v8448
    %v8454 = vrot.slane %v8453, 4
    %v8456 = vshll.u32 %v8111, 16
    %v8458 = vrot.slane %v8456, 5
    %v8459 = vsel %vm1770, %v8454, %v8458
    %v8461 = vshrl.u32 %v8112, 16
    %v8463 = vrot.slane %v8461, 4
    %v8464 = vshll.u32 %v8112, 16
    %v8466 = vrot.slane %v8464, 5
    %v8467 = vor.u32 %v8463, %v8466
    %v8468 = vrot.slane %v8467, 4
    %v8470 = vshll.u32 %v8113, 16
    %v8472 = vrot.slane %v8470, 5
    %v8473 = vsel %vm1770, %v8468, %v8472
    %v8474 = vshrl.u32 %v8113, 16
    %v8476 = vrot.slane %v8474, 4
    %v8477 = vor.u32 %v8476, %v8472
    %v8478 = vrot.slane %v8477, 4
    %v8480 = vshll.u32 %v8114, 16
    %v8482 = vrot.slane %v8480, 5
    %v8483 = vsel %vm1770, %v8478, %v8482
    %v8485 = vshrl.u32 %v8115, 16
    %v8487 = vrot.slane %v8485, 4
    %v8488 = vshll.u32 %v8115, 16
    %v8490 = vrot.slane %v8488, 5
    %v8491 = vor.u32 %v8487, %v8490
    %v8492 = vrot.slane %v8491, 4
    %v8494 = vshll.u32 %v8116, 16
    %v8496 = vrot.slane %v8494, 5
    %v8497 = vsel %vm1770, %v8492, %v8496
    %v8498 = vshrl.u32 %v8116, 16
    %v8500 = vrot.slane %v8498, 4
    %v8501 = vor.u32 %v8500, %v8496
    %v8502 = vrot.slane %v8501, 4
    %v8504 = vshll.u32 %v8117, 16
    %v8506 = vrot.slane %v8504, 5
    %v8507 = vsel %vm1770, %v8502, %v8506
    %v8509 = vshrl.u32 %v8118, 16
    %v8511 = vrot.slane %v8509, 4
    %v8512 = vshll.u32 %v8118, 16
    %v8514 = vrot.slane %v8512, 5
    %v8515 = vor.u32 %v8511, %v8514
    %v8516 = vrot.slane %v8515, 4
    %v8518 = vshll.u32 %v8119, 16
    %v8520 = vrot.slane %v8518, 5
    %v8521 = vsel %vm1770, %v8516, %v8520
    %v8522 = vshrl.u32 %v8119, 16
    %v8524 = vrot.slane %v8522, 4
    %v8525 = vor.u32 %v8524, %v8520
    %v8526 = vrot.slane %v8525, 4
    %v8528 = vshll.u32 %v8120, 16
    %v8530 = vrot.slane %v8528, 5
    %v8531 = vsel %vm1770, %v8526, %v8530
    %v8533 = vshrl.u32 %v8121, 16
    %v8535 = vrot.slane %v8533, 4
    %v8536 = vshll.u32 %v8121, 16
    %v8538 = vrot.slane %v8536, 5
    %v8539 = vor.u32 %v8535, %v8538
    %v8540 = vrot.slane %v8539, 4
    %v8542 = vshll.u32 %v8122, 16
    %v8544 = vrot.slane %v8542, 5
    %v8545 = vsel %vm1770, %v8540, %v8544
    %v8546 = vshrl.u32 %v8122, 16
    %v8548 = vrot.slane %v8546, 4
    %v8549 = vor.u32 %v8548, %v8544
    %v8550 = vrot.slane %v8549, 4
    %v8552 = vshll.u32 %v8123, 16
    %v8554 = vrot.slane %v8552, 5
    %v8555 = vsel %vm1770, %v8550, %v8554
    %v8557 = vshrl.u32 %v8124, 16
    %v8559 = vrot.slane %v8557, 4
    %v8560 = vshll.u32 %v8124, 16
    %v8562 = vrot.slane %v8560, 5
    %v8563 = vor.u32 %v8559, %v8562
    %v8564 = vrot.slane %v8563, 4
    %v8566 = vshll.u32 %v8125, 16
    %v8568 = vrot.slane %v8566, 5
    %v8569 = vsel %vm1770, %v8564, %v8568
    %v8570 = vshrl.u32 %v8125, 16
    %v8572 = vrot.slane %v8570, 4
    %v8573 = vor.u32 %v8572, %v8568
    %v8574 = vrot.slane %v8573, 4
    %v8576 = vshll.u32 %v8126, 16
    %v8578 = vrot.slane %v8576, 5
    %v8579 = vsel %vm1770, %v8574, %v8578
    %v8581 = vshrl.u32 %v8127, 16
    %v8583 = vrot.slane %v8581, 4
    %v8584 = vshll.u32 %v8127, 16
    %v8586 = vrot.slane %v8584, 5
    %v8587 = vor.u32 %v8583, %v8586
    %v8588 = vrot.slane %v8587, 4
    %v8590 = vshll.u32 %v8128, 16
    %v8592 = vrot.slane %v8590, 5
    %v8593 = vsel %vm1770, %v8588, %v8592
    %v8594 = vshrl.u32 %v8128, 16
    %v8596 = vrot.slane %v8594, 4
    %v8597 = vor.u32 %v8596, %v8592
    %v8598 = vrot.slane %v8597, 4
    %v8600 = vshll.u32 %v8129, 16
    %v8602 = vrot.slane %v8600, 5
    %v8603 = vsel %vm1770, %v8598, %v8602
    %v8605 = vshrl.u32 %v8130, 16
    %v8607 = vrot.slane %v8605, 4
    %v8608 = vshll.u32 %v8130, 16
    %v8610 = vrot.slane %v8608, 5
    %v8611 = vor.u32 %v8607, %v8610
    %v8612 = vrot.slane %v8611, 4
    %v8614 = vshll.u32 %v8131, 16
    %v8616 = vrot.slane %v8614, 5
    %v8617 = vsel %vm1770, %v8612, %v8616
    %v8618 = vshrl.u32 %v8131, 16
    %v8620 = vrot.slane %v8618, 4
    %v8621 = vor.u32 %v8620, %v8616
    %v8622 = vrot.slane %v8621, 4
    %v8624 = vshll.u32 %v8132, 16
    %v8626 = vrot.slane %v8624, 5
    %v8627 = vsel %vm1770, %v8622, %v8626
    %v8629 = vshrl.u32 %v8133, 16
    %v8631 = vrot.slane %v8629, 4
    %v8632 = vshll.u32 %v8133, 16
    %v8634 = vrot.slane %v8632, 5
    %v8635 = vor.u32 %v8631, %v8634
    %v8636 = vrot.slane %v8635, 4
    %v8638 = vshll.u32 %v8134, 16
    %v8640 = vrot.slane %v8638, 5
    %v8641 = vsel %vm1770, %v8636, %v8640
    %v8642 = vshrl.u32 %v8134, 16
    %v8644 = vrot.slane %v8642, 4
    %v8645 = vor.u32 %v8644, %v8640
    %v8646 = vrot.slane %v8645, 4
    %v8648 = vshll.u32 %v8135, 16
    %v8650 = vrot.slane %v8648, 5
    %v8651 = vsel %vm1770, %v8646, %v8650
    %v8653 = vshrl.u32 %v8136, 16
    %v8655 = vrot.slane %v8653, 4
    %v8656 = vshll.u32 %v8136, 16
    %v8658 = vrot.slane %v8656, 5
    %v8659 = vor.u32 %v8655, %v8658
    %v8660 = vrot.slane %v8659, 4
    %v8662 = vshll.u32 %v8137, 16
    %v8664 = vrot.slane %v8662, 5
    %v8665 = vsel %vm1770, %v8660, %v8664
    %v8666 = vshrl.u32 %v8137, 16
    %v8668 = vrot.slane %v8666, 4
    %v8669 = vor.u32 %v8668, %v8664
    %v8670 = vrot.slane %v8669, 4
    %v8672 = vshll.u32 %v8138, 16
    %v8674 = vrot.slane %v8672, 5
    %v8675 = vsel %vm1770, %v8670, %v8674
    %v8677 = vshrl.u32 %v8139, 16
    %v8679 = vrot.slane %v8677, 4
    %v8680 = vshll.u32 %v8139, 16
    %v8682 = vrot.slane %v8680, 5
    %v8683 = vor.u32 %v8679, %v8682
    %v8684 = vrot.slane %v8683, 4
    %v8686 = vshll.u32 %v8140, 16
    %v8688 = vrot.slane %v8686, 5
    %v8689 = vsel %vm1770, %v8684, %v8688
    %v8690 = vshrl.u32 %v8140, 16
    %v8692 = vrot.slane %v8690, 4
    %v8693 = vor.u32 %v8692, %v8688
    %v8694 = vrot.slane %v8693, 4
    %v8696 = vshll.u32 %v8141, 16
    %v8698 = vrot.slane %v8696, 5
    %v8699 = vsel %vm1770, %v8694, %v8698
    %v8701 = vshrl.u32 %v8142, 16
    %v8703 = vrot.slane %v8701, 4
    %v8704 = vshll.u32 %v8142, 16
    %v8706 = vrot.slane %v8704, 5
    %v8707 = vor.u32 %v8703, %v8706
    %v8708 = vrot.slane %v8707, 4
    %v8710 = vshll.u32 %v8143, 16
    %v8712 = vrot.slane %v8710, 5
    %v8713 = vsel %vm1770, %v8708, %v8712
    %v8714 = vshrl.u32 %v8143, 16
    %v8716 = vrot.slane %v8714, 4
    %v8717 = vor.u32 %v8716, %v8712
    %v8718 = vrot.slane %v8717, 4
    %v8720 = vshll.u32 %v8144, 16
    %v8722 = vrot.slane %v8720, 5
    %v8723 = vsel %vm1770, %v8718, %v8722
    %v8725 = vshrl.u32 %v8145, 16
    %v8727 = vrot.slane %v8725, 4
    %v8728 = vshll.u32 %v8145, 16
    %v8730 = vrot.slane %v8728, 5
    %v8731 = vor.u32 %v8727, %v8730
    %v8732 = vrot.slane %v8731, 4
    %v8734 = vshll.u32 %v8146, 16
    %v8736 = vrot.slane %v8734, 5
    %v8737 = vsel %vm1770, %v8732, %v8736
    %v8738 = vshrl.u32 %v8146, 16
    %v8740 = vrot.slane %v8738, 4
    %v8741 = vor.u32 %v8740, %v8736
    %v8742 = vrot.slane %v8741, 4
    %v8744 = vshll.u32 %v8147, 16
    %v8746 = vrot.slane %v8744, 5
    %v8747 = vsel %vm1770, %v8742, %v8746
    %v8749 = vshrl.u32 %v8148, 16
    %v8751 = vrot.slane %v8749, 4
    %v8752 = vshll.u32 %v8148, 16
    %v8754 = vrot.slane %v8752, 5
    %v8755 = vor.u32 %v8751, %v8754
    %v8756 = vrot.slane %v8755, 4
    %v8758 = vshll.u32 %v8149, 16
    %v8760 = vrot.slane %v8758, 5
    %v8761 = vsel %vm1770, %v8756, %v8760
    %v8762 = vshrl.u32 %v8149, 16
    %v8764 = vrot.slane %v8762, 4
    %v8765 = vor.u32 %v8764, %v8760
    %v8766 = vrot.slane %v8765, 4
    %v8768 = vshll.u32 %v8150, 16
    %v8770 = vrot.slane %v8768, 5
    %v8771 = vsel %vm1770, %v8766, %v8770
    %v8773 = vshrl.u32 %v8151, 16
    %v8775 = vrot.slane %v8773, 4
    %v8776 = vshll.u32 %v8151, 16
    %v8778 = vrot.slane %v8776, 5
    %v8779 = vor.u32 %v8775, %v8778
    %v8780 = vrot.slane %v8779, 4
    %v8782 = vshll.u32 %v8152, 16
    %v8784 = vrot.slane %v8782, 5
    %v8785 = vsel %vm1770, %v8780, %v8784
    %v8786 = vshrl.u32 %v8152, 16
    %v8788 = vrot.slane %v8786, 4
    %v8789 = vor.u32 %v8788, %v8784
    %v8790 = vrot.slane %v8789, 4
    %v8792 = vshll.u32 %v8153, 16
    %v8794 = vrot.slane %v8792, 5
    %v8795 = vsel %vm1770, %v8790, %v8794
    %v8797 = vshrl.u32 %v8154, 16
    %v8799 = vrot.slane %v8797, 4
    %v8800 = vshll.u32 %v8154, 16
    %v8802 = vrot.slane %v8800, 5
    %v8803 = vor.u32 %v8799, %v8802
    %v8804 = vrot.slane %v8803, 4
    %v8806 = vshll.u32 %v8155, 16
    %v8808 = vrot.slane %v8806, 5
    %v8809 = vsel %vm1770, %v8804, %v8808
    %v8810 = vshrl.u32 %v8155, 16
    %v8812 = vrot.slane %v8810, 4
    %v8813 = vor.u32 %v8812, %v8808
    %v8814 = vrot.slane %v8813, 4
    %v8816 = vshll.u32 %v8156, 16
    %v8818 = vrot.slane %v8816, 5
    %v8819 = vsel %vm1770, %v8814, %v8818
    %v8821 = vshrl.u32 %v8157, 16
    %v8823 = vrot.slane %v8821, 4
    %v8824 = vshll.u32 %v8157, 16
    %v8826 = vrot.slane %v8824, 5
    %v8827 = vor.u32 %v8823, %v8826
    %v8828 = vrot.slane %v8827, 4
    %v8830 = vshll.u32 %v8158, 16
    %v8832 = vrot.slane %v8830, 5
    %v8833 = vsel %vm1770, %v8828, %v8832
    %v8834 = vshrl.u32 %v8158, 16
    %v8836 = vrot.slane %v8834, 4
    %v8837 = vor.u32 %v8836, %v8832
    %v8838 = vrot.slane %v8837, 4
    %v8840 = vshll.u32 %v8159, 16
    %v8842 = vrot.slane %v8840, 5
    %v8843 = vsel %vm1770, %v8838, %v8842
    %v8845 = vshrl.u32 %v8160, 16
    %v8847 = vrot.slane %v8845, 4
    %v8848 = vshll.u32 %v8160, 16
    %v8850 = vrot.slane %v8848, 5
    %v8851 = vor.u32 %v8847, %v8850
    %v8852 = vrot.slane %v8851, 4
    %v8854 = vshll.u32 %v8161, 16
    %v8856 = vrot.slane %v8854, 5
    %v8857 = vsel %vm1770, %v8852, %v8856
    %v8858 = vshrl.u32 %v8161, 16
    %v8860 = vrot.slane %v8858, 4
    %v8861 = vor.u32 %v8860, %v8856
    %v8862 = vrot.slane %v8861, 4
    %v8864 = vshll.u32 %v8162, 16
    %v8866 = vrot.slane %v8864, 5
    %v8867 = vsel %vm1770, %v8862, %v8866
    %v8869 = vshrl.u32 %v8163, 16
    %v8871 = vrot.slane %v8869, 4
    %v8872 = vshll.u32 %v8163, 16
    %v8874 = vrot.slane %v8872, 5
    %v8875 = vor.u32 %v8871, %v8874
    %v8876 = vrot.slane %v8875, 4
    %v8878 = vshll.u32 %v8164, 16
    %v8880 = vrot.slane %v8878, 5
    %v8881 = vsel %vm1770, %v8876, %v8880
    %v8882 = vshrl.u32 %v8164, 16
    %v8884 = vrot.slane %v8882, 4
    %v8885 = vor.u32 %v8884, %v8880
    %v8886 = vrot.slane %v8885, 4
    %v8888 = vshll.u32 %v8165, 16
    %v8890 = vrot.slane %v8888, 5
    %v8891 = vsel %vm1770, %v8886, %v8890
    %v8893 = vshrl.u32 %v8166, 16
    %v8895 = vrot.slane %v8893, 4
    %v8896 = vshll.u32 %v8166, 16
    %v8898 = vrot.slane %v8896, 5
    %v8899 = vor.u32 %v8895, %v8898
    %v8900 = vrot.slane %v8899, 4
    %v8902 = vshll.u32 %v8167, 16
    %v8904 = vrot.slane %v8902, 5
    %v8905 = vsel %vm1770, %v8900, %v8904
    %v8906 = vshrl.u32 %v8167, 16
    %v8908 = vrot.slane %v8906, 4
    %v8909 = vor.u32 %v8908, %v8904
    %v8910 = vrot.slane %v8909, 4
    %v8912 = vshll.u32 %v8168, 16
    %v8914 = vrot.slane %v8912, 5
    %v8915 = vsel %vm1770, %v8910, %v8914
    %v8917 = vshrl.u32 %v8169, 16
    %v8919 = vrot.slane %v8917, 4
    %v8920 = vshll.u32 %v8169, 16
    %v8922 = vrot.slane %v8920, 5
    %v8923 = vor.u32 %v8919, %v8922
    %v8924 = vrot.slane %v8923, 4
    %v8926 = vshll.u32 %v8170, 16
    %v8928 = vrot.slane %v8926, 5
    %v8929 = vsel %vm1770, %v8924, %v8928
    %v8930 = vshrl.u32 %v8170, 16
    %v8932 = vrot.slane %v8930, 4
    %v8933 = vor.u32 %v8932, %v8928
    %v8934 = vrot.slane %v8933, 4
    %v8936 = vshll.u32 %v8171, 16
    %v8938 = vrot.slane %v8936, 5
    %v8939 = vsel %vm1770, %v8934, %v8938
    %s8940 = scalar_lea.vmem [#allocation6], 448
    %v8941 = vld [vmem:[%s8940] sm:$0xf]
    %v8942 = vld [vmem:[%s8940 + $0x4] sm:$0xf]
    %v8943 = vld [vmem:[%s8940 + $0x8] sm:$0xf]
    %v8944 = vld [vmem:[%s8940 + $0xc] sm:$0xf]
    %v8945 = vld [vmem:[%s8940 + $0x10] sm:$0xf]
    %v8946 = vld [vmem:[%s8940 + $0x14] sm:$0xf]
    %v8947 = vld [vmem:[%s8940 + $0x18] sm:$0xf]
    %v8948 = vld [vmem:[%s8940 + $0x1c] sm:$0xf]
    %v8949 = vld [vmem:[%s8940 + $0x20] sm:$0xf]
    %v8950 = vld [vmem:[%s8940 + $0x24] sm:$0xf]
    %v8951 = vld [vmem:[%s8940 + $0x28] sm:$0xf]
    %v8952 = vld [vmem:[%s8940 + $0x2c] sm:$0xf]
    %v8953 = vld [vmem:[%s8940 + $0x30] sm:$0xf]
    %v8954 = vld [vmem:[%s8940 + $0x34] sm:$0xf]
    %v8955 = vld [vmem:[%s8940 + $0x38] sm:$0xf]
    %v8956 = vld [vmem:[%s8940 + $0x3c] sm:$0xf]
    %v8957 = vunpack.c.l.b16 %v8185
    %v8958 = vunpack.c.l.b16 %v8195
    %v8959 = vunpack.c.l.b16 %v8209
    %v8960 = vunpack.c.l.b16 %v8219
    %v8961 = vunpack.c.l.b16 %v8233
    %v8962 = vunpack.c.l.b16 %v8243
    %v8963 = vunpack.c.l.b16 %v8257
    %v8964 = vunpack.c.l.b16 %v8267
    %v8965 = vunpack.c.l.b16 %v8281
    %v8966 = vunpack.c.l.b16 %v8291
    %v8967 = vunpack.c.l.b16 %v8305
    %v8968 = vunpack.c.l.b16 %v8315
    %v8969 = vunpack.c.l.b16 %v8329
    %v8970 = vunpack.c.l.b16 %v8339
    %v8971 = vunpack.c.l.b16 %v8353
    %v8972 = vunpack.c.l.b16 %v8363
    %v8973 = vunpack.c.l.b16 %v8377
    %v8974 = vunpack.c.l.b16 %v8387
    %v8975 = vunpack.c.l.b16 %v8401
    %v8976 = vunpack.c.l.b16 %v8411
    %v8977 = vunpack.c.l.b16 %v8425
    %v8978 = vunpack.c.l.b16 %v8435
    %v8979 = vunpack.c.l.b16 %v8449
    %v8980 = vunpack.c.l.b16 %v8459
    %v8981 = vunpack.c.l.b16 %v8473
    %v8982 = vunpack.c.l.b16 %v8483
    %v8983 = vunpack.c.l.b16 %v8497
    %v8984 = vunpack.c.l.b16 %v8507
    %v8985 = vunpack.c.l.b16 %v8521
    %v8986 = vunpack.c.l.b16 %v8531
    %v8987 = vunpack.c.l.b16 %v8545
    %v8988 = vunpack.c.l.b16 %v8555
    %v8989 = vunpack.c.l.b16 %v8569
    %v8990 = vunpack.c.l.b16 %v8579
    %v8991 = vunpack.c.l.b16 %v8593
    %v8992 = vunpack.c.l.b16 %v8603
    %v8993 = vunpack.c.l.b16 %v8617
    %v8994 = vunpack.c.l.b16 %v8627
    %v8995 = vunpack.c.l.b16 %v8641
    %v8996 = vunpack.c.l.b16 %v8651
    %v8997 = vunpack.c.l.b16 %v8665
    %v8998 = vunpack.c.l.b16 %v8675
    %v8999 = vunpack.c.l.b16 %v8689
    %v9000 = vunpack.c.l.b16 %v8699
    %v9001 = vunpack.c.l.b16 %v8713
    %v9002 = vunpack.c.l.b16 %v8723
    %v9003 = vunpack.c.l.b16 %v8737
    %v9004 = vunpack.c.l.b16 %v8747
    %v9005 = vunpack.c.l.b16 %v8761
    %v9006 = vunpack.c.l.b16 %v8771
    %v9007 = vunpack.c.l.b16 %v8785
    %v9008 = vunpack.c.l.b16 %v8795
    %v9009 = vunpack.c.l.b16 %v8809
    %v9010 = vunpack.c.l.b16 %v8819
    %v9011 = vunpack.c.l.b16 %v8833
    %v9012 = vunpack.c.l.b16 %v8843
    %v9013 = vunpack.c.l.b16 %v8857
    %v9014 = vunpack.c.l.b16 %v8867
    %v9015 = vunpack.c.l.b16 %v8881
    %v9016 = vunpack.c.l.b16 %v8891
    %v9017 = vunpack.c.l.b16 %v8905
    %v9018 = vunpack.c.l.b16 %v8915
    %v9019 = vunpack.c.l.b16 %v8929
    %v9020 = vunpack.c.l.b16 %v8939
    %v9021 = vpack.c.b16 %v8958, %v8957
    %v9022 = vpack.c.b16 %v8960, %v8959
    %v9023 = vpack.c.b16 %v8962, %v8961
    %v9024 = vpack.c.b16 %v8964, %v8963
    %v9025 = vpack.c.b16 %v8966, %v8965
    %v9026 = vpack.c.b16 %v8968, %v8967
    %v9027 = vpack.c.b16 %v8970, %v8969
    %v9028 = vpack.c.b16 %v8972, %v8971
    %v9029 = vpack.c.b16 %v8974, %v8973
    %v9030 = vpack.c.b16 %v8976, %v8975
    %v9031 = vpack.c.b16 %v8978, %v8977
    %v9032 = vpack.c.b16 %v8980, %v8979
    %v9033 = vpack.c.b16 %v8982, %v8981
    %v9034 = vpack.c.b16 %v8984, %v8983
    %v9035 = vpack.c.b16 %v8986, %v8985
    %v9036 = vpack.c.b16 %v8988, %v8987
    %v9037 = vpack.c.b16 %v8990, %v8989
    %v9038 = vpack.c.b16 %v8992, %v8991
    %v9039 = vpack.c.b16 %v8994, %v8993
    %v9040 = vpack.c.b16 %v8996, %v8995
    %v9041 = vpack.c.b16 %v8998, %v8997
    %v9042 = vpack.c.b16 %v9000, %v8999
    %v9043 = vpack.c.b16 %v9002, %v9001
    %v9044 = vpack.c.b16 %v9004, %v9003
    %v9045 = vpack.c.b16 %v9006, %v9005
    %v9046 = vpack.c.b16 %v9008, %v9007
    %v9047 = vpack.c.b16 %v9010, %v9009
    %v9048 = vpack.c.b16 %v9012, %v9011
    %v9049 = vpack.c.b16 %v9014, %v9013
    %v9050 = vpack.c.b16 %v9016, %v9015
    %v9051 = vpack.c.b16 %v9018, %v9017
    %v9052 = vpack.c.b16 %v9020, %v9019
    %v9101 = vunpack.c.l.b16 %v8941
    %v9102 = vunpack.c.l.b16 %v8942
    %v9103 = vunpack.c.l.b16 %v8943
    %v9104 = vunpack.c.l.b16 %v8944
    %v9105 = vunpack.c.l.b16 %v8945
    %v9106 = vunpack.c.l.b16 %v8946
    %v9107 = vunpack.c.l.b16 %v8947
    %v9108 = vunpack.c.l.b16 %v8948
    %v9109 = vunpack.c.l.b16 %v8949
    %v9110 = vunpack.c.l.b16 %v8950
    %v9111 = vunpack.c.l.b16 %v8951
    %v9112 = vunpack.c.l.b16 %v8952
    %v9113 = vunpack.c.l.b16 %v8953
    %v9114 = vunpack.c.l.b16 %v8954
    %v9115 = vunpack.c.l.b16 %v8955
    %v9116 = vunpack.c.l.b16 %v8956
    %v9117 = vpack.c.b16 %v9102, %v9101
    %v9118 = vpack.c.b16 %v9104, %v9103
    %v9119 = vpack.c.b16 %v9106, %v9105
    %v9120 = vpack.c.b16 %v9108, %v9107
    %v9121 = vpack.c.b16 %v9110, %v9109
    %v9122 = vpack.c.b16 %v9112, %v9111
    %v9123 = vpack.c.b16 %v9114, %v9113
    %v9124 = vpack.c.b16 %v9116, %v9115
    %9133 = vmatprep.subr.bf16.mxu0 0
    %9134 = vmatpush1.bf16.msra.mxu0 %v9124
    %9135 = vmatprep.subr.bf16.mxu0 0
    %9136 = vmatpush1.bf16.msra.mxu0 %v9123
    %9137 = vmatprep.subr.bf16.mxu0 0
    %9138 = vmatpush1.bf16.msra.mxu0 %v9122
    %9139 = vmatprep.subr.bf16.mxu0 0
    %9140 = vmatpush1.bf16.msra.mxu0 %v9121
    %9141 = vmatprep.subr.bf16.mxu0 0
    %9142 = vmatpush1.bf16.msra.mxu0 %v9120
    %9143 = vmatprep.subr.bf16.mxu0 0
    %9144 = vmatpush1.bf16.msra.mxu0 %v9119
    %9145 = vmatprep.subr.bf16.mxu0 0
    %9146 = vmatpush1.bf16.msra.mxu0 %v9118
    %9147 = vmatprep.subr.bf16.mxu0 0
    %9148 = vmatpush1.bf16.msra.mxu0 %v9117
    %9149 = vmatprep.subr.bf16.mxu0 0
    %9150 = vmatpush2.bf16.msra.mxu0 0
    %9151 = vmatprep.subr.bf16.mxu0 0
    %9152 = vmatpush2.bf16.msra.mxu0 0
    %9153 = vmatprep.subr.bf16.mxu0 0
    %9154 = vmatpush2.bf16.msra.mxu0 0
    %9155 = vmatprep.subr.bf16.mxu0 0
    %9156 = vmatpush2.bf16.msra.mxu0 0
    %9157 = vmatprep.subr.bf16.mxu0 0
    %9158 = vmatpush2.bf16.msra.mxu0 0
    %9159 = vmatprep.subr.bf16.mxu0 0
    %9160 = vmatpush2.bf16.msra.mxu0 0
    %9161 = vmatprep.subr.bf16.mxu0 0
    %9162 = vmatpush2.bf16.msra.mxu0 0
    %9163 = vmatprep.subr.bf16.mxu0 0
    %9164 = vmatpush2.bf16.msra.mxu0 0
    %9165 = vmatprep.mubr.bf16.mxu0 0
    %9166 = vmatmul.mubr.bf16.gmra.mxu0 %v9021
    %v9167 = vpop.f32.mrf.mxu0
    %v9168 = vadd.f32 0.0, %v9167
    %v9169 = vpop.f32.mrf.mxu0
    %v9170 = vpop.f32.mrf.mxu0
    %v9171 = vadd.f32 0.0, %v9170
    %v9172 = vpop.f32.mrf.mxu0
    %9173 = vmatprep.mubr.bf16.mxu0 0
    %9174 = vmatmul.mubr.bf16.gmra.mxu0 %v9022
    %v9175 = vpop.f32.mrf.mxu0
    %v9176 = vadd.f32 0.0, %v9175
    %v9177 = vpop.f32.mrf.mxu0
    %v9178 = vpop.f32.mrf.mxu0
    %v9179 = vadd.f32 0.0, %v9178
    %v9180 = vpop.f32.mrf.mxu0
    %9181 = vmatprep.mubr.bf16.mxu0 0
    %9182 = vmatmul.mubr.bf16.gmra.mxu0 %v9023
    %v9183 = vpop.f32.mrf.mxu0
    %v9184 = vadd.f32 0.0, %v9183
    %v9185 = vpop.f32.mrf.mxu0
    %v9186 = vpop.f32.mrf.mxu0
    %v9187 = vadd.f32 0.0, %v9186
    %v9188 = vpop.f32.mrf.mxu0
    %9189 = vmatprep.mubr.bf16.mxu0 0
    %9190 = vmatmul.mubr.bf16.gmra.mxu0 %v9024
    %v9191 = vpop.f32.mrf.mxu0
    %v9192 = vadd.f32 0.0, %v9191
    %v9193 = vpop.f32.mrf.mxu0
    %v9194 = vpop.f32.mrf.mxu0
    %v9195 = vadd.f32 0.0, %v9194
    %v9196 = vpop.f32.mrf.mxu0
    %9197 = vmatprep.mubr.bf16.mxu0 0
    %9198 = vmatmul.mubr.bf16.gmra.mxu0 %v9025
    %v9199 = vpop.f32.mrf.mxu0
    %v9200 = vadd.f32 0.0, %v9199
    %v9201 = vpop.f32.mrf.mxu0
    %v9202 = vpop.f32.mrf.mxu0
    %v9203 = vadd.f32 0.0, %v9202
    %v9204 = vpop.f32.mrf.mxu0
    %9205 = vmatprep.mubr.bf16.mxu0 0
    %9206 = vmatmul.mubr.bf16.gmra.mxu0 %v9026
    %v9207 = vpop.f32.mrf.mxu0
    %v9208 = vadd.f32 0.0, %v9207
    %v9209 = vpop.f32.mrf.mxu0
    %v9210 = vpop.f32.mrf.mxu0
    %v9211 = vadd.f32 0.0, %v9210
    %v9212 = vpop.f32.mrf.mxu0
    %9213 = vmatprep.mubr.bf16.mxu0 0
    %9214 = vmatmul.mubr.bf16.gmra.mxu0 %v9027
    %v9215 = vpop.f32.mrf.mxu0
    %v9216 = vadd.f32 0.0, %v9215
    %v9217 = vpop.f32.mrf.mxu0
    %v9218 = vpop.f32.mrf.mxu0
    %v9219 = vadd.f32 0.0, %v9218
    %v9220 = vpop.f32.mrf.mxu0
    %9221 = vmatprep.mubr.bf16.mxu0 0
    %9222 = vmatmul.mubr.bf16.gmra.mxu0 %v9028
    %v9223 = vpop.f32.mrf.mxu0
    %v9224 = vadd.f32 0.0, %v9223
    %v9225 = vpop.f32.mrf.mxu0
    %v9226 = vpop.f32.mrf.mxu0
    %v9227 = vadd.f32 0.0, %v9226
    %v9228 = vpop.f32.mrf.mxu0
    %9229 = vmatprep.mubr.bf16.mxu0 0
    %9230 = vmatmul.mubr.bf16.gmra.mxu0 %v9029
    %v9231 = vpop.f32.mrf.mxu0
    %v9232 = vadd.f32 0.0, %v9231
    %v9233 = vpop.f32.mrf.mxu0
    %v9234 = vpop.f32.mrf.mxu0
    %v9235 = vadd.f32 0.0, %v9234
    %v9236 = vpop.f32.mrf.mxu0
    %9237 = vmatprep.mubr.bf16.mxu0 0
    %9238 = vmatmul.mubr.bf16.gmra.mxu0 %v9030
    %v9239 = vpop.f32.mrf.mxu0
    %v9240 = vadd.f32 0.0, %v9239
    %v9241 = vpop.f32.mrf.mxu0
    %v9242 = vpop.f32.mrf.mxu0
    %v9243 = vadd.f32 0.0, %v9242
    %v9244 = vpop.f32.mrf.mxu0
    %9245 = vmatprep.mubr.bf16.mxu0 0
    %9246 = vmatmul.mubr.bf16.gmra.mxu0 %v9031
    %v9247 = vpop.f32.mrf.mxu0
    %v9248 = vadd.f32 0.0, %v9247
    %v9249 = vpop.f32.mrf.mxu0
    %v9250 = vpop.f32.mrf.mxu0
    %v9251 = vadd.f32 0.0, %v9250
    %v9252 = vpop.f32.mrf.mxu0
    %9253 = vmatprep.mubr.bf16.mxu0 0
    %9254 = vmatmul.mubr.bf16.gmra.mxu0 %v9032
    %v9255 = vpop.f32.mrf.mxu0
    %v9256 = vadd.f32 0.0, %v9255
    %v9257 = vpop.f32.mrf.mxu0
    %v9258 = vpop.f32.mrf.mxu0
    %v9259 = vadd.f32 0.0, %v9258
    %v9260 = vpop.f32.mrf.mxu0
    %9261 = vmatprep.mubr.bf16.mxu0 0
    %9262 = vmatmul.mubr.bf16.gmra.mxu0 %v9033
    %v9263 = vpop.f32.mrf.mxu0
    %v9264 = vadd.f32 0.0, %v9263
    %v9265 = vpop.f32.mrf.mxu0
    %v9266 = vpop.f32.mrf.mxu0
    %v9267 = vadd.f32 0.0, %v9266
    %v9268 = vpop.f32.mrf.mxu0
    %9269 = vmatprep.mubr.bf16.mxu0 0
    %9270 = vmatmul.mubr.bf16.gmra.mxu0 %v9034
    %v9271 = vpop.f32.mrf.mxu0
    %v9272 = vadd.f32 0.0, %v9271
    %v9273 = vpop.f32.mrf.mxu0
    %v9274 = vpop.f32.mrf.mxu0
    %v9275 = vadd.f32 0.0, %v9274
    %v9276 = vpop.f32.mrf.mxu0
    %9277 = vmatprep.mubr.bf16.mxu0 0
    %9278 = vmatmul.mubr.bf16.gmra.mxu0 %v9035
    %v9279 = vpop.f32.mrf.mxu0
    %v9280 = vadd.f32 0.0, %v9279
    %v9281 = vpop.f32.mrf.mxu0
    %v9282 = vpop.f32.mrf.mxu0
    %v9283 = vadd.f32 0.0, %v9282
    %v9284 = vpop.f32.mrf.mxu0
    %9285 = vmatprep.mubr.bf16.mxu0 0
    %9286 = vmatmul.mubr.bf16.gmra.mxu0 %v9036
    %v9287 = vpop.f32.mrf.mxu0
    %v9288 = vadd.f32 0.0, %v9287
    %v9289 = vpop.f32.mrf.mxu0
    %v9290 = vpop.f32.mrf.mxu0
    %v9291 = vadd.f32 0.0, %v9290
    %v9292 = vpop.f32.mrf.mxu0
    %9293 = vmatprep.mubr.bf16.mxu0 0
    %9294 = vmatmul.mubr.bf16.gmra.mxu0 %v9037
    %v9295 = vpop.f32.mrf.mxu0
    %v9296 = vadd.f32 0.0, %v9295
    %v9297 = vpop.f32.mrf.mxu0
    %v9298 = vpop.f32.mrf.mxu0
    %v9299 = vadd.f32 0.0, %v9298
    %v9300 = vpop.f32.mrf.mxu0
    %9301 = vmatprep.mubr.bf16.mxu0 0
    %9302 = vmatmul.mubr.bf16.gmra.mxu0 %v9038
    %v9303 = vpop.f32.mrf.mxu0
    %v9304 = vadd.f32 0.0, %v9303
    %v9305 = vpop.f32.mrf.mxu0
    %v9306 = vpop.f32.mrf.mxu0
    %v9307 = vadd.f32 0.0, %v9306
    %v9308 = vpop.f32.mrf.mxu0
    %9309 = vmatprep.mubr.bf16.mxu0 0
    %9310 = vmatmul.mubr.bf16.gmra.mxu0 %v9039
    %v9311 = vpop.f32.mrf.mxu0
    %v9312 = vadd.f32 0.0, %v9311
    %v9313 = vpop.f32.mrf.mxu0
    %v9314 = vpop.f32.mrf.mxu0
    %v9315 = vadd.f32 0.0, %v9314
    %v9316 = vpop.f32.mrf.mxu0
    %9317 = vmatprep.mubr.bf16.mxu0 0
    %9318 = vmatmul.mubr.bf16.gmra.mxu0 %v9040
    %v9319 = vpop.f32.mrf.mxu0
    %v9320 = vadd.f32 0.0, %v9319
    %v9321 = vpop.f32.mrf.mxu0
    %v9322 = vpop.f32.mrf.mxu0
    %v9323 = vadd.f32 0.0, %v9322
    %v9324 = vpop.f32.mrf.mxu0
    %9325 = vmatprep.mubr.bf16.mxu0 0
    %9326 = vmatmul.mubr.bf16.gmra.mxu0 %v9041
    %v9327 = vpop.f32.mrf.mxu0
    %v9328 = vadd.f32 0.0, %v9327
    %v9329 = vpop.f32.mrf.mxu0
    %v9330 = vpop.f32.mrf.mxu0
    %v9331 = vadd.f32 0.0, %v9330
    %v9332 = vpop.f32.mrf.mxu0
    %9333 = vmatprep.mubr.bf16.mxu0 0
    %9334 = vmatmul.mubr.bf16.gmra.mxu0 %v9042
    %v9335 = vpop.f32.mrf.mxu0
    %v9336 = vadd.f32 0.0, %v9335
    %v9337 = vpop.f32.mrf.mxu0
    %v9338 = vpop.f32.mrf.mxu0
    %v9339 = vadd.f32 0.0, %v9338
    %v9340 = vpop.f32.mrf.mxu0
    %9341 = vmatprep.mubr.bf16.mxu0 0
    %9342 = vmatmul.mubr.bf16.gmra.mxu0 %v9043
    %v9343 = vpop.f32.mrf.mxu0
    %v9344 = vadd.f32 0.0, %v9343
    %v9345 = vpop.f32.mrf.mxu0
    %v9346 = vpop.f32.mrf.mxu0
    %v9347 = vadd.f32 0.0, %v9346
    %v9348 = vpop.f32.mrf.mxu0
    %9349 = vmatprep.mubr.bf16.mxu0 0
    %9350 = vmatmul.mubr.bf16.gmra.mxu0 %v9044
    %v9351 = vpop.f32.mrf.mxu0
    %v9352 = vadd.f32 0.0, %v9351
    %v9353 = vpop.f32.mrf.mxu0
    %v9354 = vpop.f32.mrf.mxu0
    %v9355 = vadd.f32 0.0, %v9354
    %v9356 = vpop.f32.mrf.mxu0
    %9357 = vmatprep.mubr.bf16.mxu0 0
    %9358 = vmatmul.mubr.bf16.gmra.mxu0 %v9045
    %v9359 = vpop.f32.mrf.mxu0
    %v9360 = vadd.f32 0.0, %v9359
    %v9361 = vpop.f32.mrf.mxu0
    %v9362 = vpop.f32.mrf.mxu0
    %v9363 = vadd.f32 0.0, %v9362
    %v9364 = vpop.f32.mrf.mxu0
    %9365 = vmatprep.mubr.bf16.mxu0 0
    %9366 = vmatmul.mubr.bf16.gmra.mxu0 %v9046
    %v9367 = vpop.f32.mrf.mxu0
    %v9368 = vadd.f32 0.0, %v9367
    %v9369 = vpop.f32.mrf.mxu0
    %v9370 = vpop.f32.mrf.mxu0
    %v9371 = vadd.f32 0.0, %v9370
    %v9372 = vpop.f32.mrf.mxu0
    %9373 = vmatprep.mubr.bf16.mxu0 0
    %9374 = vmatmul.mubr.bf16.gmra.mxu0 %v9047
    %v9375 = vpop.f32.mrf.mxu0
    %v9376 = vadd.f32 0.0, %v9375
    %v9377 = vpop.f32.mrf.mxu0
    %v9378 = vpop.f32.mrf.mxu0
    %v9379 = vadd.f32 0.0, %v9378
    %v9380 = vpop.f32.mrf.mxu0
    %9381 = vmatprep.mubr.bf16.mxu0 0
    %9382 = vmatmul.mubr.bf16.gmra.mxu0 %v9048
    %v9383 = vpop.f32.mrf.mxu0
    %v9384 = vadd.f32 0.0, %v9383
    %v9385 = vpop.f32.mrf.mxu0
    %v9386 = vpop.f32.mrf.mxu0
    %v9387 = vadd.f32 0.0, %v9386
    %v9388 = vpop.f32.mrf.mxu0
    %9389 = vmatprep.mubr.bf16.mxu0 0
    %9390 = vmatmul.mubr.bf16.gmra.mxu0 %v9049
    %v9391 = vpop.f32.mrf.mxu0
    %v9392 = vadd.f32 0.0, %v9391
    %v9393 = vpop.f32.mrf.mxu0
    %v9394 = vpop.f32.mrf.mxu0
    %v9395 = vadd.f32 0.0, %v9394
    %v9396 = vpop.f32.mrf.mxu0
    %9397 = vmatprep.mubr.bf16.mxu0 0
    %9398 = vmatmul.mubr.bf16.gmra.mxu0 %v9050
    %v9399 = vpop.f32.mrf.mxu0
    %v9400 = vadd.f32 0.0, %v9399
    %v9401 = vpop.f32.mrf.mxu0
    %v9402 = vpop.f32.mrf.mxu0
    %v9403 = vadd.f32 0.0, %v9402
    %v9404 = vpop.f32.mrf.mxu0
    %9405 = vmatprep.mubr.bf16.mxu0 0
    %9406 = vmatmul.mubr.bf16.gmra.mxu0 %v9051
    %v9407 = vpop.f32.mrf.mxu0
    %v9408 = vadd.f32 0.0, %v9407
    %v9409 = vpop.f32.mrf.mxu0
    %v9410 = vpop.f32.mrf.mxu0
    %v9411 = vadd.f32 0.0, %v9410
    %v9412 = vpop.f32.mrf.mxu0
    %9413 = vmatprep.mubr.bf16.mxu0 0
    %9414 = vmatmul.mubr.bf16.gmra.mxu0 %v9052
    %v9415 = vpop.f32.mrf.mxu0
    %v9416 = vadd.f32 0.0, %v9415
    %v9417 = vpop.f32.mrf.mxu0
    %v9418 = vpop.f32.mrf.mxu0
    %v9419 = vadd.f32 0.0, %v9418
    %v9420 = vpop.f32.mrf.mxu0
    %9421 = vdwg.mxu0
    %v9422 = vadd.f32 %v8012, %v9168
    %v9423 = vadd.f32 %v8013, %v9171
    %v9424 = vadd.f32 %v8014, %v9176
    %v9425 = vadd.f32 %v8015, %v9179
    %v9426 = vadd.f32 %v8016, %v9184
    %v9427 = vadd.f32 %v8017, %v9187
    %v9428 = vadd.f32 %v8018, %v9192
    %v9429 = vadd.f32 %v8019, %v9195
    %v9430 = vadd.f32 %v8020, %v9200
    %v9431 = vadd.f32 %v8021, %v9203
    %v9432 = vadd.f32 %v8022, %v9208
    %v9433 = vadd.f32 %v8023, %v9211
    %v9434 = vadd.f32 %v8024, %v9216
    %v9435 = vadd.f32 %v8025, %v9219
    %v9436 = vadd.f32 %v8026, %v9224
    %v9437 = vadd.f32 %v8027, %v9227
    %v9438 = vadd.f32 %v8028, %v9232
    %v9439 = vadd.f32 %v8029, %v9235
    %v9440 = vadd.f32 %v8030, %v9240
    %v9441 = vadd.f32 %v8031, %v9243
    %v9442 = vadd.f32 %v8032, %v9248
    %v9443 = vadd.f32 %v8033, %v9251
    %v9444 = vadd.f32 %v8034, %v9256
    %v9445 = vadd.f32 %v8035, %v9259
    %v9446 = vadd.f32 %v8036, %v9264
    %v9447 = vadd.f32 %v8037, %v9267
    %v9448 = vadd.f32 %v8038, %v9272
    %v9449 = vadd.f32 %v8039, %v9275
    %v9450 = vadd.f32 %v8040, %v9280
    %v9451 = vadd.f32 %v8041, %v9283
    %v9452 = vadd.f32 %v8042, %v9288
    %v9453 = vadd.f32 %v8043, %v9291
    %v9454 = vadd.f32 %v8044, %v9296
    %v9455 = vadd.f32 %v8045, %v9299
    %v9456 = vadd.f32 %v8046, %v9304
    %v9457 = vadd.f32 %v8047, %v9307
    %v9458 = vadd.f32 %v8048, %v9312
    %v9459 = vadd.f32 %v8049, %v9315
    %v9460 = vadd.f32 %v8050, %v9320
    %v9461 = vadd.f32 %v8051, %v9323
    %v9462 = vadd.f32 %v8052, %v9328
    %v9463 = vadd.f32 %v8053, %v9331
    %v9464 = vadd.f32 %v8054, %v9336
    %v9465 = vadd.f32 %v8055, %v9339
    %v9466 = vadd.f32 %v8056, %v9344
    %v9467 = vadd.f32 %v8057, %v9347
    %v9468 = vadd.f32 %v8058, %v9352
    %v9469 = vadd.f32 %v8059, %v9355
    %v9470 = vadd.f32 %v8060, %v9360
    %v9471 = vadd.f32 %v8061, %v9363
    %v9472 = vadd.f32 %v8062, %v9368
    %v9473 = vadd.f32 %v8063, %v9371
    %v9474 = vadd.f32 %v8064, %v9376
    %v9475 = vadd.f32 %v8065, %v9379
    %v9476 = vadd.f32 %v8066, %v9384
    %v9477 = vadd.f32 %v8067, %v9387
    %v9478 = vadd.f32 %v8068, %v9392
    %v9479 = vadd.f32 %v8069, %v9395
    %v9480 = vadd.f32 %v8070, %v9400
    %v9481 = vadd.f32 %v8071, %v9403
    %v9482 = vadd.f32 %v8072, %v9408
    %v9483 = vadd.f32 %v8073, %v9411
    %v9484 = vadd.f32 %v8074, %v9416
    %v9485 = vadd.f32 %v8075, %v9419
    %v9486 = vld [vmem:[%s7401] sm:$0xe]
    %v9487 = vld [vmem:[%s7401 + $0xc] sm:$0xe]
    %v9488 = vld [vmem:[%s7401 + $0x18] sm:$0xe]
    %v9489 = vld [vmem:[%s7401 + $0x24] sm:$0xe]
    %v9490 = vld [vmem:[%s7401 + $0x30] sm:$0xe]
    %v9491 = vld [vmem:[%s7401 + $0x3c] sm:$0xe]
    %v9492 = vld [vmem:[%s7401 + $0x48] sm:$0xe]
    %v9493 = vld [vmem:[%s7401 + $0x54] sm:$0xe]
    %v9494 = vld [vmem:[%s7401 + $0x60] sm:$0xe]
    %v9495 = vld [vmem:[%s7401 + $0x6c] sm:$0xe]
    %v9496 = vld [vmem:[%s7401 + $0x78] sm:$0xe]
    %v9497 = vld [vmem:[%s7401 + $0x84] sm:$0xe]
    %v9498 = vld [vmem:[%s7401 + $0x90] sm:$0xe]
    %v9499 = vld [vmem:[%s7401 + $0x9c] sm:$0xe]
    %v9500 = vld [vmem:[%s7401 + $0xa8] sm:$0xe]
    %v9501 = vld [vmem:[%s7401 + $0xb4] sm:$0xe]
    %v9502 = vld [vmem:[%s7401 + $0xd8] sm:$0xe]
    %v9503 = vld [vmem:[%s7401 + $0xe4] sm:$0xe]
    %v9504 = vld [vmem:[%s7401 + $0xf0] sm:$0xe]
    %v9505 = vld [vmem:[%s7401 + $0xfc] sm:$0xe]
    %v9506 = vld [vmem:[%s7401 + $0x108] sm:$0xe]
    %v9507 = vld [vmem:[%s7401 + $0x114] sm:$0xe]
    %v9508 = vld [vmem:[%s7401 + $0x120] sm:$0xe]
    %v9509 = vld [vmem:[%s7401 + $0x12c] sm:$0xe]
    %v9510 = vld [vmem:[%s7401 + $0x138] sm:$0xe]
    %v9511 = vld [vmem:[%s7401 + $0x144] sm:$0xe]
    %v9512 = vld [vmem:[%s7401 + $0x150] sm:$0xe]
    %v9513 = vld [vmem:[%s7401 + $0x15c] sm:$0xe]
    %v9514 = vld [vmem:[%s7401 + $0x168] sm:$0xe]
    %v9515 = vld [vmem:[%s7401 + $0x174] sm:$0xe]
    %v9516 = vld [vmem:[%s7401 + $0x180] sm:$0xe]
    %v9517 = vld [vmem:[%s7401 + $0x18c] sm:$0xe]
    %v9614 = vrot.slane %v9486, 5
    %v9615 = vrot.slane %v9614, 4
    %v9616 = vrot.slane %v8077, 5
    %v9617 = vsel %vm3648, %v9615, %v9616
    %v9618 = vrot.slane %v9616, 4
    %v9619 = vrot.slane %v8078, 5
    %v9620 = vsel %vm3648, %v9618, %v9619
    %v9621 = vrot.slane %v9487, 5
    %v9622 = vrot.slane %v9621, 4
    %v9623 = vrot.slane %v8080, 5
    %v9624 = vsel %vm3648, %v9622, %v9623
    %v9625 = vrot.slane %v9623, 4
    %v9626 = vrot.slane %v8081, 5
    %v9627 = vsel %vm3648, %v9625, %v9626
    %v9628 = vrot.slane %v9488, 5
    %v9629 = vrot.slane %v9628, 4
    %v9630 = vrot.slane %v8083, 5
    %v9631 = vsel %vm3648, %v9629, %v9630
    %v9632 = vrot.slane %v9630, 4
    %v9633 = vrot.slane %v8084, 5
    %v9634 = vsel %vm3648, %v9632, %v9633
    %v9635 = vrot.slane %v9489, 5
    %v9636 = vrot.slane %v9635, 4
    %v9637 = vrot.slane %v8086, 5
    %v9638 = vsel %vm3648, %v9636, %v9637
    %v9639 = vrot.slane %v9637, 4
    %v9640 = vrot.slane %v8087, 5
    %v9641 = vsel %vm3648, %v9639, %v9640
    %v9642 = vrot.slane %v9490, 5
    %v9643 = vrot.slane %v9642, 4
    %v9644 = vrot.slane %v8089, 5
    %v9645 = vsel %vm3648, %v9643, %v9644
    %v9646 = vrot.slane %v9644, 4
    %v9647 = vrot.slane %v8090, 5
    %v9648 = vsel %vm3648, %v9646, %v9647
    %v9649 = vrot.slane %v9491, 5
    %v9650 = vrot.slane %v9649, 4
    %v9651 = vrot.slane %v8092, 5
    %v9652 = vsel %vm3648, %v9650, %v9651
    %v9653 = vrot.slane %v9651, 4
    %v9654 = vrot.slane %v8093, 5
    %v9655 = vsel %vm3648, %v9653, %v9654
    %v9656 = vrot.slane %v9492, 5
    %v9657 = vrot.slane %v9656, 4
    %v9658 = vrot.slane %v8095, 5
    %v9659 = vsel %vm3648, %v9657, %v9658
    %v9660 = vrot.slane %v9658, 4
    %v9661 = vrot.slane %v8096, 5
    %v9662 = vsel %vm3648, %v9660, %v9661
    %v9663 = vrot.slane %v9493, 5
    %v9664 = vrot.slane %v9663, 4
    %v9665 = vrot.slane %v8098, 5
    %v9666 = vsel %vm3648, %v9664, %v9665
    %v9667 = vrot.slane %v9665, 4
    %v9668 = vrot.slane %v8099, 5
    %v9669 = vsel %vm3648, %v9667, %v9668
    %v9670 = vrot.slane %v9494, 5
    %v9671 = vrot.slane %v9670, 4
    %v9672 = vrot.slane %v8101, 5
    %v9673 = vsel %vm3648, %v9671, %v9672
    %v9674 = vrot.slane %v9672, 4
    %v9675 = vrot.slane %v8102, 5
    %v9676 = vsel %vm3648, %v9674, %v9675
    %v9677 = vrot.slane %v9495, 5
    %v9678 = vrot.slane %v9677, 4
    %v9679 = vrot.slane %v8104, 5
    %v9680 = vsel %vm3648, %v9678, %v9679
    %v9681 = vrot.slane %v9679, 4
    %v9682 = vrot.slane %v8105, 5
    %v9683 = vsel %vm3648, %v9681, %v9682
    %v9684 = vrot.slane %v9496, 5
    %v9685 = vrot.slane %v9684, 4
    %v9686 = vrot.slane %v8107, 5
    %v9687 = vsel %vm3648, %v9685, %v9686
    %v9688 = vrot.slane %v9686, 4
    %v9689 = vrot.slane %v8108, 5
    %v9690 = vsel %vm3648, %v9688, %v9689
    %v9691 = vrot.slane %v9497, 5
    %v9692 = vrot.slane %v9691, 4
    %v9693 = vrot.slane %v8110, 5
    %v9694 = vsel %vm3648, %v9692, %v9693
    %v9695 = vrot.slane %v9693, 4
    %v9696 = vrot.slane %v8111, 5
    %v9697 = vsel %vm3648, %v9695, %v9696
    %v9698 = vrot.slane %v9498, 5
    %v9699 = vrot.slane %v9698, 4
    %v9700 = vrot.slane %v8113, 5
    %v9701 = vsel %vm3648, %v9699, %v9700
    %v9702 = vrot.slane %v9700, 4
    %v9703 = vrot.slane %v8114, 5
    %v9704 = vsel %vm3648, %v9702, %v9703
    %v9705 = vrot.slane %v9499, 5
    %v9706 = vrot.slane %v9705, 4
    %v9707 = vrot.slane %v8116, 5
    %v9708 = vsel %vm3648, %v9706, %v9707
    %v9709 = vrot.slane %v9707, 4
    %v9710 = vrot.slane %v8117, 5
    %v9711 = vsel %vm3648, %v9709, %v9710
    %v9712 = vrot.slane %v9500, 5
    %v9713 = vrot.slane %v9712, 4
    %v9714 = vrot.slane %v8119, 5
    %v9715 = vsel %vm3648, %v9713, %v9714
    %v9716 = vrot.slane %v9714, 4
    %v9717 = vrot.slane %v8120, 5
    %v9718 = vsel %vm3648, %v9716, %v9717
    %v9719 = vrot.slane %v9501, 5
    %v9720 = vrot.slane %v9719, 4
    %v9721 = vrot.slane %v8122, 5
    %v9722 = vsel %vm3648, %v9720, %v9721
    %v9723 = vrot.slane %v9721, 4
    %v9724 = vrot.slane %v8123, 5
    %v9725 = vsel %vm3648, %v9723, %v9724
    %v9726 = vrot.slane %v9502, 5
    %v9727 = vrot.slane %v9726, 4
    %v9728 = vrot.slane %v8125, 5
    %v9729 = vsel %vm3648, %v9727, %v9728
    %v9730 = vrot.slane %v9728, 4
    %v9731 = vrot.slane %v8126, 5
    %v9732 = vsel %vm3648, %v9730, %v9731
    %v9733 = vrot.slane %v9503, 5
    %v9734 = vrot.slane %v9733, 4
    %v9735 = vrot.slane %v8128, 5
    %v9736 = vsel %vm3648, %v9734, %v9735
    %v9737 = vrot.slane %v9735, 4
    %v9738 = vrot.slane %v8129, 5
    %v9739 = vsel %vm3648, %v9737, %v9738
    %v9740 = vrot.slane %v9504, 5
    %v9741 = vrot.slane %v9740, 4
    %v9742 = vrot.slane %v8131, 5
    %v9743 = vsel %vm3648, %v9741, %v9742
    %v9744 = vrot.slane %v9742, 4
    %v9745 = vrot.slane %v8132, 5
    %v9746 = vsel %vm3648, %v9744, %v9745
    %v9747 = vrot.slane %v9505, 5
    %v9748 = vrot.slane %v9747, 4
    %v9749 = vrot.slane %v8134, 5
    %v9750 = vsel %vm3648, %v9748, %v9749
    %v9751 = vrot.slane %v9749, 4
    %v9752 = vrot.slane %v8135, 5
    %v9753 = vsel %vm3648, %v9751, %v9752
    %v9754 = vrot.slane %v9506, 5
    %v9755 = vrot.slane %v9754, 4
    %v9756 = vrot.slane %v8137, 5
    %v9757 = vsel %vm3648, %v9755, %v9756
    %v9758 = vrot.slane %v9756, 4
    %v9759 = vrot.slane %v8138, 5
    %v9760 = vsel %vm3648, %v9758, %v9759
    %v9761 = vrot.slane %v9507, 5
    %v9762 = vrot.slane %v9761, 4
    %v9763 = vrot.slane %v8140, 5
    %v9764 = vsel %vm3648, %v9762, %v9763
    %v9765 = vrot.slane %v9763, 4
    %v9766 = vrot.slane %v8141, 5
    %v9767 = vsel %vm3648, %v9765, %v9766
    %v9768 = vrot.slane %v9508, 5
    %v9769 = vrot.slane %v9768, 4
    %v9770 = vrot.slane %v8143, 5
    %v9771 = vsel %vm3648, %v9769, %v9770
    %v9772 = vrot.slane %v9770, 4
    %v9773 = vrot.slane %v8144, 5
    %v9774 = vsel %vm3648, %v9772, %v9773
    %v9775 = vrot.slane %v9509, 5
    %v9776 = vrot.slane %v9775, 4
    %v9777 = vrot.slane %v8146, 5
    %v9778 = vsel %vm3648, %v9776, %v9777
    %v9779 = vrot.slane %v9777, 4
    %v9780 = vrot.slane %v8147, 5
    %v9781 = vsel %vm3648, %v9779, %v9780
    %v9782 = vrot.slane %v9510, 5
    %v9783 = vrot.slane %v9782, 4
    %v9784 = vrot.slane %v8149, 5
    %v9785 = vsel %vm3648, %v9783, %v9784
    %v9786 = vrot.slane %v9784, 4
    %v9787 = vrot.slane %v8150, 5
    %v9788 = vsel %vm3648, %v9786, %v9787
    %v9789 = vrot.slane %v9511, 5
    %v9790 = vrot.slane %v9789, 4
    %v9791 = vrot.slane %v8152, 5
    %v9792 = vsel %vm3648, %v9790, %v9791
    %v9793 = vrot.slane %v9791, 4
    %v9794 = vrot.slane %v8153, 5
    %v9795 = vsel %vm3648, %v9793, %v9794
    %v9796 = vrot.slane %v9512, 5
    %v9797 = vrot.slane %v9796, 4
    %v9798 = vrot.slane %v8155, 5
    %v9799 = vsel %vm3648, %v9797, %v9798
    %v9800 = vrot.slane %v9798, 4
    %v9801 = vrot.slane %v8156, 5
    %v9802 = vsel %vm3648, %v9800, %v9801
    %v9803 = vrot.slane %v9513, 5
    %v9804 = vrot.slane %v9803, 4
    %v9805 = vrot.slane %v8158, 5
    %v9806 = vsel %vm3648, %v9804, %v9805
    %v9807 = vrot.slane %v9805, 4
    %v9808 = vrot.slane %v8159, 5
    %v9809 = vsel %vm3648, %v9807, %v9808
    %v9810 = vrot.slane %v9514, 5
    %v9811 = vrot.slane %v9810, 4
    %v9812 = vrot.slane %v8161, 5
    %v9813 = vsel %vm3648, %v9811, %v9812
    %v9814 = vrot.slane %v9812, 4
    %v9815 = vrot.slane %v8162, 5
    %v9816 = vsel %vm3648, %v9814, %v9815
    %v9817 = vrot.slane %v9515, 5
    %v9818 = vrot.slane %v9817, 4
    %v9819 = vrot.slane %v8164, 5
    %v9820 = vsel %vm3648, %v9818, %v9819
    %v9821 = vrot.slane %v9819, 4
    %v9822 = vrot.slane %v8165, 5
    %v9823 = vsel %vm3648, %v9821, %v9822
    %v9824 = vrot.slane %v9516, 5
    %v9825 = vrot.slane %v9824, 4
    %v9826 = vrot.slane %v8167, 5
    %v9827 = vsel %vm3648, %v9825, %v9826
    %v9828 = vrot.slane %v9826, 4
    %v9829 = vrot.slane %v8168, 5
    %v9830 = vsel %vm3648, %v9828, %v9829
    %v9831 = vrot.slane %v9517, 5
    %v9832 = vrot.slane %v9831, 4
    %v9833 = vrot.slane %v8170, 5
    %v9834 = vsel %vm3648, %v9832, %v9833
    %v9835 = vrot.slane %v9833, 4
    %v9836 = vrot.slane %v8171, 5
    %v9837 = vsel %vm3648, %v9835, %v9836
    %s9838 = scalar_lea.vmem [#allocation6], 512
    %v9839 = vld [vmem:[%s9838] sm:$0xf]
    %v9840 = vld [vmem:[%s9838 + $0x4] sm:$0xf]
    %v9841 = vld [vmem:[%s9838 + $0x8] sm:$0xf]
    %v9842 = vld [vmem:[%s9838 + $0xc] sm:$0xf]
    %v9843 = vld [vmem:[%s9838 + $0x10] sm:$0xf]
    %v9844 = vld [vmem:[%s9838 + $0x14] sm:$0xf]
    %v9845 = vld [vmem:[%s9838 + $0x18] sm:$0xf]
    %v9846 = vld [vmem:[%s9838 + $0x1c] sm:$0xf]
    %v9847 = vld [vmem:[%s9838 + $0x20] sm:$0xf]
    %v9848 = vld [vmem:[%s9838 + $0x24] sm:$0xf]
    %v9849 = vld [vmem:[%s9838 + $0x28] sm:$0xf]
    %v9850 = vld [vmem:[%s9838 + $0x2c] sm:$0xf]
    %v9851 = vld [vmem:[%s9838 + $0x30] sm:$0xf]
    %v9852 = vld [vmem:[%s9838 + $0x34] sm:$0xf]
    %v9853 = vld [vmem:[%s9838 + $0x38] sm:$0xf]
    %v9854 = vld [vmem:[%s9838 + $0x3c] sm:$0xf]
    %v9855 = vunpack.c.l.b16 %v9617
    %v9856 = vunpack.c.l.b16 %v9620
    %v9857 = vunpack.c.l.b16 %v9624
    %v9858 = vunpack.c.l.b16 %v9627
    %v9859 = vunpack.c.l.b16 %v9631
    %v9860 = vunpack.c.l.b16 %v9634
    %v9861 = vunpack.c.l.b16 %v9638
    %v9862 = vunpack.c.l.b16 %v9641
    %v9863 = vunpack.c.l.b16 %v9645
    %v9864 = vunpack.c.l.b16 %v9648
    %v9865 = vunpack.c.l.b16 %v9652
    %v9866 = vunpack.c.l.b16 %v9655
    %v9867 = vunpack.c.l.b16 %v9659
    %v9868 = vunpack.c.l.b16 %v9662
    %v9869 = vunpack.c.l.b16 %v9666
    %v9870 = vunpack.c.l.b16 %v9669
    %v9871 = vunpack.c.l.b16 %v9673
    %v9872 = vunpack.c.l.b16 %v9676
    %v9873 = vunpack.c.l.b16 %v9680
    %v9874 = vunpack.c.l.b16 %v9683
    %v9875 = vunpack.c.l.b16 %v9687
    %v9876 = vunpack.c.l.b16 %v9690
    %v9877 = vunpack.c.l.b16 %v9694
    %v9878 = vunpack.c.l.b16 %v9697
    %v9879 = vunpack.c.l.b16 %v9701
    %v9880 = vunpack.c.l.b16 %v9704
    %v9881 = vunpack.c.l.b16 %v9708
    %v9882 = vunpack.c.l.b16 %v9711
    %v9883 = vunpack.c.l.b16 %v9715
    %v9884 = vunpack.c.l.b16 %v9718
    %v9885 = vunpack.c.l.b16 %v9722
    %v9886 = vunpack.c.l.b16 %v9725
    %v9887 = vunpack.c.l.b16 %v9729
    %v9888 = vunpack.c.l.b16 %v9732
    %v9889 = vunpack.c.l.b16 %v9736
    %v9890 = vunpack.c.l.b16 %v9739
    %v9891 = vunpack.c.l.b16 %v9743
    %v9892 = vunpack.c.l.b16 %v9746
    %v9893 = vunpack.c.l.b16 %v9750
    %v9894 = vunpack.c.l.b16 %v9753
    %v9895 = vunpack.c.l.b16 %v9757
    %v9896 = vunpack.c.l.b16 %v9760
    %v9897 = vunpack.c.l.b16 %v9764
    %v9898 = vunpack.c.l.b16 %v9767
    %v9899 = vunpack.c.l.b16 %v9771
    %v9900 = vunpack.c.l.b16 %v9774
    %v9901 = vunpack.c.l.b16 %v9778
    %v9902 = vunpack.c.l.b16 %v9781
    %v9903 = vunpack.c.l.b16 %v9785
    %v9904 = vunpack.c.l.b16 %v9788
    %v9905 = vunpack.c.l.b16 %v9792
    %v9906 = vunpack.c.l.b16 %v9795
    %v9907 = vunpack.c.l.b16 %v9799
    %v9908 = vunpack.c.l.b16 %v9802
    %v9909 = vunpack.c.l.b16 %v9806
    %v9910 = vunpack.c.l.b16 %v9809
    %v9911 = vunpack.c.l.b16 %v9813
    %v9912 = vunpack.c.l.b16 %v9816
    %v9913 = vunpack.c.l.b16 %v9820
    %v9914 = vunpack.c.l.b16 %v9823
    %v9915 = vunpack.c.l.b16 %v9827
    %v9916 = vunpack.c.l.b16 %v9830
    %v9917 = vunpack.c.l.b16 %v9834
    %v9918 = vunpack.c.l.b16 %v9837
    %v9919 = vpack.c.b16 %v9856, %v9855
    %v9920 = vpack.c.b16 %v9858, %v9857
    %v9921 = vpack.c.b16 %v9860, %v9859
    %v9922 = vpack.c.b16 %v9862, %v9861
    %v9923 = vpack.c.b16 %v9864, %v9863
    %v9924 = vpack.c.b16 %v9866, %v9865
    %v9925 = vpack.c.b16 %v9868, %v9867
    %v9926 = vpack.c.b16 %v9870, %v9869
    %v9927 = vpack.c.b16 %v9872, %v9871
    %v9928 = vpack.c.b16 %v9874, %v9873
    %v9929 = vpack.c.b16 %v9876, %v9875
    %v9930 = vpack.c.b16 %v9878, %v9877
    %v9931 = vpack.c.b16 %v9880, %v9879
    %v9932 = vpack.c.b16 %v9882, %v9881
    %v9933 = vpack.c.b16 %v9884, %v9883
    %v9934 = vpack.c.b16 %v9886, %v9885
    %v9935 = vpack.c.b16 %v9888, %v9887
    %v9936 = vpack.c.b16 %v9890, %v9889
    %v9937 = vpack.c.b16 %v9892, %v9891
    %v9938 = vpack.c.b16 %v9894, %v9893
    %v9939 = vpack.c.b16 %v9896, %v9895
    %v9940 = vpack.c.b16 %v9898, %v9897
    %v9941 = vpack.c.b16 %v9900, %v9899
    %v9942 = vpack.c.b16 %v9902, %v9901
    %v9943 = vpack.c.b16 %v9904, %v9903
    %v9944 = vpack.c.b16 %v9906, %v9905
    %v9945 = vpack.c.b16 %v9908, %v9907
    %v9946 = vpack.c.b16 %v9910, %v9909
    %v9947 = vpack.c.b16 %v9912, %v9911
    %v9948 = vpack.c.b16 %v9914, %v9913
    %v9949 = vpack.c.b16 %v9916, %v9915
    %v9950 = vpack.c.b16 %v9918, %v9917
    %v9999 = vunpack.c.l.b16 %v9839
    %v10000 = vunpack.c.l.b16 %v9840
    %v10001 = vunpack.c.l.b16 %v9841
    %v10002 = vunpack.c.l.b16 %v9842
    %v10003 = vunpack.c.l.b16 %v9843
    %v10004 = vunpack.c.l.b16 %v9844
    %v10005 = vunpack.c.l.b16 %v9845
    %v10006 = vunpack.c.l.b16 %v9846
    %v10007 = vunpack.c.l.b16 %v9847
    %v10008 = vunpack.c.l.b16 %v9848
    %v10009 = vunpack.c.l.b16 %v9849
    %v10010 = vunpack.c.l.b16 %v9850
    %v10011 = vunpack.c.l.b16 %v9851
    %v10012 = vunpack.c.l.b16 %v9852
    %v10013 = vunpack.c.l.b16 %v9853
    %v10014 = vunpack.c.l.b16 %v9854
    %v10015 = vpack.c.b16 %v10000, %v9999
    %v10016 = vpack.c.b16 %v10002, %v10001
    %v10017 = vpack.c.b16 %v10004, %v10003
    %v10018 = vpack.c.b16 %v10006, %v10005
    %v10019 = vpack.c.b16 %v10008, %v10007
    %v10020 = vpack.c.b16 %v10010, %v10009
    %v10021 = vpack.c.b16 %v10012, %v10011
    %v10022 = vpack.c.b16 %v10014, %v10013
    %10031 = vmatprep.subr.bf16.mxu0 0
    %10032 = vmatpush1.bf16.msra.mxu0 %v10022
    %10033 = vmatprep.subr.bf16.mxu0 0
    %10034 = vmatpush1.bf16.msra.mxu0 %v10021
    %10035 = vmatprep.subr.bf16.mxu0 0
    %10036 = vmatpush1.bf16.msra.mxu0 %v10020
    %10037 = vmatprep.subr.bf16.mxu0 0
    %10038 = vmatpush1.bf16.msra.mxu0 %v10019
    %10039 = vmatprep.subr.bf16.mxu0 0
    %10040 = vmatpush1.bf16.msra.mxu0 %v10018
    %10041 = vmatprep.subr.bf16.mxu0 0
    %10042 = vmatpush1.bf16.msra.mxu0 %v10017
    %10043 = vmatprep.subr.bf16.mxu0 0
    %10044 = vmatpush1.bf16.msra.mxu0 %v10016
    %10045 = vmatprep.subr.bf16.mxu0 0
    %10046 = vmatpush1.bf16.msra.mxu0 %v10015
    %10047 = vmatprep.subr.bf16.mxu0 0
    %10048 = vmatpush2.bf16.msra.mxu0 0
    %10049 = vmatprep.subr.bf16.mxu0 0
    %10050 = vmatpush2.bf16.msra.mxu0 0
    %10051 = vmatprep.subr.bf16.mxu0 0
    %10052 = vmatpush2.bf16.msra.mxu0 0
    %10053 = vmatprep.subr.bf16.mxu0 0
    %10054 = vmatpush2.bf16.msra.mxu0 0
    %10055 = vmatprep.subr.bf16.mxu0 0
    %10056 = vmatpush2.bf16.msra.mxu0 0
    %10057 = vmatprep.subr.bf16.mxu0 0
    %10058 = vmatpush2.bf16.msra.mxu0 0
    %10059 = vmatprep.subr.bf16.mxu0 0
    %10060 = vmatpush2.bf16.msra.mxu0 0
    %10061 = vmatprep.subr.bf16.mxu0 0
    %10062 = vmatpush2.bf16.msra.mxu0 0
    %10063 = vmatprep.mubr.bf16.mxu0 0
    %10064 = vmatmul.mubr.bf16.gmra.mxu0 %v9919
    %v10065 = vpop.f32.mrf.mxu0
    %v10066 = vadd.f32 0.0, %v10065
    %v10067 = vpop.f32.mrf.mxu0
    %v10068 = vpop.f32.mrf.mxu0
    %v10069 = vadd.f32 0.0, %v10068
    %v10070 = vpop.f32.mrf.mxu0
    %10071 = vmatprep.mubr.bf16.mxu0 0
    %10072 = vmatmul.mubr.bf16.gmra.mxu0 %v9920
    %v10073 = vpop.f32.mrf.mxu0
    %v10074 = vadd.f32 0.0, %v10073
    %v10075 = vpop.f32.mrf.mxu0
    %v10076 = vpop.f32.mrf.mxu0
    %v10077 = vadd.f32 0.0, %v10076
    %v10078 = vpop.f32.mrf.mxu0
    %10079 = vmatprep.mubr.bf16.mxu0 0
    %10080 = vmatmul.mubr.bf16.gmra.mxu0 %v9921
    %v10081 = vpop.f32.mrf.mxu0
    %v10082 = vadd.f32 0.0, %v10081
    %v10083 = vpop.f32.mrf.mxu0
    %v10084 = vpop.f32.mrf.mxu0
    %v10085 = vadd.f32 0.0, %v10084
    %v10086 = vpop.f32.mrf.mxu0
    %10087 = vmatprep.mubr.bf16.mxu0 0
    %10088 = vmatmul.mubr.bf16.gmra.mxu0 %v9922
    %v10089 = vpop.f32.mrf.mxu0
    %v10090 = vadd.f32 0.0, %v10089
    %v10091 = vpop.f32.mrf.mxu0
    %v10092 = vpop.f32.mrf.mxu0
    %v10093 = vadd.f32 0.0, %v10092
    %v10094 = vpop.f32.mrf.mxu0
    %10095 = vmatprep.mubr.bf16.mxu0 0
    %10096 = vmatmul.mubr.bf16.gmra.mxu0 %v9923
    %v10097 = vpop.f32.mrf.mxu0
    %v10098 = vadd.f32 0.0, %v10097
    %v10099 = vpop.f32.mrf.mxu0
    %v10100 = vpop.f32.mrf.mxu0
    %v10101 = vadd.f32 0.0, %v10100
    %v10102 = vpop.f32.mrf.mxu0
    %10103 = vmatprep.mubr.bf16.mxu0 0
    %10104 = vmatmul.mubr.bf16.gmra.mxu0 %v9924
    %v10105 = vpop.f32.mrf.mxu0
    %v10106 = vadd.f32 0.0, %v10105
    %v10107 = vpop.f32.mrf.mxu0
    %v10108 = vpop.f32.mrf.mxu0
    %v10109 = vadd.f32 0.0, %v10108
    %v10110 = vpop.f32.mrf.mxu0
    %10111 = vmatprep.mubr.bf16.mxu0 0
    %10112 = vmatmul.mubr.bf16.gmra.mxu0 %v9925
    %v10113 = vpop.f32.mrf.mxu0
    %v10114 = vadd.f32 0.0, %v10113
    %v10115 = vpop.f32.mrf.mxu0
    %v10116 = vpop.f32.mrf.mxu0
    %v10117 = vadd.f32 0.0, %v10116
    %v10118 = vpop.f32.mrf.mxu0
    %10119 = vmatprep.mubr.bf16.mxu0 0
    %10120 = vmatmul.mubr.bf16.gmra.mxu0 %v9926
    %v10121 = vpop.f32.mrf.mxu0
    %v10122 = vadd.f32 0.0, %v10121
    %v10123 = vpop.f32.mrf.mxu0
    %v10124 = vpop.f32.mrf.mxu0
    %v10125 = vadd.f32 0.0, %v10124
    %v10126 = vpop.f32.mrf.mxu0
    %10127 = vmatprep.mubr.bf16.mxu0 0
    %10128 = vmatmul.mubr.bf16.gmra.mxu0 %v9927
    %v10129 = vpop.f32.mrf.mxu0
    %v10130 = vadd.f32 0.0, %v10129
    %v10131 = vpop.f32.mrf.mxu0
    %v10132 = vpop.f32.mrf.mxu0
    %v10133 = vadd.f32 0.0, %v10132
    %v10134 = vpop.f32.mrf.mxu0
    %10135 = vmatprep.mubr.bf16.mxu0 0
    %10136 = vmatmul.mubr.bf16.gmra.mxu0 %v9928
    %v10137 = vpop.f32.mrf.mxu0
    %v10138 = vadd.f32 0.0, %v10137
    %v10139 = vpop.f32.mrf.mxu0
    %v10140 = vpop.f32.mrf.mxu0
    %v10141 = vadd.f32 0.0, %v10140
    %v10142 = vpop.f32.mrf.mxu0
    %10143 = vmatprep.mubr.bf16.mxu0 0
    %10144 = vmatmul.mubr.bf16.gmra.mxu0 %v9929
    %v10145 = vpop.f32.mrf.mxu0
    %v10146 = vadd.f32 0.0, %v10145
    %v10147 = vpop.f32.mrf.mxu0
    %v10148 = vpop.f32.mrf.mxu0
    %v10149 = vadd.f32 0.0, %v10148
    %v10150 = vpop.f32.mrf.mxu0
    %10151 = vmatprep.mubr.bf16.mxu0 0
    %10152 = vmatmul.mubr.bf16.gmra.mxu0 %v9930
    %v10153 = vpop.f32.mrf.mxu0
    %v10154 = vadd.f32 0.0, %v10153
    %v10155 = vpop.f32.mrf.mxu0
    %v10156 = vpop.f32.mrf.mxu0
    %v10157 = vadd.f32 0.0, %v10156
    %v10158 = vpop.f32.mrf.mxu0
    %10159 = vmatprep.mubr.bf16.mxu0 0
    %10160 = vmatmul.mubr.bf16.gmra.mxu0 %v9931
    %v10161 = vpop.f32.mrf.mxu0
    %v10162 = vadd.f32 0.0, %v10161
    %v10163 = vpop.f32.mrf.mxu0
    %v10164 = vpop.f32.mrf.mxu0
    %v10165 = vadd.f32 0.0, %v10164
    %v10166 = vpop.f32.mrf.mxu0
    %10167 = vmatprep.mubr.bf16.mxu0 0
    %10168 = vmatmul.mubr.bf16.gmra.mxu0 %v9932
    %v10169 = vpop.f32.mrf.mxu0
    %v10170 = vadd.f32 0.0, %v10169
    %v10171 = vpop.f32.mrf.mxu0
    %v10172 = vpop.f32.mrf.mxu0
    %v10173 = vadd.f32 0.0, %v10172
    %v10174 = vpop.f32.mrf.mxu0
    %10175 = vmatprep.mubr.bf16.mxu0 0
    %10176 = vmatmul.mubr.bf16.gmra.mxu0 %v9933
    %v10177 = vpop.f32.mrf.mxu0
    %v10178 = vadd.f32 0.0, %v10177
    %v10179 = vpop.f32.mrf.mxu0
    %v10180 = vpop.f32.mrf.mxu0
    %v10181 = vadd.f32 0.0, %v10180
    %v10182 = vpop.f32.mrf.mxu0
    %10183 = vmatprep.mubr.bf16.mxu0 0
    %10184 = vmatmul.mubr.bf16.gmra.mxu0 %v9934
    %v10185 = vpop.f32.mrf.mxu0
    %v10186 = vadd.f32 0.0, %v10185
    %v10187 = vpop.f32.mrf.mxu0
    %v10188 = vpop.f32.mrf.mxu0
    %v10189 = vadd.f32 0.0, %v10188
    %v10190 = vpop.f32.mrf.mxu0
    %10191 = vmatprep.mubr.bf16.mxu0 0
    %10192 = vmatmul.mubr.bf16.gmra.mxu0 %v9935
    %v10193 = vpop.f32.mrf.mxu0
    %v10194 = vadd.f32 0.0, %v10193
    %v10195 = vpop.f32.mrf.mxu0
    %v10196 = vpop.f32.mrf.mxu0
    %v10197 = vadd.f32 0.0, %v10196
    %v10198 = vpop.f32.mrf.mxu0
    %10199 = vmatprep.mubr.bf16.mxu0 0
    %10200 = vmatmul.mubr.bf16.gmra.mxu0 %v9936
    %v10201 = vpop.f32.mrf.mxu0
    %v10202 = vadd.f32 0.0, %v10201
    %v10203 = vpop.f32.mrf.mxu0
    %v10204 = vpop.f32.mrf.mxu0
    %v10205 = vadd.f32 0.0, %v10204
    %v10206 = vpop.f32.mrf.mxu0
    %10207 = vmatprep.mubr.bf16.mxu0 0
    %10208 = vmatmul.mubr.bf16.gmra.mxu0 %v9937
    %v10209 = vpop.f32.mrf.mxu0
    %v10210 = vadd.f32 0.0, %v10209
    %v10211 = vpop.f32.mrf.mxu0
    %v10212 = vpop.f32.mrf.mxu0
    %v10213 = vadd.f32 0.0, %v10212
    %v10214 = vpop.f32.mrf.mxu0
    %10215 = vmatprep.mubr.bf16.mxu0 0
    %10216 = vmatmul.mubr.bf16.gmra.mxu0 %v9938
    %v10217 = vpop.f32.mrf.mxu0
    %v10218 = vadd.f32 0.0, %v10217
    %v10219 = vpop.f32.mrf.mxu0
    %v10220 = vpop.f32.mrf.mxu0
    %v10221 = vadd.f32 0.0, %v10220
    %v10222 = vpop.f32.mrf.mxu0
    %10223 = vmatprep.mubr.bf16.mxu0 0
    %10224 = vmatmul.mubr.bf16.gmra.mxu0 %v9939
    %v10225 = vpop.f32.mrf.mxu0
    %v10226 = vadd.f32 0.0, %v10225
    %v10227 = vpop.f32.mrf.mxu0
    %v10228 = vpop.f32.mrf.mxu0
    %v10229 = vadd.f32 0.0, %v10228
    %v10230 = vpop.f32.mrf.mxu0
    %10231 = vmatprep.mubr.bf16.mxu0 0
    %10232 = vmatmul.mubr.bf16.gmra.mxu0 %v9940
    %v10233 = vpop.f32.mrf.mxu0
    %v10234 = vadd.f32 0.0, %v10233
    %v10235 = vpop.f32.mrf.mxu0
    %v10236 = vpop.f32.mrf.mxu0
    %v10237 = vadd.f32 0.0, %v10236
    %v10238 = vpop.f32.mrf.mxu0
    %10239 = vmatprep.mubr.bf16.mxu0 0
    %10240 = vmatmul.mubr.bf16.gmra.mxu0 %v9941
    %v10241 = vpop.f32.mrf.mxu0
    %v10242 = vadd.f32 0.0, %v10241
    %v10243 = vpop.f32.mrf.mxu0
    %v10244 = vpop.f32.mrf.mxu0
    %v10245 = vadd.f32 0.0, %v10244
    %v10246 = vpop.f32.mrf.mxu0
    %10247 = vmatprep.mubr.bf16.mxu0 0
    %10248 = vmatmul.mubr.bf16.gmra.mxu0 %v9942
    %v10249 = vpop.f32.mrf.mxu0
    %v10250 = vadd.f32 0.0, %v10249
    %v10251 = vpop.f32.mrf.mxu0
    %v10252 = vpop.f32.mrf.mxu0
    %v10253 = vadd.f32 0.0, %v10252
    %v10254 = vpop.f32.mrf.mxu0
    %10255 = vmatprep.mubr.bf16.mxu0 0
    %10256 = vmatmul.mubr.bf16.gmra.mxu0 %v9943
    %v10257 = vpop.f32.mrf.mxu0
    %v10258 = vadd.f32 0.0, %v10257
    %v10259 = vpop.f32.mrf.mxu0
    %v10260 = vpop.f32.mrf.mxu0
    %v10261 = vadd.f32 0.0, %v10260
    %v10262 = vpop.f32.mrf.mxu0
    %10263 = vmatprep.mubr.bf16.mxu0 0
    %10264 = vmatmul.mubr.bf16.gmra.mxu0 %v9944
    %v10265 = vpop.f32.mrf.mxu0
    %v10266 = vadd.f32 0.0, %v10265
    %v10267 = vpop.f32.mrf.mxu0
    %v10268 = vpop.f32.mrf.mxu0
    %v10269 = vadd.f32 0.0, %v10268
    %v10270 = vpop.f32.mrf.mxu0
    %10271 = vmatprep.mubr.bf16.mxu0 0
    %10272 = vmatmul.mubr.bf16.gmra.mxu0 %v9945
    %v10273 = vpop.f32.mrf.mxu0
    %v10274 = vadd.f32 0.0, %v10273
    %v10275 = vpop.f32.mrf.mxu0
    %v10276 = vpop.f32.mrf.mxu0
    %v10277 = vadd.f32 0.0, %v10276
    %v10278 = vpop.f32.mrf.mxu0
    %10279 = vmatprep.mubr.bf16.mxu0 0
    %10280 = vmatmul.mubr.bf16.gmra.mxu0 %v9946
    %v10281 = vpop.f32.mrf.mxu0
    %v10282 = vadd.f32 0.0, %v10281
    %v10283 = vpop.f32.mrf.mxu0
    %v10284 = vpop.f32.mrf.mxu0
    %v10285 = vadd.f32 0.0, %v10284
    %v10286 = vpop.f32.mrf.mxu0
    %10287 = vmatprep.mubr.bf16.mxu0 0
    %10288 = vmatmul.mubr.bf16.gmra.mxu0 %v9947
    %v10289 = vpop.f32.mrf.mxu0
    %v10290 = vadd.f32 0.0, %v10289
    %v10291 = vpop.f32.mrf.mxu0
    %v10292 = vpop.f32.mrf.mxu0
    %v10293 = vadd.f32 0.0, %v10292
    %v10294 = vpop.f32.mrf.mxu0
    %10295 = vmatprep.mubr.bf16.mxu0 0
    %10296 = vmatmul.mubr.bf16.gmra.mxu0 %v9948
    %v10297 = vpop.f32.mrf.mxu0
    %v10298 = vadd.f32 0.0, %v10297
    %v10299 = vpop.f32.mrf.mxu0
    %v10300 = vpop.f32.mrf.mxu0
    %v10301 = vadd.f32 0.0, %v10300
    %v10302 = vpop.f32.mrf.mxu0
    %10303 = vmatprep.mubr.bf16.mxu0 0
    %10304 = vmatmul.mubr.bf16.gmra.mxu0 %v9949
    %v10305 = vpop.f32.mrf.mxu0
    %v10306 = vadd.f32 0.0, %v10305
    %v10307 = vpop.f32.mrf.mxu0
    %v10308 = vpop.f32.mrf.mxu0
    %v10309 = vadd.f32 0.0, %v10308
    %v10310 = vpop.f32.mrf.mxu0
    %10311 = vmatprep.mubr.bf16.mxu0 0
    %10312 = vmatmul.mubr.bf16.gmra.mxu0 %v9950
    %v10313 = vpop.f32.mrf.mxu0
    %v10314 = vadd.f32 0.0, %v10313
    %v10315 = vpop.f32.mrf.mxu0
    %v10316 = vpop.f32.mrf.mxu0
    %v10317 = vadd.f32 0.0, %v10316
    %v10318 = vpop.f32.mrf.mxu0
    %10319 = vdwg.mxu0
    %v10320 = vadd.f32 %v9422, %v10066
    %v10321 = vadd.f32 %v9423, %v10069
    %v10322 = vadd.f32 %v9424, %v10074
    %v10323 = vadd.f32 %v9425, %v10077
    %v10324 = vadd.f32 %v9426, %v10082
    %v10325 = vadd.f32 %v9427, %v10085
    %v10326 = vadd.f32 %v9428, %v10090
    %v10327 = vadd.f32 %v9429, %v10093
    %v10328 = vadd.f32 %v9430, %v10098
    %v10329 = vadd.f32 %v9431, %v10101
    %v10330 = vadd.f32 %v9432, %v10106
    %v10331 = vadd.f32 %v9433, %v10109
    %v10332 = vadd.f32 %v9434, %v10114
    %v10333 = vadd.f32 %v9435, %v10117
    %v10334 = vadd.f32 %v9436, %v10122
    %v10335 = vadd.f32 %v9437, %v10125
    %v10336 = vadd.f32 %v9438, %v10130
    %v10337 = vadd.f32 %v9439, %v10133
    %v10338 = vadd.f32 %v9440, %v10138
    %v10339 = vadd.f32 %v9441, %v10141
    %v10340 = vadd.f32 %v9442, %v10146
    %v10341 = vadd.f32 %v9443, %v10149
    %v10342 = vadd.f32 %v9444, %v10154
    %v10343 = vadd.f32 %v9445, %v10157
    %v10344 = vadd.f32 %v9446, %v10162
    %v10345 = vadd.f32 %v9447, %v10165
    %v10346 = vadd.f32 %v9448, %v10170
    %v10347 = vadd.f32 %v9449, %v10173
    %v10348 = vadd.f32 %v9450, %v10178
    %v10349 = vadd.f32 %v9451, %v10181
    %v10350 = vadd.f32 %v9452, %v10186
    %v10351 = vadd.f32 %v9453, %v10189
    %v10352 = vadd.f32 %v9454, %v10194
    %v10353 = vadd.f32 %v9455, %v10197
    %v10354 = vadd.f32 %v9456, %v10202
    %v10355 = vadd.f32 %v9457, %v10205
    %v10356 = vadd.f32 %v9458, %v10210
    %v10357 = vadd.f32 %v9459, %v10213
    %v10358 = vadd.f32 %v9460, %v10218
    %v10359 = vadd.f32 %v9461, %v10221
    %v10360 = vadd.f32 %v9462, %v10226
    %v10361 = vadd.f32 %v9463, %v10229
    %v10362 = vadd.f32 %v9464, %v10234
    %v10363 = vadd.f32 %v9465, %v10237
    %v10364 = vadd.f32 %v9466, %v10242
    %v10365 = vadd.f32 %v9467, %v10245
    %v10366 = vadd.f32 %v9468, %v10250
    %v10367 = vadd.f32 %v9469, %v10253
    %v10368 = vadd.f32 %v9470, %v10258
    %v10369 = vadd.f32 %v9471, %v10261
    %v10370 = vadd.f32 %v9472, %v10266
    %v10371 = vadd.f32 %v9473, %v10269
    %v10372 = vadd.f32 %v9474, %v10274
    %v10373 = vadd.f32 %v9475, %v10277
    %v10374 = vadd.f32 %v9476, %v10282
    %v10375 = vadd.f32 %v9477, %v10285
    %v10376 = vadd.f32 %v9478, %v10290
    %v10377 = vadd.f32 %v9479, %v10293
    %v10378 = vadd.f32 %v9480, %v10298
    %v10379 = vadd.f32 %v9481, %v10301
    %v10380 = vadd.f32 %v9482, %v10306
    %v10381 = vadd.f32 %v9483, %v10309
    %v10382 = vadd.f32 %v9484, %v10314
    %v10383 = vadd.f32 %v9485, %v10317
    %v10384 = vpack.c.bf16 %v10321, %v10320
    %v10385 = vpack.c.bf16 %v10323, %v10322
    %v10386 = vpack.c.bf16 %v10325, %v10324
    %v10387 = vpack.c.bf16 %v10327, %v10326
    %v10388 = vpack.c.bf16 %v10329, %v10328
    %v10389 = vpack.c.bf16 %v10331, %v10330
    %v10390 = vpack.c.bf16 %v10333, %v10332
    %v10391 = vpack.c.bf16 %v10335, %v10334
    %v10392 = vpack.c.bf16 %v10337, %v10336
    %v10393 = vpack.c.bf16 %v10339, %v10338
    %v10394 = vpack.c.bf16 %v10341, %v10340
    %v10395 = vpack.c.bf16 %v10343, %v10342
    %v10396 = vpack.c.bf16 %v10345, %v10344
    %v10397 = vpack.c.bf16 %v10347, %v10346
    %v10398 = vpack.c.bf16 %v10349, %v10348
    %v10399 = vpack.c.bf16 %v10351, %v10350
    %v10400 = vpack.c.bf16 %v10353, %v10352
    %v10401 = vpack.c.bf16 %v10355, %v10354
    %v10402 = vpack.c.bf16 %v10357, %v10356
    %v10403 = vpack.c.bf16 %v10359, %v10358
    %v10404 = vpack.c.bf16 %v10361, %v10360
    %v10405 = vpack.c.bf16 %v10363, %v10362
    %v10406 = vpack.c.bf16 %v10365, %v10364
    %v10407 = vpack.c.bf16 %v10367, %v10366
    %v10408 = vpack.c.bf16 %v10369, %v10368
    %v10409 = vpack.c.bf16 %v10371, %v10370
    %v10410 = vpack.c.bf16 %v10373, %v10372
    %v10411 = vpack.c.bf16 %v10375, %v10374
    %v10412 = vpack.c.bf16 %v10377, %v10376
    %v10413 = vpack.c.bf16 %v10379, %v10378
    %v10414 = vpack.c.bf16 %v10381, %v10380
    %v10415 = vpack.c.bf16 %v10383, %v10382
    %v10448 = vunpack.c.l.b16 %v10384
    %v10449 = vunpack.c.h.b16 %v10384
    %v10450 = vunpack.c.l.b16 %v10385
    %v10451 = vunpack.c.h.b16 %v10385
    %v10452 = vunpack.c.l.b16 %v10386
    %v10453 = vunpack.c.h.b16 %v10386
    %v10454 = vunpack.c.l.b16 %v10387
    %v10455 = vunpack.c.h.b16 %v10387
    %v10456 = vunpack.c.l.b16 %v10388
    %v10457 = vunpack.c.h.b16 %v10388
    %v10458 = vunpack.c.l.b16 %v10389
    %v10459 = vunpack.c.h.b16 %v10389
    %v10460 = vunpack.c.l.b16 %v10390
    %v10461 = vunpack.c.h.b16 %v10390
    %v10462 = vunpack.c.l.b16 %v10391
    %v10463 = vunpack.c.h.b16 %v10391
    %v10464 = vunpack.c.l.b16 %v10392
    %v10465 = vunpack.c.h.b16 %v10392
    %v10466 = vunpack.c.l.b16 %v10393
    %v10467 = vunpack.c.h.b16 %v10393
    %v10468 = vunpack.c.l.b16 %v10394
    %v10469 = vunpack.c.h.b16 %v10394
    %v10470 = vunpack.c.l.b16 %v10395
    %v10471 = vunpack.c.h.b16 %v10395
    %v10472 = vunpack.c.l.b16 %v10396
    %v10473 = vunpack.c.h.b16 %v10396
    %v10474 = vunpack.c.l.b16 %v10397
    %v10475 = vunpack.c.h.b16 %v10397
    %v10476 = vunpack.c.l.b16 %v10398
    %v10477 = vunpack.c.h.b16 %v10398
    %v10478 = vunpack.c.l.b16 %v10399
    %v10479 = vunpack.c.h.b16 %v10399
    %v10480 = vunpack.c.l.b16 %v10400
    %v10481 = vunpack.c.h.b16 %v10400
    %v10482 = vunpack.c.l.b16 %v10401
    %v10483 = vunpack.c.h.b16 %v10401
    %v10484 = vunpack.c.l.b16 %v10402
    %v10485 = vunpack.c.h.b16 %v10402
    %v10486 = vunpack.c.l.b16 %v10403
    %v10487 = vunpack.c.h.b16 %v10403
    %v10488 = vunpack.c.l.b16 %v10404
    %v10489 = vunpack.c.h.b16 %v10404
    %v10490 = vunpack.c.l.b16 %v10405
    %v10491 = vunpack.c.h.b16 %v10405
    %v10492 = vunpack.c.l.b16 %v10406
    %v10493 = vunpack.c.h.b16 %v10406
    %v10494 = vunpack.c.l.b16 %v10407
    %v10495 = vunpack.c.h.b16 %v10407
    %v10496 = vunpack.c.l.b16 %v10408
    %v10497 = vunpack.c.h.b16 %v10408
    %v10498 = vunpack.c.l.b16 %v10409
    %v10499 = vunpack.c.h.b16 %v10409
    %v10500 = vunpack.c.l.b16 %v10410
    %v10501 = vunpack.c.h.b16 %v10410
    %v10502 = vunpack.c.l.b16 %v10411
    %v10503 = vunpack.c.h.b16 %v10411
    %v10504 = vunpack.c.l.b16 %v10412
    %v10505 = vunpack.c.h.b16 %v10412
    %v10506 = vunpack.c.l.b16 %v10413
    %v10507 = vunpack.c.h.b16 %v10413
    %v10508 = vunpack.c.l.b16 %v10414
    %v10509 = vunpack.c.h.b16 %v10414
    %v10510 = vunpack.c.l.b16 %v10415
    %v10511 = vunpack.c.h.b16 %v10415
    %v10512 = vpack.c.b16 %v10448, %v10448
    %v10513 = vpack.c.b16 %v10449, %v10449
    %v10514 = vpack.c.b16 %v10450, %v10450
    %v10515 = vpack.c.b16 %v10451, %v10451
    %v10516 = vpack.c.b16 %v10452, %v10452
    %v10517 = vpack.c.b16 %v10453, %v10453
    %v10518 = vpack.c.b16 %v10454, %v10454
    %v10519 = vpack.c.b16 %v10455, %v10455
    %v10520 = vpack.c.b16 %v10456, %v10456
    %v10521 = vpack.c.b16 %v10457, %v10457
    %v10522 = vpack.c.b16 %v10458, %v10458
    %v10523 = vpack.c.b16 %v10459, %v10459
    %v10524 = vpack.c.b16 %v10460, %v10460
    %v10525 = vpack.c.b16 %v10461, %v10461
    %v10526 = vpack.c.b16 %v10462, %v10462
    %v10527 = vpack.c.b16 %v10463, %v10463
    %v10528 = vpack.c.b16 %v10464, %v10464
    %v10529 = vpack.c.b16 %v10465, %v10465
    %v10530 = vpack.c.b16 %v10466, %v10466
    %v10531 = vpack.c.b16 %v10467, %v10467
    %v10532 = vpack.c.b16 %v10468, %v10468
    %v10533 = vpack.c.b16 %v10469, %v10469
    %v10534 = vpack.c.b16 %v10470, %v10470
    %v10535 = vpack.c.b16 %v10471, %v10471
    %v10536 = vpack.c.b16 %v10472, %v10472
    %v10537 = vpack.c.b16 %v10473, %v10473
    %v10538 = vpack.c.b16 %v10474, %v10474
    %v10539 = vpack.c.b16 %v10475, %v10475
    %v10540 = vpack.c.b16 %v10476, %v10476
    %v10541 = vpack.c.b16 %v10477, %v10477
    %v10542 = vpack.c.b16 %v10478, %v10478
    %v10543 = vpack.c.b16 %v10479, %v10479
    %v10544 = vpack.c.b16 %v10480, %v10480
    %v10545 = vpack.c.b16 %v10481, %v10481
    %v10546 = vpack.c.b16 %v10482, %v10482
    %v10547 = vpack.c.b16 %v10483, %v10483
    %v10548 = vpack.c.b16 %v10484, %v10484
    %v10549 = vpack.c.b16 %v10485, %v10485
    %v10550 = vpack.c.b16 %v10486, %v10486
    %v10551 = vpack.c.b16 %v10487, %v10487
    %v10552 = vpack.c.b16 %v10488, %v10488
    %v10553 = vpack.c.b16 %v10489, %v10489
    %v10554 = vpack.c.b16 %v10490, %v10490
    %v10555 = vpack.c.b16 %v10491, %v10491
    %v10556 = vpack.c.b16 %v10492, %v10492
    %v10557 = vpack.c.b16 %v10493, %v10493
    %v10558 = vpack.c.b16 %v10494, %v10494
    %v10559 = vpack.c.b16 %v10495, %v10495
    %v10560 = vpack.c.b16 %v10496, %v10496
    %v10561 = vpack.c.b16 %v10497, %v10497
    %v10562 = vpack.c.b16 %v10498, %v10498
    %v10563 = vpack.c.b16 %v10499, %v10499
    %v10564 = vpack.c.b16 %v10500, %v10500
    %v10565 = vpack.c.b16 %v10501, %v10501
    %v10566 = vpack.c.b16 %v10502, %v10502
    %v10567 = vpack.c.b16 %v10503, %v10503
    %v10568 = vpack.c.b16 %v10504, %v10504
    %v10569 = vpack.c.b16 %v10505, %v10505
    %v10570 = vpack.c.b16 %v10506, %v10506
    %v10571 = vpack.c.b16 %v10507, %v10507
    %v10572 = vpack.c.b16 %v10508, %v10508
    %v10573 = vpack.c.b16 %v10509, %v10509
    %v10574 = vpack.c.b16 %v10510, %v10510
    %v10575 = vpack.c.b16 %v10511, %v10511
    %10640 = vst [vmem:[#allocation8] sm:$0xf] %v10512
    %10641 = vst [vmem:[#allocation8 + $0x4] sm:$0xf] %v10513
    %10642 = vst [vmem:[#allocation8 + $0x8] sm:$0xf] %v10514
    %10643 = vst [vmem:[#allocation8 + $0xc] sm:$0xf] %v10515
    %10644 = vst [vmem:[#allocation8 + $0x10] sm:$0xf] %v10516
    %10645 = vst [vmem:[#allocation8 + $0x14] sm:$0xf] %v10517
    %10646 = vst [vmem:[#allocation8 + $0x18] sm:$0xf] %v10518
    %10647 = vst [vmem:[#allocation8 + $0x1c] sm:$0xf] %v10519
    %10648 = vst [vmem:[#allocation8 + $0x20] sm:$0xf] %v10520
    %10649 = vst [vmem:[#allocation8 + $0x24] sm:$0xf] %v10521
    %10650 = vst [vmem:[#allocation8 + $0x28] sm:$0xf] %v10522
    %10651 = vst [vmem:[#allocation8 + $0x2c] sm:$0xf] %v10523
    %10652 = vst [vmem:[#allocation8 + $0x30] sm:$0xf] %v10524
    %10653 = vst [vmem:[#allocation8 + $0x34] sm:$0xf] %v10525
    %10654 = vst [vmem:[#allocation8 + $0x38] sm:$0xf] %v10526
    %10655 = vst [vmem:[#allocation8 + $0x3c] sm:$0xf] %v10527
    %10656 = vst [vmem:[#allocation8 + $0x40] sm:$0xf] %v10528
    %10657 = vst [vmem:[#allocation8 + $0x44] sm:$0xf] %v10529
    %10658 = vst [vmem:[#allocation8 + $0x48] sm:$0xf] %v10530
    %10659 = vst [vmem:[#allocation8 + $0x4c] sm:$0xf] %v10531
    %10660 = vst [vmem:[#allocation8 + $0x50] sm:$0xf] %v10532
    %10661 = vst [vmem:[#allocation8 + $0x54] sm:$0xf] %v10533
    %10662 = vst [vmem:[#allocation8 + $0x58] sm:$0xf] %v10534
    %10663 = vst [vmem:[#allocation8 + $0x5c] sm:$0xf] %v10535
    %10664 = vst [vmem:[#allocation8 + $0x60] sm:$0xf] %v10536
    %10665 = vst [vmem:[#allocation8 + $0x64] sm:$0xf] %v10537
    %10666 = vst [vmem:[#allocation8 + $0x68] sm:$0xf] %v10538
    %10667 = vst [vmem:[#allocation8 + $0x6c] sm:$0xf] %v10539
    %10668 = vst [vmem:[#allocation8 + $0x70] sm:$0xf] %v10540
    %10669 = vst [vmem:[#allocation8 + $0x74] sm:$0xf] %v10541
    %10670 = vst [vmem:[#allocation8 + $0x78] sm:$0xf] %v10542
    %10671 = vst [vmem:[#allocation8 + $0x7c] sm:$0xf] %v10543
    %10672 = vst [vmem:[#allocation8 + $0x80] sm:$0xf] %v10544
    %10673 = vst [vmem:[#allocation8 + $0x84] sm:$0xf] %v10545
    %10674 = vst [vmem:[#allocation8 + $0x88] sm:$0xf] %v10546
    %10675 = vst [vmem:[#allocation8 + $0x8c] sm:$0xf] %v10547
    %10676 = vst [vmem:[#allocation8 + $0x90] sm:$0xf] %v10548
    %10677 = vst [vmem:[#allocation8 + $0x94] sm:$0xf] %v10549
    %10678 = vst [vmem:[#allocation8 + $0x98] sm:$0xf] %v10550
    %10679 = vst [vmem:[#allocation8 + $0x9c] sm:$0xf] %v10551
    %10680 = vst [vmem:[#allocation8 + $0xa0] sm:$0xf] %v10552
    %10681 = vst [vmem:[#allocation8 + $0xa4] sm:$0xf] %v10553
    %10682 = vst [vmem:[#allocation8 + $0xa8] sm:$0xf] %v10554
    %10683 = vst [vmem:[#allocation8 + $0xac] sm:$0xf] %v10555
    %10684 = vst [vmem:[#allocation8 + $0xb0] sm:$0xf] %v10556
    %10685 = vst [vmem:[#allocation8 + $0xb4] sm:$0xf] %v10557
    %10686 = vst [vmem:[#allocation8 + $0xb8] sm:$0xf] %v10558
    %10687 = vst [vmem:[#allocation8 + $0xbc] sm:$0xf] %v10559
    %10688 = vst [vmem:[#allocation8 + $0xc0] sm:$0xf] %v10560
    %10689 = vst [vmem:[#allocation8 + $0xc4] sm:$0xf] %v10561
    %10690 = vst [vmem:[#allocation8 + $0xc8] sm:$0xf] %v10562
    %10691 = vst [vmem:[#allocation8 + $0xcc] sm:$0xf] %v10563
    %10692 = vst [vmem:[#allocation8 + $0xd0] sm:$0xf] %v10564
    %10693 = vst [vmem:[#allocation8 + $0xd4] sm:$0xf] %v10565
    %10694 = vst [vmem:[#allocation8 + $0xd8] sm:$0xf] %v10566
    %10695 = vst [vmem:[#allocation8 + $0xdc] sm:$0xf] %v10567
    %10696 = vst [vmem:[#allocation8 + $0xe0] sm:$0xf] %v10568
    %10697 = vst [vmem:[#allocation8 + $0xe4] sm:$0xf] %v10569
    %10698 = vst [vmem:[#allocation8 + $0xe8] sm:$0xf] %v10570
    %10699 = vst [vmem:[#allocation8 + $0xec] sm:$0xf] %v10571
    %10700 = vst [vmem:[#allocation8 + $0xf0] sm:$0xf] %v10572
    %10701 = vst [vmem:[#allocation8 + $0xf4] sm:$0xf] %v10573
    %10702 = vst [vmem:[#allocation8 + $0xf8] sm:$0xf] %v10574
    %10703 = vst [vmem:[#allocation8 + $0xfc] sm:$0xf] %v10575
    %v10704 = vadd.f32 %v10320, %v10321
    %v10705 = vadd.f32 %v10704, %v10322
    %v10706 = vadd.f32 %v10705, %v10323
    %v10707 = vadd.f32 %v10706, %v10324
    %v10708 = vadd.f32 %v10707, %v10325
    %v10709 = vadd.f32 %v10708, %v10326
    %v10710 = vadd.f32 %v10709, %v10327
    %v10711 = vadd.f32 %v10710, %v10328
    %v10712 = vadd.f32 %v10711, %v10329
    %v10713 = vadd.f32 %v10712, %v10330
    %v10714 = vadd.f32 %v10713, %v10331
    %v10715 = vadd.f32 %v10714, %v10332
    %v10716 = vadd.f32 %v10715, %v10333
    %v10717 = vadd.f32 %v10716, %v10334
    %v10718 = vadd.f32 %v10717, %v10335
    %v10719 = vadd.f32 %v10718, %v10336
    %v10720 = vadd.f32 %v10719, %v10337
    %v10721 = vadd.f32 %v10720, %v10338
    %v10722 = vadd.f32 %v10721, %v10339
    %v10723 = vadd.f32 %v10722, %v10340
    %v10724 = vadd.f32 %v10723, %v10341
    %v10725 = vadd.f32 %v10724, %v10342
    %v10726 = vadd.f32 %v10725, %v10343
    %v10727 = vadd.f32 %v10726, %v10344
    %v10728 = vadd.f32 %v10727, %v10345
    %v10729 = vadd.f32 %v10728, %v10346
    %v10730 = vadd.f32 %v10729, %v10347
    %v10731 = vadd.f32 %v10730, %v10348
    %v10732 = vadd.f32 %v10731, %v10349
    %v10733 = vadd.f32 %v10732, %v10350
    %v10734 = vadd.f32 %v10733, %v10351
    %v10735 = vadd.f32 %v10734, %v10352
    %v10736 = vadd.f32 %v10735, %v10353
    %v10737 = vadd.f32 %v10736, %v10354
    %v10738 = vadd.f32 %v10737, %v10355
    %v10739 = vadd.f32 %v10738, %v10356
    %v10740 = vadd.f32 %v10739, %v10357
    %v10741 = vadd.f32 %v10740, %v10358
    %v10742 = vadd.f32 %v10741, %v10359
    %v10743 = vadd.f32 %v10742, %v10360
    %v10744 = vadd.f32 %v10743, %v10361
    %v10745 = vadd.f32 %v10744, %v10362
    %v10746 = vadd.f32 %v10745, %v10363
    %v10747 = vadd.f32 %v10746, %v10364
    %v10748 = vadd.f32 %v10747, %v10365
    %v10749 = vadd.f32 %v10748, %v10366
    %v10750 = vadd.f32 %v10749, %v10367
    %v10751 = vadd.f32 %v10750, %v10368
    %v10752 = vadd.f32 %v10751, %v10369
    %v10753 = vadd.f32 %v10752, %v10370
    %v10754 = vadd.f32 %v10753, %v10371
    %v10755 = vadd.f32 %v10754, %v10372
    %v10756 = vadd.f32 %v10755, %v10373
    %v10757 = vadd.f32 %v10756, %v10374
    %v10758 = vadd.f32 %v10757, %v10375
    %v10759 = vadd.f32 %v10758, %v10376
    %v10760 = vadd.f32 %v10759, %v10377
    %v10761 = vadd.f32 %v10760, %v10378
    %v10762 = vadd.f32 %v10761, %v10379
    %v10763 = vadd.f32 %v10762, %v10380
    %v10764 = vadd.f32 %v10763, %v10381
    %v10765 = vadd.f32 %v10764, %v10382
    %v10766 = vadd.f32 %v10765, %v10383
    %v10767 = vrot.slane %v10766, 4
    %v10768 = vadd.f32 %v10766, %v10767
    %v10769 = vrot.slane %v10768, 2
    %v10770 = vadd.f32 %v10768, %v10769
    %v10771 = vrot.slane %v10770, 1
    %v10772 = vadd.f32 %v10770, %v10771
    %10773 = vst [vmem:[#allocation9] sm:$0x1] %v10772
    %v10774 = vmul.f32 %v10320, %v10320
    %v10775 = vmul.f32 %v10321, %v10321
    %v10776 = vmul.f32 %v10322, %v10322
    %v10777 = vmul.f32 %v10323, %v10323
    %v10778 = vmul.f32 %v10324, %v10324
    %v10779 = vmul.f32 %v10325, %v10325
    %v10780 = vmul.f32 %v10326, %v10326
    %v10781 = vmul.f32 %v10327, %v10327
    %v10782 = vmul.f32 %v10328, %v10328
    %v10783 = vmul.f32 %v10329, %v10329
    %v10784 = vmul.f32 %v10330, %v10330
    %v10785 = vmul.f32 %v10331, %v10331
    %v10786 = vmul.f32 %v10332, %v10332
    %v10787 = vmul.f32 %v10333, %v10333
    %v10788 = vmul.f32 %v10334, %v10334
    %v10789 = vmul.f32 %v10335, %v10335
    %v10790 = vmul.f32 %v10336, %v10336
    %v10791 = vmul.f32 %v10337, %v10337
    %v10792 = vmul.f32 %v10338, %v10338
    %v10793 = vmul.f32 %v10339, %v10339
    %v10794 = vmul.f32 %v10340, %v10340
    %v10795 = vmul.f32 %v10341, %v10341
    %v10796 = vmul.f32 %v10342, %v10342
    %v10797 = vmul.f32 %v10343, %v10343
    %v10798 = vmul.f32 %v10344, %v10344
    %v10799 = vmul.f32 %v10345, %v10345
    %v10800 = vmul.f32 %v10346, %v10346
    %v10801 = vmul.f32 %v10347, %v10347
    %v10802 = vmul.f32 %v10348, %v10348
    %v10803 = vmul.f32 %v10349, %v10349
    %v10804 = vmul.f32 %v10350, %v10350
    %v10805 = vmul.f32 %v10351, %v10351
    %v10806 = vmul.f32 %v10352, %v10352
    %v10807 = vmul.f32 %v10353, %v10353
    %v10808 = vmul.f32 %v10354, %v10354
    %v10809 = vmul.f32 %v10355, %v10355
    %v10810 = vmul.f32 %v10356, %v10356
    %v10811 = vmul.f32 %v10357, %v10357
    %v10812 = vmul.f32 %v10358, %v10358
    %v10813 = vmul.f32 %v10359, %v10359
    %v10814 = vmul.f32 %v10360, %v10360
    %v10815 = vmul.f32 %v10361, %v10361
    %v10816 = vmul.f32 %v10362, %v10362
    %v10817 = vmul.f32 %v10363, %v10363
    %v10818 = vmul.f32 %v10364, %v10364
    %v10819 = vmul.f32 %v10365, %v10365
    %v10820 = vmul.f32 %v10366, %v10366
    %v10821 = vmul.f32 %v10367, %v10367
    %v10822 = vmul.f32 %v10368, %v10368
    %v10823 = vmul.f32 %v10369, %v10369
    %v10824 = vmul.f32 %v10370, %v10370
    %v10825 = vmul.f32 %v10371, %v10371
    %v10826 = vmul.f32 %v10372, %v10372
    %v10827 = vmul.f32 %v10373, %v10373
    %v10828 = vmul.f32 %v10374, %v10374
    %v10829 = vmul.f32 %v10375, %v10375
    %v10830 = vmul.f32 %v10376, %v10376
    %v10831 = vmul.f32 %v10377, %v10377
    %v10832 = vmul.f32 %v10378, %v10378
    %v10833 = vmul.f32 %v10379, %v10379
    %v10834 = vmul.f32 %v10380, %v10380
    %v10835 = vmul.f32 %v10381, %v10381
    %v10836 = vmul.f32 %v10382, %v10382
    %v10837 = vmul.f32 %v10383, %v10383
    %v10838 = vadd.f32 %v10774, %v10775
    %v10839 = vadd.f32 %v10838, %v10776
    %v10840 = vadd.f32 %v10839, %v10777
    %v10841 = vadd.f32 %v10840, %v10778
    %v10842 = vadd.f32 %v10841, %v10779
    %v10843 = vadd.f32 %v10842, %v10780
    %v10844 = vadd.f32 %v10843, %v10781
    %v10845 = vadd.f32 %v10844, %v10782
    %v10846 = vadd.f32 %v10845, %v10783
    %v10847 = vadd.f32 %v10846, %v10784
    %v10848 = vadd.f32 %v10847, %v10785
    %v10849 = vadd.f32 %v10848, %v10786
    %v10850 = vadd.f32 %v10849, %v10787
    %v10851 = vadd.f32 %v10850, %v10788
    %v10852 = vadd.f32 %v10851, %v10789
    %v10853 = vadd.f32 %v10852, %v10790
    %v10854 = vadd.f32 %v10853, %v10791
    %v10855 = vadd.f32 %v10854, %v10792
    %v10856 = vadd.f32 %v10855, %v10793
    %v10857 = vadd.f32 %v10856, %v10794
    %v10858 = vadd.f32 %v10857, %v10795
    %v10859 = vadd.f32 %v10858, %v10796
    %v10860 = vadd.f32 %v10859, %v10797
    %v10861 = vadd.f32 %v10860, %v10798
    %v10862 = vadd.f32 %v10861, %v10799
    %v10863 = vadd.f32 %v10862, %v10800
    %v10864 = vadd.f32 %v10863, %v10801
    %v10865 = vadd.f32 %v10864, %v10802
    %v10866 = vadd.f32 %v10865, %v10803
    %v10867 = vadd.f32 %v10866, %v10804
    %v10868 = vadd.f32 %v10867, %v10805
    %v10869 = vadd.f32 %v10868, %v10806
    %v10870 = vadd.f32 %v10869, %v10807
    %v10871 = vadd.f32 %v10870, %v10808
    %v10872 = vadd.f32 %v10871, %v10809
    %v10873 = vadd.f32 %v10872, %v10810
    %v10874 = vadd.f32 %v10873, %v10811
    %v10875 = vadd.f32 %v10874, %v10812
    %v10876 = vadd.f32 %v10875, %v10813
    %v10877 = vadd.f32 %v10876, %v10814
    %v10878 = vadd.f32 %v10877, %v10815
    %v10879 = vadd.f32 %v10878, %v10816
    %v10880 = vadd.f32 %v10879, %v10817
    %v10881 = vadd.f32 %v10880, %v10818
    %v10882 = vadd.f32 %v10881, %v10819
    %v10883 = vadd.f32 %v10882, %v10820
    %v10884 = vadd.f32 %v10883, %v10821
    %v10885 = vadd.f32 %v10884, %v10822
    %v10886 = vadd.f32 %v10885, %v10823
    %v10887 = vadd.f32 %v10886, %v10824
    %v10888 = vadd.f32 %v10887, %v10825
    %v10889 = vadd.f32 %v10888, %v10826
    %v10890 = vadd.f32 %v10889, %v10827
    %v10891 = vadd.f32 %v10890, %v10828
    %v10892 = vadd.f32 %v10891, %v10829
    %v10893 = vadd.f32 %v10892, %v10830
    %v10894 = vadd.f32 %v10893, %v10831
    %v10895 = vadd.f32 %v10894, %v10832
    %v10896 = vadd.f32 %v10895, %v10833
    %v10897 = vadd.f32 %v10896, %v10834
    %v10898 = vadd.f32 %v10897, %v10835
    %v10899 = vadd.f32 %v10898, %v10836
    %v10900 = vadd.f32 %v10899, %v10837
    %v10901 = vrot.slane %v10900, 4
    %v10902 = vadd.f32 %v10900, %v10901
    %v10903 = vrot.slane %v10902, 2
    %v10904 = vadd.f32 %v10902, %v10903
    %v10905 = vrot.slane %v10904, 1
    %v10906 = vadd.f32 %v10904, %v10905
    %10907 = vst [vmem:[#allocation11] sm:$0x1] %v10906
    // Predicated region
    $region26: #{tpu_custom_call.1} parent=1 // pred_check
      _
    $region27: #{tpu_custom_call.1} parent=1 // pred_check_branch
      %10909 = sbr.rel (0) target = $region29
    $region28: #{tpu_custom_call.1} parent=1 // pred_region
      %s10911 = ssub.s32 4096, 4096
      %10912 = vsyncadd [#allocation5], %s10911
      %s10913 = sshll.u32 [#allocation8], 4
      %s10914 = int_to_ptr.vmem [resolvable:$true] %s10913
      %10919 = dma.vmem_to_hbm [thread:$0]  %s10914, 4096, %s4, [#allocation5], 64, 64, 4
    $region29: #{tpu_custom_call.1} parent=1 // pred_fallthru
      _
    // Predicated region
    $region30: #{tpu_custom_call.1} parent=1 // pred_check
      _
    $region31: #{tpu_custom_call.1} parent=1 // pred_check_branch
      %10921 = sbr.rel (0) target = $region33
    $region32: #{tpu_custom_call.1} parent=1 // pred_region
      %s10923 = ssub.s32 16, 16
      %10924 = vsyncadd [#allocation10], %s10923
      %s10926 = sshll.u32 [#allocation9], 4
      %s10927 = int_to_ptr.vmem [resolvable:$true] %s10926
      %10929 = dma.vmem_to_hbm [thread:$0]  %s10927, 16, %s5, [#allocation10]
    $region33: #{tpu_custom_call.1} parent=1 // pred_fallthru
      _
    // Predicated region
    $region34: #{tpu_custom_call.1} parent=1 // pred_check
      _
    $region35: #{tpu_custom_call.1} parent=1 // pred_check_branch
      %10931 = sbr.rel (0) target = $region37
    $region36: #{tpu_custom_call.1} parent=1 // pred_region
      %s10933 = ssub.s32 16, 16
      %10934 = vsyncadd [#allocation10], %s10933
      %s10936 = sshll.u32 [#allocation11], 4
      %s10937 = int_to_ptr.vmem [resolvable:$true] %s10936
      %10939 = dma.vmem_to_hbm [thread:$0]  %s10937, 16, %s6, [#allocation10]
    $region37: #{tpu_custom_call.1} parent=1 // pred_fallthru
      _
    // Predicated region
    $region38: #{tpu_custom_call.1} parent=1 // pred_check
      _
    $region39: #{tpu_custom_call.1} parent=1 // pred_check_branch
      %10941 = sbr.rel (0) target = $region41
    $region40: #{tpu_custom_call.1} parent=1 // pred_region
      %10942 = dma.done [#allocation5], 4096
    $region41: #{tpu_custom_call.1} parent=1 // pred_fallthru
      _
    // Predicated region
    $region42: #{tpu_custom_call.1} parent=1 // pred_check
      _
    $region43: #{tpu_custom_call.1} parent=1 // pred_check_branch
      %10944 = sbr.rel (0) target = $region45
    $region44: #{tpu_custom_call.1} parent=1 // pred_region
      %10945 = dma.done [#allocation10], 16
    $region45: #{tpu_custom_call.1} parent=1 // pred_fallthru
      _
    // Predicated region
    $region46: #{tpu_custom_call.1} parent=1 // pred_check
      _
    $region47: #{tpu_custom_call.1} parent=1 // pred_check_branch
      %10947 = sbr.rel (0) target = $region49
    $region48: #{tpu_custom_call.1} parent=1 // pred_region
      %10948 = dma.done [#allocation10], 16
    $region49: #{tpu_custom_call.1} parent=1 // pred_fallthru
      _
    %10949 = vsyncpa [#allocation4], 1
    %10950 = vsyncpa [#allocation7], 1
    %10951 = vsyncpa [#allocation5], 1
    %10952 = vsyncpa [#allocation10], 1

</llo_original>
